<compile_context>
chip_gen: v6e
topology: v6e:2x2x1
jax: 0.10.0
libtpu: 0.0.40
codegen_flags: <defaults>
</compile_context>

<pallas_src>
import jax
import jax.numpy as jnp
import numpy as np
from jax import lax
from jax.experimental import pallas as pl
from jax.experimental.pallas import tpu as pltpu


def _vmem_budget():
    """Generation-aware (per-step working-set budget, vmem_limit_bytes)."""
    cap = 64 * 1024 * 1024                      # conservative default: v7x per-core VMEM
    try:
        cap = int(pltpu.get_tpu_info().vmem_capacity_bytes)
    except Exception:
        pass
    budget = (3 * cap) // 8                     # ~24 MiB on v7x, ~48 MiB on v5e/v6e
    limit = max(min((3 * cap) // 4, 96 * 1024 * 1024), 32 * 1024 * 1024)
    return budget, limit


def _pick_tile_h(H, W, Cin, Cout, budget_bytes):
    """Largest even output-row tile TH dividing Ho whose working set fits the budget,
    preferring >= 2 row tiles per image (pipeline overlap; v7x has 2 TensorCores)."""
    Ho = 2 * H
    fixed = (2 * H * W * Cin * 2            # double-buffered bf16 resident input block
             + 2 * 9 * Cin * Cout * 2       # double-buffered bf16 conv weights
             + 4 * Cout * 4)                # scale / shift

    def working_set(th):
        upad = (th + 2) * (W + 2) * Cin * 4            # padded f32 upsample scratch
        taps = 4 * (th + 2) * W * Cin * 2              # bf16 phase/tap slabs
        acc = 2 * th * W * Cout * 4                    # f32 accumulator
        outb = 2 * (2 * th * W * Cout) * 4             # double-buffered f32 output block
        temps = 9 * (th + 2) * W * Cin * 4             # f32 upsample temporaries
        return fixed + upad + taps + acc + outb + temps

    cands = [th for th in range(2, Ho + 1, 2) if Ho % th == 0]
    fits = [th for th in cands if working_set(th) <= budget_bytes]
    if not fits:
        return cands[0]
    sub_full = [th for th in fits if th < Ho]
    return max(sub_full) if sub_full else max(fits)


def _make_up_conv_kernel(H, W, Cin, Cout, TH):
    Sin = TH // 2 + 2                    # input rows per tile (1-row halo each side)

    def kernel(x_ref, w_ref, scale_ref, shift_ref, o_ref, upad_scr, tap_scr, acc_scr):
        t = pl.program_id(1)
        nt = pl.num_programs(1)
        k0 = t * (TH // 2)               # first input row of this output-row tile

        # ---- halo gather: Sin input rows, edge-clamped (concat along untiled dim) ----
        xv = x_ref.at[0]                                                # (H, W, Cin)
        top = xv[pl.ds(jnp.maximum(k0 - 1, 0), 1), :, :]
        mid = xv[pl.ds(k0, TH // 2), :, :]
        bot = xv[pl.ds(jnp.minimum(k0 + TH // 2, H - 1), 1), :, :]
        xs = jnp.concatenate([top, mid, bot], axis=0).astype(jnp.float32)   # (Sin, W, Cin)

        # ---- bilinear 2x upsample in H (align_corners=False): TH+2 rows --------------
        lo, hi = xs[:Sin - 1], xs[1:]
        u_odd = 0.75 * lo + 0.25 * hi          # upsampled rows 2*k0-1, 2*k0+1, ...
        u_even = 0.75 * hi + 0.25 * lo         # upsampled rows 2*k0,   2*k0+2, ...
        u = jnp.stack([u_odd, u_even], axis=1).reshape(TH + 2, W, Cin)

        # ---- clamped W neighbours via a padded scratch (slice load/store only) -------
        upad_scr[:, 1:W + 1, :] = u
        upad_scr[:, 0:1, :] = upad_scr[:, 1:2, :]              # clamp left  (u[0])
        upad_scr[:, W + 1:W + 2, :] = upad_scr[:, W:W + 1, :]  # clamp right (u[W-1])
        u_l = upad_scr[:, 0:W, :]
        u_r = upad_scr[:, 2:W + 2, :]

        # ---- bilinear 2x upsample in W, kept phase-separated -------------------------
        #   even output column 2w   = 0.75*u[w] + 0.25*u[w-1]
        #   odd  output column 2w+1 = 0.75*u[w] + 0.25*u[w+1]
        ve = (0.75 * u + 0.25 * u_l).astype(jnp.bfloat16)      # (TH+2, W, Cin)
        vo = (0.75 * u + 0.25 * u_r).astype(jnp.bfloat16)

        # ---- 4 column-shifted phase slabs (bf16), conv W zero-padding built in -------
        #   slab 0: vo shifted right (col w -> vo[w-1], zero at w=0)   = upsampled col 2w-1
        #   slab 1: ve                                                 = upsampled col 2w
        #   slab 2: vo                                                 = upsampled col 2w+1
        #   slab 3: ve shifted left (col w -> ve[w+1], zero at w=W-1)  = upsampled col 2w+2
        zcol = jnp.zeros((TH + 2, 1, Cin), jnp.bfloat16)
        tap_scr[1] = ve
        tap_scr[2] = vo
        tap_scr[0, :, 0:1, :] = zcol
        tap_scr[0, :, 1:W, :] = tap_scr[2, :, 0:W - 1, :]
        tap_scr[3, :, 0:W - 1, :] = tap_scr[1, :, 1:W, :]
        tap_scr[3, :, W - 1:W, :] = zcol

        # ---- conv zero rows at the image top / bottom (boundary row-tiles only) ------
        zrow = jnp.zeros((4, 1, W, Cin), jnp.bfloat16)

        @pl.when(t == 0)
        def _():
            tap_scr[:, 0:1, :, :] = zrow

        @pl.when(t == nt - 1)
        def _():
            tap_scr[:, TH + 1:TH + 2, :, :] = zrow

        # ---- 3x3 conv: 9 flattened 2-D MXU matmuls, f32 accumulation in VMEM ---------
        # For column offset dw the even-phase source is slab dw and the odd-phase source
        # is slab dw+1 (adjacent pair); rows dh..dh+TH-1 give the row offset.
        # (W multiple of 8 keeps the leading-dim collapse reshape a layout no-op.)
        for dh in range(3):
            for dw in range(3):
                tap = tap_scr[dw:dw + 2, dh:dh + TH, :, :].reshape(2 * TH * W, Cin)
                part = jnp.dot(tap, w_ref[dh, dw], preferred_element_type=jnp.float32)
                if dh == 0 and dw == 0:
                    acc_scr[...] = part
                else:
                    acc_scr[...] += part

        # ---- conv bias + folded eval-mode BatchNorm + ReLU, once per tile ------------
        y = acc_scr[...] * scale_ref[...] + shift_ref[...]
        y = jnp.maximum(y, 0.0)
        o_ref[0] = y.reshape(2, TH, W, Cout).astype(o_ref.dtype)

    return kernel


def up_conv_pallas(x_nchw, w_oihw, bias, gamma, beta, running_mean, running_var, eps=1e-5):
    """Equivalent of up_conv(in_ch, out_ch).forward(x) in eval mode. x_nchw: (N, Cin, H, W)."""
    N, Cin, H, W = x_nchw.shape
    Cout = w_oihw.shape[0]
    Ho, Wo = 2 * H, 2 * W

    budget, vmem_limit = _vmem_budget()
    TH = _pick_tile_h(H, W, Cin, Cout, budget)

    # NHWC / HWIO operands; bf16 feeds the MXU (accumulation stays f32 in-kernel).
    x_nhwc = jnp.transpose(x_nchw, (0, 2, 3, 1)).astype(jnp.bfloat16)
    w_hwio = jnp.transpose(w_oihw, (2, 3, 1, 0)).astype(jnp.bfloat16)

    inv_std = 1.0 / jnp.sqrt(running_var.astype(jnp.float32) + eps)
    scale = (gamma * inv_std).reshape(1, Cout).astype(jnp.float32)
    shift = (beta + (bias - running_mean) * gamma * inv_std).reshape(1, Cout).astype(jnp.float32)

    kernel = _make_up_conv_kernel(H, W, Cin, Cout, TH)

    # Output stays phase-separated over W: dim 1 = W-phase p, dim 3 = W index w,
    # final column index = 2*w + p (interleaved back in the XLA wrapper below).
    out5 = pl.pallas_call(
        kernel,
        out_shape=jax.ShapeDtypeStruct((N, 2, Ho, W, Cout), jnp.float32),
        grid=(N, Ho // TH),
        in_specs=[
            pl.BlockSpec((1, H, W, Cin), lambda n, t: (n, 0, 0, 0)),      # resident per image
            pl.BlockSpec((3, 3, Cin, Cout), lambda n, t: (0, 0, 0, 0)),   # resident weights
            pl.BlockSpec((1, Cout), lambda n, t: (0, 0)),                 # scale, resident
            pl.BlockSpec((1, Cout), lambda n, t: (0, 0)),                 # shift, resident
        ],
        out_specs=pl.BlockSpec((1, 2, TH, W, Cout), lambda n, t: (n, 0, t, 0, 0)),
        scratch_shapes=[
            pltpu.VMEM((TH + 2, W + 2, Cin), jnp.float32),     # clamp-padded upsample rows
            pltpu.VMEM((4, TH + 2, W, Cin), jnp.bfloat16),     # column-shifted phase slabs
            pltpu.VMEM((2 * TH * W, Cout), jnp.float32),       # flattened f32 accumulator
        ],
        compiler_params=pltpu.CompilerParams(
            dimension_semantics=("parallel", "parallel"),
            vmem_limit_bytes=vmem_limit,
        ),
    )(x_nhwc, w_hwio, scale, shift)

    # (n, p, h, w, c) -> (n, c, h, w, p) -> (N, Cout, Ho, Wo)   (wo = 2*w + p)
    return jnp.transpose(out5, (0, 4, 2, 3, 1)).reshape(N, Cout, Ho, Wo)


def up_conv_reference(x, w, b, gamma, beta, rmean, rvar, eps=1e-5):
    """Pure-JAX f32 reference (NCHW), matching PyTorch eval-mode semantics."""
    N, Cin, H, W = x.shape

    def src_idx(L, Lo):
        s = (jnp.arange(Lo, dtype=jnp.float32) + 0.5) / 2.0 - 0.5
        s = jnp.clip(s, 0.0)
        i0 = jnp.floor(s).astype(jnp.int32)
        frac = s - i0.astype(jnp.float32)
        i0 = jnp.minimum(i0, L - 1)
        i1 = jnp.minimum(i0 + 1, L - 1)
        return i0, i1, frac

    h0, h1, fh = src_idx(H, 2 * H)
    w0, w1, fw = src_idx(W, 2 * W)
    xh = (x[:, :, h0, :] * (1.0 - fh)[None, None, :, None]
          + x[:, :, h1, :] * fh[None, None, :, None])
    xu = xh[:, :, :, w0] * (1.0 - fw) + xh[:, :, :, w1] * fw

    y = lax.conv_general_dilated(xu, w, window_strides=(1, 1),
                                 padding=((1, 1), (1, 1)),
                                 dimension_numbers=("NCHW", "OIHW", "NCHW"))
    y = y + b[None, :, None, None]
    y = (y - rmean[None, :, None, None]) / jnp.sqrt(rvar + eps)[None, :, None, None]
    y = y * gamma[None, :, None, None] + beta[None, :, None, None]
    return jnp.maximum(y, 0.0)


if __name__ == "__main__":
    key = jax.random.PRNGKey(0)
    N, Cin, Cout, H, W = 2, 4, 8, 16, 16        # output: (2, 8, 32, 32); 2 row tiles per image

    k1, k2, k3 = jax.random.split(key, 3)
    x = jax.random.normal(k1, (N, Cin, H, W), dtype=jnp.float32)

    fan_in = Cin * 3 * 3
    bound = 1.0 / np.sqrt(fan_in)
    w = jax.random.uniform(k2, (Cout, Cin, 3, 3), jnp.float32, -bound, bound)
    b = jax.random.uniform(k3, (Cout,), jnp.float32, -bound, bound)
    gamma = 1.0 + 0.1 * jnp.arange(Cout, dtype=jnp.float32)
    beta = 0.05 * jnp.arange(Cout, dtype=jnp.float32)
    rmean = 0.02 * jnp.arange(Cout, dtype=jnp.float32) - 0.05
    rvar = 1.0 + 0.03 * jnp.arange(Cout, dtype=jnp.float32)

    out = up_conv_pallas(x, w, b, gamma, beta, rmean, rvar)
    out = jax.block_until_ready(out)

    ref = up_conv_reference(x, w, b, gamma, beta, rmean, rvar)
    # bf16 MXU operands vs. f32 reference -> bf16-level tolerance
    np.testing.assert_allclose(np.asarray(out), np.asarray(ref), atol=3e-2, rtol=3e-2)

    print("KERNEL_OK")
</pallas_src>

<mosaic_0001>
module attributes {stable_mosaic.version = 11 : i64} {
  func.func @kernel(%arg0: i32, %arg1: i32, %arg2: memref<1x16x16x4xbf16, #tpu.memory_space<vmem>>, %arg3: memref<3x3x4x8xbf16, #tpu.memory_space<vmem>>, %arg4: memref<1x8xf32, #tpu.memory_space<vmem>>, %arg5: memref<1x8xf32, #tpu.memory_space<vmem>>, %arg6: memref<1x2x16x16x8xf32, #tpu.memory_space<vmem>>, %arg7: memref<18x18x4xf32, #tpu.memory_space<vmem>>, %arg8: memref<4x18x16x4xbf16, #tpu.memory_space<vmem>>, %arg9: memref<512x8xf32, #tpu.memory_space<vmem>>) attributes {dimension_semantics = [#tpu.dimension_semantics<parallel>, #tpu.dimension_semantics<parallel>], iteration_bounds = array<i64: 2, 2>, scalar_prefetch = 0 : i64, scratch_operands = 3 : i64, tpu.core_type = #tpu.core_type<tc>, window_params = [{transform_indices = @transform_0, window_bounds = array<i64: 1, 16, 16, 4>}, {pipeline_mode = #tpu.pipeline_mode<synchronous>, transform_indices = @transform_1, window_bounds = array<i64: 3, 3, 4, 8>}, {pipeline_mode = #tpu.pipeline_mode<synchronous>, transform_indices = @transform_2, window_bounds = array<i64: 1, 8>}, {pipeline_mode = #tpu.pipeline_mode<synchronous>, transform_indices = @transform_3, window_bounds = array<i64: 1, 8>}, {transform_indices = @transform_4, window_bounds = array<i64: 1, 2, 16, 16, 8>}]} {
    %c8_i32 = arith.constant 8 : i32
    %0 = arith.muli %arg1, %c8_i32 : i32
    %c1_i32 = arith.constant 1 : i32
    %1 = arith.subi %0, %c1_i32 : i32
    %c0_i32 = arith.constant 0 : i32
    %2 = arith.maxsi %1, %c0_i32 : i32
    %c0_i32_0 = arith.constant 0 : i32
    %c0_i32_1 = arith.constant 0 : i32
    %c0_i32_2 = arith.constant 0 : i32
    %c0_i32_3 = arith.constant 0 : i32
    %3 = tpu.memref_slice %arg2[%c0_i32_0, %c0_i32_1, %c0_i32_2, %c0_i32_3] : memref<1x16x16x4xbf16, #tpu.memory_space<vmem>> -> memref<1x16x16x4xbf16, #tpu.memory_space<vmem>>
    %4 = tpu.memref_squeeze %3 : memref<1x16x16x4xbf16, #tpu.memory_space<vmem>> -> memref<16x16x4xbf16, #tpu.memory_space<vmem>>
    %5 = arith.index_cast %2 : i32 to index
    %c0 = arith.constant 0 : index
    %c0_4 = arith.constant 0 : index
    %6 = vector.load %4[%5, %c0, %c0_4] : memref<16x16x4xbf16, #tpu.memory_space<vmem>>, vector<1x16x4xbf16>
    %c0_i32_5 = arith.constant 0 : i32
    %c0_i32_6 = arith.constant 0 : i32
    %c0_i32_7 = arith.constant 0 : i32
    %c0_i32_8 = arith.constant 0 : i32
    %7 = tpu.memref_slice %arg2[%c0_i32_5, %c0_i32_6, %c0_i32_7, %c0_i32_8] : memref<1x16x16x4xbf16, #tpu.memory_space<vmem>> -> memref<1x16x16x4xbf16, #tpu.memory_space<vmem>>
    %8 = tpu.memref_squeeze %7 : memref<1x16x16x4xbf16, #tpu.memory_space<vmem>> -> memref<16x16x4xbf16, #tpu.memory_space<vmem>>
    %9 = arith.index_cast %0 : i32 to index
    %c0_9 = arith.constant 0 : index
    %c0_10 = arith.constant 0 : index
    %10 = vector.load %8[%9, %c0_9, %c0_10] : memref<16x16x4xbf16, #tpu.memory_space<vmem>>, vector<8x16x4xbf16>
    %c8_i32_11 = arith.constant 8 : i32
    %11 = arith.addi %0, %c8_i32_11 : i32
    %c15_i32 = arith.constant 15 : i32
    %12 = arith.minsi %11, %c15_i32 : i32
    %c0_i32_12 = arith.constant 0 : i32
    %c0_i32_13 = arith.constant 0 : i32
    %c0_i32_14 = arith.constant 0 : i32
    %c0_i32_15 = arith.constant 0 : i32
    %13 = tpu.memref_slice %arg2[%c0_i32_12, %c0_i32_13, %c0_i32_14, %c0_i32_15] : memref<1x16x16x4xbf16, #tpu.memory_space<vmem>> -> memref<1x16x16x4xbf16, #tpu.memory_space<vmem>>
    %14 = tpu.memref_squeeze %13 : memref<1x16x16x4xbf16, #tpu.memory_space<vmem>> -> memref<16x16x4xbf16, #tpu.memory_space<vmem>>
    %15 = arith.index_cast %12 : i32 to index
    %c0_16 = arith.constant 0 : index
    %c0_17 = arith.constant 0 : index
    %16 = vector.load %14[%15, %c0_16, %c0_17] : memref<16x16x4xbf16, #tpu.memory_space<vmem>>, vector<1x16x4xbf16>
    %17 = tpu.concatenate %6, %10, %16 in 0 : vector<1x16x4xbf16>, vector<8x16x4xbf16>, vector<1x16x4xbf16> -> vector<10x16x4xbf16>
    %18 = arith.extf %17 : vector<10x16x4xbf16> to vector<10x16x4xf32>
    %19 = vector.extract_strided_slice %18 {offsets = [0, 0, 0], sizes = [9, 16, 4], strides = [1, 1, 1]} : vector<10x16x4xf32> to vector<9x16x4xf32>
    %20 = vector.extract_strided_slice %18 {offsets = [1, 0, 0], sizes = [9, 16, 4], strides = [1, 1, 1]} : vector<10x16x4xf32> to vector<9x16x4xf32>
    %cst = arith.constant 7.500000e-01 : f32
    %21 = vector.broadcast %cst : f32 to vector<9x16x4xf32>
    %22 = arith.mulf %21, %19 : vector<9x16x4xf32>
    %cst_18 = arith.constant 2.500000e-01 : f32
    %23 = vector.broadcast %cst_18 : f32 to vector<9x16x4xf32>
    %24 = arith.mulf %23, %20 : vector<9x16x4xf32>
    %25 = arith.addf %22, %24 : vector<9x16x4xf32>
    %cst_19 = arith.constant 7.500000e-01 : f32
    %26 = vector.broadcast %cst_19 : f32 to vector<9x16x4xf32>
    %27 = arith.mulf %26, %20 : vector<9x16x4xf32>
    %cst_20 = arith.constant 2.500000e-01 : f32
    %28 = vector.broadcast %cst_20 : f32 to vector<9x16x4xf32>
    %29 = arith.mulf %28, %19 : vector<9x16x4xf32>
    %30 = arith.addf %27, %29 : vector<9x16x4xf32>
    %31 = vector.shape_cast %25 : vector<9x16x4xf32> to vector<9x1x16x4xf32>
    %32 = vector.shape_cast %30 : vector<9x16x4xf32> to vector<9x1x16x4xf32>
    %33 = tpu.concatenate %31, %32 in 1 : vector<9x1x16x4xf32>, vector<9x1x16x4xf32> -> vector<9x2x16x4xf32>
    %34 = vector.shape_cast %33 : vector<9x2x16x4xf32> to vector<18x16x4xf32>
    %c0_21 = arith.constant 0 : index
    %c1 = arith.constant 1 : index
    %c0_22 = arith.constant 0 : index
    %35 = vector.load %arg7[%c0_21, %c1, %c0_22] : memref<18x18x4xf32, #tpu.memory_space<vmem>>, vector<18x16x4xf32>
    tpu.vector_store %arg7[%c0_21, %c1, %c0_22], %34 {strides = array<i32>} : memref<18x18x4xf32, #tpu.memory_space<vmem>>, vector<18x16x4xf32>,
    %c0_23 = arith.constant 0 : index
    %c1_24 = arith.constant 1 : index
    %c0_25 = arith.constant 0 : index
    %36 = vector.load %arg7[%c0_23, %c1_24, %c0_25] : memref<18x18x4xf32, #tpu.memory_space<vmem>>, vector<18x1x4xf32>
    %c0_26 = arith.constant 0 : index
    %c0_27 = arith.constant 0 : index
    %c0_28 = arith.constant 0 : index
    %37 = vector.load %arg7[%c0_26, %c0_27, %c0_28] : memref<18x18x4xf32, #tpu.memory_space<vmem>>, vector<18x1x4xf32>
    tpu.vector_store %arg7[%c0_26, %c0_27, %c0_28], %36 {strides = array<i32>} : memref<18x18x4xf32, #tpu.memory_space<vmem>>, vector<18x1x4xf32>,
    %c0_29 = arith.constant 0 : index
    %c16 = arith.constant 16 : index
    %c0_30 = arith.constant 0 : index
    %38 = vector.load %arg7[%c0_29, %c16, %c0_30] : memref<18x18x4xf32, #tpu.memory_space<vmem>>, vector<18x1x4xf32>
    %c0_31 = arith.constant 0 : index
    %c17 = arith.constant 17 : index
    %c0_32 = arith.constant 0 : index
    %39 = vector.load %arg7[%c0_31, %c17, %c0_32] : memref<18x18x4xf32, #tpu.memory_space<vmem>>, vector<18x1x4xf32>
    tpu.vector_store %arg7[%c0_31, %c17, %c0_32], %38 {strides = array<i32>} : memref<18x18x4xf32, #tpu.memory_space<vmem>>, vector<18x1x4xf32>,
    %c0_33 = arith.constant 0 : index
    %c0_34 = arith.constant 0 : index
    %c0_35 = arith.constant 0 : index
    %40 = vector.load %arg7[%c0_33, %c0_34, %c0_35] : memref<18x18x4xf32, #tpu.memory_space<vmem>>, vector<18x16x4xf32>
    %c0_36 = arith.constant 0 : index
    %c2 = arith.constant 2 : index
    %c0_37 = arith.constant 0 : index
    %41 = vector.load %arg7[%c0_36, %c2, %c0_37] : memref<18x18x4xf32, #tpu.memory_space<vmem>>, vector<18x16x4xf32>
    %cst_38 = arith.constant 7.500000e-01 : f32
    %42 = vector.broadcast %cst_38 : f32 to vector<18x16x4xf32>
    %43 = arith.mulf %42, %34 : vector<18x16x4xf32>
    %cst_39 = arith.constant 2.500000e-01 : f32
    %44 = vector.broadcast %cst_39 : f32 to vector<18x16x4xf32>
    %45 = arith.mulf %44, %40 : vector<18x16x4xf32>
    %46 = arith.addf %43, %45 : vector<18x16x4xf32>
    %47 = arith.truncf %46 : vector<18x16x4xf32> to vector<18x16x4xbf16>
    %cst_40 = arith.constant 7.500000e-01 : f32
    %48 = vector.broadcast %cst_40 : f32 to vector<18x16x4xf32>
    %49 = arith.mulf %48, %34 : vector<18x16x4xf32>
    %cst_41 = arith.constant 2.500000e-01 : f32
    %50 = vector.broadcast %cst_41 : f32 to vector<18x16x4xf32>
    %51 = arith.mulf %50, %41 : vector<18x16x4xf32>
    %52 = arith.addf %49, %51 : vector<18x16x4xf32>
    %53 = arith.truncf %52 : vector<18x16x4xf32> to vector<18x16x4xbf16>
    %cst_42 = arith.constant 0.000000e+00 : bf16
    %54 = vector.broadcast %cst_42 : bf16 to vector<18x1x4xbf16>
    %c1_43 = arith.constant 1 : index
    %c0_44 = arith.constant 0 : index
    %c0_45 = arith.constant 0 : index
    %c0_46 = arith.constant 0 : index
    %55 = vector.load %arg8[%c1_43, %c0_44, %c0_45, %c0_46] : memref<4x18x16x4xbf16, #tpu.memory_space<vmem>>, vector<1x18x16x4xbf16>
    %56 = vector.shape_cast %55 : vector<1x18x16x4xbf16> to vector<18x16x4xbf16>
    %57 = vector.shape_cast %47 : vector<18x16x4xbf16> to vector<1x18x16x4xbf16>
    tpu.vector_store %arg8[%c1_43, %c0_44, %c0_45, %c0_46], %57 {strides = array<i32>} : memref<4x18x16x4xbf16, #tpu.memory_space<vmem>>, vector<1x18x16x4xbf16>,
    %c2_47 = arith.constant 2 : index
    %c0_48 = arith.constant 0 : index
    %c0_49 = arith.constant 0 : index
    %c0_50 = arith.constant 0 : index
    %58 = vector.load %arg8[%c2_47, %c0_48, %c0_49, %c0_50] : memref<4x18x16x4xbf16, #tpu.memory_space<vmem>>, vector<1x18x16x4xbf16>
    %59 = vector.shape_cast %58 : vector<1x18x16x4xbf16> to vector<18x16x4xbf16>
    %60 = vector.shape_cast %53 : vector<18x16x4xbf16> to vector<1x18x16x4xbf16>
    tpu.vector_store %arg8[%c2_47, %c0_48, %c0_49, %c0_50], %60 {strides = array<i32>} : memref<4x18x16x4xbf16, #tpu.memory_space<vmem>>, vector<1x18x16x4xbf16>,
    %c0_51 = arith.constant 0 : index
    %c0_52 = arith.constant 0 : index
    %c0_53 = arith.constant 0 : index
    %c0_54 = arith.constant 0 : index
    %61 = vector.load %arg8[%c0_51, %c0_52, %c0_53, %c0_54] : memref<4x18x16x4xbf16, #tpu.memory_space<vmem>>, vector<1x18x1x4xbf16>
    %62 = vector.shape_cast %61 : vector<1x18x1x4xbf16> to vector<18x1x4xbf16>
    %63 = vector.shape_cast %54 : vector<18x1x4xbf16> to vector<1x18x1x4xbf16>
    tpu.vector_store %arg8[%c0_51, %c0_52, %c0_53, %c0_54], %63 {strides = array<i32>} : memref<4x18x16x4xbf16, #tpu.memory_space<vmem>>, vector<1x18x1x4xbf16>,
    %c2_55 = arith.constant 2 : index
    %c0_56 = arith.constant 0 : index
    %c0_57 = arith.constant 0 : index
    %c0_58 = arith.constant 0 : index
    %64 = vector.load %arg8[%c2_55, %c0_56, %c0_57, %c0_58] : memref<4x18x16x4xbf16, #tpu.memory_space<vmem>>, vector<1x18x15x4xbf16>
    %65 = vector.shape_cast %64 : vector<1x18x15x4xbf16> to vector<18x15x4xbf16>
    %c0_59 = arith.constant 0 : index
    %c0_60 = arith.constant 0 : index
    %c1_61 = arith.constant 1 : index
    %c0_62 = arith.constant 0 : index
    %66 = vector.load %arg8[%c0_59, %c0_60, %c1_61, %c0_62] : memref<4x18x16x4xbf16, #tpu.memory_space<vmem>>, vector<1x18x15x4xbf16>
    %67 = vector.shape_cast %66 : vector<1x18x15x4xbf16> to vector<18x15x4xbf16>
    %68 = vector.shape_cast %65 : vector<18x15x4xbf16> to vector<1x18x15x4xbf16>
    tpu.vector_store %arg8[%c0_59, %c0_60, %c1_61, %c0_62], %68 {strides = array<i32>} : memref<4x18x16x4xbf16, #tpu.memory_space<vmem>>, vector<1x18x15x4xbf16>,
    %c1_63 = arith.constant 1 : index
    %c0_64 = arith.constant 0 : index
    %c1_65 = arith.constant 1 : index
    %c0_66 = arith.constant 0 : index
    %69 = vector.load %arg8[%c1_63, %c0_64, %c1_65, %c0_66] : memref<4x18x16x4xbf16, #tpu.memory_space<vmem>>, vector<1x18x15x4xbf16>
    %70 = vector.shape_cast %69 : vector<1x18x15x4xbf16> to vector<18x15x4xbf16>
    %c3 = arith.constant 3 : index
    %c0_67 = arith.constant 0 : index
    %c0_68 = arith.constant 0 : index
    %c0_69 = arith.constant 0 : index
    %71 = vector.load %arg8[%c3, %c0_67, %c0_68, %c0_69] : memref<4x18x16x4xbf16, #tpu.memory_space<vmem>>, vector<1x18x15x4xbf16>
    %72 = vector.shape_cast %71 : vector<1x18x15x4xbf16> to vector<18x15x4xbf16>
    %73 = vector.shape_cast %70 : vector<18x15x4xbf16> to vector<1x18x15x4xbf16>
    tpu.vector_store %arg8[%c3, %c0_67, %c0_68, %c0_69], %73 {strides = array<i32>} : memref<4x18x16x4xbf16, #tpu.memory_space<vmem>>, vector<1x18x15x4xbf16>,
    %c3_70 = arith.constant 3 : index
    %c0_71 = arith.constant 0 : index
    %c15 = arith.constant 15 : index
    %c0_72 = arith.constant 0 : index
    %74 = vector.load %arg8[%c3_70, %c0_71, %c15, %c0_72] : memref<4x18x16x4xbf16, #tpu.memory_space<vmem>>, vector<1x18x1x4xbf16>
    %75 = vector.shape_cast %74 : vector<1x18x1x4xbf16> to vector<18x1x4xbf16>
    %76 = vector.shape_cast %54 : vector<18x1x4xbf16> to vector<1x18x1x4xbf16>
    tpu.vector_store %arg8[%c3_70, %c0_71, %c15, %c0_72], %76 {strides = array<i32>} : memref<4x18x16x4xbf16, #tpu.memory_space<vmem>>, vector<1x18x1x4xbf16>,
    %cst_73 = arith.constant 0.000000e+00 : bf16
    %77 = vector.broadcast %cst_73 : bf16 to vector<4x1x16x4xbf16>
    %c0_i32_74 = arith.constant 0 : i32
    %78 = arith.cmpi eq, %arg1, %c0_i32_74 : i32
    %79 = arith.extui %78 : i1 to i32
    %c0_i32_75 = arith.constant 0 : i32
    %80 = arith.cmpi ne, %79, %c0_i32_75 : i32
    scf.if %80 {
      %c0_205 = arith.constant 0 : index
      %c0_206 = arith.constant 0 : index
      %c0_207 = arith.constant 0 : index
      %c0_208 = arith.constant 0 : index
      %167 = vector.load %arg8[%c0_205, %c0_206, %c0_207, %c0_208] : memref<4x18x16x4xbf16, #tpu.memory_space<vmem>>, vector<4x1x16x4xbf16>
      tpu.vector_store %arg8[%c0_205, %c0_206, %c0_207, %c0_208], %77 {strides = array<i32>} : memref<4x18x16x4xbf16, #tpu.memory_space<vmem>>, vector<4x1x16x4xbf16>,
    } else {
    }
    %c1_i32_76 = arith.constant 1 : i32
    %81 = arith.cmpi eq, %arg1, %c1_i32_76 : i32
    %82 = arith.extui %81 : i1 to i32
    %c0_i32_77 = arith.constant 0 : i32
    %83 = arith.cmpi ne, %82, %c0_i32_77 : i32
    scf.if %83 {
      %c0_205 = arith.constant 0 : index
      %c17_206 = arith.constant 17 : index
      %c0_207 = arith.constant 0 : index
      %c0_208 = arith.constant 0 : index
      %167 = vector.load %arg8[%c0_205, %c17_206, %c0_207, %c0_208] : memref<4x18x16x4xbf16, #tpu.memory_space<vmem>>, vector<4x1x16x4xbf16>
      tpu.vector_store %arg8[%c0_205, %c17_206, %c0_207, %c0_208], %77 {strides = array<i32>} : memref<4x18x16x4xbf16, #tpu.memory_space<vmem>>, vector<4x1x16x4xbf16>,
    } else {
    }
    %c0_78 = arith.constant 0 : index
    %c0_79 = arith.constant 0 : index
    %c0_80 = arith.constant 0 : index
    %c0_81 = arith.constant 0 : index
    %84 = vector.load %arg8[%c0_78, %c0_79, %c0_80, %c0_81] : memref<4x18x16x4xbf16, #tpu.memory_space<vmem>>, vector<2x16x16x4xbf16>
    %85 = vector.shape_cast %84 : vector<2x16x16x4xbf16> to vector<512x4xbf16>
    %c0_82 = arith.constant 0 : index
    %c0_83 = arith.constant 0 : index
    %c0_84 = arith.constant 0 : index
    %c0_85 = arith.constant 0 : index
    %86 = vector.load %arg3[%c0_82, %c0_83, %c0_84, %c0_85] : memref<3x3x4x8xbf16, #tpu.memory_space<vmem>>, vector<1x1x4x8xbf16>
    %87 = vector.shape_cast %86 : vector<1x1x4x8xbf16> to vector<4x8xbf16>
    %cst_86 = arith.constant dense<0.000000e+00> : vector<512x8xf32>
    %88 = tpu.matmul %85, %87, %cst_86 {dimension_numbers = #tpu.dot_dimension_numbers<[1], [0], [0], [1], [0, 0, 1, 1], [], []>} : vector<512x4xbf16>, vector<4x8xbf16>, vector<512x8xf32> -> vector<512x8xf32>
    %c0_87 = arith.constant 0 : index
    %c0_88 = arith.constant 0 : index
    %89 = vector.load %arg9[%c0_87, %c0_88] : memref<512x8xf32, #tpu.memory_space<vmem>>, vector<512x8xf32>
    tpu.vector_store %arg9[%c0_87, %c0_88], %88 {strides = array<i32>} : memref<512x8xf32, #tpu.memory_space<vmem>>, vector<512x8xf32>,
    %c1_89 = arith.constant 1 : index
    %c0_90 = arith.constant 0 : index
    %c0_91 = arith.constant 0 : index
    %c0_92 = arith.constant 0 : index
    %90 = vector.load %arg8[%c1_89, %c0_90, %c0_91, %c0_92] : memref<4x18x16x4xbf16, #tpu.memory_space<vmem>>, vector<2x16x16x4xbf16>
    %91 = vector.shape_cast %90 : vector<2x16x16x4xbf16> to vector<512x4xbf16>
    %c0_93 = arith.constant 0 : index
    %c1_94 = arith.constant 1 : index
    %c0_95 = arith.constant 0 : index
    %c0_96 = arith.constant 0 : index
    %92 = vector.load %arg3[%c0_93, %c1_94, %c0_95, %c0_96] : memref<3x3x4x8xbf16, #tpu.memory_space<vmem>>, vector<1x1x4x8xbf16>
    %93 = vector.shape_cast %92 : vector<1x1x4x8xbf16> to vector<4x8xbf16>
    %cst_97 = arith.constant dense<0.000000e+00> : vector<512x8xf32>
    %94 = tpu.matmul %91, %93, %cst_97 {dimension_numbers = #tpu.dot_dimension_numbers<[1], [0], [0], [1], [0, 0, 1, 1], [], []>} : vector<512x4xbf16>, vector<4x8xbf16>, vector<512x8xf32> -> vector<512x8xf32>
    %c0_98 = arith.constant 0 : index
    %c0_99 = arith.constant 0 : index
    %95 = vector.load %arg9[%c0_98, %c0_99] : memref<512x8xf32, #tpu.memory_space<vmem>>, vector<512x8xf32>
    %96 = arith.addf %95, %94 : vector<512x8xf32>
    %c0_100 = arith.constant 0 : index
    %c0_101 = arith.constant 0 : index
    %97 = vector.load %arg9[%c0_100, %c0_101] : memref<512x8xf32, #tpu.memory_space<vmem>>, vector<512x8xf32>
    tpu.vector_store %arg9[%c0_100, %c0_101], %96 {strides = array<i32>} : memref<512x8xf32, #tpu.memory_space<vmem>>, vector<512x8xf32>,
    %c2_102 = arith.constant 2 : index
    %c0_103 = arith.constant 0 : index
    %c0_104 = arith.constant 0 : index
    %c0_105 = arith.constant 0 : index
    %98 = vector.load %arg8[%c2_102, %c0_103, %c0_104, %c0_105] : memref<4x18x16x4xbf16, #tpu.memory_space<vmem>>, vector<2x16x16x4xbf16>
    %99 = vector.shape_cast %98 : vector<2x16x16x4xbf16> to vector<512x4xbf16>
    %c0_106 = arith.constant 0 : index
    %c2_107 = arith.constant 2 : index
    %c0_108 = arith.constant 0 : index
    %c0_109 = arith.constant 0 : index
    %100 = vector.load %arg3[%c0_106, %c2_107, %c0_108, %c0_109] : memref<3x3x4x8xbf16, #tpu.memory_space<vmem>>, vector<1x1x4x8xbf16>
    %101 = vector.shape_cast %100 : vector<1x1x4x8xbf16> to vector<4x8xbf16>
    %cst_110 = arith.constant dense<0.000000e+00> : vector<512x8xf32>
    %102 = tpu.matmul %99, %101, %cst_110 {dimension_numbers = #tpu.dot_dimension_numbers<[1], [0], [0], [1], [0, 0, 1, 1], [], []>} : vector<512x4xbf16>, vector<4x8xbf16>, vector<512x8xf32> -> vector<512x8xf32>
    %c0_111 = arith.constant 0 : index
    %c0_112 = arith.constant 0 : index
    %103 = vector.load %arg9[%c0_111, %c0_112] : memref<512x8xf32, #tpu.memory_space<vmem>>, vector<512x8xf32>
    %104 = arith.addf %103, %102 : vector<512x8xf32>
    %c0_113 = arith.constant 0 : index
    %c0_114 = arith.constant 0 : index
    %105 = vector.load %arg9[%c0_113, %c0_114] : memref<512x8xf32, #tpu.memory_space<vmem>>, vector<512x8xf32>
    tpu.vector_store %arg9[%c0_113, %c0_114], %104 {strides = array<i32>} : memref<512x8xf32, #tpu.memory_space<vmem>>, vector<512x8xf32>,
    %c0_115 = arith.constant 0 : index
    %c1_116 = arith.constant 1 : index
    %c0_117 = arith.constant 0 : index
    %c0_118 = arith.constant 0 : index
    %106 = vector.load %arg8[%c0_115, %c1_116, %c0_117, %c0_118] : memref<4x18x16x4xbf16, #tpu.memory_space<vmem>>, vector<2x16x16x4xbf16>
    %107 = vector.shape_cast %106 : vector<2x16x16x4xbf16> to vector<512x4xbf16>
    %c1_119 = arith.constant 1 : index
    %c0_120 = arith.constant 0 : index
    %c0_121 = arith.constant 0 : index
    %c0_122 = arith.constant 0 : index
    %108 = vector.load %arg3[%c1_119, %c0_120, %c0_121, %c0_122] : memref<3x3x4x8xbf16, #tpu.memory_space<vmem>>, vector<1x1x4x8xbf16>
    %109 = vector.shape_cast %108 : vector<1x1x4x8xbf16> to vector<4x8xbf16>
    %cst_123 = arith.constant dense<0.000000e+00> : vector<512x8xf32>
    %110 = tpu.matmul %107, %109, %cst_123 {dimension_numbers = #tpu.dot_dimension_numbers<[1], [0], [0], [1], [0, 0, 1, 1], [], []>} : vector<512x4xbf16>, vector<4x8xbf16>, vector<512x8xf32> -> vector<512x8xf32>
    %c0_124 = arith.constant 0 : index
    %c0_125 = arith.constant 0 : index
    %111 = vector.load %arg9[%c0_124, %c0_125] : memref<512x8xf32, #tpu.memory_space<vmem>>, vector<512x8xf32>
    %112 = arith.addf %111, %110 : vector<512x8xf32>
    %c0_126 = arith.constant 0 : index
    %c0_127 = arith.constant 0 : index
    %113 = vector.load %arg9[%c0_126, %c0_127] : memref<512x8xf32, #tpu.memory_space<vmem>>, vector<512x8xf32>
    tpu.vector_store %arg9[%c0_126, %c0_127], %112 {strides = array<i32>} : memref<512x8xf32, #tpu.memory_space<vmem>>, vector<512x8xf32>,
    %c1_128 = arith.constant 1 : index
    %c1_129 = arith.constant 1 : index
    %c0_130 = arith.constant 0 : index
    %c0_131 = arith.constant 0 : index
    %114 = vector.load %arg8[%c1_128, %c1_129, %c0_130, %c0_131] : memref<4x18x16x4xbf16, #tpu.memory_space<vmem>>, vector<2x16x16x4xbf16>
    %115 = vector.shape_cast %114 : vector<2x16x16x4xbf16> to vector<512x4xbf16>
    %c1_132 = arith.constant 1 : index
    %c1_133 = arith.constant 1 : index
    %c0_134 = arith.constant 0 : index
    %c0_135 = arith.constant 0 : index
    %116 = vector.load %arg3[%c1_132, %c1_133, %c0_134, %c0_135] : memref<3x3x4x8xbf16, #tpu.memory_space<vmem>>, vector<1x1x4x8xbf16>
    %117 = vector.shape_cast %116 : vector<1x1x4x8xbf16> to vector<4x8xbf16>
    %cst_136 = arith.constant dense<0.000000e+00> : vector<512x8xf32>
    %118 = tpu.matmul %115, %117, %cst_136 {dimension_numbers = #tpu.dot_dimension_numbers<[1], [0], [0], [1], [0, 0, 1, 1], [], []>} : vector<512x4xbf16>, vector<4x8xbf16>, vector<512x8xf32> -> vector<512x8xf32>
    %c0_137 = arith.constant 0 : index
    %c0_138 = arith.constant 0 : index
    %119 = vector.load %arg9[%c0_137, %c0_138] : memref<512x8xf32, #tpu.memory_space<vmem>>, vector<512x8xf32>
    %120 = arith.addf %119, %118 : vector<512x8xf32>
    %c0_139 = arith.constant 0 : index
    %c0_140 = arith.constant 0 : index
    %121 = vector.load %arg9[%c0_139, %c0_140] : memref<512x8xf32, #tpu.memory_space<vmem>>, vector<512x8xf32>
    tpu.vector_store %arg9[%c0_139, %c0_140], %120 {strides = array<i32>} : memref<512x8xf32, #tpu.memory_space<vmem>>, vector<512x8xf32>,
    %c2_141 = arith.constant 2 : index
    %c1_142 = arith.constant 1 : index
    %c0_143 = arith.constant 0 : index
    %c0_144 = arith.constant 0 : index
    %122 = vector.load %arg8[%c2_141, %c1_142, %c0_143, %c0_144] : memref<4x18x16x4xbf16, #tpu.memory_space<vmem>>, vector<2x16x16x4xbf16>
    %123 = vector.shape_cast %122 : vector<2x16x16x4xbf16> to vector<512x4xbf16>
    %c1_145 = arith.constant 1 : index
    %c2_146 = arith.constant 2 : index
    %c0_147 = arith.constant 0 : index
    %c0_148 = arith.constant 0 : index
    %124 = vector.load %arg3[%c1_145, %c2_146, %c0_147, %c0_148] : memref<3x3x4x8xbf16, #tpu.memory_space<vmem>>, vector<1x1x4x8xbf16>
    %125 = vector.shape_cast %124 : vector<1x1x4x8xbf16> to vector<4x8xbf16>
    %cst_149 = arith.constant dense<0.000000e+00> : vector<512x8xf32>
    %126 = tpu.matmul %123, %125, %cst_149 {dimension_numbers = #tpu.dot_dimension_numbers<[1], [0], [0], [1], [0, 0, 1, 1], [], []>} : vector<512x4xbf16>, vector<4x8xbf16>, vector<512x8xf32> -> vector<512x8xf32>
    %c0_150 = arith.constant 0 : index
    %c0_151 = arith.constant 0 : index
    %127 = vector.load %arg9[%c0_150, %c0_151] : memref<512x8xf32, #tpu.memory_space<vmem>>, vector<512x8xf32>
    %128 = arith.addf %127, %126 : vector<512x8xf32>
    %c0_152 = arith.constant 0 : index
    %c0_153 = arith.constant 0 : index
    %129 = vector.load %arg9[%c0_152, %c0_153] : memref<512x8xf32, #tpu.memory_space<vmem>>, vector<512x8xf32>
    tpu.vector_store %arg9[%c0_152, %c0_153], %128 {strides = array<i32>} : memref<512x8xf32, #tpu.memory_space<vmem>>, vector<512x8xf32>,
    %c0_154 = arith.constant 0 : index
    %c2_155 = arith.constant 2 : index
    %c0_156 = arith.constant 0 : index
    %c0_157 = arith.constant 0 : index
    %130 = vector.load %arg8[%c0_154, %c2_155, %c0_156, %c0_157] : memref<4x18x16x4xbf16, #tpu.memory_space<vmem>>, vector<2x16x16x4xbf16>
    %131 = vector.shape_cast %130 : vector<2x16x16x4xbf16> to vector<512x4xbf16>
    %c2_158 = arith.constant 2 : index
    %c0_159 = arith.constant 0 : index
    %c0_160 = arith.constant 0 : index
    %c0_161 = arith.constant 0 : index
    %132 = vector.load %arg3[%c2_158, %c0_159, %c0_160, %c0_161] : memref<3x3x4x8xbf16, #tpu.memory_space<vmem>>, vector<1x1x4x8xbf16>
    %133 = vector.shape_cast %132 : vector<1x1x4x8xbf16> to vector<4x8xbf16>
    %cst_162 = arith.constant dense<0.000000e+00> : vector<512x8xf32>
    %134 = tpu.matmul %131, %133, %cst_162 {dimension_numbers = #tpu.dot_dimension_numbers<[1], [0], [0], [1], [0, 0, 1, 1], [], []>} : vector<512x4xbf16>, vector<4x8xbf16>, vector<512x8xf32> -> vector<512x8xf32>
    %c0_163 = arith.constant 0 : index
    %c0_164 = arith.constant 0 : index
    %135 = vector.load %arg9[%c0_163, %c0_164] : memref<512x8xf32, #tpu.memory_space<vmem>>, vector<512x8xf32>
    %136 = arith.addf %135, %134 : vector<512x8xf32>
    %c0_165 = arith.constant 0 : index
    %c0_166 = arith.constant 0 : index
    %137 = vector.load %arg9[%c0_165, %c0_166] : memref<512x8xf32, #tpu.memory_space<vmem>>, vector<512x8xf32>
    tpu.vector_store %arg9[%c0_165, %c0_166], %136 {strides = array<i32>} : memref<512x8xf32, #tpu.memory_space<vmem>>, vector<512x8xf32>,
    %c1_167 = arith.constant 1 : index
    %c2_168 = arith.constant 2 : index
    %c0_169 = arith.constant 0 : index
    %c0_170 = arith.constant 0 : index
    %138 = vector.load %arg8[%c1_167, %c2_168, %c0_169, %c0_170] : memref<4x18x16x4xbf16, #tpu.memory_space<vmem>>, vector<2x16x16x4xbf16>
    %139 = vector.shape_cast %138 : vector<2x16x16x4xbf16> to vector<512x4xbf16>
    %c2_171 = arith.constant 2 : index
    %c1_172 = arith.constant 1 : index
    %c0_173 = arith.constant 0 : index
    %c0_174 = arith.constant 0 : index
    %140 = vector.load %arg3[%c2_171, %c1_172, %c0_173, %c0_174] : memref<3x3x4x8xbf16, #tpu.memory_space<vmem>>, vector<1x1x4x8xbf16>
    %141 = vector.shape_cast %140 : vector<1x1x4x8xbf16> to vector<4x8xbf16>
    %cst_175 = arith.constant dense<0.000000e+00> : vector<512x8xf32>
    %142 = tpu.matmul %139, %141, %cst_175 {dimension_numbers = #tpu.dot_dimension_numbers<[1], [0], [0], [1], [0, 0, 1, 1], [], []>} : vector<512x4xbf16>, vector<4x8xbf16>, vector<512x8xf32> -> vector<512x8xf32>
    %c0_176 = arith.constant 0 : index
    %c0_177 = arith.constant 0 : index
    %143 = vector.load %arg9[%c0_176, %c0_177] : memref<512x8xf32, #tpu.memory_space<vmem>>, vector<512x8xf32>
    %144 = arith.addf %143, %142 : vector<512x8xf32>
    %c0_178 = arith.constant 0 : index
    %c0_179 = arith.constant 0 : index
    %145 = vector.load %arg9[%c0_178, %c0_179] : memref<512x8xf32, #tpu.memory_space<vmem>>, vector<512x8xf32>
    tpu.vector_store %arg9[%c0_178, %c0_179], %144 {strides = array<i32>} : memref<512x8xf32, #tpu.memory_space<vmem>>, vector<512x8xf32>,
    %c2_180 = arith.constant 2 : index
    %c2_181 = arith.constant 2 : index
    %c0_182 = arith.constant 0 : index
    %c0_183 = arith.constant 0 : index
    %146 = vector.load %arg8[%c2_180, %c2_181, %c0_182, %c0_183] : memref<4x18x16x4xbf16, #tpu.memory_space<vmem>>, vector<2x16x16x4xbf16>
    %147 = vector.shape_cast %146 : vector<2x16x16x4xbf16> to vector<512x4xbf16>
    %c2_184 = arith.constant 2 : index
    %c2_185 = arith.constant 2 : index
    %c0_186 = arith.constant 0 : index
    %c0_187 = arith.constant 0 : index
    %148 = vector.load %arg3[%c2_184, %c2_185, %c0_186, %c0_187] : memref<3x3x4x8xbf16, #tpu.memory_space<vmem>>, vector<1x1x4x8xbf16>
    %149 = vector.shape_cast %148 : vector<1x1x4x8xbf16> to vector<4x8xbf16>
    %cst_188 = arith.constant dense<0.000000e+00> : vector<512x8xf32>
    %150 = tpu.matmul %147, %149, %cst_188 {dimension_numbers = #tpu.dot_dimension_numbers<[1], [0], [0], [1], [0, 0, 1, 1], [], []>} : vector<512x4xbf16>, vector<4x8xbf16>, vector<512x8xf32> -> vector<512x8xf32>
    %c0_189 = arith.constant 0 : index
    %c0_190 = arith.constant 0 : index
    %151 = vector.load %arg9[%c0_189, %c0_190] : memref<512x8xf32, #tpu.memory_space<vmem>>, vector<512x8xf32>
    %152 = arith.addf %151, %150 : vector<512x8xf32>
    %c0_191 = arith.constant 0 : index
    %c0_192 = arith.constant 0 : index
    %153 = vector.load %arg9[%c0_191, %c0_192] : memref<512x8xf32, #tpu.memory_space<vmem>>, vector<512x8xf32>
    tpu.vector_store %arg9[%c0_191, %c0_192], %152 {strides = array<i32>} : memref<512x8xf32, #tpu.memory_space<vmem>>, vector<512x8xf32>,
    %c0_193 = arith.constant 0 : index
    %c0_194 = arith.constant 0 : index
    %154 = vector.load %arg9[%c0_193, %c0_194] : memref<512x8xf32, #tpu.memory_space<vmem>>, vector<512x8xf32>
    %c0_195 = arith.constant 0 : index
    %c0_196 = arith.constant 0 : index
    %155 = vector.load %arg4[%c0_195, %c0_196] : memref<1x8xf32, #tpu.memory_space<vmem>>, vector<1x8xf32>
    %156 = vector.broadcast %155 : vector<1x8xf32> to vector<512x8xf32>
    %157 = arith.mulf %154, %156 : vector<512x8xf32>
    %c0_197 = arith.constant 0 : index
    %c0_198 = arith.constant 0 : index
    %158 = vector.load %arg5[%c0_197, %c0_198] : memref<1x8xf32, #tpu.memory_space<vmem>>, vector<1x8xf32>
    %159 = vector.broadcast %158 : vector<1x8xf32> to vector<512x8xf32>
    %160 = arith.addf %157, %159 : vector<512x8xf32>
    %cst_199 = arith.constant 0.000000e+00 : f32
    %161 = vector.broadcast %cst_199 : f32 to vector<512x8xf32>
    %162 = arith.maximumf %160, %161 : vector<512x8xf32>
    %163 = vector.shape_cast %162 : vector<512x8xf32> to vector<2x16x16x8xf32>
    %c0_200 = arith.constant 0 : index
    %c0_201 = arith.constant 0 : index
    %c0_202 = arith.constant 0 : index
    %c0_203 = arith.constant 0 : index
    %c0_204 = arith.constant 0 : index
    %164 = vector.load %arg6[%c0_200, %c0_201, %c0_202, %c0_203, %c0_204] : memref<1x2x16x16x8xf32, #tpu.memory_space<vmem>>, vector<1x2x16x16x8xf32>
    %165 = vector.shape_cast %164 : vector<1x2x16x16x8xf32> to vector<2x16x16x8xf32>
    %166 = vector.shape_cast %163 : vector<2x16x16x8xf32> to vector<1x2x16x16x8xf32>
    tpu.vector_store %arg6[%c0_200, %c0_201, %c0_202, %c0_203, %c0_204], %166 {strides = array<i32>} : memref<1x2x16x16x8xf32, #tpu.memory_space<vmem>>, vector<1x2x16x16x8xf32>,
    return
  }
  func.func @transform_0(%arg0: i32, %arg1: i32) -> (i32, i32, i32, i32) {
    %c0_i32 = arith.constant 0 : i32
    %c0_i32_0 = arith.constant 0 : i32
    %c0_i32_1 = arith.constant 0 : i32
    %c0_i32_2 = arith.constant 0 : i32
    return %arg0, %c0_i32, %c0_i32_0, %c0_i32_1 : i32, i32, i32, i32
  }
  func.func @transform_1(%arg0: i32, %arg1: i32) -> (i32, i32, i32, i32) {
    %c0_i32 = arith.constant 0 : i32
    %c0_i32_0 = arith.constant 0 : i32
    %c0_i32_1 = arith.constant 0 : i32
    %c0_i32_2 = arith.constant 0 : i32
    %c0_i32_3 = arith.constant 0 : i32
    return %c0_i32, %c0_i32_0, %c0_i32_1, %c0_i32_2 : i32, i32, i32, i32
  }
  func.func @transform_2(%arg0: i32, %arg1: i32) -> (i32, i32) {
    %c0_i32 = arith.constant 0 : i32
    %c0_i32_0 = arith.constant 0 : i32
    %c0_i32_1 = arith.constant 0 : i32
    return %c0_i32, %c0_i32_0 : i32, i32
  }
  func.func @transform_3(%arg0: i32, %arg1: i32) -> (i32, i32) {
    %c0_i32 = arith.constant 0 : i32
    %c0_i32_0 = arith.constant 0 : i32
    %c0_i32_1 = arith.constant 0 : i32
    return %c0_i32, %c0_i32_0 : i32, i32
  }
  func.func @transform_4(%arg0: i32, %arg1: i32) -> (i32, i32, i32, i32, i32) {
    %c0_i32 = arith.constant 0 : i32
    %c0_i32_0 = arith.constant 0 : i32
    %c0_i32_1 = arith.constant 0 : i32
    %c0_i32_2 = arith.constant 0 : i32
    return %arg0, %c0_i32, %arg1, %c0_i32_0, %c0_i32_1 : i32, i32, i32, i32, i32
  }
}

</mosaic_0001>

<llo_original>
// kernel: tpu_custom_call.1
$region0: #{tpu_custom_call.1}
  #allocation0 [shape = 'u32[]', space=smem, size = 0x4, offset = 0x4, fixed_abs, tag = 'smem constant byte address 0x4 - core index']
  #allocation1 [shape = 'u32[144,128]{1,0:T(1,128)}', space=vmem, size = 0x12000, scoped, tag = 'internal scratch']
  #allocation2 [shape = 'f32[18,18,4]{2,1,0:T(8,128)}', space=vmem, size = 0x36000, scoped, tag = 'scratch operand']
  #allocation3 [shape = 'bf16[4,18,16,4]{3,2,1,0:T(8,128)(2,1)}', space=vmem, size = 0x48000, scoped, tag = 'scratch operand']
  #allocation4 [shape = 'f32[512,8]{1,0:T(8,128)}', space=vmem, size = 0x40000, scoped, tag = 'scratch operand']
  %s0 = inlined_call_operand.vmem [shape: bf16[2,16,16,4], index: 0, kind: input, shape index: {}]
  %s1 = inlined_call_operand.vmem [shape: bf16[3,3,4,8], index: 1, kind: input, shape index: {}]
  %s2 = inlined_call_operand.vmem [shape: f32[1,8], index: 2, kind: input, shape index: {}]
  %s3 = inlined_call_operand.vmem [shape: f32[1,8], index: 3, kind: input, shape index: {}]
  %s4 = inlined_call_operand.vmem [shape: f32[2,2,32,16,8], index: 4, kind: output, shape index: {}]
  %s5 = sld [smem:[#allocation0]]
  $region91: #{tpu_custom_call.1} parent=0
    _
  %s7 = ssub.s32 1, %s5
  %s8 = scalar_select 0, %s7, %s5
  $region1: #{tpu_custom_call.1} parent=0
    #allocation5 [shape = 'u8[524288]{0}', space=vmem, size = 0x80000, scoped, tag = 'output window, operand 0']
    loop: start=0, step=1, limit=6
    $region2: #{tpu_custom_call.1} parent=1 // loop_pre_header
      _
    $region3: #{tpu_custom_call.1} parent=1 // loop_header
      %s10 = sphi 0, %s14
      %p11 = scmp.ge.s32.totalorder %s10, 6
      %s17 = sphi 0, %s29
      %s18 = sphi 0, %s25
      %s19 = sphi 0, %s17
      %s20 = sphi 0, %s18
      %s21 = sphi 0, %s19
      %s22 = sphi 0, %s20
      %s32 = sphi 0, %s34
      %s35 = sphi 0, %s32
      %s36 = sphi 0, %s35
      %s52 = sphi 0, %s36
      %s56 = sphi 0, %s56
      %s58 = sphi 0, %s56
      %s59 = sphi 0, %s58
      %s73 = sphi 0, %s59
      %s77 = sphi 0, %s77
      %s79 = sphi 0, %s77
      %s80 = sphi 0, %s79
      %s94 = sphi 0, %s80
      %s98 = sphi 0, %s98
      %s100 = sphi 0, %s98
      %s101 = sphi 0, %s100
      %s115 = sphi 0, %s101
      %s123 = sphi 0, %s125
      %s126 = sphi 0, %s123
      %s127 = sphi 0, %s126
      %s143 = sphi 0, %s127
    $region4: #{tpu_custom_call.1} parent=1 // loop_header_branch
      %13 = sbr.rel (%p11) target = $region8
    $region5: #{tpu_custom_call.1} parent=1 // loop_body
      %s15 = ssub.s32 %s10, 1
      %s16 = ssub.s32 %s10, 2
      %s23 = sadd.s32 1, %s18
      %p24 = scmp.ge.s32.totalorder %s23, 2
      %s25 = scalar_select %p24, 0, %s23
      %s26 = sadd.s32 1, %s17
      %s27 = scalar_select %p24, %s26, %s17
      %p28 = scmp.ge.s32.totalorder %s27, 2
      %s29 = scalar_select %p28, 0, %s27
      %s30 = ssub.s32 %s17, %s29
      %p31 = scmp.eq.s32.totalorder %s30, 0
      %s33 = sadd.s32 %s32, 1
      %s34 = scalar_select %p31, %s32, %s33
      %p37 = pneg %p31
      %p38 = scmp.eq.s32.totalorder %s10, 3
      %p39 = por %p37, %p38
      %p40 = scmp.ne.s32.totalorder %s32, %s35
      %p41 = scmp.eq.s32.totalorder %s10, 0
      %p42 = por %p40, %p41
      %p43 = scmp.ne.s32.totalorder %s32, %s35
      %p44 = scmp.eq.s32.totalorder %s15, 3
      %p45 = por %p43, %p44
      %p46 = scmp.ne.s32.totalorder %s35, %s36
      %p47 = scmp.eq.s32.totalorder %s15, 0
      %p48 = por %p46, %p47
      %p49 = scmp.ne.s32.totalorder %s35, %s36
      %p50 = scmp.eq.s32.totalorder %s16, 3
      %p51 = por %p49, %p50
      %p53 = scmp.ne.s32.totalorder %s36, %s52
      %p54 = scmp.eq.s32.totalorder %s16, 0
      %p55 = por %p53, %p54
      %s57 = sadd.s32 %s56, 1
      %p60 = scmp.eq.s32.totalorder %s10, 3
      %p61 = scmp.ne.s32.totalorder %s56, %s58
      %p62 = scmp.eq.s32.totalorder %s10, 0
      %p63 = por %p61, %p62
      %p64 = scmp.ne.s32.totalorder %s56, %s58
      %p65 = scmp.eq.s32.totalorder %s15, 3
      %p66 = por %p64, %p65
      %p67 = scmp.ne.s32.totalorder %s58, %s59
      %p68 = scmp.eq.s32.totalorder %s15, 0
      %p69 = por %p67, %p68
      %p70 = scmp.ne.s32.totalorder %s58, %s59
      %p71 = scmp.eq.s32.totalorder %s16, 3
      %p72 = por %p70, %p71
      %p74 = scmp.ne.s32.totalorder %s59, %s73
      %p75 = scmp.eq.s32.totalorder %s16, 0
      %p76 = por %p74, %p75
      %s78 = sadd.s32 %s77, 1
      %p81 = scmp.eq.s32.totalorder %s10, 3
      %p82 = scmp.ne.s32.totalorder %s77, %s79
      %p83 = scmp.eq.s32.totalorder %s10, 0
      %p84 = por %p82, %p83
      %p85 = scmp.ne.s32.totalorder %s77, %s79
      %p86 = scmp.eq.s32.totalorder %s15, 3
      %p87 = por %p85, %p86
      %p88 = scmp.ne.s32.totalorder %s79, %s80
      %p89 = scmp.eq.s32.totalorder %s15, 0
      %p90 = por %p88, %p89
      %p91 = scmp.ne.s32.totalorder %s79, %s80
      %p92 = scmp.eq.s32.totalorder %s16, 3
      %p93 = por %p91, %p92
      %p95 = scmp.ne.s32.totalorder %s80, %s94
      %p96 = scmp.eq.s32.totalorder %s16, 0
      %p97 = por %p95, %p96
      %s99 = sadd.s32 %s98, 1
      %p102 = scmp.eq.s32.totalorder %s10, 3
      %p103 = scmp.ne.s32.totalorder %s98, %s100
      %p104 = scmp.eq.s32.totalorder %s10, 0
      %p105 = por %p103, %p104
      %p106 = scmp.ne.s32.totalorder %s98, %s100
      %p107 = scmp.eq.s32.totalorder %s15, 3
      %p108 = por %p106, %p107
      %p109 = scmp.ne.s32.totalorder %s100, %s101
      %p110 = scmp.eq.s32.totalorder %s15, 0
      %p111 = por %p109, %p110
      %p112 = scmp.ne.s32.totalorder %s100, %s101
      %p113 = scmp.eq.s32.totalorder %s16, 3
      %p114 = por %p112, %p113
      %p116 = scmp.ne.s32.totalorder %s101, %s115
      %p117 = scmp.eq.s32.totalorder %s16, 0
      %p118 = por %p116, %p117
      %s119 = ssub.s32 %s17, %s29
      %s120 = ssub.s32 %s18, %s25
      %s121 = sor.u32 %s119, %s120
      %p122 = scmp.eq.s32.totalorder %s121, 0
      %s124 = sadd.s32 %s123, 1
      %s125 = scalar_select %p122, %s123, %s124
      %p128 = pneg %p122
      %p129 = scmp.eq.s32.totalorder %s10, 3
      %p130 = por %p128, %p129
      %p131 = scmp.ne.s32.totalorder %s123, %s126
      %p132 = scmp.eq.s32.totalorder %s10, 0
      %p133 = por %p131, %p132
      %p134 = scmp.ne.s32.totalorder %s123, %s126
      %p135 = scmp.eq.s32.totalorder %s15, 3
      %p136 = por %p134, %p135
      %p137 = scmp.ne.s32.totalorder %s126, %s127
      %p138 = scmp.eq.s32.totalorder %s15, 0
      %p139 = por %p137, %p138
      %p140 = scmp.ne.s32.totalorder %s126, %s127
      %p141 = scmp.eq.s32.totalorder %s16, 3
      %p142 = por %p140, %p141
      %p144 = scmp.ne.s32.totalorder %s127, %s143
      %p145 = scmp.eq.s32.totalorder %s16, 0
      %p146 = por %p144, %p145
      %p147 = scmp.le.s32.totalorder 1, %s10
      %p148 = scmp.lt.s32.totalorder %s10, 5
      %p149 = pnand %p147, %p148
      %p150 = pneg %p149
      // Predicated region
      $region9: #{tpu_custom_call.1} parent=5 // pred_check
        _
      $region10: #{tpu_custom_call.1} parent=5 // pred_check_branch
        %152 = sbr.rel (%p149) target = $region12
      $region11: #{tpu_custom_call.1} parent=5 // pred_region
        %s153 = ssub.s32 %s10, 1
        // Predicated region
        $region13: #{tpu_custom_call.1} parent=11 // pred_check
          %p154 = pneg %p69
        $region14: #{tpu_custom_call.1} parent=11 // pred_check_branch
          %156 = sbr.rel (%p154) target = $region16
        $region15: #{tpu_custom_call.1} parent=11 // pred_region
          _
        $region16: #{tpu_custom_call.1} parent=11 // pred_fallthru
          _
        // Predicated region
        $region17: #{tpu_custom_call.1} parent=11 // pred_check
          %p157 = pneg %p90
        $region18: #{tpu_custom_call.1} parent=11 // pred_check_branch
          %159 = sbr.rel (%p157) target = $region20
        $region19: #{tpu_custom_call.1} parent=11 // pred_region
          _
        $region20: #{tpu_custom_call.1} parent=11 // pred_fallthru
          _
        // Predicated region
        $region21: #{tpu_custom_call.1} parent=11 // pred_check
          %p160 = pneg %p111
        $region22: #{tpu_custom_call.1} parent=11 // pred_check_branch
          %162 = sbr.rel (%p160) target = $region24
        $region23: #{tpu_custom_call.1} parent=11 // pred_region
          _
        $region24: #{tpu_custom_call.1} parent=11 // pred_fallthru
          _
      $region12: #{tpu_custom_call.1} parent=5 // pred_fallthru
        _
      %p163 = scmp.lt.s32.totalorder %s10, 4
      // Predicated region
      $region25: #{tpu_custom_call.1} parent=5 // pred_check
        %p164 = pneg %p163
      $region26: #{tpu_custom_call.1} parent=5 // pred_check_branch
        %166 = sbr.rel (%p164) target = $region28
      $region27: #{tpu_custom_call.1} parent=5 // pred_region
        // Predicated region
        $region29: #{tpu_custom_call.1} parent=27 // pred_check
          %p167 = pneg %p42
        $region30: #{tpu_custom_call.1} parent=27 // pred_check_branch
          %169 = sbr.rel (%p167) target = $region32
        $region31: #{tpu_custom_call.1} parent=27 // pred_region
          %p170 = scmp.lt.s32.totalorder %s17, 1
          %s171 = scalar_select %p170, %s17, 1
          %s172 = smul.addr %s171, 32
          %s173 = smul.addr %s172, 4
          %s174 = scalar_lea.vmem %s0, %s173
        $region32: #{tpu_custom_call.1} parent=27 // pred_fallthru
          _
      $region28: #{tpu_custom_call.1} parent=5 // pred_fallthru
        _
      %p175 = scmp.le.s32.totalorder 1, %s10
      %p176 = scmp.lt.s32.totalorder %s10, 5
      %p177 = pnand %p175, %p176
      %p178 = pneg %p177
      // Predicated region
      $region33: #{tpu_custom_call.1} parent=5 // pred_check
        _
      $region34: #{tpu_custom_call.1} parent=5 // pred_check_branch
        %180 = sbr.rel (%p177) target = $region36
      $region35: #{tpu_custom_call.1} parent=5 // pred_region
        %s181 = ssub.s32 %s10, 1
        %p182 = scmp.lt.s32.totalorder %s19, 1
        %s183 = scalar_select %p182, %s19, 1
        %s184 = smul.addr %s183, 32
        %s185 = smul.addr %s184, 4
        %s186 = scalar_lea.vmem %s0, %s185
        %p187 = pneg %p48
        %p188 = pneg %p45
        %p189 = pneg %p69
        %p190 = pneg %p66
        %p191 = pneg %p90
        %p192 = pneg %p87
        %p193 = pneg %p111
        %p194 = pneg %p108
        %p195 = pneg %p139
        %p196 = pneg %p136
        %s197 = sand.u32 %s126, 1
        %s198 = sand.u32 %s126, 1
        %s199 = smul.addr %s198, 512
        %s200 = scalar_lea.vmem [#allocation5], %s199
        %p201 = scmp.lt.s32.totalorder %s19, 1
        %s202 = scalar_select %p201, %s19, 1
        %s203 = smul.addr %s202, 32
        %s204 = smul.addr %s203, 4
        %s205 = scalar_lea.vmem %s0, %s204
        %s206 = smul.u32 16, %s20
        %s208 = smul.u32 %s20, 8
        %s209 = ssub.s32 %s208, 1
        %p210 = scmp.gt.s32.totalorder %s209, 0
        %s211 = scalar_select %p210, %s209, 0
        %s212 = smul.u32 %s211, 2
        %s213 = smul.addr %s212, 4
        %s214 = scalar_lea.vmem %s205, %s213
        %v215 = vld [vmem:[%s214] sm:$0xf]
        %v216 = vld [vmem:[%s214 + $0x4] sm:$0xf]
        %s217 = smul.u32 %s208, 2
        %s218 = smul.addr %s217, 4
        %s219 = scalar_lea.vmem %s205, %s218
        %v220 = vld [vmem:[%s219] sm:$0xf]
        %v221 = vld [vmem:[%s219 + $0x4] sm:$0xf]
        %v222 = vld [vmem:[%s219 + $0x8] sm:$0xf]
        %v223 = vld [vmem:[%s219 + $0xc] sm:$0xf]
        %v224 = vld [vmem:[%s219 + $0x10] sm:$0xf]
        %v225 = vld [vmem:[%s219 + $0x14] sm:$0xf]
        %v226 = vld [vmem:[%s219 + $0x18] sm:$0xf]
        %v227 = vld [vmem:[%s219 + $0x1c] sm:$0xf]
        %v228 = vld [vmem:[%s219 + $0x20] sm:$0xf]
        %v229 = vld [vmem:[%s219 + $0x24] sm:$0xf]
        %v230 = vld [vmem:[%s219 + $0x28] sm:$0xf]
        %v231 = vld [vmem:[%s219 + $0x2c] sm:$0xf]
        %v232 = vld [vmem:[%s219 + $0x30] sm:$0xf]
        %v233 = vld [vmem:[%s219 + $0x34] sm:$0xf]
        %v234 = vld [vmem:[%s219 + $0x38] sm:$0xf]
        %v235 = vld [vmem:[%s219 + $0x3c] sm:$0xf]
        %s236 = sadd.s32 %s208, 8
        %p237 = scmp.lt.s32.totalorder %s236, 15
        %s238 = scalar_select %p237, %s236, 15
        %s239 = smul.u32 %s238, 2
        %s240 = smul.addr %s239, 4
        %s241 = scalar_lea.vmem %s205, %s240
        %v242 = vld [vmem:[%s241] sm:$0xf]
        %v243 = vld [vmem:[%s241 + $0x4] sm:$0xf]
        %v244 = vunpack.c.l.bf16 %v215
        %v245 = vunpack.c.l.bf16 %v216
        %v246 = vunpack.c.l.bf16 %v220
        %v247 = vunpack.c.l.bf16 %v221
        %v248 = vunpack.c.l.bf16 %v222
        %v249 = vunpack.c.l.bf16 %v223
        %v250 = vunpack.c.l.bf16 %v224
        %v251 = vunpack.c.l.bf16 %v225
        %v252 = vunpack.c.l.bf16 %v226
        %v253 = vunpack.c.l.bf16 %v227
        %v254 = vunpack.c.l.bf16 %v228
        %v255 = vunpack.c.l.bf16 %v229
        %v256 = vunpack.c.l.bf16 %v230
        %v257 = vunpack.c.l.bf16 %v231
        %v258 = vunpack.c.l.bf16 %v232
        %v259 = vunpack.c.l.bf16 %v233
        %v260 = vunpack.c.l.bf16 %v234
        %v261 = vunpack.c.l.bf16 %v235
        %v262 = vunpack.c.l.bf16 %v242
        %v263 = vunpack.c.l.bf16 %v243
        %v264 = vmul.f32 %v244, 0.75
        %v265 = vmul.f32 %v245, 0.75
        %v266 = vmul.f32 %v246, 0.75
        %v267 = vmul.f32 %v247, 0.75
        %v268 = vmul.f32 %v248, 0.75
        %v269 = vmul.f32 %v249, 0.75
        %v270 = vmul.f32 %v250, 0.75
        %v271 = vmul.f32 %v251, 0.75
        %v272 = vmul.f32 %v252, 0.75
        %v273 = vmul.f32 %v253, 0.75
        %v274 = vmul.f32 %v254, 0.75
        %v275 = vmul.f32 %v255, 0.75
        %v276 = vmul.f32 %v256, 0.75
        %v277 = vmul.f32 %v257, 0.75
        %v278 = vmul.f32 %v258, 0.75
        %v279 = vmul.f32 %v259, 0.75
        %v280 = vmul.f32 %v260, 0.75
        %v281 = vmul.f32 %v261, 0.75
        %v282 = vmul.f32 %v246, 0.25
        %v283 = vmul.f32 %v247, 0.25
        %v284 = vmul.f32 %v248, 0.25
        %v285 = vmul.f32 %v249, 0.25
        %v286 = vmul.f32 %v250, 0.25
        %v287 = vmul.f32 %v251, 0.25
        %v288 = vmul.f32 %v252, 0.25
        %v289 = vmul.f32 %v253, 0.25
        %v290 = vmul.f32 %v254, 0.25
        %v291 = vmul.f32 %v255, 0.25
        %v292 = vmul.f32 %v256, 0.25
        %v293 = vmul.f32 %v257, 0.25
        %v294 = vmul.f32 %v258, 0.25
        %v295 = vmul.f32 %v259, 0.25
        %v296 = vmul.f32 %v260, 0.25
        %v297 = vmul.f32 %v261, 0.25
        %v298 = vmul.f32 %v262, 0.25
        %v299 = vmul.f32 %v263, 0.25
        %v300 = vadd.f32 %v264, %v282
        %v301 = vadd.f32 %v265, %v283
        %v302 = vadd.f32 %v266, %v284
        %v303 = vadd.f32 %v267, %v285
        %v304 = vadd.f32 %v268, %v286
        %v305 = vadd.f32 %v269, %v287
        %v306 = vadd.f32 %v270, %v288
        %v307 = vadd.f32 %v271, %v289
        %v308 = vadd.f32 %v272, %v290
        %v309 = vadd.f32 %v273, %v291
        %v310 = vadd.f32 %v274, %v292
        %v311 = vadd.f32 %v275, %v293
        %v312 = vadd.f32 %v276, %v294
        %v313 = vadd.f32 %v277, %v295
        %v314 = vadd.f32 %v278, %v296
        %v315 = vadd.f32 %v279, %v297
        %v316 = vadd.f32 %v280, %v298
        %v317 = vadd.f32 %v281, %v299
        %v318 = vmul.f32 %v262, 0.75
        %v319 = vmul.f32 %v263, 0.75
        %v320 = vmul.f32 %v244, 0.25
        %v321 = vmul.f32 %v245, 0.25
        %v322 = vadd.f32 %v266, %v320
        %v323 = vadd.f32 %v267, %v321
        %v324 = vadd.f32 %v268, %v282
        %v325 = vadd.f32 %v269, %v283
        %v326 = vadd.f32 %v270, %v284
        %v327 = vadd.f32 %v271, %v285
        %v328 = vadd.f32 %v272, %v286
        %v329 = vadd.f32 %v273, %v287
        %v330 = vadd.f32 %v274, %v288
        %v331 = vadd.f32 %v275, %v289
        %v332 = vadd.f32 %v276, %v290
        %v333 = vadd.f32 %v277, %v291
        %v334 = vadd.f32 %v278, %v292
        %v335 = vadd.f32 %v279, %v293
        %v336 = vadd.f32 %v280, %v294
        %v337 = vadd.f32 %v281, %v295
        %v338 = vadd.f32 %v318, %v296
        %v339 = vadd.f32 %v319, %v297
        %vm340 = vcmask 31744
        %341 = vst.msk [vmem:[#allocation2 + $0x1] sm:$0xff] %vm340, %v300
        %342 = vst.msk [vmem:[#allocation2 + $0x9] sm:$0xff] %vm340, %v301
        %343 = vst.msk [vmem:[#allocation2 + $0x19] sm:$0xff] %vm340, %v322
        %344 = vst.msk [vmem:[#allocation2 + $0x21] sm:$0xff] %vm340, %v323
        %345 = vst.msk [vmem:[#allocation2 + $0x31] sm:$0xff] %vm340, %v302
        %346 = vst.msk [vmem:[#allocation2 + $0x39] sm:$0xff] %vm340, %v303
        %347 = vst.msk [vmem:[#allocation2 + $0x49] sm:$0xff] %vm340, %v324
        %348 = vst.msk [vmem:[#allocation2 + $0x51] sm:$0xff] %vm340, %v325
        %349 = vst.msk [vmem:[#allocation2 + $0x61] sm:$0xff] %vm340, %v304
        %350 = vst.msk [vmem:[#allocation2 + $0x69] sm:$0xff] %vm340, %v305
        %351 = vst.msk [vmem:[#allocation2 + $0x79] sm:$0xff] %vm340, %v326
        %352 = vst.msk [vmem:[#allocation2 + $0x81] sm:$0xff] %vm340, %v327
        %353 = vst.msk [vmem:[#allocation2 + $0x91] sm:$0xff] %vm340, %v306
        %354 = vst.msk [vmem:[#allocation2 + $0x99] sm:$0xff] %vm340, %v307
        %355 = vst.msk [vmem:[#allocation2 + $0xa9] sm:$0xff] %vm340, %v328
        %356 = vst.msk [vmem:[#allocation2 + $0xb1] sm:$0xff] %vm340, %v329
        %357 = vst.msk [vmem:[#allocation2 + $0xc1] sm:$0xff] %vm340, %v308
        %358 = vst.msk [vmem:[#allocation2 + $0xc9] sm:$0xff] %vm340, %v309
        %359 = vst.msk [vmem:[#allocation2 + $0xd9] sm:$0xff] %vm340, %v330
        %360 = vst.msk [vmem:[#allocation2 + $0xe1] sm:$0xff] %vm340, %v331
        %361 = vst.msk [vmem:[#allocation2 + $0xf1] sm:$0xff] %vm340, %v310
        %362 = vst.msk [vmem:[#allocation2 + $0xf9] sm:$0xff] %vm340, %v311
        %363 = vst.msk [vmem:[#allocation2 + $0x109] sm:$0xff] %vm340, %v332
        %364 = vst.msk [vmem:[#allocation2 + $0x111] sm:$0xff] %vm340, %v333
        %365 = vst.msk [vmem:[#allocation2 + $0x121] sm:$0xff] %vm340, %v312
        %366 = vst.msk [vmem:[#allocation2 + $0x129] sm:$0xff] %vm340, %v313
        %367 = vst.msk [vmem:[#allocation2 + $0x139] sm:$0xff] %vm340, %v334
        %368 = vst.msk [vmem:[#allocation2 + $0x141] sm:$0xff] %vm340, %v335
        %369 = vst.msk [vmem:[#allocation2 + $0x151] sm:$0xff] %vm340, %v314
        %370 = vst.msk [vmem:[#allocation2 + $0x159] sm:$0xff] %vm340, %v315
        %371 = vst.msk [vmem:[#allocation2 + $0x169] sm:$0xff] %vm340, %v336
        %372 = vst.msk [vmem:[#allocation2 + $0x171] sm:$0xff] %vm340, %v337
        %373 = vst.msk [vmem:[#allocation2 + $0x181] sm:$0xff] %vm340, %v316
        %374 = vst.msk [vmem:[#allocation2 + $0x189] sm:$0xff] %vm340, %v317
        %375 = vst.msk [vmem:[#allocation2 + $0x199] sm:$0xff] %vm340, %v338
        %376 = vst.msk [vmem:[#allocation2 + $0x1a1] sm:$0xff] %vm340, %v339
        %v377 = vld [vmem:[#allocation2 + $0x1] sm:$0x1]
        %v378 = vld [vmem:[#allocation2 + $0x19] sm:$0x1]
        %v379 = vld [vmem:[#allocation2 + $0x31] sm:$0x1]
        %v380 = vld [vmem:[#allocation2 + $0x49] sm:$0x1]
        %v381 = vld [vmem:[#allocation2 + $0x61] sm:$0x1]
        %v382 = vld [vmem:[#allocation2 + $0x79] sm:$0x1]
        %v383 = vld [vmem:[#allocation2 + $0x91] sm:$0x1]
        %v384 = vld [vmem:[#allocation2 + $0xa9] sm:$0x1]
        %v385 = vld [vmem:[#allocation2 + $0xc1] sm:$0x1]
        %v386 = vld [vmem:[#allocation2 + $0xd9] sm:$0x1]
        %v387 = vld [vmem:[#allocation2 + $0xf1] sm:$0x1]
        %v388 = vld [vmem:[#allocation2 + $0x109] sm:$0x1]
        %v389 = vld [vmem:[#allocation2 + $0x121] sm:$0x1]
        %v390 = vld [vmem:[#allocation2 + $0x139] sm:$0x1]
        %v391 = vld [vmem:[#allocation2 + $0x151] sm:$0x1]
        %v392 = vld [vmem:[#allocation2 + $0x169] sm:$0x1]
        %v393 = vld [vmem:[#allocation2 + $0x181] sm:$0x1]
        %v394 = vld [vmem:[#allocation2 + $0x199] sm:$0x1]
        %vm395 = vcmask 24576
        %396 = vst.msk [vmem:[#allocation2] sm:$0x1] %vm395, %v377
        %397 = vst.msk [vmem:[#allocation2 + $0x18] sm:$0x1] %vm395, %v378
        %398 = vst.msk [vmem:[#allocation2 + $0x30] sm:$0x1] %vm395, %v379
        %399 = vst.msk [vmem:[#allocation2 + $0x48] sm:$0x1] %vm395, %v380
        %400 = vst.msk [vmem:[#allocation2 + $0x60] sm:$0x1] %vm395, %v381
        %401 = vst.msk [vmem:[#allocation2 + $0x78] sm:$0x1] %vm395, %v382
        %402 = vst.msk [vmem:[#allocation2 + $0x90] sm:$0x1] %vm395, %v383
        %403 = vst.msk [vmem:[#allocation2 + $0xa8] sm:$0x1] %vm395, %v384
        %404 = vst.msk [vmem:[#allocation2 + $0xc0] sm:$0x1] %vm395, %v385
        %405 = vst.msk [vmem:[#allocation2 + $0xd8] sm:$0x1] %vm395, %v386
        %406 = vst.msk [vmem:[#allocation2 + $0xf0] sm:$0x1] %vm395, %v387
        %407 = vst.msk [vmem:[#allocation2 + $0x108] sm:$0x1] %vm395, %v388
        %408 = vst.msk [vmem:[#allocation2 + $0x120] sm:$0x1] %vm395, %v389
        %409 = vst.msk [vmem:[#allocation2 + $0x138] sm:$0x1] %vm395, %v390
        %410 = vst.msk [vmem:[#allocation2 + $0x150] sm:$0x1] %vm395, %v391
        %411 = vst.msk [vmem:[#allocation2 + $0x168] sm:$0x1] %vm395, %v392
        %412 = vst.msk [vmem:[#allocation2 + $0x180] sm:$0x1] %vm395, %v393
        %413 = vst.msk [vmem:[#allocation2 + $0x198] sm:$0x1] %vm395, %v394
        %v414 = vld [vmem:[#allocation2 + $0x10] sm:$0x1]
        %v415 = vld [vmem:[#allocation2 + $0x28] sm:$0x1]
        %v416 = vld [vmem:[#allocation2 + $0x40] sm:$0x1]
        %v417 = vld [vmem:[#allocation2 + $0x58] sm:$0x1]
        %v418 = vld [vmem:[#allocation2 + $0x70] sm:$0x1]
        %v419 = vld [vmem:[#allocation2 + $0x88] sm:$0x1]
        %v420 = vld [vmem:[#allocation2 + $0xa0] sm:$0x1]
        %v421 = vld [vmem:[#allocation2 + $0xb8] sm:$0x1]
        %v422 = vld [vmem:[#allocation2 + $0xd0] sm:$0x1]
        %v423 = vld [vmem:[#allocation2 + $0xe8] sm:$0x1]
        %v424 = vld [vmem:[#allocation2 + $0x100] sm:$0x1]
        %v425 = vld [vmem:[#allocation2 + $0x118] sm:$0x1]
        %v426 = vld [vmem:[#allocation2 + $0x130] sm:$0x1]
        %v427 = vld [vmem:[#allocation2 + $0x148] sm:$0x1]
        %v428 = vld [vmem:[#allocation2 + $0x160] sm:$0x1]
        %v429 = vld [vmem:[#allocation2 + $0x178] sm:$0x1]
        %v430 = vld [vmem:[#allocation2 + $0x190] sm:$0x1]
        %v431 = vld [vmem:[#allocation2 + $0x1a8] sm:$0x1]
        %432 = vst.msk [vmem:[#allocation2 + $0x11] sm:$0x1] %vm395, %v414
        %433 = vst.msk [vmem:[#allocation2 + $0x29] sm:$0x1] %vm395, %v415
        %434 = vst.msk [vmem:[#allocation2 + $0x41] sm:$0x1] %vm395, %v416
        %435 = vst.msk [vmem:[#allocation2 + $0x59] sm:$0x1] %vm395, %v417
        %436 = vst.msk [vmem:[#allocation2 + $0x71] sm:$0x1] %vm395, %v418
        %437 = vst.msk [vmem:[#allocation2 + $0x89] sm:$0x1] %vm395, %v419
        %438 = vst.msk [vmem:[#allocation2 + $0xa1] sm:$0x1] %vm395, %v420
        %439 = vst.msk [vmem:[#allocation2 + $0xb9] sm:$0x1] %vm395, %v421
        %440 = vst.msk [vmem:[#allocation2 + $0xd1] sm:$0x1] %vm395, %v422
        %441 = vst.msk [vmem:[#allocation2 + $0xe9] sm:$0x1] %vm395, %v423
        %442 = vst.msk [vmem:[#allocation2 + $0x101] sm:$0x1] %vm395, %v424
        %443 = vst.msk [vmem:[#allocation2 + $0x119] sm:$0x1] %vm395, %v425
        %444 = vst.msk [vmem:[#allocation2 + $0x131] sm:$0x1] %vm395, %v426
        %445 = vst.msk [vmem:[#allocation2 + $0x149] sm:$0x1] %vm395, %v427
        %446 = vst.msk [vmem:[#allocation2 + $0x161] sm:$0x1] %vm395, %v428
        %447 = vst.msk [vmem:[#allocation2 + $0x179] sm:$0x1] %vm395, %v429
        %448 = vst.msk [vmem:[#allocation2 + $0x191] sm:$0x1] %vm395, %v430
        %449 = vst.msk [vmem:[#allocation2 + $0x1a9] sm:$0x1] %vm395, %v431
        %v450 = vld [vmem:[#allocation2] sm:$0xff]
        %v451 = vld [vmem:[#allocation2 + $0x8] sm:$0xff]
        %v452 = vld [vmem:[#allocation2 + $0x18] sm:$0xff]
        %v453 = vld [vmem:[#allocation2 + $0x20] sm:$0xff]
        %v454 = vld [vmem:[#allocation2 + $0x30] sm:$0xff]
        %v455 = vld [vmem:[#allocation2 + $0x38] sm:$0xff]
        %v456 = vld [vmem:[#allocation2 + $0x48] sm:$0xff]
        %v457 = vld [vmem:[#allocation2 + $0x50] sm:$0xff]
        %v458 = vld [vmem:[#allocation2 + $0x60] sm:$0xff]
        %v459 = vld [vmem:[#allocation2 + $0x68] sm:$0xff]
        %v460 = vld [vmem:[#allocation2 + $0x78] sm:$0xff]
        %v461 = vld [vmem:[#allocation2 + $0x80] sm:$0xff]
        %v462 = vld [vmem:[#allocation2 + $0x90] sm:$0xff]
        %v463 = vld [vmem:[#allocation2 + $0x98] sm:$0xff]
        %v464 = vld [vmem:[#allocation2 + $0xa8] sm:$0xff]
        %v465 = vld [vmem:[#allocation2 + $0xb0] sm:$0xff]
        %v466 = vld [vmem:[#allocation2 + $0xc0] sm:$0xff]
        %v467 = vld [vmem:[#allocation2 + $0xc8] sm:$0xff]
        %v468 = vld [vmem:[#allocation2 + $0xd8] sm:$0xff]
        %v469 = vld [vmem:[#allocation2 + $0xe0] sm:$0xff]
        %v470 = vld [vmem:[#allocation2 + $0xf0] sm:$0xff]
        %v471 = vld [vmem:[#allocation2 + $0xf8] sm:$0xff]
        %v472 = vld [vmem:[#allocation2 + $0x108] sm:$0xff]
        %v473 = vld [vmem:[#allocation2 + $0x110] sm:$0xff]
        %v474 = vld [vmem:[#allocation2 + $0x120] sm:$0xff]
        %v475 = vld [vmem:[#allocation2 + $0x128] sm:$0xff]
        %v476 = vld [vmem:[#allocation2 + $0x138] sm:$0xff]
        %v477 = vld [vmem:[#allocation2 + $0x140] sm:$0xff]
        %v478 = vld [vmem:[#allocation2 + $0x150] sm:$0xff]
        %v479 = vld [vmem:[#allocation2 + $0x158] sm:$0xff]
        %v480 = vld [vmem:[#allocation2 + $0x168] sm:$0xff]
        %v481 = vld [vmem:[#allocation2 + $0x170] sm:$0xff]
        %v482 = vld [vmem:[#allocation2 + $0x180] sm:$0xff]
        %v483 = vld [vmem:[#allocation2 + $0x188] sm:$0xff]
        %v484 = vld [vmem:[#allocation2 + $0x198] sm:$0xff]
        %v485 = vld [vmem:[#allocation2 + $0x1a0] sm:$0xff]
        %v486 = vld [vmem:[#allocation2 + $0x2] sm:$0xff]
        %v487 = vld [vmem:[#allocation2 + $0xa] sm:$0xff]
        %v488 = vld [vmem:[#allocation2 + $0x1a] sm:$0xff]
        %v489 = vld [vmem:[#allocation2 + $0x22] sm:$0xff]
        %v490 = vld [vmem:[#allocation2 + $0x32] sm:$0xff]
        %v491 = vld [vmem:[#allocation2 + $0x3a] sm:$0xff]
        %v492 = vld [vmem:[#allocation2 + $0x4a] sm:$0xff]
        %v493 = vld [vmem:[#allocation2 + $0x52] sm:$0xff]
        %v494 = vld [vmem:[#allocation2 + $0x62] sm:$0xff]
        %v495 = vld [vmem:[#allocation2 + $0x6a] sm:$0xff]
        %v496 = vld [vmem:[#allocation2 + $0x7a] sm:$0xff]
        %v497 = vld [vmem:[#allocation2 + $0x82] sm:$0xff]
        %v498 = vld [vmem:[#allocation2 + $0x92] sm:$0xff]
        %v499 = vld [vmem:[#allocation2 + $0x9a] sm:$0xff]
        %v500 = vld [vmem:[#allocation2 + $0xaa] sm:$0xff]
        %v501 = vld [vmem:[#allocation2 + $0xb2] sm:$0xff]
        %v502 = vld [vmem:[#allocation2 + $0xc2] sm:$0xff]
        %v503 = vld [vmem:[#allocation2 + $0xca] sm:$0xff]
        %v504 = vld [vmem:[#allocation2 + $0xda] sm:$0xff]
        %v505 = vld [vmem:[#allocation2 + $0xe2] sm:$0xff]
        %v506 = vld [vmem:[#allocation2 + $0xf2] sm:$0xff]
        %v507 = vld [vmem:[#allocation2 + $0xfa] sm:$0xff]
        %v508 = vld [vmem:[#allocation2 + $0x10a] sm:$0xff]
        %v509 = vld [vmem:[#allocation2 + $0x112] sm:$0xff]
        %v510 = vld [vmem:[#allocation2 + $0x122] sm:$0xff]
        %v511 = vld [vmem:[#allocation2 + $0x12a] sm:$0xff]
        %v512 = vld [vmem:[#allocation2 + $0x13a] sm:$0xff]
        %v513 = vld [vmem:[#allocation2 + $0x142] sm:$0xff]
        %v514 = vld [vmem:[#allocation2 + $0x152] sm:$0xff]
        %v515 = vld [vmem:[#allocation2 + $0x15a] sm:$0xff]
        %v516 = vld [vmem:[#allocation2 + $0x16a] sm:$0xff]
        %v517 = vld [vmem:[#allocation2 + $0x172] sm:$0xff]
        %v518 = vld [vmem:[#allocation2 + $0x182] sm:$0xff]
        %v519 = vld [vmem:[#allocation2 + $0x18a] sm:$0xff]
        %v520 = vld [vmem:[#allocation2 + $0x19a] sm:$0xff]
        %v521 = vld [vmem:[#allocation2 + $0x1a2] sm:$0xff]
        %v522 = vmul.f32 %v300, 0.75
        %v523 = vmul.f32 %v301, 0.75
        %v524 = vmul.f32 %v322, 0.75
        %v525 = vmul.f32 %v323, 0.75
        %v526 = vmul.f32 %v302, 0.75
        %v527 = vmul.f32 %v303, 0.75
        %v528 = vmul.f32 %v324, 0.75
        %v529 = vmul.f32 %v325, 0.75
        %v530 = vmul.f32 %v304, 0.75
        %v531 = vmul.f32 %v305, 0.75
        %v532 = vmul.f32 %v326, 0.75
        %v533 = vmul.f32 %v327, 0.75
        %v534 = vmul.f32 %v306, 0.75
        %v535 = vmul.f32 %v307, 0.75
        %v536 = vmul.f32 %v328, 0.75
        %v537 = vmul.f32 %v329, 0.75
        %v538 = vmul.f32 %v308, 0.75
        %v539 = vmul.f32 %v309, 0.75
        %v540 = vmul.f32 %v330, 0.75
        %v541 = vmul.f32 %v331, 0.75
        %v542 = vmul.f32 %v310, 0.75
        %v543 = vmul.f32 %v311, 0.75
        %v544 = vmul.f32 %v332, 0.75
        %v545 = vmul.f32 %v333, 0.75
        %v546 = vmul.f32 %v312, 0.75
        %v547 = vmul.f32 %v313, 0.75
        %v548 = vmul.f32 %v334, 0.75
        %v549 = vmul.f32 %v335, 0.75
        %v550 = vmul.f32 %v314, 0.75
        %v551 = vmul.f32 %v315, 0.75
        %v552 = vmul.f32 %v336, 0.75
        %v553 = vmul.f32 %v337, 0.75
        %v554 = vmul.f32 %v316, 0.75
        %v555 = vmul.f32 %v317, 0.75
        %v556 = vmul.f32 %v338, 0.75
        %v557 = vmul.f32 %v339, 0.75
        %v558 = vmul.f32 %v450, 0.25
        %v559 = vmul.f32 %v451, 0.25
        %v560 = vmul.f32 %v452, 0.25
        %v561 = vmul.f32 %v453, 0.25
        %v562 = vmul.f32 %v454, 0.25
        %v563 = vmul.f32 %v455, 0.25
        %v564 = vmul.f32 %v456, 0.25
        %v565 = vmul.f32 %v457, 0.25
        %v566 = vmul.f32 %v458, 0.25
        %v567 = vmul.f32 %v459, 0.25
        %v568 = vmul.f32 %v460, 0.25
        %v569 = vmul.f32 %v461, 0.25
        %v570 = vmul.f32 %v462, 0.25
        %v571 = vmul.f32 %v463, 0.25
        %v572 = vmul.f32 %v464, 0.25
        %v573 = vmul.f32 %v465, 0.25
        %v574 = vmul.f32 %v466, 0.25
        %v575 = vmul.f32 %v467, 0.25
        %v576 = vmul.f32 %v468, 0.25
        %v577 = vmul.f32 %v469, 0.25
        %v578 = vmul.f32 %v470, 0.25
        %v579 = vmul.f32 %v471, 0.25
        %v580 = vmul.f32 %v472, 0.25
        %v581 = vmul.f32 %v473, 0.25
        %v582 = vmul.f32 %v474, 0.25
        %v583 = vmul.f32 %v475, 0.25
        %v584 = vmul.f32 %v476, 0.25
        %v585 = vmul.f32 %v477, 0.25
        %v586 = vmul.f32 %v478, 0.25
        %v587 = vmul.f32 %v479, 0.25
        %v588 = vmul.f32 %v480, 0.25
        %v589 = vmul.f32 %v481, 0.25
        %v590 = vmul.f32 %v482, 0.25
        %v591 = vmul.f32 %v483, 0.25
        %v592 = vmul.f32 %v484, 0.25
        %v593 = vmul.f32 %v485, 0.25
        %v594 = vadd.f32 %v522, %v558
        %v595 = vadd.f32 %v523, %v559
        %v596 = vadd.f32 %v524, %v560
        %v597 = vadd.f32 %v525, %v561
        %v598 = vadd.f32 %v526, %v562
        %v599 = vadd.f32 %v527, %v563
        %v600 = vadd.f32 %v528, %v564
        %v601 = vadd.f32 %v529, %v565
        %v602 = vadd.f32 %v530, %v566
        %v603 = vadd.f32 %v531, %v567
        %v604 = vadd.f32 %v532, %v568
        %v605 = vadd.f32 %v533, %v569
        %v606 = vadd.f32 %v534, %v570
        %v607 = vadd.f32 %v535, %v571
        %v608 = vadd.f32 %v536, %v572
        %v609 = vadd.f32 %v537, %v573
        %v610 = vadd.f32 %v538, %v574
        %v611 = vadd.f32 %v539, %v575
        %v612 = vadd.f32 %v540, %v576
        %v613 = vadd.f32 %v541, %v577
        %v614 = vadd.f32 %v542, %v578
        %v615 = vadd.f32 %v543, %v579
        %v616 = vadd.f32 %v544, %v580
        %v617 = vadd.f32 %v545, %v581
        %v618 = vadd.f32 %v546, %v582
        %v619 = vadd.f32 %v547, %v583
        %v620 = vadd.f32 %v548, %v584
        %v621 = vadd.f32 %v549, %v585
        %v622 = vadd.f32 %v550, %v586
        %v623 = vadd.f32 %v551, %v587
        %v624 = vadd.f32 %v552, %v588
        %v625 = vadd.f32 %v553, %v589
        %v626 = vadd.f32 %v554, %v590
        %v627 = vadd.f32 %v555, %v591
        %v628 = vadd.f32 %v556, %v592
        %v629 = vadd.f32 %v557, %v593
        %v630 = vpack.c.bf16 %v595, %v594
        %v631 = vpack.c.bf16 %v597, %v596
        %v632 = vpack.c.bf16 %v599, %v598
        %v633 = vpack.c.bf16 %v601, %v600
        %v634 = vpack.c.bf16 %v603, %v602
        %v635 = vpack.c.bf16 %v605, %v604
        %v636 = vpack.c.bf16 %v607, %v606
        %v637 = vpack.c.bf16 %v609, %v608
        %v638 = vpack.c.bf16 %v611, %v610
        %v639 = vpack.c.bf16 %v613, %v612
        %v640 = vpack.c.bf16 %v615, %v614
        %v641 = vpack.c.bf16 %v617, %v616
        %v642 = vpack.c.bf16 %v619, %v618
        %v643 = vpack.c.bf16 %v621, %v620
        %v644 = vpack.c.bf16 %v623, %v622
        %v645 = vpack.c.bf16 %v625, %v624
        %v646 = vpack.c.bf16 %v627, %v626
        %v647 = vpack.c.bf16 %v629, %v628
        %v648 = vmul.f32 %v486, 0.25
        %v649 = vmul.f32 %v487, 0.25
        %v650 = vmul.f32 %v488, 0.25
        %v651 = vmul.f32 %v489, 0.25
        %v652 = vmul.f32 %v490, 0.25
        %v653 = vmul.f32 %v491, 0.25
        %v654 = vmul.f32 %v492, 0.25
        %v655 = vmul.f32 %v493, 0.25
        %v656 = vmul.f32 %v494, 0.25
        %v657 = vmul.f32 %v495, 0.25
        %v658 = vmul.f32 %v496, 0.25
        %v659 = vmul.f32 %v497, 0.25
        %v660 = vmul.f32 %v498, 0.25
        %v661 = vmul.f32 %v499, 0.25
        %v662 = vmul.f32 %v500, 0.25
        %v663 = vmul.f32 %v501, 0.25
        %v664 = vmul.f32 %v502, 0.25
        %v665 = vmul.f32 %v503, 0.25
        %v666 = vmul.f32 %v504, 0.25
        %v667 = vmul.f32 %v505, 0.25
        %v668 = vmul.f32 %v506, 0.25
        %v669 = vmul.f32 %v507, 0.25
        %v670 = vmul.f32 %v508, 0.25
        %v671 = vmul.f32 %v509, 0.25
        %v672 = vmul.f32 %v510, 0.25
        %v673 = vmul.f32 %v511, 0.25
        %v674 = vmul.f32 %v512, 0.25
        %v675 = vmul.f32 %v513, 0.25
        %v676 = vmul.f32 %v514, 0.25
        %v677 = vmul.f32 %v515, 0.25
        %v678 = vmul.f32 %v516, 0.25
        %v679 = vmul.f32 %v517, 0.25
        %v680 = vmul.f32 %v518, 0.25
        %v681 = vmul.f32 %v519, 0.25
        %v682 = vmul.f32 %v520, 0.25
        %v683 = vmul.f32 %v521, 0.25
        %v684 = vadd.f32 %v522, %v648
        %v685 = vadd.f32 %v523, %v649
        %v686 = vadd.f32 %v524, %v650
        %v687 = vadd.f32 %v525, %v651
        %v688 = vadd.f32 %v526, %v652
        %v689 = vadd.f32 %v527, %v653
        %v690 = vadd.f32 %v528, %v654
        %v691 = vadd.f32 %v529, %v655
        %v692 = vadd.f32 %v530, %v656
        %v693 = vadd.f32 %v531, %v657
        %v694 = vadd.f32 %v532, %v658
        %v695 = vadd.f32 %v533, %v659
        %v696 = vadd.f32 %v534, %v660
        %v697 = vadd.f32 %v535, %v661
        %v698 = vadd.f32 %v536, %v662
        %v699 = vadd.f32 %v537, %v663
        %v700 = vadd.f32 %v538, %v664
        %v701 = vadd.f32 %v539, %v665
        %v702 = vadd.f32 %v540, %v666
        %v703 = vadd.f32 %v541, %v667
        %v704 = vadd.f32 %v542, %v668
        %v705 = vadd.f32 %v543, %v669
        %v706 = vadd.f32 %v544, %v670
        %v707 = vadd.f32 %v545, %v671
        %v708 = vadd.f32 %v546, %v672
        %v709 = vadd.f32 %v547, %v673
        %v710 = vadd.f32 %v548, %v674
        %v711 = vadd.f32 %v549, %v675
        %v712 = vadd.f32 %v550, %v676
        %v713 = vadd.f32 %v551, %v677
        %v714 = vadd.f32 %v552, %v678
        %v715 = vadd.f32 %v553, %v679
        %v716 = vadd.f32 %v554, %v680
        %v717 = vadd.f32 %v555, %v681
        %v718 = vadd.f32 %v556, %v682
        %v719 = vadd.f32 %v557, %v683
        %v720 = vpack.c.bf16 %v685, %v684
        %v721 = vpack.c.bf16 %v687, %v686
        %v722 = vpack.c.bf16 %v689, %v688
        %v723 = vpack.c.bf16 %v691, %v690
        %v724 = vpack.c.bf16 %v693, %v692
        %v725 = vpack.c.bf16 %v695, %v694
        %v726 = vpack.c.bf16 %v697, %v696
        %v727 = vpack.c.bf16 %v699, %v698
        %v728 = vpack.c.bf16 %v701, %v700
        %v729 = vpack.c.bf16 %v703, %v702
        %v730 = vpack.c.bf16 %v705, %v704
        %v731 = vpack.c.bf16 %v707, %v706
        %v732 = vpack.c.bf16 %v709, %v708
        %v733 = vpack.c.bf16 %v711, %v710
        %v734 = vpack.c.bf16 %v713, %v712
        %v735 = vpack.c.bf16 %v715, %v714
        %v736 = vpack.c.bf16 %v717, %v716
        %v737 = vpack.c.bf16 %v719, %v718
        %v756 = vunpack.c.l.b16 %v630
        %v757 = vunpack.c.h.b16 %v630
        %v758 = vunpack.c.l.b16 %v631
        %v759 = vunpack.c.h.b16 %v631
        %v760 = vunpack.c.l.b16 %v632
        %v761 = vunpack.c.h.b16 %v632
        %v762 = vunpack.c.l.b16 %v633
        %v763 = vunpack.c.h.b16 %v633
        %v764 = vunpack.c.l.b16 %v634
        %v765 = vunpack.c.h.b16 %v634
        %v766 = vunpack.c.l.b16 %v635
        %v767 = vunpack.c.h.b16 %v635
        %v768 = vunpack.c.l.b16 %v636
        %v769 = vunpack.c.h.b16 %v636
        %v770 = vunpack.c.l.b16 %v637
        %v771 = vunpack.c.h.b16 %v637
        %v772 = vunpack.c.l.b16 %v638
        %v773 = vunpack.c.h.b16 %v638
        %v774 = vunpack.c.l.b16 %v639
        %v775 = vunpack.c.h.b16 %v639
        %v776 = vunpack.c.l.b16 %v640
        %v777 = vunpack.c.h.b16 %v640
        %v778 = vunpack.c.l.b16 %v641
        %v779 = vunpack.c.h.b16 %v641
        %v780 = vunpack.c.l.b16 %v642
        %v781 = vunpack.c.h.b16 %v642
        %v782 = vunpack.c.l.b16 %v643
        %v783 = vunpack.c.h.b16 %v643
        %v784 = vunpack.c.l.b16 %v644
        %v785 = vunpack.c.h.b16 %v644
        %v786 = vunpack.c.l.b16 %v645
        %v787 = vunpack.c.h.b16 %v645
        %v788 = vunpack.c.l.b16 %v646
        %v789 = vunpack.c.h.b16 %v646
        %v790 = vunpack.c.l.b16 %v647
        %v791 = vunpack.c.h.b16 %v647
        %v792 = vpack.c.b16 %v756, %v756
        %v793 = vpack.c.b16 %v757, %v757
        %v794 = vpack.c.b16 %v758, %v758
        %v795 = vpack.c.b16 %v759, %v759
        %v796 = vpack.c.b16 %v760, %v760
        %v797 = vpack.c.b16 %v761, %v761
        %v798 = vpack.c.b16 %v762, %v762
        %v799 = vpack.c.b16 %v763, %v763
        %v800 = vpack.c.b16 %v764, %v764
        %v801 = vpack.c.b16 %v765, %v765
        %v802 = vpack.c.b16 %v766, %v766
        %v803 = vpack.c.b16 %v767, %v767
        %v804 = vpack.c.b16 %v768, %v768
        %v805 = vpack.c.b16 %v769, %v769
        %v806 = vpack.c.b16 %v770, %v770
        %v807 = vpack.c.b16 %v771, %v771
        %v808 = vpack.c.b16 %v772, %v772
        %v809 = vpack.c.b16 %v773, %v773
        %v810 = vpack.c.b16 %v774, %v774
        %v811 = vpack.c.b16 %v775, %v775
        %v812 = vpack.c.b16 %v776, %v776
        %v813 = vpack.c.b16 %v777, %v777
        %v814 = vpack.c.b16 %v778, %v778
        %v815 = vpack.c.b16 %v779, %v779
        %v816 = vpack.c.b16 %v780, %v780
        %v817 = vpack.c.b16 %v781, %v781
        %v818 = vpack.c.b16 %v782, %v782
        %v819 = vpack.c.b16 %v783, %v783
        %v820 = vpack.c.b16 %v784, %v784
        %v821 = vpack.c.b16 %v785, %v785
        %v822 = vpack.c.b16 %v786, %v786
        %v823 = vpack.c.b16 %v787, %v787
        %v824 = vpack.c.b16 %v788, %v788
        %v825 = vpack.c.b16 %v789, %v789
        %v826 = vpack.c.b16 %v790, %v790
        %v827 = vpack.c.b16 %v791, %v791
        %s864 = scalar_lea.vmem [#allocation3], 144
        %vm865 = vcmask 27648
        %866 = vst.msk [vmem:[%s864] sm:$0xf] %vm865, %v792
        %867 = vst.msk [vmem:[%s864 + $0x4] sm:$0xf] %vm865, %v793
        %868 = vst.msk [vmem:[%s864 + $0x8] sm:$0xf] %vm865, %v794
        %869 = vst.msk [vmem:[%s864 + $0xc] sm:$0xf] %vm865, %v795
        %870 = vst.msk [vmem:[%s864 + $0x10] sm:$0xf] %vm865, %v796
        %871 = vst.msk [vmem:[%s864 + $0x14] sm:$0xf] %vm865, %v797
        %872 = vst.msk [vmem:[%s864 + $0x18] sm:$0xf] %vm865, %v798
        %873 = vst.msk [vmem:[%s864 + $0x1c] sm:$0xf] %vm865, %v799
        %874 = vst.msk [vmem:[%s864 + $0x20] sm:$0xf] %vm865, %v800
        %875 = vst.msk [vmem:[%s864 + $0x24] sm:$0xf] %vm865, %v801
        %876 = vst.msk [vmem:[%s864 + $0x28] sm:$0xf] %vm865, %v802
        %877 = vst.msk [vmem:[%s864 + $0x2c] sm:$0xf] %vm865, %v803
        %878 = vst.msk [vmem:[%s864 + $0x30] sm:$0xf] %vm865, %v804
        %879 = vst.msk [vmem:[%s864 + $0x34] sm:$0xf] %vm865, %v805
        %880 = vst.msk [vmem:[%s864 + $0x38] sm:$0xf] %vm865, %v806
        %881 = vst.msk [vmem:[%s864 + $0x3c] sm:$0xf] %vm865, %v807
        %882 = vst.msk [vmem:[%s864 + $0x40] sm:$0xf] %vm865, %v808
        %883 = vst.msk [vmem:[%s864 + $0x44] sm:$0xf] %vm865, %v809
        %884 = vst.msk [vmem:[%s864 + $0x48] sm:$0xf] %vm865, %v810
        %885 = vst.msk [vmem:[%s864 + $0x4c] sm:$0xf] %vm865, %v811
        %886 = vst.msk [vmem:[%s864 + $0x50] sm:$0xf] %vm865, %v812
        %887 = vst.msk [vmem:[%s864 + $0x54] sm:$0xf] %vm865, %v813
        %888 = vst.msk [vmem:[%s864 + $0x58] sm:$0xf] %vm865, %v814
        %889 = vst.msk [vmem:[%s864 + $0x5c] sm:$0xf] %vm865, %v815
        %890 = vst.msk [vmem:[%s864 + $0x60] sm:$0xf] %vm865, %v816
        %891 = vst.msk [vmem:[%s864 + $0x64] sm:$0xf] %vm865, %v817
        %892 = vst.msk [vmem:[%s864 + $0x68] sm:$0xf] %vm865, %v818
        %893 = vst.msk [vmem:[%s864 + $0x6c] sm:$0xf] %vm865, %v819
        %894 = vst.msk [vmem:[%s864 + $0x70] sm:$0xf] %vm865, %v820
        %895 = vst.msk [vmem:[%s864 + $0x74] sm:$0xf] %vm865, %v821
        %896 = vst.msk [vmem:[%s864 + $0x78] sm:$0xf] %vm865, %v822
        %897 = vst.msk [vmem:[%s864 + $0x7c] sm:$0xf] %vm865, %v823
        %898 = vst.msk [vmem:[%s864 + $0x80] sm:$0xf] %vm865, %v824
        %899 = vst.msk [vmem:[%s864 + $0x84] sm:$0xf] %vm865, %v825
        %900 = vst.msk [vmem:[%s864 + $0x88] sm:$0xf] %vm865, %v826
        %901 = vst.msk [vmem:[%s864 + $0x8c] sm:$0xf] %vm865, %v827
        %v920 = vunpack.c.l.b16 %v720
        %v921 = vunpack.c.h.b16 %v720
        %v922 = vunpack.c.l.b16 %v721
        %v923 = vunpack.c.h.b16 %v721
        %v924 = vunpack.c.l.b16 %v722
        %v925 = vunpack.c.h.b16 %v722
        %v926 = vunpack.c.l.b16 %v723
        %v927 = vunpack.c.h.b16 %v723
        %v928 = vunpack.c.l.b16 %v724
        %v929 = vunpack.c.h.b16 %v724
        %v930 = vunpack.c.l.b16 %v725
        %v931 = vunpack.c.h.b16 %v725
        %v932 = vunpack.c.l.b16 %v726
        %v933 = vunpack.c.h.b16 %v726
        %v934 = vunpack.c.l.b16 %v727
        %v935 = vunpack.c.h.b16 %v727
        %v936 = vunpack.c.l.b16 %v728
        %v937 = vunpack.c.h.b16 %v728
        %v938 = vunpack.c.l.b16 %v729
        %v939 = vunpack.c.h.b16 %v729
        %v940 = vunpack.c.l.b16 %v730
        %v941 = vunpack.c.h.b16 %v730
        %v942 = vunpack.c.l.b16 %v731
        %v943 = vunpack.c.h.b16 %v731
        %v944 = vunpack.c.l.b16 %v732
        %v945 = vunpack.c.h.b16 %v732
        %v946 = vunpack.c.l.b16 %v733
        %v947 = vunpack.c.h.b16 %v733
        %v948 = vunpack.c.l.b16 %v734
        %v949 = vunpack.c.h.b16 %v734
        %v950 = vunpack.c.l.b16 %v735
        %v951 = vunpack.c.h.b16 %v735
        %v952 = vunpack.c.l.b16 %v736
        %v953 = vunpack.c.h.b16 %v736
        %v954 = vunpack.c.l.b16 %v737
        %v955 = vunpack.c.h.b16 %v737
        %v956 = vpack.c.b16 %v920, %v920
        %v957 = vpack.c.b16 %v921, %v921
        %v958 = vpack.c.b16 %v922, %v922
        %v959 = vpack.c.b16 %v923, %v923
        %v960 = vpack.c.b16 %v924, %v924
        %v961 = vpack.c.b16 %v925, %v925
        %v962 = vpack.c.b16 %v926, %v926
        %v963 = vpack.c.b16 %v927, %v927
        %v964 = vpack.c.b16 %v928, %v928
        %v965 = vpack.c.b16 %v929, %v929
        %v966 = vpack.c.b16 %v930, %v930
        %v967 = vpack.c.b16 %v931, %v931
        %v968 = vpack.c.b16 %v932, %v932
        %v969 = vpack.c.b16 %v933, %v933
        %v970 = vpack.c.b16 %v934, %v934
        %v971 = vpack.c.b16 %v935, %v935
        %v972 = vpack.c.b16 %v936, %v936
        %v973 = vpack.c.b16 %v937, %v937
        %v974 = vpack.c.b16 %v938, %v938
        %v975 = vpack.c.b16 %v939, %v939
        %v976 = vpack.c.b16 %v940, %v940
        %v977 = vpack.c.b16 %v941, %v941
        %v978 = vpack.c.b16 %v942, %v942
        %v979 = vpack.c.b16 %v943, %v943
        %v980 = vpack.c.b16 %v944, %v944
        %v981 = vpack.c.b16 %v945, %v945
        %v982 = vpack.c.b16 %v946, %v946
        %v983 = vpack.c.b16 %v947, %v947
        %v984 = vpack.c.b16 %v948, %v948
        %v985 = vpack.c.b16 %v949, %v949
        %v986 = vpack.c.b16 %v950, %v950
        %v987 = vpack.c.b16 %v951, %v951
        %v988 = vpack.c.b16 %v952, %v952
        %v989 = vpack.c.b16 %v953, %v953
        %v990 = vpack.c.b16 %v954, %v954
        %v991 = vpack.c.b16 %v955, %v955
        %s1028 = scalar_lea.vmem [#allocation3], 288
        %1029 = vst.msk [vmem:[%s1028] sm:$0xf] %vm865, %v956
        %1030 = vst.msk [vmem:[%s1028 + $0x4] sm:$0xf] %vm865, %v957
        %1031 = vst.msk [vmem:[%s1028 + $0x8] sm:$0xf] %vm865, %v958
        %1032 = vst.msk [vmem:[%s1028 + $0xc] sm:$0xf] %vm865, %v959
        %1033 = vst.msk [vmem:[%s1028 + $0x10] sm:$0xf] %vm865, %v960
        %1034 = vst.msk [vmem:[%s1028 + $0x14] sm:$0xf] %vm865, %v961
        %1035 = vst.msk [vmem:[%s1028 + $0x18] sm:$0xf] %vm865, %v962
        %1036 = vst.msk [vmem:[%s1028 + $0x1c] sm:$0xf] %vm865, %v963
        %1037 = vst.msk [vmem:[%s1028 + $0x20] sm:$0xf] %vm865, %v964
        %1038 = vst.msk [vmem:[%s1028 + $0x24] sm:$0xf] %vm865, %v965
        %1039 = vst.msk [vmem:[%s1028 + $0x28] sm:$0xf] %vm865, %v966
        %1040 = vst.msk [vmem:[%s1028 + $0x2c] sm:$0xf] %vm865, %v967
        %1041 = vst.msk [vmem:[%s1028 + $0x30] sm:$0xf] %vm865, %v968
        %1042 = vst.msk [vmem:[%s1028 + $0x34] sm:$0xf] %vm865, %v969
        %1043 = vst.msk [vmem:[%s1028 + $0x38] sm:$0xf] %vm865, %v970
        %1044 = vst.msk [vmem:[%s1028 + $0x3c] sm:$0xf] %vm865, %v971
        %1045 = vst.msk [vmem:[%s1028 + $0x40] sm:$0xf] %vm865, %v972
        %1046 = vst.msk [vmem:[%s1028 + $0x44] sm:$0xf] %vm865, %v973
        %1047 = vst.msk [vmem:[%s1028 + $0x48] sm:$0xf] %vm865, %v974
        %1048 = vst.msk [vmem:[%s1028 + $0x4c] sm:$0xf] %vm865, %v975
        %1049 = vst.msk [vmem:[%s1028 + $0x50] sm:$0xf] %vm865, %v976
        %1050 = vst.msk [vmem:[%s1028 + $0x54] sm:$0xf] %vm865, %v977
        %1051 = vst.msk [vmem:[%s1028 + $0x58] sm:$0xf] %vm865, %v978
        %1052 = vst.msk [vmem:[%s1028 + $0x5c] sm:$0xf] %vm865, %v979
        %1053 = vst.msk [vmem:[%s1028 + $0x60] sm:$0xf] %vm865, %v980
        %1054 = vst.msk [vmem:[%s1028 + $0x64] sm:$0xf] %vm865, %v981
        %1055 = vst.msk [vmem:[%s1028 + $0x68] sm:$0xf] %vm865, %v982
        %1056 = vst.msk [vmem:[%s1028 + $0x6c] sm:$0xf] %vm865, %v983
        %1057 = vst.msk [vmem:[%s1028 + $0x70] sm:$0xf] %vm865, %v984
        %1058 = vst.msk [vmem:[%s1028 + $0x74] sm:$0xf] %vm865, %v985
        %1059 = vst.msk [vmem:[%s1028 + $0x78] sm:$0xf] %vm865, %v986
        %1060 = vst.msk [vmem:[%s1028 + $0x7c] sm:$0xf] %vm865, %v987
        %1061 = vst.msk [vmem:[%s1028 + $0x80] sm:$0xf] %vm865, %v988
        %1062 = vst.msk [vmem:[%s1028 + $0x84] sm:$0xf] %vm865, %v989
        %1063 = vst.msk [vmem:[%s1028 + $0x88] sm:$0xf] %vm865, %v990
        %1064 = vst.msk [vmem:[%s1028 + $0x8c] sm:$0xf] %vm865, %v991
        %vm1065 = vcmask 24576
        %vm1066 = vsmask.f32 256
        %vm1067 = vmand %vm1065, %vm1066
        %v1068 = vld [vmem:[#allocation3] sm:$0x1]
        %v1069 = vsel %vm1067, 0, %v1068
        %1070 = vst [vmem:[#allocation3] sm:$0x1] %v1069
        %v1071 = vld [vmem:[#allocation3 + $0x8] sm:$0x1]
        %v1072 = vsel %vm1067, 0, %v1071
        %1073 = vst [vmem:[#allocation3 + $0x8] sm:$0x1] %v1072
        %v1074 = vld [vmem:[#allocation3 + $0x10] sm:$0x1]
        %v1075 = vsel %vm1067, 0, %v1074
        %1076 = vst [vmem:[#allocation3 + $0x10] sm:$0x1] %v1075
        %v1077 = vld [vmem:[#allocation3 + $0x18] sm:$0x1]
        %v1078 = vsel %vm1067, 0, %v1077
        %1079 = vst [vmem:[#allocation3 + $0x18] sm:$0x1] %v1078
        %v1080 = vld [vmem:[#allocation3 + $0x20] sm:$0x1]
        %v1081 = vsel %vm1067, 0, %v1080
        %1082 = vst [vmem:[#allocation3 + $0x20] sm:$0x1] %v1081
        %v1083 = vld [vmem:[#allocation3 + $0x28] sm:$0x1]
        %v1084 = vsel %vm1067, 0, %v1083
        %1085 = vst [vmem:[#allocation3 + $0x28] sm:$0x1] %v1084
        %v1086 = vld [vmem:[#allocation3 + $0x30] sm:$0x1]
        %v1087 = vsel %vm1067, 0, %v1086
        %1088 = vst [vmem:[#allocation3 + $0x30] sm:$0x1] %v1087
        %v1089 = vld [vmem:[#allocation3 + $0x38] sm:$0x1]
        %v1090 = vsel %vm1067, 0, %v1089
        %1091 = vst [vmem:[#allocation3 + $0x38] sm:$0x1] %v1090
        %v1092 = vld [vmem:[#allocation3 + $0x40] sm:$0x1]
        %v1093 = vsel %vm1067, 0, %v1092
        %1094 = vst [vmem:[#allocation3 + $0x40] sm:$0x1] %v1093
        %v1095 = vld [vmem:[#allocation3 + $0x48] sm:$0x1]
        %v1096 = vsel %vm1067, 0, %v1095
        %1097 = vst [vmem:[#allocation3 + $0x48] sm:$0x1] %v1096
        %v1098 = vld [vmem:[#allocation3 + $0x50] sm:$0x1]
        %v1099 = vsel %vm1067, 0, %v1098
        %1100 = vst [vmem:[#allocation3 + $0x50] sm:$0x1] %v1099
        %v1101 = vld [vmem:[#allocation3 + $0x58] sm:$0x1]
        %v1102 = vsel %vm1067, 0, %v1101
        %1103 = vst [vmem:[#allocation3 + $0x58] sm:$0x1] %v1102
        %v1104 = vld [vmem:[#allocation3 + $0x60] sm:$0x1]
        %v1105 = vsel %vm1067, 0, %v1104
        %1106 = vst [vmem:[#allocation3 + $0x60] sm:$0x1] %v1105
        %v1107 = vld [vmem:[#allocation3 + $0x68] sm:$0x1]
        %v1108 = vsel %vm1067, 0, %v1107
        %1109 = vst [vmem:[#allocation3 + $0x68] sm:$0x1] %v1108
        %v1110 = vld [vmem:[#allocation3 + $0x70] sm:$0x1]
        %v1111 = vsel %vm1067, 0, %v1110
        %1112 = vst [vmem:[#allocation3 + $0x70] sm:$0x1] %v1111
        %v1113 = vld [vmem:[#allocation3 + $0x78] sm:$0x1]
        %v1114 = vsel %vm1067, 0, %v1113
        %1115 = vst [vmem:[#allocation3 + $0x78] sm:$0x1] %v1114
        %v1116 = vld [vmem:[#allocation3 + $0x80] sm:$0x1]
        %v1117 = vsel %vm1067, 0, %v1116
        %1118 = vst [vmem:[#allocation3 + $0x80] sm:$0x1] %v1117
        %v1119 = vld [vmem:[#allocation3 + $0x88] sm:$0x1]
        %v1120 = vsel %vm1067, 0, %v1119
        %1121 = vst [vmem:[#allocation3 + $0x88] sm:$0x1] %v1120
        %v1122 = vld [vmem:[%s1028] sm:$0xf]
        %v1123 = vld [vmem:[%s1028 + $0x4] sm:$0xf]
        %v1124 = vld [vmem:[%s1028 + $0x8] sm:$0xf]
        %v1125 = vld [vmem:[%s1028 + $0xc] sm:$0xf]
        %v1126 = vld [vmem:[%s1028 + $0x10] sm:$0xf]
        %v1127 = vld [vmem:[%s1028 + $0x14] sm:$0xf]
        %v1128 = vld [vmem:[%s1028 + $0x18] sm:$0xf]
        %v1129 = vld [vmem:[%s1028 + $0x1c] sm:$0xf]
        %v1130 = vld [vmem:[%s1028 + $0x20] sm:$0xf]
        %v1131 = vld [vmem:[%s1028 + $0x24] sm:$0xf]
        %v1132 = vld [vmem:[%s1028 + $0x28] sm:$0xf]
        %v1133 = vld [vmem:[%s1028 + $0x2c] sm:$0xf]
        %v1134 = vld [vmem:[%s1028 + $0x30] sm:$0xf]
        %v1135 = vld [vmem:[%s1028 + $0x34] sm:$0xf]
        %v1136 = vld [vmem:[%s1028 + $0x38] sm:$0xf]
        %v1137 = vld [vmem:[%s1028 + $0x3c] sm:$0xf]
        %v1138 = vld [vmem:[%s1028 + $0x40] sm:$0xf]
        %v1139 = vld [vmem:[%s1028 + $0x44] sm:$0xf]
        %v1140 = vld [vmem:[%s1028 + $0x48] sm:$0xf]
        %v1141 = vld [vmem:[%s1028 + $0x4c] sm:$0xf]
        %v1142 = vld [vmem:[%s1028 + $0x50] sm:$0xf]
        %v1143 = vld [vmem:[%s1028 + $0x54] sm:$0xf]
        %v1144 = vld [vmem:[%s1028 + $0x58] sm:$0xf]
        %v1145 = vld [vmem:[%s1028 + $0x5c] sm:$0xf]
        %v1146 = vld [vmem:[%s1028 + $0x60] sm:$0xf]
        %v1147 = vld [vmem:[%s1028 + $0x64] sm:$0xf]
        %v1148 = vld [vmem:[%s1028 + $0x68] sm:$0xf]
        %v1149 = vld [vmem:[%s1028 + $0x6c] sm:$0xf]
        %v1150 = vld [vmem:[%s1028 + $0x70] sm:$0xf]
        %v1151 = vld [vmem:[%s1028 + $0x74] sm:$0xf]
        %v1152 = vld [vmem:[%s1028 + $0x78] sm:$0xf]
        %v1153 = vld [vmem:[%s1028 + $0x7c] sm:$0xf]
        %v1154 = vld [vmem:[%s1028 + $0x80] sm:$0xf]
        %v1155 = vld [vmem:[%s1028 + $0x84] sm:$0xf]
        %v1156 = vld [vmem:[%s1028 + $0x88] sm:$0xf]
        %v1157 = vld [vmem:[%s1028 + $0x8c] sm:$0xf]
        %vm1158 = vsmask.f32 4368
        %vm1159 = vmor %vm1066, %vm1158
        %v1161 = vshrl.u32 %v1122, 16
        %v1163 = vrot.slane %v1161, 7
        %v1164 = vshll.u32 %v1122, 16
        %v1166 = vor.u32 %v1163, %v1164
        %v1167 = vrot.slane %v1163, 4
        %v1169 = vshrl.u32 %v1123, 16
        %v1171 = vrot.slane %v1169, 7
        %v1172 = vshll.u32 %v1123, 16
        %v1174 = vor.u32 %v1171, %v1172
        %v1175 = vsel %vm1159, %v1167, %v1174
        %v1177 = vshrl.u32 %v1124, 16
        %v1179 = vrot.slane %v1177, 7
        %v1180 = vshll.u32 %v1124, 16
        %v1182 = vor.u32 %v1179, %v1180
        %v1183 = vrot.slane %v1179, 4
        %v1185 = vshrl.u32 %v1125, 16
        %v1187 = vrot.slane %v1185, 7
        %v1188 = vshll.u32 %v1125, 16
        %v1190 = vor.u32 %v1187, %v1188
        %v1191 = vsel %vm1159, %v1183, %v1190
        %v1193 = vshrl.u32 %v1126, 16
        %v1195 = vrot.slane %v1193, 7
        %v1196 = vshll.u32 %v1126, 16
        %v1198 = vor.u32 %v1195, %v1196
        %v1199 = vrot.slane %v1195, 4
        %v1201 = vshrl.u32 %v1127, 16
        %v1203 = vrot.slane %v1201, 7
        %v1204 = vshll.u32 %v1127, 16
        %v1206 = vor.u32 %v1203, %v1204
        %v1207 = vsel %vm1159, %v1199, %v1206
        %v1209 = vshrl.u32 %v1128, 16
        %v1211 = vrot.slane %v1209, 7
        %v1212 = vshll.u32 %v1128, 16
        %v1214 = vor.u32 %v1211, %v1212
        %v1215 = vrot.slane %v1211, 4
        %v1217 = vshrl.u32 %v1129, 16
        %v1219 = vrot.slane %v1217, 7
        %v1220 = vshll.u32 %v1129, 16
        %v1222 = vor.u32 %v1219, %v1220
        %v1223 = vsel %vm1159, %v1215, %v1222
        %v1225 = vshrl.u32 %v1130, 16
        %v1227 = vrot.slane %v1225, 7
        %v1228 = vshll.u32 %v1130, 16
        %v1230 = vor.u32 %v1227, %v1228
        %v1231 = vrot.slane %v1227, 4
        %v1233 = vshrl.u32 %v1131, 16
        %v1235 = vrot.slane %v1233, 7
        %v1236 = vshll.u32 %v1131, 16
        %v1238 = vor.u32 %v1235, %v1236
        %v1239 = vsel %vm1159, %v1231, %v1238
        %v1241 = vshrl.u32 %v1132, 16
        %v1243 = vrot.slane %v1241, 7
        %v1244 = vshll.u32 %v1132, 16
        %v1246 = vor.u32 %v1243, %v1244
        %v1247 = vrot.slane %v1243, 4
        %v1249 = vshrl.u32 %v1133, 16
        %v1251 = vrot.slane %v1249, 7
        %v1252 = vshll.u32 %v1133, 16
        %v1254 = vor.u32 %v1251, %v1252
        %v1255 = vsel %vm1159, %v1247, %v1254
        %v1257 = vshrl.u32 %v1134, 16
        %v1259 = vrot.slane %v1257, 7
        %v1260 = vshll.u32 %v1134, 16
        %v1262 = vor.u32 %v1259, %v1260
        %v1263 = vrot.slane %v1259, 4
        %v1265 = vshrl.u32 %v1135, 16
        %v1267 = vrot.slane %v1265, 7
        %v1268 = vshll.u32 %v1135, 16
        %v1270 = vor.u32 %v1267, %v1268
        %v1271 = vsel %vm1159, %v1263, %v1270
        %v1273 = vshrl.u32 %v1136, 16
        %v1275 = vrot.slane %v1273, 7
        %v1276 = vshll.u32 %v1136, 16
        %v1278 = vor.u32 %v1275, %v1276
        %v1279 = vrot.slane %v1275, 4
        %v1281 = vshrl.u32 %v1137, 16
        %v1283 = vrot.slane %v1281, 7
        %v1284 = vshll.u32 %v1137, 16
        %v1286 = vor.u32 %v1283, %v1284
        %v1287 = vsel %vm1159, %v1279, %v1286
        %v1289 = vshrl.u32 %v1138, 16
        %v1291 = vrot.slane %v1289, 7
        %v1292 = vshll.u32 %v1138, 16
        %v1294 = vor.u32 %v1291, %v1292
        %v1295 = vrot.slane %v1291, 4
        %v1297 = vshrl.u32 %v1139, 16
        %v1299 = vrot.slane %v1297, 7
        %v1300 = vshll.u32 %v1139, 16
        %v1302 = vor.u32 %v1299, %v1300
        %v1303 = vsel %vm1159, %v1295, %v1302
        %v1305 = vshrl.u32 %v1140, 16
        %v1307 = vrot.slane %v1305, 7
        %v1308 = vshll.u32 %v1140, 16
        %v1310 = vor.u32 %v1307, %v1308
        %v1311 = vrot.slane %v1307, 4
        %v1313 = vshrl.u32 %v1141, 16
        %v1315 = vrot.slane %v1313, 7
        %v1316 = vshll.u32 %v1141, 16
        %v1318 = vor.u32 %v1315, %v1316
        %v1319 = vsel %vm1159, %v1311, %v1318
        %v1321 = vshrl.u32 %v1142, 16
        %v1323 = vrot.slane %v1321, 7
        %v1324 = vshll.u32 %v1142, 16
        %v1326 = vor.u32 %v1323, %v1324
        %v1327 = vrot.slane %v1323, 4
        %v1329 = vshrl.u32 %v1143, 16
        %v1331 = vrot.slane %v1329, 7
        %v1332 = vshll.u32 %v1143, 16
        %v1334 = vor.u32 %v1331, %v1332
        %v1335 = vsel %vm1159, %v1327, %v1334
        %v1337 = vshrl.u32 %v1144, 16
        %v1339 = vrot.slane %v1337, 7
        %v1340 = vshll.u32 %v1144, 16
        %v1342 = vor.u32 %v1339, %v1340
        %v1343 = vrot.slane %v1339, 4
        %v1345 = vshrl.u32 %v1145, 16
        %v1347 = vrot.slane %v1345, 7
        %v1348 = vshll.u32 %v1145, 16
        %v1350 = vor.u32 %v1347, %v1348
        %v1351 = vsel %vm1159, %v1343, %v1350
        %v1353 = vshrl.u32 %v1146, 16
        %v1355 = vrot.slane %v1353, 7
        %v1356 = vshll.u32 %v1146, 16
        %v1358 = vor.u32 %v1355, %v1356
        %v1359 = vrot.slane %v1355, 4
        %v1361 = vshrl.u32 %v1147, 16
        %v1363 = vrot.slane %v1361, 7
        %v1364 = vshll.u32 %v1147, 16
        %v1366 = vor.u32 %v1363, %v1364
        %v1367 = vsel %vm1159, %v1359, %v1366
        %v1369 = vshrl.u32 %v1148, 16
        %v1371 = vrot.slane %v1369, 7
        %v1372 = vshll.u32 %v1148, 16
        %v1374 = vor.u32 %v1371, %v1372
        %v1375 = vrot.slane %v1371, 4
        %v1377 = vshrl.u32 %v1149, 16
        %v1379 = vrot.slane %v1377, 7
        %v1380 = vshll.u32 %v1149, 16
        %v1382 = vor.u32 %v1379, %v1380
        %v1383 = vsel %vm1159, %v1375, %v1382
        %v1385 = vshrl.u32 %v1150, 16
        %v1387 = vrot.slane %v1385, 7
        %v1388 = vshll.u32 %v1150, 16
        %v1390 = vor.u32 %v1387, %v1388
        %v1391 = vrot.slane %v1387, 4
        %v1393 = vshrl.u32 %v1151, 16
        %v1395 = vrot.slane %v1393, 7
        %v1396 = vshll.u32 %v1151, 16
        %v1398 = vor.u32 %v1395, %v1396
        %v1399 = vsel %vm1159, %v1391, %v1398
        %v1401 = vshrl.u32 %v1152, 16
        %v1403 = vrot.slane %v1401, 7
        %v1404 = vshll.u32 %v1152, 16
        %v1406 = vor.u32 %v1403, %v1404
        %v1407 = vrot.slane %v1403, 4
        %v1409 = vshrl.u32 %v1153, 16
        %v1411 = vrot.slane %v1409, 7
        %v1412 = vshll.u32 %v1153, 16
        %v1414 = vor.u32 %v1411, %v1412
        %v1415 = vsel %vm1159, %v1407, %v1414
        %v1417 = vshrl.u32 %v1154, 16
        %v1419 = vrot.slane %v1417, 7
        %v1420 = vshll.u32 %v1154, 16
        %v1422 = vor.u32 %v1419, %v1420
        %v1423 = vrot.slane %v1419, 4
        %v1425 = vshrl.u32 %v1155, 16
        %v1427 = vrot.slane %v1425, 7
        %v1428 = vshll.u32 %v1155, 16
        %v1430 = vor.u32 %v1427, %v1428
        %v1431 = vsel %vm1159, %v1423, %v1430
        %v1433 = vshrl.u32 %v1156, 16
        %v1435 = vrot.slane %v1433, 7
        %v1436 = vshll.u32 %v1156, 16
        %v1438 = vor.u32 %v1435, %v1436
        %v1439 = vrot.slane %v1435, 4
        %v1441 = vshrl.u32 %v1157, 16
        %v1443 = vrot.slane %v1441, 7
        %v1444 = vshll.u32 %v1157, 16
        %v1446 = vor.u32 %v1443, %v1444
        %v1447 = vsel %vm1159, %v1439, %v1446
        %vm1484 = vcmask 27648
        %vm1485 = vsmask.f32 7938
        %vm1486 = vmand %vm1484, %vm1485
        %v1487 = vld [vmem:[#allocation3] sm:$0xf]
        %v1488 = vsel %vm1486, %v1166, %v1487
        %1489 = vst [vmem:[#allocation3] sm:$0xf] %v1488
        %1490 = vst.msk [vmem:[#allocation3 + $0x4] sm:$0xf] %vm865, %v1175
        %v1491 = vld [vmem:[#allocation3 + $0x8] sm:$0xf]
        %v1492 = vsel %vm1486, %v1182, %v1491
        %1493 = vst [vmem:[#allocation3 + $0x8] sm:$0xf] %v1492
        %1494 = vst.msk [vmem:[#allocation3 + $0xc] sm:$0xf] %vm865, %v1191
        %v1495 = vld [vmem:[#allocation3 + $0x10] sm:$0xf]
        %v1496 = vsel %vm1486, %v1198, %v1495
        %1497 = vst [vmem:[#allocation3 + $0x10] sm:$0xf] %v1496
        %1498 = vst.msk [vmem:[#allocation3 + $0x14] sm:$0xf] %vm865, %v1207
        %v1499 = vld [vmem:[#allocation3 + $0x18] sm:$0xf]
        %v1500 = vsel %vm1486, %v1214, %v1499
        %1501 = vst [vmem:[#allocation3 + $0x18] sm:$0xf] %v1500
        %1502 = vst.msk [vmem:[#allocation3 + $0x1c] sm:$0xf] %vm865, %v1223
        %v1503 = vld [vmem:[#allocation3 + $0x20] sm:$0xf]
        %v1504 = vsel %vm1486, %v1230, %v1503
        %1505 = vst [vmem:[#allocation3 + $0x20] sm:$0xf] %v1504
        %1506 = vst.msk [vmem:[#allocation3 + $0x24] sm:$0xf] %vm865, %v1239
        %v1507 = vld [vmem:[#allocation3 + $0x28] sm:$0xf]
        %v1508 = vsel %vm1486, %v1246, %v1507
        %1509 = vst [vmem:[#allocation3 + $0x28] sm:$0xf] %v1508
        %1510 = vst.msk [vmem:[#allocation3 + $0x2c] sm:$0xf] %vm865, %v1255
        %v1511 = vld [vmem:[#allocation3 + $0x30] sm:$0xf]
        %v1512 = vsel %vm1486, %v1262, %v1511
        %1513 = vst [vmem:[#allocation3 + $0x30] sm:$0xf] %v1512
        %1514 = vst.msk [vmem:[#allocation3 + $0x34] sm:$0xf] %vm865, %v1271
        %v1515 = vld [vmem:[#allocation3 + $0x38] sm:$0xf]
        %v1516 = vsel %vm1486, %v1278, %v1515
        %1517 = vst [vmem:[#allocation3 + $0x38] sm:$0xf] %v1516
        %1518 = vst.msk [vmem:[#allocation3 + $0x3c] sm:$0xf] %vm865, %v1287
        %v1519 = vld [vmem:[#allocation3 + $0x40] sm:$0xf]
        %v1520 = vsel %vm1486, %v1294, %v1519
        %1521 = vst [vmem:[#allocation3 + $0x40] sm:$0xf] %v1520
        %1522 = vst.msk [vmem:[#allocation3 + $0x44] sm:$0xf] %vm865, %v1303
        %v1523 = vld [vmem:[#allocation3 + $0x48] sm:$0xf]
        %v1524 = vsel %vm1486, %v1310, %v1523
        %1525 = vst [vmem:[#allocation3 + $0x48] sm:$0xf] %v1524
        %1526 = vst.msk [vmem:[#allocation3 + $0x4c] sm:$0xf] %vm865, %v1319
        %v1527 = vld [vmem:[#allocation3 + $0x50] sm:$0xf]
        %v1528 = vsel %vm1486, %v1326, %v1527
        %1529 = vst [vmem:[#allocation3 + $0x50] sm:$0xf] %v1528
        %1530 = vst.msk [vmem:[#allocation3 + $0x54] sm:$0xf] %vm865, %v1335
        %v1531 = vld [vmem:[#allocation3 + $0x58] sm:$0xf]
        %v1532 = vsel %vm1486, %v1342, %v1531
        %1533 = vst [vmem:[#allocation3 + $0x58] sm:$0xf] %v1532
        %1534 = vst.msk [vmem:[#allocation3 + $0x5c] sm:$0xf] %vm865, %v1351
        %v1535 = vld [vmem:[#allocation3 + $0x60] sm:$0xf]
        %v1536 = vsel %vm1486, %v1358, %v1535
        %1537 = vst [vmem:[#allocation3 + $0x60] sm:$0xf] %v1536
        %1538 = vst.msk [vmem:[#allocation3 + $0x64] sm:$0xf] %vm865, %v1367
        %v1539 = vld [vmem:[#allocation3 + $0x68] sm:$0xf]
        %v1540 = vsel %vm1486, %v1374, %v1539
        %1541 = vst [vmem:[#allocation3 + $0x68] sm:$0xf] %v1540
        %1542 = vst.msk [vmem:[#allocation3 + $0x6c] sm:$0xf] %vm865, %v1383
        %v1543 = vld [vmem:[#allocation3 + $0x70] sm:$0xf]
        %v1544 = vsel %vm1486, %v1390, %v1543
        %1545 = vst [vmem:[#allocation3 + $0x70] sm:$0xf] %v1544
        %1546 = vst.msk [vmem:[#allocation3 + $0x74] sm:$0xf] %vm865, %v1399
        %v1547 = vld [vmem:[#allocation3 + $0x78] sm:$0xf]
        %v1548 = vsel %vm1486, %v1406, %v1547
        %1549 = vst [vmem:[#allocation3 + $0x78] sm:$0xf] %v1548
        %1550 = vst.msk [vmem:[#allocation3 + $0x7c] sm:$0xf] %vm865, %v1415
        %v1551 = vld [vmem:[#allocation3 + $0x80] sm:$0xf]
        %v1552 = vsel %vm1486, %v1422, %v1551
        %1553 = vst [vmem:[#allocation3 + $0x80] sm:$0xf] %v1552
        %1554 = vst.msk [vmem:[#allocation3 + $0x84] sm:$0xf] %vm865, %v1431
        %v1555 = vld [vmem:[#allocation3 + $0x88] sm:$0xf]
        %v1556 = vsel %vm1486, %v1438, %v1555
        %1557 = vst [vmem:[#allocation3 + $0x88] sm:$0xf] %v1556
        %1558 = vst.msk [vmem:[#allocation3 + $0x8c] sm:$0xf] %vm865, %v1447
        %v1559 = vld [vmem:[%s864] sm:$0xf]
        %v1560 = vld [vmem:[%s864 + $0x4] sm:$0xf]
        %v1561 = vld [vmem:[%s864 + $0x8] sm:$0xf]
        %v1562 = vld [vmem:[%s864 + $0xc] sm:$0xf]
        %v1563 = vld [vmem:[%s864 + $0x10] sm:$0xf]
        %v1564 = vld [vmem:[%s864 + $0x14] sm:$0xf]
        %v1565 = vld [vmem:[%s864 + $0x18] sm:$0xf]
        %v1566 = vld [vmem:[%s864 + $0x1c] sm:$0xf]
        %v1567 = vld [vmem:[%s864 + $0x20] sm:$0xf]
        %v1568 = vld [vmem:[%s864 + $0x24] sm:$0xf]
        %v1569 = vld [vmem:[%s864 + $0x28] sm:$0xf]
        %v1570 = vld [vmem:[%s864 + $0x2c] sm:$0xf]
        %v1571 = vld [vmem:[%s864 + $0x30] sm:$0xf]
        %v1572 = vld [vmem:[%s864 + $0x34] sm:$0xf]
        %v1573 = vld [vmem:[%s864 + $0x38] sm:$0xf]
        %v1574 = vld [vmem:[%s864 + $0x3c] sm:$0xf]
        %v1575 = vld [vmem:[%s864 + $0x40] sm:$0xf]
        %v1576 = vld [vmem:[%s864 + $0x44] sm:$0xf]
        %v1577 = vld [vmem:[%s864 + $0x48] sm:$0xf]
        %v1578 = vld [vmem:[%s864 + $0x4c] sm:$0xf]
        %v1579 = vld [vmem:[%s864 + $0x50] sm:$0xf]
        %v1580 = vld [vmem:[%s864 + $0x54] sm:$0xf]
        %v1581 = vld [vmem:[%s864 + $0x58] sm:$0xf]
        %v1582 = vld [vmem:[%s864 + $0x5c] sm:$0xf]
        %v1583 = vld [vmem:[%s864 + $0x60] sm:$0xf]
        %v1584 = vld [vmem:[%s864 + $0x64] sm:$0xf]
        %v1585 = vld [vmem:[%s864 + $0x68] sm:$0xf]
        %v1586 = vld [vmem:[%s864 + $0x6c] sm:$0xf]
        %v1587 = vld [vmem:[%s864 + $0x70] sm:$0xf]
        %v1588 = vld [vmem:[%s864 + $0x74] sm:$0xf]
        %v1589 = vld [vmem:[%s864 + $0x78] sm:$0xf]
        %v1590 = vld [vmem:[%s864 + $0x7c] sm:$0xf]
        %v1591 = vld [vmem:[%s864 + $0x80] sm:$0xf]
        %v1592 = vld [vmem:[%s864 + $0x84] sm:$0xf]
        %v1593 = vld [vmem:[%s864 + $0x88] sm:$0xf]
        %v1594 = vld [vmem:[%s864 + $0x8c] sm:$0xf]
        %vm1595 = vsmask.f32 3328
        %vm1596 = vsmask.f32 7440
        %vm1597 = vmor %vm1595, %vm1596
        %v1599 = vshrl.u32 %v1559, 16
        %v1601 = vrot.slane %v1599, 4
        %v1602 = vshll.u32 %v1559, 16
        %v1604 = vrot.slane %v1602, 5
        %v1605 = vor.u32 %v1601, %v1604
        %v1606 = vrot.slane %v1605, 4
        %v1608 = vshll.u32 %v1560, 16
        %v1610 = vrot.slane %v1608, 5
        %v1611 = vsel %vm1597, %v1606, %v1610
        %v1612 = vshrl.u32 %v1560, 16
        %v1614 = vrot.slane %v1612, 4
        %v1615 = vor.u32 %v1614, %v1610
        %v1616 = vrot.slane %v1615, 4
        %v1618 = vshrl.u32 %v1561, 16
        %v1620 = vrot.slane %v1618, 4
        %v1621 = vshll.u32 %v1561, 16
        %v1623 = vrot.slane %v1621, 5
        %v1624 = vor.u32 %v1620, %v1623
        %v1625 = vrot.slane %v1624, 4
        %v1627 = vshll.u32 %v1562, 16
        %v1629 = vrot.slane %v1627, 5
        %v1630 = vsel %vm1597, %v1625, %v1629
        %v1631 = vshrl.u32 %v1562, 16
        %v1633 = vrot.slane %v1631, 4
        %v1634 = vor.u32 %v1633, %v1629
        %v1635 = vrot.slane %v1634, 4
        %v1637 = vshrl.u32 %v1563, 16
        %v1639 = vrot.slane %v1637, 4
        %v1640 = vshll.u32 %v1563, 16
        %v1642 = vrot.slane %v1640, 5
        %v1643 = vor.u32 %v1639, %v1642
        %v1644 = vrot.slane %v1643, 4
        %v1646 = vshll.u32 %v1564, 16
        %v1648 = vrot.slane %v1646, 5
        %v1649 = vsel %vm1597, %v1644, %v1648
        %v1650 = vshrl.u32 %v1564, 16
        %v1652 = vrot.slane %v1650, 4
        %v1653 = vor.u32 %v1652, %v1648
        %v1654 = vrot.slane %v1653, 4
        %v1656 = vshrl.u32 %v1565, 16
        %v1658 = vrot.slane %v1656, 4
        %v1659 = vshll.u32 %v1565, 16
        %v1661 = vrot.slane %v1659, 5
        %v1662 = vor.u32 %v1658, %v1661
        %v1663 = vrot.slane %v1662, 4
        %v1665 = vshll.u32 %v1566, 16
        %v1667 = vrot.slane %v1665, 5
        %v1668 = vsel %vm1597, %v1663, %v1667
        %v1669 = vshrl.u32 %v1566, 16
        %v1671 = vrot.slane %v1669, 4
        %v1672 = vor.u32 %v1671, %v1667
        %v1673 = vrot.slane %v1672, 4
        %v1675 = vshrl.u32 %v1567, 16
        %v1677 = vrot.slane %v1675, 4
        %v1678 = vshll.u32 %v1567, 16
        %v1680 = vrot.slane %v1678, 5
        %v1681 = vor.u32 %v1677, %v1680
        %v1682 = vrot.slane %v1681, 4
        %v1684 = vshll.u32 %v1568, 16
        %v1686 = vrot.slane %v1684, 5
        %v1687 = vsel %vm1597, %v1682, %v1686
        %v1688 = vshrl.u32 %v1568, 16
        %v1690 = vrot.slane %v1688, 4
        %v1691 = vor.u32 %v1690, %v1686
        %v1692 = vrot.slane %v1691, 4
        %v1694 = vshrl.u32 %v1569, 16
        %v1696 = vrot.slane %v1694, 4
        %v1697 = vshll.u32 %v1569, 16
        %v1699 = vrot.slane %v1697, 5
        %v1700 = vor.u32 %v1696, %v1699
        %v1701 = vrot.slane %v1700, 4
        %v1703 = vshll.u32 %v1570, 16
        %v1705 = vrot.slane %v1703, 5
        %v1706 = vsel %vm1597, %v1701, %v1705
        %v1707 = vshrl.u32 %v1570, 16
        %v1709 = vrot.slane %v1707, 4
        %v1710 = vor.u32 %v1709, %v1705
        %v1711 = vrot.slane %v1710, 4
        %v1713 = vshrl.u32 %v1571, 16
        %v1715 = vrot.slane %v1713, 4
        %v1716 = vshll.u32 %v1571, 16
        %v1718 = vrot.slane %v1716, 5
        %v1719 = vor.u32 %v1715, %v1718
        %v1720 = vrot.slane %v1719, 4
        %v1722 = vshll.u32 %v1572, 16
        %v1724 = vrot.slane %v1722, 5
        %v1725 = vsel %vm1597, %v1720, %v1724
        %v1726 = vshrl.u32 %v1572, 16
        %v1728 = vrot.slane %v1726, 4
        %v1729 = vor.u32 %v1728, %v1724
        %v1730 = vrot.slane %v1729, 4
        %v1732 = vshrl.u32 %v1573, 16
        %v1734 = vrot.slane %v1732, 4
        %v1735 = vshll.u32 %v1573, 16
        %v1737 = vrot.slane %v1735, 5
        %v1738 = vor.u32 %v1734, %v1737
        %v1739 = vrot.slane %v1738, 4
        %v1741 = vshll.u32 %v1574, 16
        %v1743 = vrot.slane %v1741, 5
        %v1744 = vsel %vm1597, %v1739, %v1743
        %v1745 = vshrl.u32 %v1574, 16
        %v1747 = vrot.slane %v1745, 4
        %v1748 = vor.u32 %v1747, %v1743
        %v1749 = vrot.slane %v1748, 4
        %v1751 = vshrl.u32 %v1575, 16
        %v1753 = vrot.slane %v1751, 4
        %v1754 = vshll.u32 %v1575, 16
        %v1756 = vrot.slane %v1754, 5
        %v1757 = vor.u32 %v1753, %v1756
        %v1758 = vrot.slane %v1757, 4
        %v1760 = vshll.u32 %v1576, 16
        %v1762 = vrot.slane %v1760, 5
        %v1763 = vsel %vm1597, %v1758, %v1762
        %v1764 = vshrl.u32 %v1576, 16
        %v1766 = vrot.slane %v1764, 4
        %v1767 = vor.u32 %v1766, %v1762
        %v1768 = vrot.slane %v1767, 4
        %v1770 = vshrl.u32 %v1577, 16
        %v1772 = vrot.slane %v1770, 4
        %v1773 = vshll.u32 %v1577, 16
        %v1775 = vrot.slane %v1773, 5
        %v1776 = vor.u32 %v1772, %v1775
        %v1777 = vrot.slane %v1776, 4
        %v1779 = vshll.u32 %v1578, 16
        %v1781 = vrot.slane %v1779, 5
        %v1782 = vsel %vm1597, %v1777, %v1781
        %v1783 = vshrl.u32 %v1578, 16
        %v1785 = vrot.slane %v1783, 4
        %v1786 = vor.u32 %v1785, %v1781
        %v1787 = vrot.slane %v1786, 4
        %v1789 = vshrl.u32 %v1579, 16
        %v1791 = vrot.slane %v1789, 4
        %v1792 = vshll.u32 %v1579, 16
        %v1794 = vrot.slane %v1792, 5
        %v1795 = vor.u32 %v1791, %v1794
        %v1796 = vrot.slane %v1795, 4
        %v1798 = vshll.u32 %v1580, 16
        %v1800 = vrot.slane %v1798, 5
        %v1801 = vsel %vm1597, %v1796, %v1800
        %v1802 = vshrl.u32 %v1580, 16
        %v1804 = vrot.slane %v1802, 4
        %v1805 = vor.u32 %v1804, %v1800
        %v1806 = vrot.slane %v1805, 4
        %v1808 = vshrl.u32 %v1581, 16
        %v1810 = vrot.slane %v1808, 4
        %v1811 = vshll.u32 %v1581, 16
        %v1813 = vrot.slane %v1811, 5
        %v1814 = vor.u32 %v1810, %v1813
        %v1815 = vrot.slane %v1814, 4
        %v1817 = vshll.u32 %v1582, 16
        %v1819 = vrot.slane %v1817, 5
        %v1820 = vsel %vm1597, %v1815, %v1819
        %v1821 = vshrl.u32 %v1582, 16
        %v1823 = vrot.slane %v1821, 4
        %v1824 = vor.u32 %v1823, %v1819
        %v1825 = vrot.slane %v1824, 4
        %v1827 = vshrl.u32 %v1583, 16
        %v1829 = vrot.slane %v1827, 4
        %v1830 = vshll.u32 %v1583, 16
        %v1832 = vrot.slane %v1830, 5
        %v1833 = vor.u32 %v1829, %v1832
        %v1834 = vrot.slane %v1833, 4
        %v1836 = vshll.u32 %v1584, 16
        %v1838 = vrot.slane %v1836, 5
        %v1839 = vsel %vm1597, %v1834, %v1838
        %v1840 = vshrl.u32 %v1584, 16
        %v1842 = vrot.slane %v1840, 4
        %v1843 = vor.u32 %v1842, %v1838
        %v1844 = vrot.slane %v1843, 4
        %v1846 = vshrl.u32 %v1585, 16
        %v1848 = vrot.slane %v1846, 4
        %v1849 = vshll.u32 %v1585, 16
        %v1851 = vrot.slane %v1849, 5
        %v1852 = vor.u32 %v1848, %v1851
        %v1853 = vrot.slane %v1852, 4
        %v1855 = vshll.u32 %v1586, 16
        %v1857 = vrot.slane %v1855, 5
        %v1858 = vsel %vm1597, %v1853, %v1857
        %v1859 = vshrl.u32 %v1586, 16
        %v1861 = vrot.slane %v1859, 4
        %v1862 = vor.u32 %v1861, %v1857
        %v1863 = vrot.slane %v1862, 4
        %v1865 = vshrl.u32 %v1587, 16
        %v1867 = vrot.slane %v1865, 4
        %v1868 = vshll.u32 %v1587, 16
        %v1870 = vrot.slane %v1868, 5
        %v1871 = vor.u32 %v1867, %v1870
        %v1872 = vrot.slane %v1871, 4
        %v1874 = vshll.u32 %v1588, 16
        %v1876 = vrot.slane %v1874, 5
        %v1877 = vsel %vm1597, %v1872, %v1876
        %v1878 = vshrl.u32 %v1588, 16
        %v1880 = vrot.slane %v1878, 4
        %v1881 = vor.u32 %v1880, %v1876
        %v1882 = vrot.slane %v1881, 4
        %v1884 = vshrl.u32 %v1589, 16
        %v1886 = vrot.slane %v1884, 4
        %v1887 = vshll.u32 %v1589, 16
        %v1889 = vrot.slane %v1887, 5
        %v1890 = vor.u32 %v1886, %v1889
        %v1891 = vrot.slane %v1890, 4
        %v1893 = vshll.u32 %v1590, 16
        %v1895 = vrot.slane %v1893, 5
        %v1896 = vsel %vm1597, %v1891, %v1895
        %v1897 = vshrl.u32 %v1590, 16
        %v1899 = vrot.slane %v1897, 4
        %v1900 = vor.u32 %v1899, %v1895
        %v1901 = vrot.slane %v1900, 4
        %v1903 = vshrl.u32 %v1591, 16
        %v1905 = vrot.slane %v1903, 4
        %v1906 = vshll.u32 %v1591, 16
        %v1908 = vrot.slane %v1906, 5
        %v1909 = vor.u32 %v1905, %v1908
        %v1910 = vrot.slane %v1909, 4
        %v1912 = vshll.u32 %v1592, 16
        %v1914 = vrot.slane %v1912, 5
        %v1915 = vsel %vm1597, %v1910, %v1914
        %v1916 = vshrl.u32 %v1592, 16
        %v1918 = vrot.slane %v1916, 4
        %v1919 = vor.u32 %v1918, %v1914
        %v1920 = vrot.slane %v1919, 4
        %v1922 = vshrl.u32 %v1593, 16
        %v1924 = vrot.slane %v1922, 4
        %v1925 = vshll.u32 %v1593, 16
        %v1927 = vrot.slane %v1925, 5
        %v1928 = vor.u32 %v1924, %v1927
        %v1929 = vrot.slane %v1928, 4
        %v1931 = vshll.u32 %v1594, 16
        %v1933 = vrot.slane %v1931, 5
        %v1934 = vsel %vm1597, %v1929, %v1933
        %v1935 = vshrl.u32 %v1594, 16
        %v1937 = vrot.slane %v1935, 4
        %v1938 = vor.u32 %v1937, %v1933
        %v1939 = vrot.slane %v1938, 4
        %s1976 = scalar_lea.vmem [#allocation3], 432
        %1977 = vst.msk [vmem:[%s1976] sm:$0xf] %vm865, %v1611
        %vm1978 = vmand %vm1484, %vm1595
        %v1979 = vld [vmem:[%s1976 + $0x4] sm:$0xf]
        %v1980 = vsel %vm1978, %v1616, %v1979
        %1981 = vst [vmem:[%s1976 + $0x4] sm:$0xf] %v1980
        %1982 = vst.msk [vmem:[%s1976 + $0x8] sm:$0xf] %vm865, %v1630
        %v1983 = vld [vmem:[%s1976 + $0xc] sm:$0xf]
        %v1984 = vsel %vm1978, %v1635, %v1983
        %1985 = vst [vmem:[%s1976 + $0xc] sm:$0xf] %v1984
        %1986 = vst.msk [vmem:[%s1976 + $0x10] sm:$0xf] %vm865, %v1649
        %v1987 = vld [vmem:[%s1976 + $0x14] sm:$0xf]
        %v1988 = vsel %vm1978, %v1654, %v1987
        %1989 = vst [vmem:[%s1976 + $0x14] sm:$0xf] %v1988
        %1990 = vst.msk [vmem:[%s1976 + $0x18] sm:$0xf] %vm865, %v1668
        %v1991 = vld [vmem:[%s1976 + $0x1c] sm:$0xf]
        %v1992 = vsel %vm1978, %v1673, %v1991
        %1993 = vst [vmem:[%s1976 + $0x1c] sm:$0xf] %v1992
        %1994 = vst.msk [vmem:[%s1976 + $0x20] sm:$0xf] %vm865, %v1687
        %v1995 = vld [vmem:[%s1976 + $0x24] sm:$0xf]
        %v1996 = vsel %vm1978, %v1692, %v1995
        %1997 = vst [vmem:[%s1976 + $0x24] sm:$0xf] %v1996
        %1998 = vst.msk [vmem:[%s1976 + $0x28] sm:$0xf] %vm865, %v1706
        %v1999 = vld [vmem:[%s1976 + $0x2c] sm:$0xf]
        %v2000 = vsel %vm1978, %v1711, %v1999
        %2001 = vst [vmem:[%s1976 + $0x2c] sm:$0xf] %v2000
        %2002 = vst.msk [vmem:[%s1976 + $0x30] sm:$0xf] %vm865, %v1725
        %v2003 = vld [vmem:[%s1976 + $0x34] sm:$0xf]
        %v2004 = vsel %vm1978, %v1730, %v2003
        %2005 = vst [vmem:[%s1976 + $0x34] sm:$0xf] %v2004
        %2006 = vst.msk [vmem:[%s1976 + $0x38] sm:$0xf] %vm865, %v1744
        %v2007 = vld [vmem:[%s1976 + $0x3c] sm:$0xf]
        %v2008 = vsel %vm1978, %v1749, %v2007
        %2009 = vst [vmem:[%s1976 + $0x3c] sm:$0xf] %v2008
        %2010 = vst.msk [vmem:[%s1976 + $0x40] sm:$0xf] %vm865, %v1763
        %v2011 = vld [vmem:[%s1976 + $0x44] sm:$0xf]
        %v2012 = vsel %vm1978, %v1768, %v2011
        %2013 = vst [vmem:[%s1976 + $0x44] sm:$0xf] %v2012
        %2014 = vst.msk [vmem:[%s1976 + $0x48] sm:$0xf] %vm865, %v1782
        %v2015 = vld [vmem:[%s1976 + $0x4c] sm:$0xf]
        %v2016 = vsel %vm1978, %v1787, %v2015
        %2017 = vst [vmem:[%s1976 + $0x4c] sm:$0xf] %v2016
        %2018 = vst.msk [vmem:[%s1976 + $0x50] sm:$0xf] %vm865, %v1801
        %v2019 = vld [vmem:[%s1976 + $0x54] sm:$0xf]
        %v2020 = vsel %vm1978, %v1806, %v2019
        %2021 = vst [vmem:[%s1976 + $0x54] sm:$0xf] %v2020
        %2022 = vst.msk [vmem:[%s1976 + $0x58] sm:$0xf] %vm865, %v1820
        %v2023 = vld [vmem:[%s1976 + $0x5c] sm:$0xf]
        %v2024 = vsel %vm1978, %v1825, %v2023
        %2025 = vst [vmem:[%s1976 + $0x5c] sm:$0xf] %v2024
        %2026 = vst.msk [vmem:[%s1976 + $0x60] sm:$0xf] %vm865, %v1839
        %v2027 = vld [vmem:[%s1976 + $0x64] sm:$0xf]
        %v2028 = vsel %vm1978, %v1844, %v2027
        %2029 = vst [vmem:[%s1976 + $0x64] sm:$0xf] %v2028
        %2030 = vst.msk [vmem:[%s1976 + $0x68] sm:$0xf] %vm865, %v1858
        %v2031 = vld [vmem:[%s1976 + $0x6c] sm:$0xf]
        %v2032 = vsel %vm1978, %v1863, %v2031
        %2033 = vst [vmem:[%s1976 + $0x6c] sm:$0xf] %v2032
        %2034 = vst.msk [vmem:[%s1976 + $0x70] sm:$0xf] %vm865, %v1877
        %v2035 = vld [vmem:[%s1976 + $0x74] sm:$0xf]
        %v2036 = vsel %vm1978, %v1882, %v2035
        %2037 = vst [vmem:[%s1976 + $0x74] sm:$0xf] %v2036
        %2038 = vst.msk [vmem:[%s1976 + $0x78] sm:$0xf] %vm865, %v1896
        %v2039 = vld [vmem:[%s1976 + $0x7c] sm:$0xf]
        %v2040 = vsel %vm1978, %v1901, %v2039
        %2041 = vst [vmem:[%s1976 + $0x7c] sm:$0xf] %v2040
        %2042 = vst.msk [vmem:[%s1976 + $0x80] sm:$0xf] %vm865, %v1915
        %v2043 = vld [vmem:[%s1976 + $0x84] sm:$0xf]
        %v2044 = vsel %vm1978, %v1920, %v2043
        %2045 = vst [vmem:[%s1976 + $0x84] sm:$0xf] %v2044
        %2046 = vst.msk [vmem:[%s1976 + $0x88] sm:$0xf] %vm865, %v1934
        %v2047 = vld [vmem:[%s1976 + $0x8c] sm:$0xf]
        %v2048 = vsel %vm1978, %v1939, %v2047
        %2049 = vst [vmem:[%s1976 + $0x8c] sm:$0xf] %v2048
        %vm2050 = vcmask 27651
        %vm2051 = vsmask.f32 7950
        %vm2052 = vmand %vm2050, %vm2051
        %v2053 = vld [vmem:[%s1976 + $0x4] sm:$0x8]
        %v2054 = vsel %vm2052, 0, %v2053
        %2055 = vst [vmem:[%s1976 + $0x4] sm:$0x8] %v2054
        %v2056 = vld [vmem:[%s1976 + $0xc] sm:$0x8]
        %v2057 = vsel %vm2052, 0, %v2056
        %2058 = vst [vmem:[%s1976 + $0xc] sm:$0x8] %v2057
        %v2059 = vld [vmem:[%s1976 + $0x14] sm:$0x8]
        %v2060 = vsel %vm2052, 0, %v2059
        %2061 = vst [vmem:[%s1976 + $0x14] sm:$0x8] %v2060
        %v2062 = vld [vmem:[%s1976 + $0x1c] sm:$0x8]
        %v2063 = vsel %vm2052, 0, %v2062
        %2064 = vst [vmem:[%s1976 + $0x1c] sm:$0x8] %v2063
        %v2065 = vld [vmem:[%s1976 + $0x24] sm:$0x8]
        %v2066 = vsel %vm2052, 0, %v2065
        %2067 = vst [vmem:[%s1976 + $0x24] sm:$0x8] %v2066
        %v2068 = vld [vmem:[%s1976 + $0x2c] sm:$0x8]
        %v2069 = vsel %vm2052, 0, %v2068
        %2070 = vst [vmem:[%s1976 + $0x2c] sm:$0x8] %v2069
        %v2071 = vld [vmem:[%s1976 + $0x34] sm:$0x8]
        %v2072 = vsel %vm2052, 0, %v2071
        %2073 = vst [vmem:[%s1976 + $0x34] sm:$0x8] %v2072
        %v2074 = vld [vmem:[%s1976 + $0x3c] sm:$0x8]
        %v2075 = vsel %vm2052, 0, %v2074
        %2076 = vst [vmem:[%s1976 + $0x3c] sm:$0x8] %v2075
        %v2077 = vld [vmem:[%s1976 + $0x44] sm:$0x8]
        %v2078 = vsel %vm2052, 0, %v2077
        %2079 = vst [vmem:[%s1976 + $0x44] sm:$0x8] %v2078
        %v2080 = vld [vmem:[%s1976 + $0x4c] sm:$0x8]
        %v2081 = vsel %vm2052, 0, %v2080
        %2082 = vst [vmem:[%s1976 + $0x4c] sm:$0x8] %v2081
        %v2083 = vld [vmem:[%s1976 + $0x54] sm:$0x8]
        %v2084 = vsel %vm2052, 0, %v2083
        %2085 = vst [vmem:[%s1976 + $0x54] sm:$0x8] %v2084
        %v2086 = vld [vmem:[%s1976 + $0x5c] sm:$0x8]
        %v2087 = vsel %vm2052, 0, %v2086
        %2088 = vst [vmem:[%s1976 + $0x5c] sm:$0x8] %v2087
        %v2089 = vld [vmem:[%s1976 + $0x64] sm:$0x8]
        %v2090 = vsel %vm2052, 0, %v2089
        %2091 = vst [vmem:[%s1976 + $0x64] sm:$0x8] %v2090
        %v2092 = vld [vmem:[%s1976 + $0x6c] sm:$0x8]
        %v2093 = vsel %vm2052, 0, %v2092
        %2094 = vst [vmem:[%s1976 + $0x6c] sm:$0x8] %v2093
        %v2095 = vld [vmem:[%s1976 + $0x74] sm:$0x8]
        %v2096 = vsel %vm2052, 0, %v2095
        %2097 = vst [vmem:[%s1976 + $0x74] sm:$0x8] %v2096
        %v2098 = vld [vmem:[%s1976 + $0x7c] sm:$0x8]
        %v2099 = vsel %vm2052, 0, %v2098
        %2100 = vst [vmem:[%s1976 + $0x7c] sm:$0x8] %v2099
        %v2101 = vld [vmem:[%s1976 + $0x84] sm:$0x8]
        %v2102 = vsel %vm2052, 0, %v2101
        %2103 = vst [vmem:[%s1976 + $0x84] sm:$0x8] %v2102
        %v2104 = vld [vmem:[%s1976 + $0x8c] sm:$0x8]
        %v2105 = vsel %vm2052, 0, %v2104
        %2106 = vst [vmem:[%s1976 + $0x8c] sm:$0x8] %v2105
        %p2107 = scmp.eq.s32.totalorder %s20, 0
        // Predicated region
        $region37: #{tpu_custom_call.1} parent=35 // pred_check
          %p2108 = pneg %p2107
        $region38: #{tpu_custom_call.1} parent=35 // pred_check_branch
          %2110 = sbr.rel (%p2108) target = $region40
        $region39: #{tpu_custom_call.1} parent=35 // pred_region
          %2111 = vst.msk [vmem:[#allocation3] sm:$0xf] %vm865, 0
          %2112 = vst.msk [vmem:[#allocation3 + $0x4] sm:$0xf] %vm865, 0
          %2113 = vst.msk [vmem:[#allocation3 + $0x90] sm:$0xf] %vm865, 0
          %2114 = vst.msk [vmem:[#allocation3 + $0x94] sm:$0xf] %vm865, 0
          %2115 = vst.msk [vmem:[#allocation3 + $0x120] sm:$0xf] %vm865, 0
          %2116 = vst.msk [vmem:[#allocation3 + $0x124] sm:$0xf] %vm865, 0
          %2117 = vst.msk [vmem:[#allocation3 + $0x1b0] sm:$0xf] %vm865, 0
          %2118 = vst.msk [vmem:[#allocation3 + $0x1b4] sm:$0xf] %vm865, 0
        $region40: #{tpu_custom_call.1} parent=35 // pred_fallthru
          _
        %p2119 = scmp.eq.s32.totalorder %s20, 1
        // Predicated region
        $region41: #{tpu_custom_call.1} parent=35 // pred_check
          %p2120 = pneg %p2119
        $region42: #{tpu_custom_call.1} parent=35 // pred_check_branch
          %2122 = sbr.rel (%p2120) target = $region44
        $region43: #{tpu_custom_call.1} parent=35 // pred_region
          %s2123 = scalar_lea.vmem [#allocation3], 136
          %2124 = vst.msk [vmem:[%s2123] sm:$0xf] %vm865, 0
          %2125 = vst.msk [vmem:[%s2123 + $0x4] sm:$0xf] %vm865, 0
          %2126 = vst.msk [vmem:[%s2123 + $0x90] sm:$0xf] %vm865, 0
          %2127 = vst.msk [vmem:[%s2123 + $0x94] sm:$0xf] %vm865, 0
          %2128 = vst.msk [vmem:[%s2123 + $0x120] sm:$0xf] %vm865, 0
          %2129 = vst.msk [vmem:[%s2123 + $0x124] sm:$0xf] %vm865, 0
          %2130 = vst.msk [vmem:[%s2123 + $0x1b0] sm:$0xf] %vm865, 0
          %2131 = vst.msk [vmem:[%s2123 + $0x1b4] sm:$0xf] %vm865, 0
        $region44: #{tpu_custom_call.1} parent=35 // pred_fallthru
          _
        %v2132 = vld [vmem:[#allocation3] sm:$0xf]
        %v2133 = vld [vmem:[#allocation3 + $0x4] sm:$0xf]
        %v2134 = vld [vmem:[#allocation3 + $0x8] sm:$0xf]
        %v2135 = vld [vmem:[#allocation3 + $0xc] sm:$0xf]
        %v2136 = vld [vmem:[#allocation3 + $0x10] sm:$0xf]
        %v2137 = vld [vmem:[#allocation3 + $0x14] sm:$0xf]
        %v2138 = vld [vmem:[#allocation3 + $0x18] sm:$0xf]
        %v2139 = vld [vmem:[#allocation3 + $0x1c] sm:$0xf]
        %v2140 = vld [vmem:[#allocation3 + $0x20] sm:$0xf]
        %v2141 = vld [vmem:[#allocation3 + $0x24] sm:$0xf]
        %v2142 = vld [vmem:[#allocation3 + $0x28] sm:$0xf]
        %v2143 = vld [vmem:[#allocation3 + $0x2c] sm:$0xf]
        %v2144 = vld [vmem:[#allocation3 + $0x30] sm:$0xf]
        %v2145 = vld [vmem:[#allocation3 + $0x34] sm:$0xf]
        %v2146 = vld [vmem:[#allocation3 + $0x38] sm:$0xf]
        %v2147 = vld [vmem:[#allocation3 + $0x3c] sm:$0xf]
        %v2148 = vld [vmem:[#allocation3 + $0x40] sm:$0xf]
        %v2149 = vld [vmem:[#allocation3 + $0x44] sm:$0xf]
        %v2150 = vld [vmem:[#allocation3 + $0x48] sm:$0xf]
        %v2151 = vld [vmem:[#allocation3 + $0x4c] sm:$0xf]
        %v2152 = vld [vmem:[#allocation3 + $0x50] sm:$0xf]
        %v2153 = vld [vmem:[#allocation3 + $0x54] sm:$0xf]
        %v2154 = vld [vmem:[#allocation3 + $0x58] sm:$0xf]
        %v2155 = vld [vmem:[#allocation3 + $0x5c] sm:$0xf]
        %v2156 = vld [vmem:[#allocation3 + $0x60] sm:$0xf]
        %v2157 = vld [vmem:[#allocation3 + $0x64] sm:$0xf]
        %v2158 = vld [vmem:[#allocation3 + $0x68] sm:$0xf]
        %v2159 = vld [vmem:[#allocation3 + $0x6c] sm:$0xf]
        %v2160 = vld [vmem:[#allocation3 + $0x70] sm:$0xf]
        %v2161 = vld [vmem:[#allocation3 + $0x74] sm:$0xf]
        %v2162 = vld [vmem:[#allocation3 + $0x78] sm:$0xf]
        %v2163 = vld [vmem:[#allocation3 + $0x7c] sm:$0xf]
        %v2164 = vld [vmem:[#allocation3 + $0x90] sm:$0xf]
        %v2165 = vld [vmem:[#allocation3 + $0x94] sm:$0xf]
        %v2166 = vld [vmem:[#allocation3 + $0x98] sm:$0xf]
        %v2167 = vld [vmem:[#allocation3 + $0x9c] sm:$0xf]
        %v2168 = vld [vmem:[#allocation3 + $0xa0] sm:$0xf]
        %v2169 = vld [vmem:[#allocation3 + $0xa4] sm:$0xf]
        %v2170 = vld [vmem:[#allocation3 + $0xa8] sm:$0xf]
        %v2171 = vld [vmem:[#allocation3 + $0xac] sm:$0xf]
        %v2172 = vld [vmem:[#allocation3 + $0xb0] sm:$0xf]
        %v2173 = vld [vmem:[#allocation3 + $0xb4] sm:$0xf]
        %v2174 = vld [vmem:[#allocation3 + $0xb8] sm:$0xf]
        %v2175 = vld [vmem:[#allocation3 + $0xbc] sm:$0xf]
        %v2176 = vld [vmem:[#allocation3 + $0xc0] sm:$0xf]
        %v2177 = vld [vmem:[#allocation3 + $0xc4] sm:$0xf]
        %v2178 = vld [vmem:[#allocation3 + $0xc8] sm:$0xf]
        %v2179 = vld [vmem:[#allocation3 + $0xcc] sm:$0xf]
        %v2180 = vld [vmem:[#allocation3 + $0xd0] sm:$0xf]
        %v2181 = vld [vmem:[#allocation3 + $0xd4] sm:$0xf]
        %v2182 = vld [vmem:[#allocation3 + $0xd8] sm:$0xf]
        %v2183 = vld [vmem:[#allocation3 + $0xdc] sm:$0xf]
        %v2184 = vld [vmem:[#allocation3 + $0xe0] sm:$0xf]
        %v2185 = vld [vmem:[#allocation3 + $0xe4] sm:$0xf]
        %v2186 = vld [vmem:[#allocation3 + $0xe8] sm:$0xf]
        %v2187 = vld [vmem:[#allocation3 + $0xec] sm:$0xf]
        %v2188 = vld [vmem:[#allocation3 + $0xf0] sm:$0xf]
        %v2189 = vld [vmem:[#allocation3 + $0xf4] sm:$0xf]
        %v2190 = vld [vmem:[#allocation3 + $0xf8] sm:$0xf]
        %v2191 = vld [vmem:[#allocation3 + $0xfc] sm:$0xf]
        %v2192 = vld [vmem:[#allocation3 + $0x100] sm:$0xf]
        %v2193 = vld [vmem:[#allocation3 + $0x104] sm:$0xf]
        %v2194 = vld [vmem:[#allocation3 + $0x108] sm:$0xf]
        %v2195 = vld [vmem:[#allocation3 + $0x10c] sm:$0xf]
        %v2196 = vld [vmem:[%s1] sm:$0x3]
        %v2261 = vunpack.c.l.b16 %v2132
        %v2262 = vunpack.c.l.b16 %v2133
        %v2263 = vunpack.c.l.b16 %v2134
        %v2264 = vunpack.c.l.b16 %v2135
        %v2265 = vunpack.c.l.b16 %v2136
        %v2266 = vunpack.c.l.b16 %v2137
        %v2267 = vunpack.c.l.b16 %v2138
        %v2268 = vunpack.c.l.b16 %v2139
        %v2269 = vunpack.c.l.b16 %v2140
        %v2270 = vunpack.c.l.b16 %v2141
        %v2271 = vunpack.c.l.b16 %v2142
        %v2272 = vunpack.c.l.b16 %v2143
        %v2273 = vunpack.c.l.b16 %v2144
        %v2274 = vunpack.c.l.b16 %v2145
        %v2275 = vunpack.c.l.b16 %v2146
        %v2276 = vunpack.c.l.b16 %v2147
        %v2277 = vunpack.c.l.b16 %v2148
        %v2278 = vunpack.c.l.b16 %v2149
        %v2279 = vunpack.c.l.b16 %v2150
        %v2280 = vunpack.c.l.b16 %v2151
        %v2281 = vunpack.c.l.b16 %v2152
        %v2282 = vunpack.c.l.b16 %v2153
        %v2283 = vunpack.c.l.b16 %v2154
        %v2284 = vunpack.c.l.b16 %v2155
        %v2285 = vunpack.c.l.b16 %v2156
        %v2286 = vunpack.c.l.b16 %v2157
        %v2287 = vunpack.c.l.b16 %v2158
        %v2288 = vunpack.c.l.b16 %v2159
        %v2289 = vunpack.c.l.b16 %v2160
        %v2290 = vunpack.c.l.b16 %v2161
        %v2291 = vunpack.c.l.b16 %v2162
        %v2292 = vunpack.c.l.b16 %v2163
        %v2293 = vunpack.c.l.b16 %v2164
        %v2294 = vunpack.c.l.b16 %v2165
        %v2295 = vunpack.c.l.b16 %v2166
        %v2296 = vunpack.c.l.b16 %v2167
        %v2297 = vunpack.c.l.b16 %v2168
        %v2298 = vunpack.c.l.b16 %v2169
        %v2299 = vunpack.c.l.b16 %v2170
        %v2300 = vunpack.c.l.b16 %v2171
        %v2301 = vunpack.c.l.b16 %v2172
        %v2302 = vunpack.c.l.b16 %v2173
        %v2303 = vunpack.c.l.b16 %v2174
        %v2304 = vunpack.c.l.b16 %v2175
        %v2305 = vunpack.c.l.b16 %v2176
        %v2306 = vunpack.c.l.b16 %v2177
        %v2307 = vunpack.c.l.b16 %v2178
        %v2308 = vunpack.c.l.b16 %v2179
        %v2309 = vunpack.c.l.b16 %v2180
        %v2310 = vunpack.c.l.b16 %v2181
        %v2311 = vunpack.c.l.b16 %v2182
        %v2312 = vunpack.c.l.b16 %v2183
        %v2313 = vunpack.c.l.b16 %v2184
        %v2314 = vunpack.c.l.b16 %v2185
        %v2315 = vunpack.c.l.b16 %v2186
        %v2316 = vunpack.c.l.b16 %v2187
        %v2317 = vunpack.c.l.b16 %v2188
        %v2318 = vunpack.c.l.b16 %v2189
        %v2319 = vunpack.c.l.b16 %v2190
        %v2320 = vunpack.c.l.b16 %v2191
        %v2321 = vunpack.c.l.b16 %v2192
        %v2322 = vunpack.c.l.b16 %v2193
        %v2323 = vunpack.c.l.b16 %v2194
        %v2324 = vunpack.c.l.b16 %v2195
        %v2325 = vpack.c.b16 %v2262, %v2261
        %v2326 = vpack.c.b16 %v2264, %v2263
        %v2327 = vpack.c.b16 %v2266, %v2265
        %v2328 = vpack.c.b16 %v2268, %v2267
        %v2329 = vpack.c.b16 %v2270, %v2269
        %v2330 = vpack.c.b16 %v2272, %v2271
        %v2331 = vpack.c.b16 %v2274, %v2273
        %v2332 = vpack.c.b16 %v2276, %v2275
        %v2333 = vpack.c.b16 %v2278, %v2277
        %v2334 = vpack.c.b16 %v2280, %v2279
        %v2335 = vpack.c.b16 %v2282, %v2281
        %v2336 = vpack.c.b16 %v2284, %v2283
        %v2337 = vpack.c.b16 %v2286, %v2285
        %v2338 = vpack.c.b16 %v2288, %v2287
        %v2339 = vpack.c.b16 %v2290, %v2289
        %v2340 = vpack.c.b16 %v2292, %v2291
        %v2341 = vpack.c.b16 %v2294, %v2293
        %v2342 = vpack.c.b16 %v2296, %v2295
        %v2343 = vpack.c.b16 %v2298, %v2297
        %v2344 = vpack.c.b16 %v2300, %v2299
        %v2345 = vpack.c.b16 %v2302, %v2301
        %v2346 = vpack.c.b16 %v2304, %v2303
        %v2347 = vpack.c.b16 %v2306, %v2305
        %v2348 = vpack.c.b16 %v2308, %v2307
        %v2349 = vpack.c.b16 %v2310, %v2309
        %v2350 = vpack.c.b16 %v2312, %v2311
        %v2351 = vpack.c.b16 %v2314, %v2313
        %v2352 = vpack.c.b16 %v2316, %v2315
        %v2353 = vpack.c.b16 %v2318, %v2317
        %v2354 = vpack.c.b16 %v2320, %v2319
        %v2355 = vpack.c.b16 %v2322, %v2321
        %v2356 = vpack.c.b16 %v2324, %v2323
        %v2358 = vsel %vm340, %v2325, 0
        %v2361 = vsel %vm340, %v2326, 0
        %v2364 = vsel %vm340, %v2327, 0
        %v2367 = vsel %vm340, %v2328, 0
        %v2370 = vsel %vm340, %v2329, 0
        %v2373 = vsel %vm340, %v2330, 0
        %v2376 = vsel %vm340, %v2331, 0
        %v2379 = vsel %vm340, %v2332, 0
        %v2382 = vsel %vm340, %v2333, 0
        %v2385 = vsel %vm340, %v2334, 0
        %v2388 = vsel %vm340, %v2335, 0
        %v2391 = vsel %vm340, %v2336, 0
        %v2394 = vsel %vm340, %v2337, 0
        %v2397 = vsel %vm340, %v2338, 0
        %v2400 = vsel %vm340, %v2339, 0
        %v2403 = vsel %vm340, %v2340, 0
        %v2406 = vsel %vm340, %v2341, 0
        %v2409 = vsel %vm340, %v2342, 0
        %v2412 = vsel %vm340, %v2343, 0
        %v2415 = vsel %vm340, %v2344, 0
        %v2418 = vsel %vm340, %v2345, 0
        %v2421 = vsel %vm340, %v2346, 0
        %v2424 = vsel %vm340, %v2347, 0
        %v2427 = vsel %vm340, %v2348, 0
        %v2430 = vsel %vm340, %v2349, 0
        %v2433 = vsel %vm340, %v2350, 0
        %v2436 = vsel %vm340, %v2351, 0
        %v2439 = vsel %vm340, %v2352, 0
        %v2442 = vsel %vm340, %v2353, 0
        %v2445 = vsel %vm340, %v2354, 0
        %v2448 = vsel %vm340, %v2355, 0
        %v2451 = vsel %vm340, %v2356, 0
        %vm2453 = vcmask 1041408
        %v2455 = vsel %vm2453, %v2196, 0
        %2457 = vmatprep.subr.bf16.mxu0 0
        %2458 = vmatpush1.bf16.msra.mxu0 0
        %2459 = vmatprep.subr.bf16.mxu0 0
        %2460 = vmatpush1.bf16.msra.mxu0 0
        %2461 = vmatprep.subr.bf16.mxu0 0
        %2462 = vmatpush1.bf16.msra.mxu0 0
        %2463 = vmatprep.subr.bf16.mxu0 0
        %2464 = vmatpush1.bf16.msra.mxu0 0
        %2465 = vmatprep.subr.bf16.mxu0 0
        %2466 = vmatpush1.bf16.msra.mxu0 0
        %2467 = vmatprep.subr.bf16.mxu0 0
        %2468 = vmatpush1.bf16.msra.mxu0 0
        %2469 = vmatprep.subr.bf16.mxu0 0
        %2470 = vmatpush1.bf16.msra.mxu0 0
        %2471 = vmatprep.subr.bf16.mxu0 0
        %2472 = vmatpush1.bf16.msra.mxu0 %v2455
        %2473 = vmatprep.subr.bf16.mxu0 0
        %2474 = vmatpush2.bf16.msra.mxu0 0
        %2475 = vmatprep.subr.bf16.mxu0 0
        %2476 = vmatpush2.bf16.msra.mxu0 0
        %2477 = vmatprep.subr.bf16.mxu0 0
        %2478 = vmatpush2.bf16.msra.mxu0 0
        %2479 = vmatprep.subr.bf16.mxu0 0
        %2480 = vmatpush2.bf16.msra.mxu0 0
        %2481 = vmatprep.subr.bf16.mxu0 0
        %2482 = vmatpush2.bf16.msra.mxu0 0
        %2483 = vmatprep.subr.bf16.mxu0 0
        %2484 = vmatpush2.bf16.msra.mxu0 0
        %2485 = vmatprep.subr.bf16.mxu0 0
        %2486 = vmatpush2.bf16.msra.mxu0 0
        %2487 = vmatprep.subr.bf16.mxu0 0
        %2488 = vmatpush2.bf16.msra.mxu0 0
        %2489 = vmatprep.mubr.bf16.mxu0 0
        %2490 = vmatmul.mubr.bf16.gmra.mxu0 %v2358
        %v2491 = vpop.f32.mrf.mxu0
        %v2492 = vadd.f32 0.0, %v2491
        %v2493 = vpop.f32.mrf.mxu0
        %v2494 = vpop.f32.mrf.mxu0
        %v2495 = vadd.f32 0.0, %v2494
        %v2496 = vpop.f32.mrf.mxu0
        %2497 = vmatprep.mubr.bf16.mxu0 0
        %2498 = vmatmul.mubr.bf16.gmra.mxu0 %v2361
        %v2499 = vpop.f32.mrf.mxu0
        %v2500 = vadd.f32 0.0, %v2499
        %v2501 = vpop.f32.mrf.mxu0
        %v2502 = vpop.f32.mrf.mxu0
        %v2503 = vadd.f32 0.0, %v2502
        %v2504 = vpop.f32.mrf.mxu0
        %2505 = vmatprep.mubr.bf16.mxu0 0
        %2506 = vmatmul.mubr.bf16.gmra.mxu0 %v2364
        %v2507 = vpop.f32.mrf.mxu0
        %v2508 = vadd.f32 0.0, %v2507
        %v2509 = vpop.f32.mrf.mxu0
        %v2510 = vpop.f32.mrf.mxu0
        %v2511 = vadd.f32 0.0, %v2510
        %v2512 = vpop.f32.mrf.mxu0
        %2513 = vmatprep.mubr.bf16.mxu0 0
        %2514 = vmatmul.mubr.bf16.gmra.mxu0 %v2367
        %v2515 = vpop.f32.mrf.mxu0
        %v2516 = vadd.f32 0.0, %v2515
        %v2517 = vpop.f32.mrf.mxu0
        %v2518 = vpop.f32.mrf.mxu0
        %v2519 = vadd.f32 0.0, %v2518
        %v2520 = vpop.f32.mrf.mxu0
        %2521 = vmatprep.mubr.bf16.mxu0 0
        %2522 = vmatmul.mubr.bf16.gmra.mxu0 %v2370
        %v2523 = vpop.f32.mrf.mxu0
        %v2524 = vadd.f32 0.0, %v2523
        %v2525 = vpop.f32.mrf.mxu0
        %v2526 = vpop.f32.mrf.mxu0
        %v2527 = vadd.f32 0.0, %v2526
        %v2528 = vpop.f32.mrf.mxu0
        %2529 = vmatprep.mubr.bf16.mxu0 0
        %2530 = vmatmul.mubr.bf16.gmra.mxu0 %v2373
        %v2531 = vpop.f32.mrf.mxu0
        %v2532 = vadd.f32 0.0, %v2531
        %v2533 = vpop.f32.mrf.mxu0
        %v2534 = vpop.f32.mrf.mxu0
        %v2535 = vadd.f32 0.0, %v2534
        %v2536 = vpop.f32.mrf.mxu0
        %2537 = vmatprep.mubr.bf16.mxu0 0
        %2538 = vmatmul.mubr.bf16.gmra.mxu0 %v2376
        %v2539 = vpop.f32.mrf.mxu0
        %v2540 = vadd.f32 0.0, %v2539
        %v2541 = vpop.f32.mrf.mxu0
        %v2542 = vpop.f32.mrf.mxu0
        %v2543 = vadd.f32 0.0, %v2542
        %v2544 = vpop.f32.mrf.mxu0
        %2545 = vmatprep.mubr.bf16.mxu0 0
        %2546 = vmatmul.mubr.bf16.gmra.mxu0 %v2379
        %v2547 = vpop.f32.mrf.mxu0
        %v2548 = vadd.f32 0.0, %v2547
        %v2549 = vpop.f32.mrf.mxu0
        %v2550 = vpop.f32.mrf.mxu0
        %v2551 = vadd.f32 0.0, %v2550
        %v2552 = vpop.f32.mrf.mxu0
        %2553 = vmatprep.mubr.bf16.mxu0 0
        %2554 = vmatmul.mubr.bf16.gmra.mxu0 %v2382
        %v2555 = vpop.f32.mrf.mxu0
        %v2556 = vadd.f32 0.0, %v2555
        %v2557 = vpop.f32.mrf.mxu0
        %v2558 = vpop.f32.mrf.mxu0
        %v2559 = vadd.f32 0.0, %v2558
        %v2560 = vpop.f32.mrf.mxu0
        %2561 = vmatprep.mubr.bf16.mxu0 0
        %2562 = vmatmul.mubr.bf16.gmra.mxu0 %v2385
        %v2563 = vpop.f32.mrf.mxu0
        %v2564 = vadd.f32 0.0, %v2563
        %v2565 = vpop.f32.mrf.mxu0
        %v2566 = vpop.f32.mrf.mxu0
        %v2567 = vadd.f32 0.0, %v2566
        %v2568 = vpop.f32.mrf.mxu0
        %2569 = vmatprep.mubr.bf16.mxu0 0
        %2570 = vmatmul.mubr.bf16.gmra.mxu0 %v2388
        %v2571 = vpop.f32.mrf.mxu0
        %v2572 = vadd.f32 0.0, %v2571
        %v2573 = vpop.f32.mrf.mxu0
        %v2574 = vpop.f32.mrf.mxu0
        %v2575 = vadd.f32 0.0, %v2574
        %v2576 = vpop.f32.mrf.mxu0
        %2577 = vmatprep.mubr.bf16.mxu0 0
        %2578 = vmatmul.mubr.bf16.gmra.mxu0 %v2391
        %v2579 = vpop.f32.mrf.mxu0
        %v2580 = vadd.f32 0.0, %v2579
        %v2581 = vpop.f32.mrf.mxu0
        %v2582 = vpop.f32.mrf.mxu0
        %v2583 = vadd.f32 0.0, %v2582
        %v2584 = vpop.f32.mrf.mxu0
        %2585 = vmatprep.mubr.bf16.mxu0 0
        %2586 = vmatmul.mubr.bf16.gmra.mxu0 %v2394
        %v2587 = vpop.f32.mrf.mxu0
        %v2588 = vadd.f32 0.0, %v2587
        %v2589 = vpop.f32.mrf.mxu0
        %v2590 = vpop.f32.mrf.mxu0
        %v2591 = vadd.f32 0.0, %v2590
        %v2592 = vpop.f32.mrf.mxu0
        %2593 = vmatprep.mubr.bf16.mxu0 0
        %2594 = vmatmul.mubr.bf16.gmra.mxu0 %v2397
        %v2595 = vpop.f32.mrf.mxu0
        %v2596 = vadd.f32 0.0, %v2595
        %v2597 = vpop.f32.mrf.mxu0
        %v2598 = vpop.f32.mrf.mxu0
        %v2599 = vadd.f32 0.0, %v2598
        %v2600 = vpop.f32.mrf.mxu0
        %2601 = vmatprep.mubr.bf16.mxu0 0
        %2602 = vmatmul.mubr.bf16.gmra.mxu0 %v2400
        %v2603 = vpop.f32.mrf.mxu0
        %v2604 = vadd.f32 0.0, %v2603
        %v2605 = vpop.f32.mrf.mxu0
        %v2606 = vpop.f32.mrf.mxu0
        %v2607 = vadd.f32 0.0, %v2606
        %v2608 = vpop.f32.mrf.mxu0
        %2609 = vmatprep.mubr.bf16.mxu0 0
        %2610 = vmatmul.mubr.bf16.gmra.mxu0 %v2403
        %v2611 = vpop.f32.mrf.mxu0
        %v2612 = vadd.f32 0.0, %v2611
        %v2613 = vpop.f32.mrf.mxu0
        %v2614 = vpop.f32.mrf.mxu0
        %v2615 = vadd.f32 0.0, %v2614
        %v2616 = vpop.f32.mrf.mxu0
        %2617 = vmatprep.mubr.bf16.mxu0 0
        %2618 = vmatmul.mubr.bf16.gmra.mxu0 %v2406
        %v2619 = vpop.f32.mrf.mxu0
        %v2620 = vadd.f32 0.0, %v2619
        %v2621 = vpop.f32.mrf.mxu0
        %v2622 = vpop.f32.mrf.mxu0
        %v2623 = vadd.f32 0.0, %v2622
        %v2624 = vpop.f32.mrf.mxu0
        %2625 = vmatprep.mubr.bf16.mxu0 0
        %2626 = vmatmul.mubr.bf16.gmra.mxu0 %v2409
        %v2627 = vpop.f32.mrf.mxu0
        %v2628 = vadd.f32 0.0, %v2627
        %v2629 = vpop.f32.mrf.mxu0
        %v2630 = vpop.f32.mrf.mxu0
        %v2631 = vadd.f32 0.0, %v2630
        %v2632 = vpop.f32.mrf.mxu0
        %2633 = vmatprep.mubr.bf16.mxu0 0
        %2634 = vmatmul.mubr.bf16.gmra.mxu0 %v2412
        %v2635 = vpop.f32.mrf.mxu0
        %v2636 = vadd.f32 0.0, %v2635
        %v2637 = vpop.f32.mrf.mxu0
        %v2638 = vpop.f32.mrf.mxu0
        %v2639 = vadd.f32 0.0, %v2638
        %v2640 = vpop.f32.mrf.mxu0
        %2641 = vmatprep.mubr.bf16.mxu0 0
        %2642 = vmatmul.mubr.bf16.gmra.mxu0 %v2415
        %v2643 = vpop.f32.mrf.mxu0
        %v2644 = vadd.f32 0.0, %v2643
        %v2645 = vpop.f32.mrf.mxu0
        %v2646 = vpop.f32.mrf.mxu0
        %v2647 = vadd.f32 0.0, %v2646
        %v2648 = vpop.f32.mrf.mxu0
        %2649 = vmatprep.mubr.bf16.mxu0 0
        %2650 = vmatmul.mubr.bf16.gmra.mxu0 %v2418
        %v2651 = vpop.f32.mrf.mxu0
        %v2652 = vadd.f32 0.0, %v2651
        %v2653 = vpop.f32.mrf.mxu0
        %v2654 = vpop.f32.mrf.mxu0
        %v2655 = vadd.f32 0.0, %v2654
        %v2656 = vpop.f32.mrf.mxu0
        %2657 = vmatprep.mubr.bf16.mxu0 0
        %2658 = vmatmul.mubr.bf16.gmra.mxu0 %v2421
        %v2659 = vpop.f32.mrf.mxu0
        %v2660 = vadd.f32 0.0, %v2659
        %v2661 = vpop.f32.mrf.mxu0
        %v2662 = vpop.f32.mrf.mxu0
        %v2663 = vadd.f32 0.0, %v2662
        %v2664 = vpop.f32.mrf.mxu0
        %2665 = vmatprep.mubr.bf16.mxu0 0
        %2666 = vmatmul.mubr.bf16.gmra.mxu0 %v2424
        %v2667 = vpop.f32.mrf.mxu0
        %v2668 = vadd.f32 0.0, %v2667
        %v2669 = vpop.f32.mrf.mxu0
        %v2670 = vpop.f32.mrf.mxu0
        %v2671 = vadd.f32 0.0, %v2670
        %v2672 = vpop.f32.mrf.mxu0
        %2673 = vmatprep.mubr.bf16.mxu0 0
        %2674 = vmatmul.mubr.bf16.gmra.mxu0 %v2427
        %v2675 = vpop.f32.mrf.mxu0
        %v2676 = vadd.f32 0.0, %v2675
        %v2677 = vpop.f32.mrf.mxu0
        %v2678 = vpop.f32.mrf.mxu0
        %v2679 = vadd.f32 0.0, %v2678
        %v2680 = vpop.f32.mrf.mxu0
        %2681 = vmatprep.mubr.bf16.mxu0 0
        %2682 = vmatmul.mubr.bf16.gmra.mxu0 %v2430
        %v2683 = vpop.f32.mrf.mxu0
        %v2684 = vadd.f32 0.0, %v2683
        %v2685 = vpop.f32.mrf.mxu0
        %v2686 = vpop.f32.mrf.mxu0
        %v2687 = vadd.f32 0.0, %v2686
        %v2688 = vpop.f32.mrf.mxu0
        %2689 = vmatprep.mubr.bf16.mxu0 0
        %2690 = vmatmul.mubr.bf16.gmra.mxu0 %v2433
        %v2691 = vpop.f32.mrf.mxu0
        %v2692 = vadd.f32 0.0, %v2691
        %v2693 = vpop.f32.mrf.mxu0
        %v2694 = vpop.f32.mrf.mxu0
        %v2695 = vadd.f32 0.0, %v2694
        %v2696 = vpop.f32.mrf.mxu0
        %2697 = vmatprep.mubr.bf16.mxu0 0
        %2698 = vmatmul.mubr.bf16.gmra.mxu0 %v2436
        %v2699 = vpop.f32.mrf.mxu0
        %v2700 = vadd.f32 0.0, %v2699
        %v2701 = vpop.f32.mrf.mxu0
        %v2702 = vpop.f32.mrf.mxu0
        %v2703 = vadd.f32 0.0, %v2702
        %v2704 = vpop.f32.mrf.mxu0
        %2705 = vmatprep.mubr.bf16.mxu0 0
        %2706 = vmatmul.mubr.bf16.gmra.mxu0 %v2439
        %v2707 = vpop.f32.mrf.mxu0
        %v2708 = vadd.f32 0.0, %v2707
        %v2709 = vpop.f32.mrf.mxu0
        %v2710 = vpop.f32.mrf.mxu0
        %v2711 = vadd.f32 0.0, %v2710
        %v2712 = vpop.f32.mrf.mxu0
        %2713 = vmatprep.mubr.bf16.mxu0 0
        %2714 = vmatmul.mubr.bf16.gmra.mxu0 %v2442
        %v2715 = vpop.f32.mrf.mxu0
        %v2716 = vadd.f32 0.0, %v2715
        %v2717 = vpop.f32.mrf.mxu0
        %v2718 = vpop.f32.mrf.mxu0
        %v2719 = vadd.f32 0.0, %v2718
        %v2720 = vpop.f32.mrf.mxu0
        %2721 = vmatprep.mubr.bf16.mxu0 0
        %2722 = vmatmul.mubr.bf16.gmra.mxu0 %v2445
        %v2723 = vpop.f32.mrf.mxu0
        %v2724 = vadd.f32 0.0, %v2723
        %v2725 = vpop.f32.mrf.mxu0
        %v2726 = vpop.f32.mrf.mxu0
        %v2727 = vadd.f32 0.0, %v2726
        %v2728 = vpop.f32.mrf.mxu0
        %2729 = vmatprep.mubr.bf16.mxu0 0
        %2730 = vmatmul.mubr.bf16.gmra.mxu0 %v2448
        %v2731 = vpop.f32.mrf.mxu0
        %v2732 = vadd.f32 0.0, %v2731
        %v2733 = vpop.f32.mrf.mxu0
        %v2734 = vpop.f32.mrf.mxu0
        %v2735 = vadd.f32 0.0, %v2734
        %v2736 = vpop.f32.mrf.mxu0
        %2737 = vmatprep.mubr.bf16.mxu0 0
        %2738 = vmatmul.mubr.bf16.gmra.mxu0 %v2451
        %v2739 = vpop.f32.mrf.mxu0
        %v2740 = vadd.f32 0.0, %v2739
        %v2741 = vpop.f32.mrf.mxu0
        %v2742 = vpop.f32.mrf.mxu0
        %v2743 = vadd.f32 0.0, %v2742
        %v2744 = vpop.f32.mrf.mxu0
        %2745 = vdwg.mxu0
        %vm2746 = vcmask 64512
        %2747 = vst.msk [vmem:[#allocation4] sm:$0xff] %vm2746, %v2492
        %2748 = vst.msk [vmem:[#allocation4 + $0x8] sm:$0xff] %vm2746, %v2495
        %2749 = vst.msk [vmem:[#allocation4 + $0x10] sm:$0xff] %vm2746, %v2500
        %2750 = vst.msk [vmem:[#allocation4 + $0x18] sm:$0xff] %vm2746, %v2503
        %2751 = vst.msk [vmem:[#allocation4 + $0x20] sm:$0xff] %vm2746, %v2508
        %2752 = vst.msk [vmem:[#allocation4 + $0x28] sm:$0xff] %vm2746, %v2511
        %2753 = vst.msk [vmem:[#allocation4 + $0x30] sm:$0xff] %vm2746, %v2516
        %2754 = vst.msk [vmem:[#allocation4 + $0x38] sm:$0xff] %vm2746, %v2519
        %2755 = vst.msk [vmem:[#allocation4 + $0x40] sm:$0xff] %vm2746, %v2524
        %2756 = vst.msk [vmem:[#allocation4 + $0x48] sm:$0xff] %vm2746, %v2527
        %2757 = vst.msk [vmem:[#allocation4 + $0x50] sm:$0xff] %vm2746, %v2532
        %2758 = vst.msk [vmem:[#allocation4 + $0x58] sm:$0xff] %vm2746, %v2535
        %2759 = vst.msk [vmem:[#allocation4 + $0x60] sm:$0xff] %vm2746, %v2540
        %2760 = vst.msk [vmem:[#allocation4 + $0x68] sm:$0xff] %vm2746, %v2543
        %2761 = vst.msk [vmem:[#allocation4 + $0x70] sm:$0xff] %vm2746, %v2548
        %2762 = vst.msk [vmem:[#allocation4 + $0x78] sm:$0xff] %vm2746, %v2551
        %2763 = vst.msk [vmem:[#allocation4 + $0x80] sm:$0xff] %vm2746, %v2556
        %2764 = vst.msk [vmem:[#allocation4 + $0x88] sm:$0xff] %vm2746, %v2559
        %2765 = vst.msk [vmem:[#allocation4 + $0x90] sm:$0xff] %vm2746, %v2564
        %2766 = vst.msk [vmem:[#allocation4 + $0x98] sm:$0xff] %vm2746, %v2567
        %2767 = vst.msk [vmem:[#allocation4 + $0xa0] sm:$0xff] %vm2746, %v2572
        %2768 = vst.msk [vmem:[#allocation4 + $0xa8] sm:$0xff] %vm2746, %v2575
        %2769 = vst.msk [vmem:[#allocation4 + $0xb0] sm:$0xff] %vm2746, %v2580
        %2770 = vst.msk [vmem:[#allocation4 + $0xb8] sm:$0xff] %vm2746, %v2583
        %2771 = vst.msk [vmem:[#allocation4 + $0xc0] sm:$0xff] %vm2746, %v2588
        %2772 = vst.msk [vmem:[#allocation4 + $0xc8] sm:$0xff] %vm2746, %v2591
        %2773 = vst.msk [vmem:[#allocation4 + $0xd0] sm:$0xff] %vm2746, %v2596
        %2774 = vst.msk [vmem:[#allocation4 + $0xd8] sm:$0xff] %vm2746, %v2599
        %2775 = vst.msk [vmem:[#allocation4 + $0xe0] sm:$0xff] %vm2746, %v2604
        %2776 = vst.msk [vmem:[#allocation4 + $0xe8] sm:$0xff] %vm2746, %v2607
        %2777 = vst.msk [vmem:[#allocation4 + $0xf0] sm:$0xff] %vm2746, %v2612
        %2778 = vst.msk [vmem:[#allocation4 + $0xf8] sm:$0xff] %vm2746, %v2615
        %2779 = vst.msk [vmem:[#allocation4 + $0x100] sm:$0xff] %vm2746, %v2620
        %2780 = vst.msk [vmem:[#allocation4 + $0x108] sm:$0xff] %vm2746, %v2623
        %2781 = vst.msk [vmem:[#allocation4 + $0x110] sm:$0xff] %vm2746, %v2628
        %2782 = vst.msk [vmem:[#allocation4 + $0x118] sm:$0xff] %vm2746, %v2631
        %2783 = vst.msk [vmem:[#allocation4 + $0x120] sm:$0xff] %vm2746, %v2636
        %2784 = vst.msk [vmem:[#allocation4 + $0x128] sm:$0xff] %vm2746, %v2639
        %2785 = vst.msk [vmem:[#allocation4 + $0x130] sm:$0xff] %vm2746, %v2644
        %2786 = vst.msk [vmem:[#allocation4 + $0x138] sm:$0xff] %vm2746, %v2647
        %2787 = vst.msk [vmem:[#allocation4 + $0x140] sm:$0xff] %vm2746, %v2652
        %2788 = vst.msk [vmem:[#allocation4 + $0x148] sm:$0xff] %vm2746, %v2655
        %2789 = vst.msk [vmem:[#allocation4 + $0x150] sm:$0xff] %vm2746, %v2660
        %2790 = vst.msk [vmem:[#allocation4 + $0x158] sm:$0xff] %vm2746, %v2663
        %2791 = vst.msk [vmem:[#allocation4 + $0x160] sm:$0xff] %vm2746, %v2668
        %2792 = vst.msk [vmem:[#allocation4 + $0x168] sm:$0xff] %vm2746, %v2671
        %2793 = vst.msk [vmem:[#allocation4 + $0x170] sm:$0xff] %vm2746, %v2676
        %2794 = vst.msk [vmem:[#allocation4 + $0x178] sm:$0xff] %vm2746, %v2679
        %2795 = vst.msk [vmem:[#allocation4 + $0x180] sm:$0xff] %vm2746, %v2684
        %2796 = vst.msk [vmem:[#allocation4 + $0x188] sm:$0xff] %vm2746, %v2687
        %2797 = vst.msk [vmem:[#allocation4 + $0x190] sm:$0xff] %vm2746, %v2692
        %2798 = vst.msk [vmem:[#allocation4 + $0x198] sm:$0xff] %vm2746, %v2695
        %2799 = vst.msk [vmem:[#allocation4 + $0x1a0] sm:$0xff] %vm2746, %v2700
        %2800 = vst.msk [vmem:[#allocation4 + $0x1a8] sm:$0xff] %vm2746, %v2703
        %2801 = vst.msk [vmem:[#allocation4 + $0x1b0] sm:$0xff] %vm2746, %v2708
        %2802 = vst.msk [vmem:[#allocation4 + $0x1b8] sm:$0xff] %vm2746, %v2711
        %2803 = vst.msk [vmem:[#allocation4 + $0x1c0] sm:$0xff] %vm2746, %v2716
        %2804 = vst.msk [vmem:[#allocation4 + $0x1c8] sm:$0xff] %vm2746, %v2719
        %2805 = vst.msk [vmem:[#allocation4 + $0x1d0] sm:$0xff] %vm2746, %v2724
        %2806 = vst.msk [vmem:[#allocation4 + $0x1d8] sm:$0xff] %vm2746, %v2727
        %2807 = vst.msk [vmem:[#allocation4 + $0x1e0] sm:$0xff] %vm2746, %v2732
        %2808 = vst.msk [vmem:[#allocation4 + $0x1e8] sm:$0xff] %vm2746, %v2735
        %2809 = vst.msk [vmem:[#allocation4 + $0x1f0] sm:$0xff] %vm2746, %v2740
        %2810 = vst.msk [vmem:[#allocation4 + $0x1f8] sm:$0xff] %vm2746, %v2743
        %v2811 = vld [vmem:[%s864] sm:$0xf]
        %v2812 = vld [vmem:[%s864 + $0x4] sm:$0xf]
        %v2813 = vld [vmem:[%s864 + $0x8] sm:$0xf]
        %v2814 = vld [vmem:[%s864 + $0xc] sm:$0xf]
        %v2815 = vld [vmem:[%s864 + $0x10] sm:$0xf]
        %v2816 = vld [vmem:[%s864 + $0x14] sm:$0xf]
        %v2817 = vld [vmem:[%s864 + $0x18] sm:$0xf]
        %v2818 = vld [vmem:[%s864 + $0x1c] sm:$0xf]
        %v2819 = vld [vmem:[%s864 + $0x20] sm:$0xf]
        %v2820 = vld [vmem:[%s864 + $0x24] sm:$0xf]
        %v2821 = vld [vmem:[%s864 + $0x28] sm:$0xf]
        %v2822 = vld [vmem:[%s864 + $0x2c] sm:$0xf]
        %v2823 = vld [vmem:[%s864 + $0x30] sm:$0xf]
        %v2824 = vld [vmem:[%s864 + $0x34] sm:$0xf]
        %v2825 = vld [vmem:[%s864 + $0x38] sm:$0xf]
        %v2826 = vld [vmem:[%s864 + $0x3c] sm:$0xf]
        %v2827 = vld [vmem:[%s864 + $0x40] sm:$0xf]
        %v2828 = vld [vmem:[%s864 + $0x44] sm:$0xf]
        %v2829 = vld [vmem:[%s864 + $0x48] sm:$0xf]
        %v2830 = vld [vmem:[%s864 + $0x4c] sm:$0xf]
        %v2831 = vld [vmem:[%s864 + $0x50] sm:$0xf]
        %v2832 = vld [vmem:[%s864 + $0x54] sm:$0xf]
        %v2833 = vld [vmem:[%s864 + $0x58] sm:$0xf]
        %v2834 = vld [vmem:[%s864 + $0x5c] sm:$0xf]
        %v2835 = vld [vmem:[%s864 + $0x60] sm:$0xf]
        %v2836 = vld [vmem:[%s864 + $0x64] sm:$0xf]
        %v2837 = vld [vmem:[%s864 + $0x68] sm:$0xf]
        %v2838 = vld [vmem:[%s864 + $0x6c] sm:$0xf]
        %v2839 = vld [vmem:[%s864 + $0x70] sm:$0xf]
        %v2840 = vld [vmem:[%s864 + $0x74] sm:$0xf]
        %v2841 = vld [vmem:[%s864 + $0x78] sm:$0xf]
        %v2842 = vld [vmem:[%s864 + $0x7c] sm:$0xf]
        %v2843 = vld [vmem:[%s864 + $0x90] sm:$0xf]
        %v2844 = vld [vmem:[%s864 + $0x94] sm:$0xf]
        %v2845 = vld [vmem:[%s864 + $0x98] sm:$0xf]
        %v2846 = vld [vmem:[%s864 + $0x9c] sm:$0xf]
        %v2847 = vld [vmem:[%s864 + $0xa0] sm:$0xf]
        %v2848 = vld [vmem:[%s864 + $0xa4] sm:$0xf]
        %v2849 = vld [vmem:[%s864 + $0xa8] sm:$0xf]
        %v2850 = vld [vmem:[%s864 + $0xac] sm:$0xf]
        %v2851 = vld [vmem:[%s864 + $0xb0] sm:$0xf]
        %v2852 = vld [vmem:[%s864 + $0xb4] sm:$0xf]
        %v2853 = vld [vmem:[%s864 + $0xb8] sm:$0xf]
        %v2854 = vld [vmem:[%s864 + $0xbc] sm:$0xf]
        %v2855 = vld [vmem:[%s864 + $0xc0] sm:$0xf]
        %v2856 = vld [vmem:[%s864 + $0xc4] sm:$0xf]
        %v2857 = vld [vmem:[%s864 + $0xc8] sm:$0xf]
        %v2858 = vld [vmem:[%s864 + $0xcc] sm:$0xf]
        %v2859 = vld [vmem:[%s864 + $0xd0] sm:$0xf]
        %v2860 = vld [vmem:[%s864 + $0xd4] sm:$0xf]
        %v2861 = vld [vmem:[%s864 + $0xd8] sm:$0xf]
        %v2862 = vld [vmem:[%s864 + $0xdc] sm:$0xf]
        %v2863 = vld [vmem:[%s864 + $0xe0] sm:$0xf]
        %v2864 = vld [vmem:[%s864 + $0xe4] sm:$0xf]
        %v2865 = vld [vmem:[%s864 + $0xe8] sm:$0xf]
        %v2866 = vld [vmem:[%s864 + $0xec] sm:$0xf]
        %v2867 = vld [vmem:[%s864 + $0xf0] sm:$0xf]
        %v2868 = vld [vmem:[%s864 + $0xf4] sm:$0xf]
        %v2869 = vld [vmem:[%s864 + $0xf8] sm:$0xf]
        %v2870 = vld [vmem:[%s864 + $0xfc] sm:$0xf]
        %v2871 = vld [vmem:[%s864 + $0x100] sm:$0xf]
        %v2872 = vld [vmem:[%s864 + $0x104] sm:$0xf]
        %v2873 = vld [vmem:[%s864 + $0x108] sm:$0xf]
        %v2874 = vld [vmem:[%s864 + $0x10c] sm:$0xf]
        %s2875 = scalar_lea.vmem %s1, 2
        %v2876 = vld [vmem:[%s2875] sm:$0x3]
        %v2941 = vunpack.c.l.b16 %v2811
        %v2942 = vunpack.c.l.b16 %v2812
        %v2943 = vunpack.c.l.b16 %v2813
        %v2944 = vunpack.c.l.b16 %v2814
        %v2945 = vunpack.c.l.b16 %v2815
        %v2946 = vunpack.c.l.b16 %v2816
        %v2947 = vunpack.c.l.b16 %v2817
        %v2948 = vunpack.c.l.b16 %v2818
        %v2949 = vunpack.c.l.b16 %v2819
        %v2950 = vunpack.c.l.b16 %v2820
        %v2951 = vunpack.c.l.b16 %v2821
        %v2952 = vunpack.c.l.b16 %v2822
        %v2953 = vunpack.c.l.b16 %v2823
        %v2954 = vunpack.c.l.b16 %v2824
        %v2955 = vunpack.c.l.b16 %v2825
        %v2956 = vunpack.c.l.b16 %v2826
        %v2957 = vunpack.c.l.b16 %v2827
        %v2958 = vunpack.c.l.b16 %v2828
        %v2959 = vunpack.c.l.b16 %v2829
        %v2960 = vunpack.c.l.b16 %v2830
        %v2961 = vunpack.c.l.b16 %v2831
        %v2962 = vunpack.c.l.b16 %v2832
        %v2963 = vunpack.c.l.b16 %v2833
        %v2964 = vunpack.c.l.b16 %v2834
        %v2965 = vunpack.c.l.b16 %v2835
        %v2966 = vunpack.c.l.b16 %v2836
        %v2967 = vunpack.c.l.b16 %v2837
        %v2968 = vunpack.c.l.b16 %v2838
        %v2969 = vunpack.c.l.b16 %v2839
        %v2970 = vunpack.c.l.b16 %v2840
        %v2971 = vunpack.c.l.b16 %v2841
        %v2972 = vunpack.c.l.b16 %v2842
        %v2973 = vunpack.c.l.b16 %v2843
        %v2974 = vunpack.c.l.b16 %v2844
        %v2975 = vunpack.c.l.b16 %v2845
        %v2976 = vunpack.c.l.b16 %v2846
        %v2977 = vunpack.c.l.b16 %v2847
        %v2978 = vunpack.c.l.b16 %v2848
        %v2979 = vunpack.c.l.b16 %v2849
        %v2980 = vunpack.c.l.b16 %v2850
        %v2981 = vunpack.c.l.b16 %v2851
        %v2982 = vunpack.c.l.b16 %v2852
        %v2983 = vunpack.c.l.b16 %v2853
        %v2984 = vunpack.c.l.b16 %v2854
        %v2985 = vunpack.c.l.b16 %v2855
        %v2986 = vunpack.c.l.b16 %v2856
        %v2987 = vunpack.c.l.b16 %v2857
        %v2988 = vunpack.c.l.b16 %v2858
        %v2989 = vunpack.c.l.b16 %v2859
        %v2990 = vunpack.c.l.b16 %v2860
        %v2991 = vunpack.c.l.b16 %v2861
        %v2992 = vunpack.c.l.b16 %v2862
        %v2993 = vunpack.c.l.b16 %v2863
        %v2994 = vunpack.c.l.b16 %v2864
        %v2995 = vunpack.c.l.b16 %v2865
        %v2996 = vunpack.c.l.b16 %v2866
        %v2997 = vunpack.c.l.b16 %v2867
        %v2998 = vunpack.c.l.b16 %v2868
        %v2999 = vunpack.c.l.b16 %v2869
        %v3000 = vunpack.c.l.b16 %v2870
        %v3001 = vunpack.c.l.b16 %v2871
        %v3002 = vunpack.c.l.b16 %v2872
        %v3003 = vunpack.c.l.b16 %v2873
        %v3004 = vunpack.c.l.b16 %v2874
        %v3005 = vpack.c.b16 %v2942, %v2941
        %v3006 = vpack.c.b16 %v2944, %v2943
        %v3007 = vpack.c.b16 %v2946, %v2945
        %v3008 = vpack.c.b16 %v2948, %v2947
        %v3009 = vpack.c.b16 %v2950, %v2949
        %v3010 = vpack.c.b16 %v2952, %v2951
        %v3011 = vpack.c.b16 %v2954, %v2953
        %v3012 = vpack.c.b16 %v2956, %v2955
        %v3013 = vpack.c.b16 %v2958, %v2957
        %v3014 = vpack.c.b16 %v2960, %v2959
        %v3015 = vpack.c.b16 %v2962, %v2961
        %v3016 = vpack.c.b16 %v2964, %v2963
        %v3017 = vpack.c.b16 %v2966, %v2965
        %v3018 = vpack.c.b16 %v2968, %v2967
        %v3019 = vpack.c.b16 %v2970, %v2969
        %v3020 = vpack.c.b16 %v2972, %v2971
        %v3021 = vpack.c.b16 %v2974, %v2973
        %v3022 = vpack.c.b16 %v2976, %v2975
        %v3023 = vpack.c.b16 %v2978, %v2977
        %v3024 = vpack.c.b16 %v2980, %v2979
        %v3025 = vpack.c.b16 %v2982, %v2981
        %v3026 = vpack.c.b16 %v2984, %v2983
        %v3027 = vpack.c.b16 %v2986, %v2985
        %v3028 = vpack.c.b16 %v2988, %v2987
        %v3029 = vpack.c.b16 %v2990, %v2989
        %v3030 = vpack.c.b16 %v2992, %v2991
        %v3031 = vpack.c.b16 %v2994, %v2993
        %v3032 = vpack.c.b16 %v2996, %v2995
        %v3033 = vpack.c.b16 %v2998, %v2997
        %v3034 = vpack.c.b16 %v3000, %v2999
        %v3035 = vpack.c.b16 %v3002, %v3001
        %v3036 = vpack.c.b16 %v3004, %v3003
        %v3038 = vsel %vm340, %v3005, 0
        %v3041 = vsel %vm340, %v3006, 0
        %v3044 = vsel %vm340, %v3007, 0
        %v3047 = vsel %vm340, %v3008, 0
        %v3050 = vsel %vm340, %v3009, 0
        %v3053 = vsel %vm340, %v3010, 0
        %v3056 = vsel %vm340, %v3011, 0
        %v3059 = vsel %vm340, %v3012, 0
        %v3062 = vsel %vm340, %v3013, 0
        %v3065 = vsel %vm340, %v3014, 0
        %v3068 = vsel %vm340, %v3015, 0
        %v3071 = vsel %vm340, %v3016, 0
        %v3074 = vsel %vm340, %v3017, 0
        %v3077 = vsel %vm340, %v3018, 0
        %v3080 = vsel %vm340, %v3019, 0
        %v3083 = vsel %vm340, %v3020, 0
        %v3086 = vsel %vm340, %v3021, 0
        %v3089 = vsel %vm340, %v3022, 0
        %v3092 = vsel %vm340, %v3023, 0
        %v3095 = vsel %vm340, %v3024, 0
        %v3098 = vsel %vm340, %v3025, 0
        %v3101 = vsel %vm340, %v3026, 0
        %v3104 = vsel %vm340, %v3027, 0
        %v3107 = vsel %vm340, %v3028, 0
        %v3110 = vsel %vm340, %v3029, 0
        %v3113 = vsel %vm340, %v3030, 0
        %v3116 = vsel %vm340, %v3031, 0
        %v3119 = vsel %vm340, %v3032, 0
        %v3122 = vsel %vm340, %v3033, 0
        %v3125 = vsel %vm340, %v3034, 0
        %v3128 = vsel %vm340, %v3035, 0
        %v3131 = vsel %vm340, %v3036, 0
        %v3134 = vsel %vm2453, %v2876, 0
        %3136 = vmatprep.subr.bf16.mxu0 0
        %3137 = vmatpush1.bf16.msra.mxu0 0
        %3138 = vmatprep.subr.bf16.mxu0 0
        %3139 = vmatpush1.bf16.msra.mxu0 0
        %3140 = vmatprep.subr.bf16.mxu0 0
        %3141 = vmatpush1.bf16.msra.mxu0 0
        %3142 = vmatprep.subr.bf16.mxu0 0
        %3143 = vmatpush1.bf16.msra.mxu0 0
        %3144 = vmatprep.subr.bf16.mxu0 0
        %3145 = vmatpush1.bf16.msra.mxu0 0
        %3146 = vmatprep.subr.bf16.mxu0 0
        %3147 = vmatpush1.bf16.msra.mxu0 0
        %3148 = vmatprep.subr.bf16.mxu0 0
        %3149 = vmatpush1.bf16.msra.mxu0 0
        %3150 = vmatprep.subr.bf16.mxu0 0
        %3151 = vmatpush1.bf16.msra.mxu0 %v3134
        %3152 = vmatprep.subr.bf16.mxu0 0
        %3153 = vmatpush2.bf16.msra.mxu0 0
        %3154 = vmatprep.subr.bf16.mxu0 0
        %3155 = vmatpush2.bf16.msra.mxu0 0
        %3156 = vmatprep.subr.bf16.mxu0 0
        %3157 = vmatpush2.bf16.msra.mxu0 0
        %3158 = vmatprep.subr.bf16.mxu0 0
        %3159 = vmatpush2.bf16.msra.mxu0 0
        %3160 = vmatprep.subr.bf16.mxu0 0
        %3161 = vmatpush2.bf16.msra.mxu0 0
        %3162 = vmatprep.subr.bf16.mxu0 0
        %3163 = vmatpush2.bf16.msra.mxu0 0
        %3164 = vmatprep.subr.bf16.mxu0 0
        %3165 = vmatpush2.bf16.msra.mxu0 0
        %3166 = vmatprep.subr.bf16.mxu0 0
        %3167 = vmatpush2.bf16.msra.mxu0 0
        %3168 = vmatprep.mubr.bf16.mxu0 0
        %3169 = vmatmul.mubr.bf16.gmra.mxu0 %v3038
        %v3170 = vpop.f32.mrf.mxu0
        %v3171 = vadd.f32 0.0, %v3170
        %v3172 = vpop.f32.mrf.mxu0
        %v3173 = vpop.f32.mrf.mxu0
        %v3174 = vadd.f32 0.0, %v3173
        %v3175 = vpop.f32.mrf.mxu0
        %3176 = vmatprep.mubr.bf16.mxu0 0
        %3177 = vmatmul.mubr.bf16.gmra.mxu0 %v3041
        %v3178 = vpop.f32.mrf.mxu0
        %v3179 = vadd.f32 0.0, %v3178
        %v3180 = vpop.f32.mrf.mxu0
        %v3181 = vpop.f32.mrf.mxu0
        %v3182 = vadd.f32 0.0, %v3181
        %v3183 = vpop.f32.mrf.mxu0
        %3184 = vmatprep.mubr.bf16.mxu0 0
        %3185 = vmatmul.mubr.bf16.gmra.mxu0 %v3044
        %v3186 = vpop.f32.mrf.mxu0
        %v3187 = vadd.f32 0.0, %v3186
        %v3188 = vpop.f32.mrf.mxu0
        %v3189 = vpop.f32.mrf.mxu0
        %v3190 = vadd.f32 0.0, %v3189
        %v3191 = vpop.f32.mrf.mxu0
        %3192 = vmatprep.mubr.bf16.mxu0 0
        %3193 = vmatmul.mubr.bf16.gmra.mxu0 %v3047
        %v3194 = vpop.f32.mrf.mxu0
        %v3195 = vadd.f32 0.0, %v3194
        %v3196 = vpop.f32.mrf.mxu0
        %v3197 = vpop.f32.mrf.mxu0
        %v3198 = vadd.f32 0.0, %v3197
        %v3199 = vpop.f32.mrf.mxu0
        %3200 = vmatprep.mubr.bf16.mxu0 0
        %3201 = vmatmul.mubr.bf16.gmra.mxu0 %v3050
        %v3202 = vpop.f32.mrf.mxu0
        %v3203 = vadd.f32 0.0, %v3202
        %v3204 = vpop.f32.mrf.mxu0
        %v3205 = vpop.f32.mrf.mxu0
        %v3206 = vadd.f32 0.0, %v3205
        %v3207 = vpop.f32.mrf.mxu0
        %3208 = vmatprep.mubr.bf16.mxu0 0
        %3209 = vmatmul.mubr.bf16.gmra.mxu0 %v3053
        %v3210 = vpop.f32.mrf.mxu0
        %v3211 = vadd.f32 0.0, %v3210
        %v3212 = vpop.f32.mrf.mxu0
        %v3213 = vpop.f32.mrf.mxu0
        %v3214 = vadd.f32 0.0, %v3213
        %v3215 = vpop.f32.mrf.mxu0
        %3216 = vmatprep.mubr.bf16.mxu0 0
        %3217 = vmatmul.mubr.bf16.gmra.mxu0 %v3056
        %v3218 = vpop.f32.mrf.mxu0
        %v3219 = vadd.f32 0.0, %v3218
        %v3220 = vpop.f32.mrf.mxu0
        %v3221 = vpop.f32.mrf.mxu0
        %v3222 = vadd.f32 0.0, %v3221
        %v3223 = vpop.f32.mrf.mxu0
        %3224 = vmatprep.mubr.bf16.mxu0 0
        %3225 = vmatmul.mubr.bf16.gmra.mxu0 %v3059
        %v3226 = vpop.f32.mrf.mxu0
        %v3227 = vadd.f32 0.0, %v3226
        %v3228 = vpop.f32.mrf.mxu0
        %v3229 = vpop.f32.mrf.mxu0
        %v3230 = vadd.f32 0.0, %v3229
        %v3231 = vpop.f32.mrf.mxu0
        %3232 = vmatprep.mubr.bf16.mxu0 0
        %3233 = vmatmul.mubr.bf16.gmra.mxu0 %v3062
        %v3234 = vpop.f32.mrf.mxu0
        %v3235 = vadd.f32 0.0, %v3234
        %v3236 = vpop.f32.mrf.mxu0
        %v3237 = vpop.f32.mrf.mxu0
        %v3238 = vadd.f32 0.0, %v3237
        %v3239 = vpop.f32.mrf.mxu0
        %3240 = vmatprep.mubr.bf16.mxu0 0
        %3241 = vmatmul.mubr.bf16.gmra.mxu0 %v3065
        %v3242 = vpop.f32.mrf.mxu0
        %v3243 = vadd.f32 0.0, %v3242
        %v3244 = vpop.f32.mrf.mxu0
        %v3245 = vpop.f32.mrf.mxu0
        %v3246 = vadd.f32 0.0, %v3245
        %v3247 = vpop.f32.mrf.mxu0
        %3248 = vmatprep.mubr.bf16.mxu0 0
        %3249 = vmatmul.mubr.bf16.gmra.mxu0 %v3068
        %v3250 = vpop.f32.mrf.mxu0
        %v3251 = vadd.f32 0.0, %v3250
        %v3252 = vpop.f32.mrf.mxu0
        %v3253 = vpop.f32.mrf.mxu0
        %v3254 = vadd.f32 0.0, %v3253
        %v3255 = vpop.f32.mrf.mxu0
        %3256 = vmatprep.mubr.bf16.mxu0 0
        %3257 = vmatmul.mubr.bf16.gmra.mxu0 %v3071
        %v3258 = vpop.f32.mrf.mxu0
        %v3259 = vadd.f32 0.0, %v3258
        %v3260 = vpop.f32.mrf.mxu0
        %v3261 = vpop.f32.mrf.mxu0
        %v3262 = vadd.f32 0.0, %v3261
        %v3263 = vpop.f32.mrf.mxu0
        %3264 = vmatprep.mubr.bf16.mxu0 0
        %3265 = vmatmul.mubr.bf16.gmra.mxu0 %v3074
        %v3266 = vpop.f32.mrf.mxu0
        %v3267 = vadd.f32 0.0, %v3266
        %v3268 = vpop.f32.mrf.mxu0
        %v3269 = vpop.f32.mrf.mxu0
        %v3270 = vadd.f32 0.0, %v3269
        %v3271 = vpop.f32.mrf.mxu0
        %3272 = vmatprep.mubr.bf16.mxu0 0
        %3273 = vmatmul.mubr.bf16.gmra.mxu0 %v3077
        %v3274 = vpop.f32.mrf.mxu0
        %v3275 = vadd.f32 0.0, %v3274
        %v3276 = vpop.f32.mrf.mxu0
        %v3277 = vpop.f32.mrf.mxu0
        %v3278 = vadd.f32 0.0, %v3277
        %v3279 = vpop.f32.mrf.mxu0
        %3280 = vmatprep.mubr.bf16.mxu0 0
        %3281 = vmatmul.mubr.bf16.gmra.mxu0 %v3080
        %v3282 = vpop.f32.mrf.mxu0
        %v3283 = vadd.f32 0.0, %v3282
        %v3284 = vpop.f32.mrf.mxu0
        %v3285 = vpop.f32.mrf.mxu0
        %v3286 = vadd.f32 0.0, %v3285
        %v3287 = vpop.f32.mrf.mxu0
        %3288 = vmatprep.mubr.bf16.mxu0 0
        %3289 = vmatmul.mubr.bf16.gmra.mxu0 %v3083
        %v3290 = vpop.f32.mrf.mxu0
        %v3291 = vadd.f32 0.0, %v3290
        %v3292 = vpop.f32.mrf.mxu0
        %v3293 = vpop.f32.mrf.mxu0
        %v3294 = vadd.f32 0.0, %v3293
        %v3295 = vpop.f32.mrf.mxu0
        %3296 = vmatprep.mubr.bf16.mxu0 0
        %3297 = vmatmul.mubr.bf16.gmra.mxu0 %v3086
        %v3298 = vpop.f32.mrf.mxu0
        %v3299 = vadd.f32 0.0, %v3298
        %v3300 = vpop.f32.mrf.mxu0
        %v3301 = vpop.f32.mrf.mxu0
        %v3302 = vadd.f32 0.0, %v3301
        %v3303 = vpop.f32.mrf.mxu0
        %3304 = vmatprep.mubr.bf16.mxu0 0
        %3305 = vmatmul.mubr.bf16.gmra.mxu0 %v3089
        %v3306 = vpop.f32.mrf.mxu0
        %v3307 = vadd.f32 0.0, %v3306
        %v3308 = vpop.f32.mrf.mxu0
        %v3309 = vpop.f32.mrf.mxu0
        %v3310 = vadd.f32 0.0, %v3309
        %v3311 = vpop.f32.mrf.mxu0
        %3312 = vmatprep.mubr.bf16.mxu0 0
        %3313 = vmatmul.mubr.bf16.gmra.mxu0 %v3092
        %v3314 = vpop.f32.mrf.mxu0
        %v3315 = vadd.f32 0.0, %v3314
        %v3316 = vpop.f32.mrf.mxu0
        %v3317 = vpop.f32.mrf.mxu0
        %v3318 = vadd.f32 0.0, %v3317
        %v3319 = vpop.f32.mrf.mxu0
        %3320 = vmatprep.mubr.bf16.mxu0 0
        %3321 = vmatmul.mubr.bf16.gmra.mxu0 %v3095
        %v3322 = vpop.f32.mrf.mxu0
        %v3323 = vadd.f32 0.0, %v3322
        %v3324 = vpop.f32.mrf.mxu0
        %v3325 = vpop.f32.mrf.mxu0
        %v3326 = vadd.f32 0.0, %v3325
        %v3327 = vpop.f32.mrf.mxu0
        %3328 = vmatprep.mubr.bf16.mxu0 0
        %3329 = vmatmul.mubr.bf16.gmra.mxu0 %v3098
        %v3330 = vpop.f32.mrf.mxu0
        %v3331 = vadd.f32 0.0, %v3330
        %v3332 = vpop.f32.mrf.mxu0
        %v3333 = vpop.f32.mrf.mxu0
        %v3334 = vadd.f32 0.0, %v3333
        %v3335 = vpop.f32.mrf.mxu0
        %3336 = vmatprep.mubr.bf16.mxu0 0
        %3337 = vmatmul.mubr.bf16.gmra.mxu0 %v3101
        %v3338 = vpop.f32.mrf.mxu0
        %v3339 = vadd.f32 0.0, %v3338
        %v3340 = vpop.f32.mrf.mxu0
        %v3341 = vpop.f32.mrf.mxu0
        %v3342 = vadd.f32 0.0, %v3341
        %v3343 = vpop.f32.mrf.mxu0
        %3344 = vmatprep.mubr.bf16.mxu0 0
        %3345 = vmatmul.mubr.bf16.gmra.mxu0 %v3104
        %v3346 = vpop.f32.mrf.mxu0
        %v3347 = vadd.f32 0.0, %v3346
        %v3348 = vpop.f32.mrf.mxu0
        %v3349 = vpop.f32.mrf.mxu0
        %v3350 = vadd.f32 0.0, %v3349
        %v3351 = vpop.f32.mrf.mxu0
        %3352 = vmatprep.mubr.bf16.mxu0 0
        %3353 = vmatmul.mubr.bf16.gmra.mxu0 %v3107
        %v3354 = vpop.f32.mrf.mxu0
        %v3355 = vadd.f32 0.0, %v3354
        %v3356 = vpop.f32.mrf.mxu0
        %v3357 = vpop.f32.mrf.mxu0
        %v3358 = vadd.f32 0.0, %v3357
        %v3359 = vpop.f32.mrf.mxu0
        %3360 = vmatprep.mubr.bf16.mxu0 0
        %3361 = vmatmul.mubr.bf16.gmra.mxu0 %v3110
        %v3362 = vpop.f32.mrf.mxu0
        %v3363 = vadd.f32 0.0, %v3362
        %v3364 = vpop.f32.mrf.mxu0
        %v3365 = vpop.f32.mrf.mxu0
        %v3366 = vadd.f32 0.0, %v3365
        %v3367 = vpop.f32.mrf.mxu0
        %3368 = vmatprep.mubr.bf16.mxu0 0
        %3369 = vmatmul.mubr.bf16.gmra.mxu0 %v3113
        %v3370 = vpop.f32.mrf.mxu0
        %v3371 = vadd.f32 0.0, %v3370
        %v3372 = vpop.f32.mrf.mxu0
        %v3373 = vpop.f32.mrf.mxu0
        %v3374 = vadd.f32 0.0, %v3373
        %v3375 = vpop.f32.mrf.mxu0
        %3376 = vmatprep.mubr.bf16.mxu0 0
        %3377 = vmatmul.mubr.bf16.gmra.mxu0 %v3116
        %v3378 = vpop.f32.mrf.mxu0
        %v3379 = vadd.f32 0.0, %v3378
        %v3380 = vpop.f32.mrf.mxu0
        %v3381 = vpop.f32.mrf.mxu0
        %v3382 = vadd.f32 0.0, %v3381
        %v3383 = vpop.f32.mrf.mxu0
        %3384 = vmatprep.mubr.bf16.mxu0 0
        %3385 = vmatmul.mubr.bf16.gmra.mxu0 %v3119
        %v3386 = vpop.f32.mrf.mxu0
        %v3387 = vadd.f32 0.0, %v3386
        %v3388 = vpop.f32.mrf.mxu0
        %v3389 = vpop.f32.mrf.mxu0
        %v3390 = vadd.f32 0.0, %v3389
        %v3391 = vpop.f32.mrf.mxu0
        %3392 = vmatprep.mubr.bf16.mxu0 0
        %3393 = vmatmul.mubr.bf16.gmra.mxu0 %v3122
        %v3394 = vpop.f32.mrf.mxu0
        %v3395 = vadd.f32 0.0, %v3394
        %v3396 = vpop.f32.mrf.mxu0
        %v3397 = vpop.f32.mrf.mxu0
        %v3398 = vadd.f32 0.0, %v3397
        %v3399 = vpop.f32.mrf.mxu0
        %3400 = vmatprep.mubr.bf16.mxu0 0
        %3401 = vmatmul.mubr.bf16.gmra.mxu0 %v3125
        %v3402 = vpop.f32.mrf.mxu0
        %v3403 = vadd.f32 0.0, %v3402
        %v3404 = vpop.f32.mrf.mxu0
        %v3405 = vpop.f32.mrf.mxu0
        %v3406 = vadd.f32 0.0, %v3405
        %v3407 = vpop.f32.mrf.mxu0
        %3408 = vmatprep.mubr.bf16.mxu0 0
        %3409 = vmatmul.mubr.bf16.gmra.mxu0 %v3128
        %v3410 = vpop.f32.mrf.mxu0
        %v3411 = vadd.f32 0.0, %v3410
        %v3412 = vpop.f32.mrf.mxu0
        %v3413 = vpop.f32.mrf.mxu0
        %v3414 = vadd.f32 0.0, %v3413
        %v3415 = vpop.f32.mrf.mxu0
        %3416 = vmatprep.mubr.bf16.mxu0 0
        %3417 = vmatmul.mubr.bf16.gmra.mxu0 %v3131
        %v3418 = vpop.f32.mrf.mxu0
        %v3419 = vadd.f32 0.0, %v3418
        %v3420 = vpop.f32.mrf.mxu0
        %v3421 = vpop.f32.mrf.mxu0
        %v3422 = vadd.f32 0.0, %v3421
        %v3423 = vpop.f32.mrf.mxu0
        %3424 = vdwg.mxu0
        %v3425 = vld [vmem:[#allocation4] sm:$0xff]
        %v3426 = vld [vmem:[#allocation4 + $0x8] sm:$0xff]
        %v3427 = vld [vmem:[#allocation4 + $0x10] sm:$0xff]
        %v3428 = vld [vmem:[#allocation4 + $0x18] sm:$0xff]
        %v3429 = vld [vmem:[#allocation4 + $0x20] sm:$0xff]
        %v3430 = vld [vmem:[#allocation4 + $0x28] sm:$0xff]
        %v3431 = vld [vmem:[#allocation4 + $0x30] sm:$0xff]
        %v3432 = vld [vmem:[#allocation4 + $0x38] sm:$0xff]
        %v3433 = vld [vmem:[#allocation4 + $0x40] sm:$0xff]
        %v3434 = vld [vmem:[#allocation4 + $0x48] sm:$0xff]
        %v3435 = vld [vmem:[#allocation4 + $0x50] sm:$0xff]
        %v3436 = vld [vmem:[#allocation4 + $0x58] sm:$0xff]
        %v3437 = vld [vmem:[#allocation4 + $0x60] sm:$0xff]
        %v3438 = vld [vmem:[#allocation4 + $0x68] sm:$0xff]
        %v3439 = vld [vmem:[#allocation4 + $0x70] sm:$0xff]
        %v3440 = vld [vmem:[#allocation4 + $0x78] sm:$0xff]
        %v3441 = vld [vmem:[#allocation4 + $0x80] sm:$0xff]
        %v3442 = vld [vmem:[#allocation4 + $0x88] sm:$0xff]
        %v3443 = vld [vmem:[#allocation4 + $0x90] sm:$0xff]
        %v3444 = vld [vmem:[#allocation4 + $0x98] sm:$0xff]
        %v3445 = vld [vmem:[#allocation4 + $0xa0] sm:$0xff]
        %v3446 = vld [vmem:[#allocation4 + $0xa8] sm:$0xff]
        %v3447 = vld [vmem:[#allocation4 + $0xb0] sm:$0xff]
        %v3448 = vld [vmem:[#allocation4 + $0xb8] sm:$0xff]
        %v3449 = vld [vmem:[#allocation4 + $0xc0] sm:$0xff]
        %v3450 = vld [vmem:[#allocation4 + $0xc8] sm:$0xff]
        %v3451 = vld [vmem:[#allocation4 + $0xd0] sm:$0xff]
        %v3452 = vld [vmem:[#allocation4 + $0xd8] sm:$0xff]
        %v3453 = vld [vmem:[#allocation4 + $0xe0] sm:$0xff]
        %v3454 = vld [vmem:[#allocation4 + $0xe8] sm:$0xff]
        %v3455 = vld [vmem:[#allocation4 + $0xf0] sm:$0xff]
        %v3456 = vld [vmem:[#allocation4 + $0xf8] sm:$0xff]
        %v3457 = vld [vmem:[#allocation4 + $0x100] sm:$0xff]
        %v3458 = vld [vmem:[#allocation4 + $0x108] sm:$0xff]
        %v3459 = vld [vmem:[#allocation4 + $0x110] sm:$0xff]
        %v3460 = vld [vmem:[#allocation4 + $0x118] sm:$0xff]
        %v3461 = vld [vmem:[#allocation4 + $0x120] sm:$0xff]
        %v3462 = vld [vmem:[#allocation4 + $0x128] sm:$0xff]
        %v3463 = vld [vmem:[#allocation4 + $0x130] sm:$0xff]
        %v3464 = vld [vmem:[#allocation4 + $0x138] sm:$0xff]
        %v3465 = vld [vmem:[#allocation4 + $0x140] sm:$0xff]
        %v3466 = vld [vmem:[#allocation4 + $0x148] sm:$0xff]
        %v3467 = vld [vmem:[#allocation4 + $0x150] sm:$0xff]
        %v3468 = vld [vmem:[#allocation4 + $0x158] sm:$0xff]
        %v3469 = vld [vmem:[#allocation4 + $0x160] sm:$0xff]
        %v3470 = vld [vmem:[#allocation4 + $0x168] sm:$0xff]
        %v3471 = vld [vmem:[#allocation4 + $0x170] sm:$0xff]
        %v3472 = vld [vmem:[#allocation4 + $0x178] sm:$0xff]
        %v3473 = vld [vmem:[#allocation4 + $0x180] sm:$0xff]
        %v3474 = vld [vmem:[#allocation4 + $0x188] sm:$0xff]
        %v3475 = vld [vmem:[#allocation4 + $0x190] sm:$0xff]
        %v3476 = vld [vmem:[#allocation4 + $0x198] sm:$0xff]
        %v3477 = vld [vmem:[#allocation4 + $0x1a0] sm:$0xff]
        %v3478 = vld [vmem:[#allocation4 + $0x1a8] sm:$0xff]
        %v3479 = vld [vmem:[#allocation4 + $0x1b0] sm:$0xff]
        %v3480 = vld [vmem:[#allocation4 + $0x1b8] sm:$0xff]
        %v3481 = vld [vmem:[#allocation4 + $0x1c0] sm:$0xff]
        %v3482 = vld [vmem:[#allocation4 + $0x1c8] sm:$0xff]
        %v3483 = vld [vmem:[#allocation4 + $0x1d0] sm:$0xff]
        %v3484 = vld [vmem:[#allocation4 + $0x1d8] sm:$0xff]
        %v3485 = vld [vmem:[#allocation4 + $0x1e0] sm:$0xff]
        %v3486 = vld [vmem:[#allocation4 + $0x1e8] sm:$0xff]
        %v3487 = vld [vmem:[#allocation4 + $0x1f0] sm:$0xff]
        %v3488 = vld [vmem:[#allocation4 + $0x1f8] sm:$0xff]
        %v3489 = vadd.f32 %v3425, %v3171
        %v3490 = vadd.f32 %v3426, %v3174
        %v3491 = vadd.f32 %v3427, %v3179
        %v3492 = vadd.f32 %v3428, %v3182
        %v3493 = vadd.f32 %v3429, %v3187
        %v3494 = vadd.f32 %v3430, %v3190
        %v3495 = vadd.f32 %v3431, %v3195
        %v3496 = vadd.f32 %v3432, %v3198
        %v3497 = vadd.f32 %v3433, %v3203
        %v3498 = vadd.f32 %v3434, %v3206
        %v3499 = vadd.f32 %v3435, %v3211
        %v3500 = vadd.f32 %v3436, %v3214
        %v3501 = vadd.f32 %v3437, %v3219
        %v3502 = vadd.f32 %v3438, %v3222
        %v3503 = vadd.f32 %v3439, %v3227
        %v3504 = vadd.f32 %v3440, %v3230
        %v3505 = vadd.f32 %v3441, %v3235
        %v3506 = vadd.f32 %v3442, %v3238
        %v3507 = vadd.f32 %v3443, %v3243
        %v3508 = vadd.f32 %v3444, %v3246
        %v3509 = vadd.f32 %v3445, %v3251
        %v3510 = vadd.f32 %v3446, %v3254
        %v3511 = vadd.f32 %v3447, %v3259
        %v3512 = vadd.f32 %v3448, %v3262
        %v3513 = vadd.f32 %v3449, %v3267
        %v3514 = vadd.f32 %v3450, %v3270
        %v3515 = vadd.f32 %v3451, %v3275
        %v3516 = vadd.f32 %v3452, %v3278
        %v3517 = vadd.f32 %v3453, %v3283
        %v3518 = vadd.f32 %v3454, %v3286
        %v3519 = vadd.f32 %v3455, %v3291
        %v3520 = vadd.f32 %v3456, %v3294
        %v3521 = vadd.f32 %v3457, %v3299
        %v3522 = vadd.f32 %v3458, %v3302
        %v3523 = vadd.f32 %v3459, %v3307
        %v3524 = vadd.f32 %v3460, %v3310
        %v3525 = vadd.f32 %v3461, %v3315
        %v3526 = vadd.f32 %v3462, %v3318
        %v3527 = vadd.f32 %v3463, %v3323
        %v3528 = vadd.f32 %v3464, %v3326
        %v3529 = vadd.f32 %v3465, %v3331
        %v3530 = vadd.f32 %v3466, %v3334
        %v3531 = vadd.f32 %v3467, %v3339
        %v3532 = vadd.f32 %v3468, %v3342
        %v3533 = vadd.f32 %v3469, %v3347
        %v3534 = vadd.f32 %v3470, %v3350
        %v3535 = vadd.f32 %v3471, %v3355
        %v3536 = vadd.f32 %v3472, %v3358
        %v3537 = vadd.f32 %v3473, %v3363
        %v3538 = vadd.f32 %v3474, %v3366
        %v3539 = vadd.f32 %v3475, %v3371
        %v3540 = vadd.f32 %v3476, %v3374
        %v3541 = vadd.f32 %v3477, %v3379
        %v3542 = vadd.f32 %v3478, %v3382
        %v3543 = vadd.f32 %v3479, %v3387
        %v3544 = vadd.f32 %v3480, %v3390
        %v3545 = vadd.f32 %v3481, %v3395
        %v3546 = vadd.f32 %v3482, %v3398
        %v3547 = vadd.f32 %v3483, %v3403
        %v3548 = vadd.f32 %v3484, %v3406
        %v3549 = vadd.f32 %v3485, %v3411
        %v3550 = vadd.f32 %v3486, %v3414
        %v3551 = vadd.f32 %v3487, %v3419
        %v3552 = vadd.f32 %v3488, %v3422
        %3553 = vst.msk [vmem:[#allocation4] sm:$0xff] %vm2746, %v3489
        %3554 = vst.msk [vmem:[#allocation4 + $0x8] sm:$0xff] %vm2746, %v3490
        %3555 = vst.msk [vmem:[#allocation4 + $0x10] sm:$0xff] %vm2746, %v3491
        %3556 = vst.msk [vmem:[#allocation4 + $0x18] sm:$0xff] %vm2746, %v3492
        %3557 = vst.msk [vmem:[#allocation4 + $0x20] sm:$0xff] %vm2746, %v3493
        %3558 = vst.msk [vmem:[#allocation4 + $0x28] sm:$0xff] %vm2746, %v3494
        %3559 = vst.msk [vmem:[#allocation4 + $0x30] sm:$0xff] %vm2746, %v3495
        %3560 = vst.msk [vmem:[#allocation4 + $0x38] sm:$0xff] %vm2746, %v3496
        %3561 = vst.msk [vmem:[#allocation4 + $0x40] sm:$0xff] %vm2746, %v3497
        %3562 = vst.msk [vmem:[#allocation4 + $0x48] sm:$0xff] %vm2746, %v3498
        %3563 = vst.msk [vmem:[#allocation4 + $0x50] sm:$0xff] %vm2746, %v3499
        %3564 = vst.msk [vmem:[#allocation4 + $0x58] sm:$0xff] %vm2746, %v3500
        %3565 = vst.msk [vmem:[#allocation4 + $0x60] sm:$0xff] %vm2746, %v3501
        %3566 = vst.msk [vmem:[#allocation4 + $0x68] sm:$0xff] %vm2746, %v3502
        %3567 = vst.msk [vmem:[#allocation4 + $0x70] sm:$0xff] %vm2746, %v3503
        %3568 = vst.msk [vmem:[#allocation4 + $0x78] sm:$0xff] %vm2746, %v3504
        %3569 = vst.msk [vmem:[#allocation4 + $0x80] sm:$0xff] %vm2746, %v3505
        %3570 = vst.msk [vmem:[#allocation4 + $0x88] sm:$0xff] %vm2746, %v3506
        %3571 = vst.msk [vmem:[#allocation4 + $0x90] sm:$0xff] %vm2746, %v3507
        %3572 = vst.msk [vmem:[#allocation4 + $0x98] sm:$0xff] %vm2746, %v3508
        %3573 = vst.msk [vmem:[#allocation4 + $0xa0] sm:$0xff] %vm2746, %v3509
        %3574 = vst.msk [vmem:[#allocation4 + $0xa8] sm:$0xff] %vm2746, %v3510
        %3575 = vst.msk [vmem:[#allocation4 + $0xb0] sm:$0xff] %vm2746, %v3511
        %3576 = vst.msk [vmem:[#allocation4 + $0xb8] sm:$0xff] %vm2746, %v3512
        %3577 = vst.msk [vmem:[#allocation4 + $0xc0] sm:$0xff] %vm2746, %v3513
        %3578 = vst.msk [vmem:[#allocation4 + $0xc8] sm:$0xff] %vm2746, %v3514
        %3579 = vst.msk [vmem:[#allocation4 + $0xd0] sm:$0xff] %vm2746, %v3515
        %3580 = vst.msk [vmem:[#allocation4 + $0xd8] sm:$0xff] %vm2746, %v3516
        %3581 = vst.msk [vmem:[#allocation4 + $0xe0] sm:$0xff] %vm2746, %v3517
        %3582 = vst.msk [vmem:[#allocation4 + $0xe8] sm:$0xff] %vm2746, %v3518
        %3583 = vst.msk [vmem:[#allocation4 + $0xf0] sm:$0xff] %vm2746, %v3519
        %3584 = vst.msk [vmem:[#allocation4 + $0xf8] sm:$0xff] %vm2746, %v3520
        %3585 = vst.msk [vmem:[#allocation4 + $0x100] sm:$0xff] %vm2746, %v3521
        %3586 = vst.msk [vmem:[#allocation4 + $0x108] sm:$0xff] %vm2746, %v3522
        %3587 = vst.msk [vmem:[#allocation4 + $0x110] sm:$0xff] %vm2746, %v3523
        %3588 = vst.msk [vmem:[#allocation4 + $0x118] sm:$0xff] %vm2746, %v3524
        %3589 = vst.msk [vmem:[#allocation4 + $0x120] sm:$0xff] %vm2746, %v3525
        %3590 = vst.msk [vmem:[#allocation4 + $0x128] sm:$0xff] %vm2746, %v3526
        %3591 = vst.msk [vmem:[#allocation4 + $0x130] sm:$0xff] %vm2746, %v3527
        %3592 = vst.msk [vmem:[#allocation4 + $0x138] sm:$0xff] %vm2746, %v3528
        %3593 = vst.msk [vmem:[#allocation4 + $0x140] sm:$0xff] %vm2746, %v3529
        %3594 = vst.msk [vmem:[#allocation4 + $0x148] sm:$0xff] %vm2746, %v3530
        %3595 = vst.msk [vmem:[#allocation4 + $0x150] sm:$0xff] %vm2746, %v3531
        %3596 = vst.msk [vmem:[#allocation4 + $0x158] sm:$0xff] %vm2746, %v3532
        %3597 = vst.msk [vmem:[#allocation4 + $0x160] sm:$0xff] %vm2746, %v3533
        %3598 = vst.msk [vmem:[#allocation4 + $0x168] sm:$0xff] %vm2746, %v3534
        %3599 = vst.msk [vmem:[#allocation4 + $0x170] sm:$0xff] %vm2746, %v3535
        %3600 = vst.msk [vmem:[#allocation4 + $0x178] sm:$0xff] %vm2746, %v3536
        %3601 = vst.msk [vmem:[#allocation4 + $0x180] sm:$0xff] %vm2746, %v3537
        %3602 = vst.msk [vmem:[#allocation4 + $0x188] sm:$0xff] %vm2746, %v3538
        %3603 = vst.msk [vmem:[#allocation4 + $0x190] sm:$0xff] %vm2746, %v3539
        %3604 = vst.msk [vmem:[#allocation4 + $0x198] sm:$0xff] %vm2746, %v3540
        %3605 = vst.msk [vmem:[#allocation4 + $0x1a0] sm:$0xff] %vm2746, %v3541
        %3606 = vst.msk [vmem:[#allocation4 + $0x1a8] sm:$0xff] %vm2746, %v3542
        %3607 = vst.msk [vmem:[#allocation4 + $0x1b0] sm:$0xff] %vm2746, %v3543
        %3608 = vst.msk [vmem:[#allocation4 + $0x1b8] sm:$0xff] %vm2746, %v3544
        %3609 = vst.msk [vmem:[#allocation4 + $0x1c0] sm:$0xff] %vm2746, %v3545
        %3610 = vst.msk [vmem:[#allocation4 + $0x1c8] sm:$0xff] %vm2746, %v3546
        %3611 = vst.msk [vmem:[#allocation4 + $0x1d0] sm:$0xff] %vm2746, %v3547
        %3612 = vst.msk [vmem:[#allocation4 + $0x1d8] sm:$0xff] %vm2746, %v3548
        %3613 = vst.msk [vmem:[#allocation4 + $0x1e0] sm:$0xff] %vm2746, %v3549
        %3614 = vst.msk [vmem:[#allocation4 + $0x1e8] sm:$0xff] %vm2746, %v3550
        %3615 = vst.msk [vmem:[#allocation4 + $0x1f0] sm:$0xff] %vm2746, %v3551
        %3616 = vst.msk [vmem:[#allocation4 + $0x1f8] sm:$0xff] %vm2746, %v3552
        %v3617 = vld [vmem:[%s1028] sm:$0xf]
        %v3618 = vld [vmem:[%s1028 + $0x4] sm:$0xf]
        %v3619 = vld [vmem:[%s1028 + $0x8] sm:$0xf]
        %v3620 = vld [vmem:[%s1028 + $0xc] sm:$0xf]
        %v3621 = vld [vmem:[%s1028 + $0x10] sm:$0xf]
        %v3622 = vld [vmem:[%s1028 + $0x14] sm:$0xf]
        %v3623 = vld [vmem:[%s1028 + $0x18] sm:$0xf]
        %v3624 = vld [vmem:[%s1028 + $0x1c] sm:$0xf]
        %v3625 = vld [vmem:[%s1028 + $0x20] sm:$0xf]
        %v3626 = vld [vmem:[%s1028 + $0x24] sm:$0xf]
        %v3627 = vld [vmem:[%s1028 + $0x28] sm:$0xf]
        %v3628 = vld [vmem:[%s1028 + $0x2c] sm:$0xf]
        %v3629 = vld [vmem:[%s1028 + $0x30] sm:$0xf]
        %v3630 = vld [vmem:[%s1028 + $0x34] sm:$0xf]
        %v3631 = vld [vmem:[%s1028 + $0x38] sm:$0xf]
        %v3632 = vld [vmem:[%s1028 + $0x3c] sm:$0xf]
        %v3633 = vld [vmem:[%s1028 + $0x40] sm:$0xf]
        %v3634 = vld [vmem:[%s1028 + $0x44] sm:$0xf]
        %v3635 = vld [vmem:[%s1028 + $0x48] sm:$0xf]
        %v3636 = vld [vmem:[%s1028 + $0x4c] sm:$0xf]
        %v3637 = vld [vmem:[%s1028 + $0x50] sm:$0xf]
        %v3638 = vld [vmem:[%s1028 + $0x54] sm:$0xf]
        %v3639 = vld [vmem:[%s1028 + $0x58] sm:$0xf]
        %v3640 = vld [vmem:[%s1028 + $0x5c] sm:$0xf]
        %v3641 = vld [vmem:[%s1028 + $0x60] sm:$0xf]
        %v3642 = vld [vmem:[%s1028 + $0x64] sm:$0xf]
        %v3643 = vld [vmem:[%s1028 + $0x68] sm:$0xf]
        %v3644 = vld [vmem:[%s1028 + $0x6c] sm:$0xf]
        %v3645 = vld [vmem:[%s1028 + $0x70] sm:$0xf]
        %v3646 = vld [vmem:[%s1028 + $0x74] sm:$0xf]
        %v3647 = vld [vmem:[%s1028 + $0x78] sm:$0xf]
        %v3648 = vld [vmem:[%s1028 + $0x7c] sm:$0xf]
        %v3649 = vld [vmem:[%s1028 + $0x90] sm:$0xf]
        %v3650 = vld [vmem:[%s1028 + $0x94] sm:$0xf]
        %v3651 = vld [vmem:[%s1028 + $0x98] sm:$0xf]
        %v3652 = vld [vmem:[%s1028 + $0x9c] sm:$0xf]
        %v3653 = vld [vmem:[%s1028 + $0xa0] sm:$0xf]
        %v3654 = vld [vmem:[%s1028 + $0xa4] sm:$0xf]
        %v3655 = vld [vmem:[%s1028 + $0xa8] sm:$0xf]
        %v3656 = vld [vmem:[%s1028 + $0xac] sm:$0xf]
        %v3657 = vld [vmem:[%s1028 + $0xb0] sm:$0xf]
        %v3658 = vld [vmem:[%s1028 + $0xb4] sm:$0xf]
        %v3659 = vld [vmem:[%s1028 + $0xb8] sm:$0xf]
        %v3660 = vld [vmem:[%s1028 + $0xbc] sm:$0xf]
        %v3661 = vld [vmem:[%s1028 + $0xc0] sm:$0xf]
        %v3662 = vld [vmem:[%s1028 + $0xc4] sm:$0xf]
        %v3663 = vld [vmem:[%s1028 + $0xc8] sm:$0xf]
        %v3664 = vld [vmem:[%s1028 + $0xcc] sm:$0xf]
        %v3665 = vld [vmem:[%s1028 + $0xd0] sm:$0xf]
        %v3666 = vld [vmem:[%s1028 + $0xd4] sm:$0xf]
        %v3667 = vld [vmem:[%s1028 + $0xd8] sm:$0xf]
        %v3668 = vld [vmem:[%s1028 + $0xdc] sm:$0xf]
        %v3669 = vld [vmem:[%s1028 + $0xe0] sm:$0xf]
        %v3670 = vld [vmem:[%s1028 + $0xe4] sm:$0xf]
        %v3671 = vld [vmem:[%s1028 + $0xe8] sm:$0xf]
        %v3672 = vld [vmem:[%s1028 + $0xec] sm:$0xf]
        %v3673 = vld [vmem:[%s1028 + $0xf0] sm:$0xf]
        %v3674 = vld [vmem:[%s1028 + $0xf4] sm:$0xf]
        %v3675 = vld [vmem:[%s1028 + $0xf8] sm:$0xf]
        %v3676 = vld [vmem:[%s1028 + $0xfc] sm:$0xf]
        %v3677 = vld [vmem:[%s1028 + $0x100] sm:$0xf]
        %v3678 = vld [vmem:[%s1028 + $0x104] sm:$0xf]
        %v3679 = vld [vmem:[%s1028 + $0x108] sm:$0xf]
        %v3680 = vld [vmem:[%s1028 + $0x10c] sm:$0xf]
        %s3681 = scalar_lea.vmem %s1, 4
        %v3682 = vld [vmem:[%s3681] sm:$0x3]
        %v3747 = vunpack.c.l.b16 %v3617
        %v3748 = vunpack.c.l.b16 %v3618
        %v3749 = vunpack.c.l.b16 %v3619
        %v3750 = vunpack.c.l.b16 %v3620
        %v3751 = vunpack.c.l.b16 %v3621
        %v3752 = vunpack.c.l.b16 %v3622
        %v3753 = vunpack.c.l.b16 %v3623
        %v3754 = vunpack.c.l.b16 %v3624
        %v3755 = vunpack.c.l.b16 %v3625
        %v3756 = vunpack.c.l.b16 %v3626
        %v3757 = vunpack.c.l.b16 %v3627
        %v3758 = vunpack.c.l.b16 %v3628
        %v3759 = vunpack.c.l.b16 %v3629
        %v3760 = vunpack.c.l.b16 %v3630
        %v3761 = vunpack.c.l.b16 %v3631
        %v3762 = vunpack.c.l.b16 %v3632
        %v3763 = vunpack.c.l.b16 %v3633
        %v3764 = vunpack.c.l.b16 %v3634
        %v3765 = vunpack.c.l.b16 %v3635
        %v3766 = vunpack.c.l.b16 %v3636
        %v3767 = vunpack.c.l.b16 %v3637
        %v3768 = vunpack.c.l.b16 %v3638
        %v3769 = vunpack.c.l.b16 %v3639
        %v3770 = vunpack.c.l.b16 %v3640
        %v3771 = vunpack.c.l.b16 %v3641
        %v3772 = vunpack.c.l.b16 %v3642
        %v3773 = vunpack.c.l.b16 %v3643
        %v3774 = vunpack.c.l.b16 %v3644
        %v3775 = vunpack.c.l.b16 %v3645
        %v3776 = vunpack.c.l.b16 %v3646
        %v3777 = vunpack.c.l.b16 %v3647
        %v3778 = vunpack.c.l.b16 %v3648
        %v3779 = vunpack.c.l.b16 %v3649
        %v3780 = vunpack.c.l.b16 %v3650
        %v3781 = vunpack.c.l.b16 %v3651
        %v3782 = vunpack.c.l.b16 %v3652
        %v3783 = vunpack.c.l.b16 %v3653
        %v3784 = vunpack.c.l.b16 %v3654
        %v3785 = vunpack.c.l.b16 %v3655
        %v3786 = vunpack.c.l.b16 %v3656
        %v3787 = vunpack.c.l.b16 %v3657
        %v3788 = vunpack.c.l.b16 %v3658
        %v3789 = vunpack.c.l.b16 %v3659
        %v3790 = vunpack.c.l.b16 %v3660
        %v3791 = vunpack.c.l.b16 %v3661
        %v3792 = vunpack.c.l.b16 %v3662
        %v3793 = vunpack.c.l.b16 %v3663
        %v3794 = vunpack.c.l.b16 %v3664
        %v3795 = vunpack.c.l.b16 %v3665
        %v3796 = vunpack.c.l.b16 %v3666
        %v3797 = vunpack.c.l.b16 %v3667
        %v3798 = vunpack.c.l.b16 %v3668
        %v3799 = vunpack.c.l.b16 %v3669
        %v3800 = vunpack.c.l.b16 %v3670
        %v3801 = vunpack.c.l.b16 %v3671
        %v3802 = vunpack.c.l.b16 %v3672
        %v3803 = vunpack.c.l.b16 %v3673
        %v3804 = vunpack.c.l.b16 %v3674
        %v3805 = vunpack.c.l.b16 %v3675
        %v3806 = vunpack.c.l.b16 %v3676
        %v3807 = vunpack.c.l.b16 %v3677
        %v3808 = vunpack.c.l.b16 %v3678
        %v3809 = vunpack.c.l.b16 %v3679
        %v3810 = vunpack.c.l.b16 %v3680
        %v3811 = vpack.c.b16 %v3748, %v3747
        %v3812 = vpack.c.b16 %v3750, %v3749
        %v3813 = vpack.c.b16 %v3752, %v3751
        %v3814 = vpack.c.b16 %v3754, %v3753
        %v3815 = vpack.c.b16 %v3756, %v3755
        %v3816 = vpack.c.b16 %v3758, %v3757
        %v3817 = vpack.c.b16 %v3760, %v3759
        %v3818 = vpack.c.b16 %v3762, %v3761
        %v3819 = vpack.c.b16 %v3764, %v3763
        %v3820 = vpack.c.b16 %v3766, %v3765
        %v3821 = vpack.c.b16 %v3768, %v3767
        %v3822 = vpack.c.b16 %v3770, %v3769
        %v3823 = vpack.c.b16 %v3772, %v3771
        %v3824 = vpack.c.b16 %v3774, %v3773
        %v3825 = vpack.c.b16 %v3776, %v3775
        %v3826 = vpack.c.b16 %v3778, %v3777
        %v3827 = vpack.c.b16 %v3780, %v3779
        %v3828 = vpack.c.b16 %v3782, %v3781
        %v3829 = vpack.c.b16 %v3784, %v3783
        %v3830 = vpack.c.b16 %v3786, %v3785
        %v3831 = vpack.c.b16 %v3788, %v3787
        %v3832 = vpack.c.b16 %v3790, %v3789
        %v3833 = vpack.c.b16 %v3792, %v3791
        %v3834 = vpack.c.b16 %v3794, %v3793
        %v3835 = vpack.c.b16 %v3796, %v3795
        %v3836 = vpack.c.b16 %v3798, %v3797
        %v3837 = vpack.c.b16 %v3800, %v3799
        %v3838 = vpack.c.b16 %v3802, %v3801
        %v3839 = vpack.c.b16 %v3804, %v3803
        %v3840 = vpack.c.b16 %v3806, %v3805
        %v3841 = vpack.c.b16 %v3808, %v3807
        %v3842 = vpack.c.b16 %v3810, %v3809
        %v3844 = vsel %vm340, %v3811, 0
        %v3847 = vsel %vm340, %v3812, 0
        %v3850 = vsel %vm340, %v3813, 0
        %v3853 = vsel %vm340, %v3814, 0
        %v3856 = vsel %vm340, %v3815, 0
        %v3859 = vsel %vm340, %v3816, 0
        %v3862 = vsel %vm340, %v3817, 0
        %v3865 = vsel %vm340, %v3818, 0
        %v3868 = vsel %vm340, %v3819, 0
        %v3871 = vsel %vm340, %v3820, 0
        %v3874 = vsel %vm340, %v3821, 0
        %v3877 = vsel %vm340, %v3822, 0
        %v3880 = vsel %vm340, %v3823, 0
        %v3883 = vsel %vm340, %v3824, 0
        %v3886 = vsel %vm340, %v3825, 0
        %v3889 = vsel %vm340, %v3826, 0
        %v3892 = vsel %vm340, %v3827, 0
        %v3895 = vsel %vm340, %v3828, 0
        %v3898 = vsel %vm340, %v3829, 0
        %v3901 = vsel %vm340, %v3830, 0
        %v3904 = vsel %vm340, %v3831, 0
        %v3907 = vsel %vm340, %v3832, 0
        %v3910 = vsel %vm340, %v3833, 0
        %v3913 = vsel %vm340, %v3834, 0
        %v3916 = vsel %vm340, %v3835, 0
        %v3919 = vsel %vm340, %v3836, 0
        %v3922 = vsel %vm340, %v3837, 0
        %v3925 = vsel %vm340, %v3838, 0
        %v3928 = vsel %vm340, %v3839, 0
        %v3931 = vsel %vm340, %v3840, 0
        %v3934 = vsel %vm340, %v3841, 0
        %v3937 = vsel %vm340, %v3842, 0
        %v3940 = vsel %vm2453, %v3682, 0
        %3942 = vmatprep.subr.bf16.mxu0 0
        %3943 = vmatpush1.bf16.msra.mxu0 0
        %3944 = vmatprep.subr.bf16.mxu0 0
        %3945 = vmatpush1.bf16.msra.mxu0 0
        %3946 = vmatprep.subr.bf16.mxu0 0
        %3947 = vmatpush1.bf16.msra.mxu0 0
        %3948 = vmatprep.subr.bf16.mxu0 0
        %3949 = vmatpush1.bf16.msra.mxu0 0
        %3950 = vmatprep.subr.bf16.mxu0 0
        %3951 = vmatpush1.bf16.msra.mxu0 0
        %3952 = vmatprep.subr.bf16.mxu0 0
        %3953 = vmatpush1.bf16.msra.mxu0 0
        %3954 = vmatprep.subr.bf16.mxu0 0
        %3955 = vmatpush1.bf16.msra.mxu0 0
        %3956 = vmatprep.subr.bf16.mxu0 0
        %3957 = vmatpush1.bf16.msra.mxu0 %v3940
        %3958 = vmatprep.subr.bf16.mxu0 0
        %3959 = vmatpush2.bf16.msra.mxu0 0
        %3960 = vmatprep.subr.bf16.mxu0 0
        %3961 = vmatpush2.bf16.msra.mxu0 0
        %3962 = vmatprep.subr.bf16.mxu0 0
        %3963 = vmatpush2.bf16.msra.mxu0 0
        %3964 = vmatprep.subr.bf16.mxu0 0
        %3965 = vmatpush2.bf16.msra.mxu0 0
        %3966 = vmatprep.subr.bf16.mxu0 0
        %3967 = vmatpush2.bf16.msra.mxu0 0
        %3968 = vmatprep.subr.bf16.mxu0 0
        %3969 = vmatpush2.bf16.msra.mxu0 0
        %3970 = vmatprep.subr.bf16.mxu0 0
        %3971 = vmatpush2.bf16.msra.mxu0 0
        %3972 = vmatprep.subr.bf16.mxu0 0
        %3973 = vmatpush2.bf16.msra.mxu0 0
        %3974 = vmatprep.mubr.bf16.mxu0 0
        %3975 = vmatmul.mubr.bf16.gmra.mxu0 %v3844
        %v3976 = vpop.f32.mrf.mxu0
        %v3977 = vadd.f32 0.0, %v3976
        %v3978 = vpop.f32.mrf.mxu0
        %v3979 = vpop.f32.mrf.mxu0
        %v3980 = vadd.f32 0.0, %v3979
        %v3981 = vpop.f32.mrf.mxu0
        %3982 = vmatprep.mubr.bf16.mxu0 0
        %3983 = vmatmul.mubr.bf16.gmra.mxu0 %v3847
        %v3984 = vpop.f32.mrf.mxu0
        %v3985 = vadd.f32 0.0, %v3984
        %v3986 = vpop.f32.mrf.mxu0
        %v3987 = vpop.f32.mrf.mxu0
        %v3988 = vadd.f32 0.0, %v3987
        %v3989 = vpop.f32.mrf.mxu0
        %3990 = vmatprep.mubr.bf16.mxu0 0
        %3991 = vmatmul.mubr.bf16.gmra.mxu0 %v3850
        %v3992 = vpop.f32.mrf.mxu0
        %v3993 = vadd.f32 0.0, %v3992
        %v3994 = vpop.f32.mrf.mxu0
        %v3995 = vpop.f32.mrf.mxu0
        %v3996 = vadd.f32 0.0, %v3995
        %v3997 = vpop.f32.mrf.mxu0
        %3998 = vmatprep.mubr.bf16.mxu0 0
        %3999 = vmatmul.mubr.bf16.gmra.mxu0 %v3853
        %v4000 = vpop.f32.mrf.mxu0
        %v4001 = vadd.f32 0.0, %v4000
        %v4002 = vpop.f32.mrf.mxu0
        %v4003 = vpop.f32.mrf.mxu0
        %v4004 = vadd.f32 0.0, %v4003
        %v4005 = vpop.f32.mrf.mxu0
        %4006 = vmatprep.mubr.bf16.mxu0 0
        %4007 = vmatmul.mubr.bf16.gmra.mxu0 %v3856
        %v4008 = vpop.f32.mrf.mxu0
        %v4009 = vadd.f32 0.0, %v4008
        %v4010 = vpop.f32.mrf.mxu0
        %v4011 = vpop.f32.mrf.mxu0
        %v4012 = vadd.f32 0.0, %v4011
        %v4013 = vpop.f32.mrf.mxu0
        %4014 = vmatprep.mubr.bf16.mxu0 0
        %4015 = vmatmul.mubr.bf16.gmra.mxu0 %v3859
        %v4016 = vpop.f32.mrf.mxu0
        %v4017 = vadd.f32 0.0, %v4016
        %v4018 = vpop.f32.mrf.mxu0
        %v4019 = vpop.f32.mrf.mxu0
        %v4020 = vadd.f32 0.0, %v4019
        %v4021 = vpop.f32.mrf.mxu0
        %4022 = vmatprep.mubr.bf16.mxu0 0
        %4023 = vmatmul.mubr.bf16.gmra.mxu0 %v3862
        %v4024 = vpop.f32.mrf.mxu0
        %v4025 = vadd.f32 0.0, %v4024
        %v4026 = vpop.f32.mrf.mxu0
        %v4027 = vpop.f32.mrf.mxu0
        %v4028 = vadd.f32 0.0, %v4027
        %v4029 = vpop.f32.mrf.mxu0
        %4030 = vmatprep.mubr.bf16.mxu0 0
        %4031 = vmatmul.mubr.bf16.gmra.mxu0 %v3865
        %v4032 = vpop.f32.mrf.mxu0
        %v4033 = vadd.f32 0.0, %v4032
        %v4034 = vpop.f32.mrf.mxu0
        %v4035 = vpop.f32.mrf.mxu0
        %v4036 = vadd.f32 0.0, %v4035
        %v4037 = vpop.f32.mrf.mxu0
        %4038 = vmatprep.mubr.bf16.mxu0 0
        %4039 = vmatmul.mubr.bf16.gmra.mxu0 %v3868
        %v4040 = vpop.f32.mrf.mxu0
        %v4041 = vadd.f32 0.0, %v4040
        %v4042 = vpop.f32.mrf.mxu0
        %v4043 = vpop.f32.mrf.mxu0
        %v4044 = vadd.f32 0.0, %v4043
        %v4045 = vpop.f32.mrf.mxu0
        %4046 = vmatprep.mubr.bf16.mxu0 0
        %4047 = vmatmul.mubr.bf16.gmra.mxu0 %v3871
        %v4048 = vpop.f32.mrf.mxu0
        %v4049 = vadd.f32 0.0, %v4048
        %v4050 = vpop.f32.mrf.mxu0
        %v4051 = vpop.f32.mrf.mxu0
        %v4052 = vadd.f32 0.0, %v4051
        %v4053 = vpop.f32.mrf.mxu0
        %4054 = vmatprep.mubr.bf16.mxu0 0
        %4055 = vmatmul.mubr.bf16.gmra.mxu0 %v3874
        %v4056 = vpop.f32.mrf.mxu0
        %v4057 = vadd.f32 0.0, %v4056
        %v4058 = vpop.f32.mrf.mxu0
        %v4059 = vpop.f32.mrf.mxu0
        %v4060 = vadd.f32 0.0, %v4059
        %v4061 = vpop.f32.mrf.mxu0
        %4062 = vmatprep.mubr.bf16.mxu0 0
        %4063 = vmatmul.mubr.bf16.gmra.mxu0 %v3877
        %v4064 = vpop.f32.mrf.mxu0
        %v4065 = vadd.f32 0.0, %v4064
        %v4066 = vpop.f32.mrf.mxu0
        %v4067 = vpop.f32.mrf.mxu0
        %v4068 = vadd.f32 0.0, %v4067
        %v4069 = vpop.f32.mrf.mxu0
        %4070 = vmatprep.mubr.bf16.mxu0 0
        %4071 = vmatmul.mubr.bf16.gmra.mxu0 %v3880
        %v4072 = vpop.f32.mrf.mxu0
        %v4073 = vadd.f32 0.0, %v4072
        %v4074 = vpop.f32.mrf.mxu0
        %v4075 = vpop.f32.mrf.mxu0
        %v4076 = vadd.f32 0.0, %v4075
        %v4077 = vpop.f32.mrf.mxu0
        %4078 = vmatprep.mubr.bf16.mxu0 0
        %4079 = vmatmul.mubr.bf16.gmra.mxu0 %v3883
        %v4080 = vpop.f32.mrf.mxu0
        %v4081 = vadd.f32 0.0, %v4080
        %v4082 = vpop.f32.mrf.mxu0
        %v4083 = vpop.f32.mrf.mxu0
        %v4084 = vadd.f32 0.0, %v4083
        %v4085 = vpop.f32.mrf.mxu0
        %4086 = vmatprep.mubr.bf16.mxu0 0
        %4087 = vmatmul.mubr.bf16.gmra.mxu0 %v3886
        %v4088 = vpop.f32.mrf.mxu0
        %v4089 = vadd.f32 0.0, %v4088
        %v4090 = vpop.f32.mrf.mxu0
        %v4091 = vpop.f32.mrf.mxu0
        %v4092 = vadd.f32 0.0, %v4091
        %v4093 = vpop.f32.mrf.mxu0
        %4094 = vmatprep.mubr.bf16.mxu0 0
        %4095 = vmatmul.mubr.bf16.gmra.mxu0 %v3889
        %v4096 = vpop.f32.mrf.mxu0
        %v4097 = vadd.f32 0.0, %v4096
        %v4098 = vpop.f32.mrf.mxu0
        %v4099 = vpop.f32.mrf.mxu0
        %v4100 = vadd.f32 0.0, %v4099
        %v4101 = vpop.f32.mrf.mxu0
        %4102 = vmatprep.mubr.bf16.mxu0 0
        %4103 = vmatmul.mubr.bf16.gmra.mxu0 %v3892
        %v4104 = vpop.f32.mrf.mxu0
        %v4105 = vadd.f32 0.0, %v4104
        %v4106 = vpop.f32.mrf.mxu0
        %v4107 = vpop.f32.mrf.mxu0
        %v4108 = vadd.f32 0.0, %v4107
        %v4109 = vpop.f32.mrf.mxu0
        %4110 = vmatprep.mubr.bf16.mxu0 0
        %4111 = vmatmul.mubr.bf16.gmra.mxu0 %v3895
        %v4112 = vpop.f32.mrf.mxu0
        %v4113 = vadd.f32 0.0, %v4112
        %v4114 = vpop.f32.mrf.mxu0
        %v4115 = vpop.f32.mrf.mxu0
        %v4116 = vadd.f32 0.0, %v4115
        %v4117 = vpop.f32.mrf.mxu0
        %4118 = vmatprep.mubr.bf16.mxu0 0
        %4119 = vmatmul.mubr.bf16.gmra.mxu0 %v3898
        %v4120 = vpop.f32.mrf.mxu0
        %v4121 = vadd.f32 0.0, %v4120
        %v4122 = vpop.f32.mrf.mxu0
        %v4123 = vpop.f32.mrf.mxu0
        %v4124 = vadd.f32 0.0, %v4123
        %v4125 = vpop.f32.mrf.mxu0
        %4126 = vmatprep.mubr.bf16.mxu0 0
        %4127 = vmatmul.mubr.bf16.gmra.mxu0 %v3901
        %v4128 = vpop.f32.mrf.mxu0
        %v4129 = vadd.f32 0.0, %v4128
        %v4130 = vpop.f32.mrf.mxu0
        %v4131 = vpop.f32.mrf.mxu0
        %v4132 = vadd.f32 0.0, %v4131
        %v4133 = vpop.f32.mrf.mxu0
        %4134 = vmatprep.mubr.bf16.mxu0 0
        %4135 = vmatmul.mubr.bf16.gmra.mxu0 %v3904
        %v4136 = vpop.f32.mrf.mxu0
        %v4137 = vadd.f32 0.0, %v4136
        %v4138 = vpop.f32.mrf.mxu0
        %v4139 = vpop.f32.mrf.mxu0
        %v4140 = vadd.f32 0.0, %v4139
        %v4141 = vpop.f32.mrf.mxu0
        %4142 = vmatprep.mubr.bf16.mxu0 0
        %4143 = vmatmul.mubr.bf16.gmra.mxu0 %v3907
        %v4144 = vpop.f32.mrf.mxu0
        %v4145 = vadd.f32 0.0, %v4144
        %v4146 = vpop.f32.mrf.mxu0
        %v4147 = vpop.f32.mrf.mxu0
        %v4148 = vadd.f32 0.0, %v4147
        %v4149 = vpop.f32.mrf.mxu0
        %4150 = vmatprep.mubr.bf16.mxu0 0
        %4151 = vmatmul.mubr.bf16.gmra.mxu0 %v3910
        %v4152 = vpop.f32.mrf.mxu0
        %v4153 = vadd.f32 0.0, %v4152
        %v4154 = vpop.f32.mrf.mxu0
        %v4155 = vpop.f32.mrf.mxu0
        %v4156 = vadd.f32 0.0, %v4155
        %v4157 = vpop.f32.mrf.mxu0
        %4158 = vmatprep.mubr.bf16.mxu0 0
        %4159 = vmatmul.mubr.bf16.gmra.mxu0 %v3913
        %v4160 = vpop.f32.mrf.mxu0
        %v4161 = vadd.f32 0.0, %v4160
        %v4162 = vpop.f32.mrf.mxu0
        %v4163 = vpop.f32.mrf.mxu0
        %v4164 = vadd.f32 0.0, %v4163
        %v4165 = vpop.f32.mrf.mxu0
        %4166 = vmatprep.mubr.bf16.mxu0 0
        %4167 = vmatmul.mubr.bf16.gmra.mxu0 %v3916
        %v4168 = vpop.f32.mrf.mxu0
        %v4169 = vadd.f32 0.0, %v4168
        %v4170 = vpop.f32.mrf.mxu0
        %v4171 = vpop.f32.mrf.mxu0
        %v4172 = vadd.f32 0.0, %v4171
        %v4173 = vpop.f32.mrf.mxu0
        %4174 = vmatprep.mubr.bf16.mxu0 0
        %4175 = vmatmul.mubr.bf16.gmra.mxu0 %v3919
        %v4176 = vpop.f32.mrf.mxu0
        %v4177 = vadd.f32 0.0, %v4176
        %v4178 = vpop.f32.mrf.mxu0
        %v4179 = vpop.f32.mrf.mxu0
        %v4180 = vadd.f32 0.0, %v4179
        %v4181 = vpop.f32.mrf.mxu0
        %4182 = vmatprep.mubr.bf16.mxu0 0
        %4183 = vmatmul.mubr.bf16.gmra.mxu0 %v3922
        %v4184 = vpop.f32.mrf.mxu0
        %v4185 = vadd.f32 0.0, %v4184
        %v4186 = vpop.f32.mrf.mxu0
        %v4187 = vpop.f32.mrf.mxu0
        %v4188 = vadd.f32 0.0, %v4187
        %v4189 = vpop.f32.mrf.mxu0
        %4190 = vmatprep.mubr.bf16.mxu0 0
        %4191 = vmatmul.mubr.bf16.gmra.mxu0 %v3925
        %v4192 = vpop.f32.mrf.mxu0
        %v4193 = vadd.f32 0.0, %v4192
        %v4194 = vpop.f32.mrf.mxu0
        %v4195 = vpop.f32.mrf.mxu0
        %v4196 = vadd.f32 0.0, %v4195
        %v4197 = vpop.f32.mrf.mxu0
        %4198 = vmatprep.mubr.bf16.mxu0 0
        %4199 = vmatmul.mubr.bf16.gmra.mxu0 %v3928
        %v4200 = vpop.f32.mrf.mxu0
        %v4201 = vadd.f32 0.0, %v4200
        %v4202 = vpop.f32.mrf.mxu0
        %v4203 = vpop.f32.mrf.mxu0
        %v4204 = vadd.f32 0.0, %v4203
        %v4205 = vpop.f32.mrf.mxu0
        %4206 = vmatprep.mubr.bf16.mxu0 0
        %4207 = vmatmul.mubr.bf16.gmra.mxu0 %v3931
        %v4208 = vpop.f32.mrf.mxu0
        %v4209 = vadd.f32 0.0, %v4208
        %v4210 = vpop.f32.mrf.mxu0
        %v4211 = vpop.f32.mrf.mxu0
        %v4212 = vadd.f32 0.0, %v4211
        %v4213 = vpop.f32.mrf.mxu0
        %4214 = vmatprep.mubr.bf16.mxu0 0
        %4215 = vmatmul.mubr.bf16.gmra.mxu0 %v3934
        %v4216 = vpop.f32.mrf.mxu0
        %v4217 = vadd.f32 0.0, %v4216
        %v4218 = vpop.f32.mrf.mxu0
        %v4219 = vpop.f32.mrf.mxu0
        %v4220 = vadd.f32 0.0, %v4219
        %v4221 = vpop.f32.mrf.mxu0
        %4222 = vmatprep.mubr.bf16.mxu0 0
        %4223 = vmatmul.mubr.bf16.gmra.mxu0 %v3937
        %v4224 = vpop.f32.mrf.mxu0
        %v4225 = vadd.f32 0.0, %v4224
        %v4226 = vpop.f32.mrf.mxu0
        %v4227 = vpop.f32.mrf.mxu0
        %v4228 = vadd.f32 0.0, %v4227
        %v4229 = vpop.f32.mrf.mxu0
        %4230 = vdwg.mxu0
        %v4231 = vld [vmem:[#allocation4] sm:$0xff]
        %v4232 = vld [vmem:[#allocation4 + $0x8] sm:$0xff]
        %v4233 = vld [vmem:[#allocation4 + $0x10] sm:$0xff]
        %v4234 = vld [vmem:[#allocation4 + $0x18] sm:$0xff]
        %v4235 = vld [vmem:[#allocation4 + $0x20] sm:$0xff]
        %v4236 = vld [vmem:[#allocation4 + $0x28] sm:$0xff]
        %v4237 = vld [vmem:[#allocation4 + $0x30] sm:$0xff]
        %v4238 = vld [vmem:[#allocation4 + $0x38] sm:$0xff]
        %v4239 = vld [vmem:[#allocation4 + $0x40] sm:$0xff]
        %v4240 = vld [vmem:[#allocation4 + $0x48] sm:$0xff]
        %v4241 = vld [vmem:[#allocation4 + $0x50] sm:$0xff]
        %v4242 = vld [vmem:[#allocation4 + $0x58] sm:$0xff]
        %v4243 = vld [vmem:[#allocation4 + $0x60] sm:$0xff]
        %v4244 = vld [vmem:[#allocation4 + $0x68] sm:$0xff]
        %v4245 = vld [vmem:[#allocation4 + $0x70] sm:$0xff]
        %v4246 = vld [vmem:[#allocation4 + $0x78] sm:$0xff]
        %v4247 = vld [vmem:[#allocation4 + $0x80] sm:$0xff]
        %v4248 = vld [vmem:[#allocation4 + $0x88] sm:$0xff]
        %v4249 = vld [vmem:[#allocation4 + $0x90] sm:$0xff]
        %v4250 = vld [vmem:[#allocation4 + $0x98] sm:$0xff]
        %v4251 = vld [vmem:[#allocation4 + $0xa0] sm:$0xff]
        %v4252 = vld [vmem:[#allocation4 + $0xa8] sm:$0xff]
        %v4253 = vld [vmem:[#allocation4 + $0xb0] sm:$0xff]
        %v4254 = vld [vmem:[#allocation4 + $0xb8] sm:$0xff]
        %v4255 = vld [vmem:[#allocation4 + $0xc0] sm:$0xff]
        %v4256 = vld [vmem:[#allocation4 + $0xc8] sm:$0xff]
        %v4257 = vld [vmem:[#allocation4 + $0xd0] sm:$0xff]
        %v4258 = vld [vmem:[#allocation4 + $0xd8] sm:$0xff]
        %v4259 = vld [vmem:[#allocation4 + $0xe0] sm:$0xff]
        %v4260 = vld [vmem:[#allocation4 + $0xe8] sm:$0xff]
        %v4261 = vld [vmem:[#allocation4 + $0xf0] sm:$0xff]
        %v4262 = vld [vmem:[#allocation4 + $0xf8] sm:$0xff]
        %v4263 = vld [vmem:[#allocation4 + $0x100] sm:$0xff]
        %v4264 = vld [vmem:[#allocation4 + $0x108] sm:$0xff]
        %v4265 = vld [vmem:[#allocation4 + $0x110] sm:$0xff]
        %v4266 = vld [vmem:[#allocation4 + $0x118] sm:$0xff]
        %v4267 = vld [vmem:[#allocation4 + $0x120] sm:$0xff]
        %v4268 = vld [vmem:[#allocation4 + $0x128] sm:$0xff]
        %v4269 = vld [vmem:[#allocation4 + $0x130] sm:$0xff]
        %v4270 = vld [vmem:[#allocation4 + $0x138] sm:$0xff]
        %v4271 = vld [vmem:[#allocation4 + $0x140] sm:$0xff]
        %v4272 = vld [vmem:[#allocation4 + $0x148] sm:$0xff]
        %v4273 = vld [vmem:[#allocation4 + $0x150] sm:$0xff]
        %v4274 = vld [vmem:[#allocation4 + $0x158] sm:$0xff]
        %v4275 = vld [vmem:[#allocation4 + $0x160] sm:$0xff]
        %v4276 = vld [vmem:[#allocation4 + $0x168] sm:$0xff]
        %v4277 = vld [vmem:[#allocation4 + $0x170] sm:$0xff]
        %v4278 = vld [vmem:[#allocation4 + $0x178] sm:$0xff]
        %v4279 = vld [vmem:[#allocation4 + $0x180] sm:$0xff]
        %v4280 = vld [vmem:[#allocation4 + $0x188] sm:$0xff]
        %v4281 = vld [vmem:[#allocation4 + $0x190] sm:$0xff]
        %v4282 = vld [vmem:[#allocation4 + $0x198] sm:$0xff]
        %v4283 = vld [vmem:[#allocation4 + $0x1a0] sm:$0xff]
        %v4284 = vld [vmem:[#allocation4 + $0x1a8] sm:$0xff]
        %v4285 = vld [vmem:[#allocation4 + $0x1b0] sm:$0xff]
        %v4286 = vld [vmem:[#allocation4 + $0x1b8] sm:$0xff]
        %v4287 = vld [vmem:[#allocation4 + $0x1c0] sm:$0xff]
        %v4288 = vld [vmem:[#allocation4 + $0x1c8] sm:$0xff]
        %v4289 = vld [vmem:[#allocation4 + $0x1d0] sm:$0xff]
        %v4290 = vld [vmem:[#allocation4 + $0x1d8] sm:$0xff]
        %v4291 = vld [vmem:[#allocation4 + $0x1e0] sm:$0xff]
        %v4292 = vld [vmem:[#allocation4 + $0x1e8] sm:$0xff]
        %v4293 = vld [vmem:[#allocation4 + $0x1f0] sm:$0xff]
        %v4294 = vld [vmem:[#allocation4 + $0x1f8] sm:$0xff]
        %v4295 = vadd.f32 %v4231, %v3977
        %v4296 = vadd.f32 %v4232, %v3980
        %v4297 = vadd.f32 %v4233, %v3985
        %v4298 = vadd.f32 %v4234, %v3988
        %v4299 = vadd.f32 %v4235, %v3993
        %v4300 = vadd.f32 %v4236, %v3996
        %v4301 = vadd.f32 %v4237, %v4001
        %v4302 = vadd.f32 %v4238, %v4004
        %v4303 = vadd.f32 %v4239, %v4009
        %v4304 = vadd.f32 %v4240, %v4012
        %v4305 = vadd.f32 %v4241, %v4017
        %v4306 = vadd.f32 %v4242, %v4020
        %v4307 = vadd.f32 %v4243, %v4025
        %v4308 = vadd.f32 %v4244, %v4028
        %v4309 = vadd.f32 %v4245, %v4033
        %v4310 = vadd.f32 %v4246, %v4036
        %v4311 = vadd.f32 %v4247, %v4041
        %v4312 = vadd.f32 %v4248, %v4044
        %v4313 = vadd.f32 %v4249, %v4049
        %v4314 = vadd.f32 %v4250, %v4052
        %v4315 = vadd.f32 %v4251, %v4057
        %v4316 = vadd.f32 %v4252, %v4060
        %v4317 = vadd.f32 %v4253, %v4065
        %v4318 = vadd.f32 %v4254, %v4068
        %v4319 = vadd.f32 %v4255, %v4073
        %v4320 = vadd.f32 %v4256, %v4076
        %v4321 = vadd.f32 %v4257, %v4081
        %v4322 = vadd.f32 %v4258, %v4084
        %v4323 = vadd.f32 %v4259, %v4089
        %v4324 = vadd.f32 %v4260, %v4092
        %v4325 = vadd.f32 %v4261, %v4097
        %v4326 = vadd.f32 %v4262, %v4100
        %v4327 = vadd.f32 %v4263, %v4105
        %v4328 = vadd.f32 %v4264, %v4108
        %v4329 = vadd.f32 %v4265, %v4113
        %v4330 = vadd.f32 %v4266, %v4116
        %v4331 = vadd.f32 %v4267, %v4121
        %v4332 = vadd.f32 %v4268, %v4124
        %v4333 = vadd.f32 %v4269, %v4129
        %v4334 = vadd.f32 %v4270, %v4132
        %v4335 = vadd.f32 %v4271, %v4137
        %v4336 = vadd.f32 %v4272, %v4140
        %v4337 = vadd.f32 %v4273, %v4145
        %v4338 = vadd.f32 %v4274, %v4148
        %v4339 = vadd.f32 %v4275, %v4153
        %v4340 = vadd.f32 %v4276, %v4156
        %v4341 = vadd.f32 %v4277, %v4161
        %v4342 = vadd.f32 %v4278, %v4164
        %v4343 = vadd.f32 %v4279, %v4169
        %v4344 = vadd.f32 %v4280, %v4172
        %v4345 = vadd.f32 %v4281, %v4177
        %v4346 = vadd.f32 %v4282, %v4180
        %v4347 = vadd.f32 %v4283, %v4185
        %v4348 = vadd.f32 %v4284, %v4188
        %v4349 = vadd.f32 %v4285, %v4193
        %v4350 = vadd.f32 %v4286, %v4196
        %v4351 = vadd.f32 %v4287, %v4201
        %v4352 = vadd.f32 %v4288, %v4204
        %v4353 = vadd.f32 %v4289, %v4209
        %v4354 = vadd.f32 %v4290, %v4212
        %v4355 = vadd.f32 %v4291, %v4217
        %v4356 = vadd.f32 %v4292, %v4220
        %v4357 = vadd.f32 %v4293, %v4225
        %v4358 = vadd.f32 %v4294, %v4228
        %4359 = vst.msk [vmem:[#allocation4] sm:$0xff] %vm2746, %v4295
        %4360 = vst.msk [vmem:[#allocation4 + $0x8] sm:$0xff] %vm2746, %v4296
        %4361 = vst.msk [vmem:[#allocation4 + $0x10] sm:$0xff] %vm2746, %v4297
        %4362 = vst.msk [vmem:[#allocation4 + $0x18] sm:$0xff] %vm2746, %v4298
        %4363 = vst.msk [vmem:[#allocation4 + $0x20] sm:$0xff] %vm2746, %v4299
        %4364 = vst.msk [vmem:[#allocation4 + $0x28] sm:$0xff] %vm2746, %v4300
        %4365 = vst.msk [vmem:[#allocation4 + $0x30] sm:$0xff] %vm2746, %v4301
        %4366 = vst.msk [vmem:[#allocation4 + $0x38] sm:$0xff] %vm2746, %v4302
        %4367 = vst.msk [vmem:[#allocation4 + $0x40] sm:$0xff] %vm2746, %v4303
        %4368 = vst.msk [vmem:[#allocation4 + $0x48] sm:$0xff] %vm2746, %v4304
        %4369 = vst.msk [vmem:[#allocation4 + $0x50] sm:$0xff] %vm2746, %v4305
        %4370 = vst.msk [vmem:[#allocation4 + $0x58] sm:$0xff] %vm2746, %v4306
        %4371 = vst.msk [vmem:[#allocation4 + $0x60] sm:$0xff] %vm2746, %v4307
        %4372 = vst.msk [vmem:[#allocation4 + $0x68] sm:$0xff] %vm2746, %v4308
        %4373 = vst.msk [vmem:[#allocation4 + $0x70] sm:$0xff] %vm2746, %v4309
        %4374 = vst.msk [vmem:[#allocation4 + $0x78] sm:$0xff] %vm2746, %v4310
        %4375 = vst.msk [vmem:[#allocation4 + $0x80] sm:$0xff] %vm2746, %v4311
        %4376 = vst.msk [vmem:[#allocation4 + $0x88] sm:$0xff] %vm2746, %v4312
        %4377 = vst.msk [vmem:[#allocation4 + $0x90] sm:$0xff] %vm2746, %v4313
        %4378 = vst.msk [vmem:[#allocation4 + $0x98] sm:$0xff] %vm2746, %v4314
        %4379 = vst.msk [vmem:[#allocation4 + $0xa0] sm:$0xff] %vm2746, %v4315
        %4380 = vst.msk [vmem:[#allocation4 + $0xa8] sm:$0xff] %vm2746, %v4316
        %4381 = vst.msk [vmem:[#allocation4 + $0xb0] sm:$0xff] %vm2746, %v4317
        %4382 = vst.msk [vmem:[#allocation4 + $0xb8] sm:$0xff] %vm2746, %v4318
        %4383 = vst.msk [vmem:[#allocation4 + $0xc0] sm:$0xff] %vm2746, %v4319
        %4384 = vst.msk [vmem:[#allocation4 + $0xc8] sm:$0xff] %vm2746, %v4320
        %4385 = vst.msk [vmem:[#allocation4 + $0xd0] sm:$0xff] %vm2746, %v4321
        %4386 = vst.msk [vmem:[#allocation4 + $0xd8] sm:$0xff] %vm2746, %v4322
        %4387 = vst.msk [vmem:[#allocation4 + $0xe0] sm:$0xff] %vm2746, %v4323
        %4388 = vst.msk [vmem:[#allocation4 + $0xe8] sm:$0xff] %vm2746, %v4324
        %4389 = vst.msk [vmem:[#allocation4 + $0xf0] sm:$0xff] %vm2746, %v4325
        %4390 = vst.msk [vmem:[#allocation4 + $0xf8] sm:$0xff] %vm2746, %v4326
        %4391 = vst.msk [vmem:[#allocation4 + $0x100] sm:$0xff] %vm2746, %v4327
        %4392 = vst.msk [vmem:[#allocation4 + $0x108] sm:$0xff] %vm2746, %v4328
        %4393 = vst.msk [vmem:[#allocation4 + $0x110] sm:$0xff] %vm2746, %v4329
        %4394 = vst.msk [vmem:[#allocation4 + $0x118] sm:$0xff] %vm2746, %v4330
        %4395 = vst.msk [vmem:[#allocation4 + $0x120] sm:$0xff] %vm2746, %v4331
        %4396 = vst.msk [vmem:[#allocation4 + $0x128] sm:$0xff] %vm2746, %v4332
        %4397 = vst.msk [vmem:[#allocation4 + $0x130] sm:$0xff] %vm2746, %v4333
        %4398 = vst.msk [vmem:[#allocation4 + $0x138] sm:$0xff] %vm2746, %v4334
        %4399 = vst.msk [vmem:[#allocation4 + $0x140] sm:$0xff] %vm2746, %v4335
        %4400 = vst.msk [vmem:[#allocation4 + $0x148] sm:$0xff] %vm2746, %v4336
        %4401 = vst.msk [vmem:[#allocation4 + $0x150] sm:$0xff] %vm2746, %v4337
        %4402 = vst.msk [vmem:[#allocation4 + $0x158] sm:$0xff] %vm2746, %v4338
        %4403 = vst.msk [vmem:[#allocation4 + $0x160] sm:$0xff] %vm2746, %v4339
        %4404 = vst.msk [vmem:[#allocation4 + $0x168] sm:$0xff] %vm2746, %v4340
        %4405 = vst.msk [vmem:[#allocation4 + $0x170] sm:$0xff] %vm2746, %v4341
        %4406 = vst.msk [vmem:[#allocation4 + $0x178] sm:$0xff] %vm2746, %v4342
        %4407 = vst.msk [vmem:[#allocation4 + $0x180] sm:$0xff] %vm2746, %v4343
        %4408 = vst.msk [vmem:[#allocation4 + $0x188] sm:$0xff] %vm2746, %v4344
        %4409 = vst.msk [vmem:[#allocation4 + $0x190] sm:$0xff] %vm2746, %v4345
        %4410 = vst.msk [vmem:[#allocation4 + $0x198] sm:$0xff] %vm2746, %v4346
        %4411 = vst.msk [vmem:[#allocation4 + $0x1a0] sm:$0xff] %vm2746, %v4347
        %4412 = vst.msk [vmem:[#allocation4 + $0x1a8] sm:$0xff] %vm2746, %v4348
        %4413 = vst.msk [vmem:[#allocation4 + $0x1b0] sm:$0xff] %vm2746, %v4349
        %4414 = vst.msk [vmem:[#allocation4 + $0x1b8] sm:$0xff] %vm2746, %v4350
        %4415 = vst.msk [vmem:[#allocation4 + $0x1c0] sm:$0xff] %vm2746, %v4351
        %4416 = vst.msk [vmem:[#allocation4 + $0x1c8] sm:$0xff] %vm2746, %v4352
        %4417 = vst.msk [vmem:[#allocation4 + $0x1d0] sm:$0xff] %vm2746, %v4353
        %4418 = vst.msk [vmem:[#allocation4 + $0x1d8] sm:$0xff] %vm2746, %v4354
        %4419 = vst.msk [vmem:[#allocation4 + $0x1e0] sm:$0xff] %vm2746, %v4355
        %4420 = vst.msk [vmem:[#allocation4 + $0x1e8] sm:$0xff] %vm2746, %v4356
        %4421 = vst.msk [vmem:[#allocation4 + $0x1f0] sm:$0xff] %vm2746, %v4357
        %4422 = vst.msk [vmem:[#allocation4 + $0x1f8] sm:$0xff] %vm2746, %v4358
        %s4423 = scalar_lea.vmem [#allocation3], 8
        %v4424 = vld [vmem:[%s4423] sm:$0xf]
        %v4425 = vld [vmem:[%s4423 + $0x4] sm:$0xf]
        %v4426 = vld [vmem:[%s4423 + $0x8] sm:$0xf]
        %v4427 = vld [vmem:[%s4423 + $0xc] sm:$0xf]
        %v4428 = vld [vmem:[%s4423 + $0x10] sm:$0xf]
        %v4429 = vld [vmem:[%s4423 + $0x14] sm:$0xf]
        %v4430 = vld [vmem:[%s4423 + $0x18] sm:$0xf]
        %v4431 = vld [vmem:[%s4423 + $0x1c] sm:$0xf]
        %v4432 = vld [vmem:[%s4423 + $0x20] sm:$0xf]
        %v4433 = vld [vmem:[%s4423 + $0x24] sm:$0xf]
        %v4434 = vld [vmem:[%s4423 + $0x28] sm:$0xf]
        %v4435 = vld [vmem:[%s4423 + $0x2c] sm:$0xf]
        %v4436 = vld [vmem:[%s4423 + $0x30] sm:$0xf]
        %v4437 = vld [vmem:[%s4423 + $0x34] sm:$0xf]
        %v4438 = vld [vmem:[%s4423 + $0x38] sm:$0xf]
        %v4439 = vld [vmem:[%s4423 + $0x3c] sm:$0xf]
        %v4440 = vld [vmem:[%s4423 + $0x40] sm:$0xf]
        %v4441 = vld [vmem:[%s4423 + $0x44] sm:$0xf]
        %v4442 = vld [vmem:[%s4423 + $0x48] sm:$0xf]
        %v4443 = vld [vmem:[%s4423 + $0x4c] sm:$0xf]
        %v4444 = vld [vmem:[%s4423 + $0x50] sm:$0xf]
        %v4445 = vld [vmem:[%s4423 + $0x54] sm:$0xf]
        %v4446 = vld [vmem:[%s4423 + $0x58] sm:$0xf]
        %v4447 = vld [vmem:[%s4423 + $0x5c] sm:$0xf]
        %v4448 = vld [vmem:[%s4423 + $0x60] sm:$0xf]
        %v4449 = vld [vmem:[%s4423 + $0x64] sm:$0xf]
        %v4450 = vld [vmem:[%s4423 + $0x68] sm:$0xf]
        %v4451 = vld [vmem:[%s4423 + $0x6c] sm:$0xf]
        %v4452 = vld [vmem:[%s4423 + $0x70] sm:$0xf]
        %v4453 = vld [vmem:[%s4423 + $0x74] sm:$0xf]
        %v4454 = vld [vmem:[%s4423 + $0x78] sm:$0xf]
        %v4455 = vld [vmem:[%s4423 + $0x7c] sm:$0xf]
        %v4456 = vld [vmem:[%s4423 + $0x90] sm:$0xf]
        %v4457 = vld [vmem:[%s4423 + $0x94] sm:$0xf]
        %v4458 = vld [vmem:[%s4423 + $0x98] sm:$0xf]
        %v4459 = vld [vmem:[%s4423 + $0x9c] sm:$0xf]
        %v4460 = vld [vmem:[%s4423 + $0xa0] sm:$0xf]
        %v4461 = vld [vmem:[%s4423 + $0xa4] sm:$0xf]
        %v4462 = vld [vmem:[%s4423 + $0xa8] sm:$0xf]
        %v4463 = vld [vmem:[%s4423 + $0xac] sm:$0xf]
        %v4464 = vld [vmem:[%s4423 + $0xb0] sm:$0xf]
        %v4465 = vld [vmem:[%s4423 + $0xb4] sm:$0xf]
        %v4466 = vld [vmem:[%s4423 + $0xb8] sm:$0xf]
        %v4467 = vld [vmem:[%s4423 + $0xbc] sm:$0xf]
        %v4468 = vld [vmem:[%s4423 + $0xc0] sm:$0xf]
        %v4469 = vld [vmem:[%s4423 + $0xc4] sm:$0xf]
        %v4470 = vld [vmem:[%s4423 + $0xc8] sm:$0xf]
        %v4471 = vld [vmem:[%s4423 + $0xcc] sm:$0xf]
        %v4472 = vld [vmem:[%s4423 + $0xd0] sm:$0xf]
        %v4473 = vld [vmem:[%s4423 + $0xd4] sm:$0xf]
        %v4474 = vld [vmem:[%s4423 + $0xd8] sm:$0xf]
        %v4475 = vld [vmem:[%s4423 + $0xdc] sm:$0xf]
        %v4476 = vld [vmem:[%s4423 + $0xe0] sm:$0xf]
        %v4477 = vld [vmem:[%s4423 + $0xe4] sm:$0xf]
        %v4478 = vld [vmem:[%s4423 + $0xe8] sm:$0xf]
        %v4479 = vld [vmem:[%s4423 + $0xec] sm:$0xf]
        %v4480 = vld [vmem:[%s4423 + $0xf0] sm:$0xf]
        %v4481 = vld [vmem:[%s4423 + $0xf4] sm:$0xf]
        %v4482 = vld [vmem:[%s4423 + $0xf8] sm:$0xf]
        %v4483 = vld [vmem:[%s4423 + $0xfc] sm:$0xf]
        %v4484 = vld [vmem:[%s4423 + $0x100] sm:$0xf]
        %v4485 = vld [vmem:[%s4423 + $0x104] sm:$0xf]
        %v4486 = vld [vmem:[%s4423 + $0x108] sm:$0xf]
        %v4487 = vld [vmem:[%s4423 + $0x10c] sm:$0xf]
        %s4488 = scalar_lea.vmem %s1, 6
        %v4489 = vld [vmem:[%s4488] sm:$0x3]
        %v4554 = vunpack.c.l.b16 %v4424
        %v4555 = vunpack.c.l.b16 %v4425
        %v4556 = vunpack.c.l.b16 %v4426
        %v4557 = vunpack.c.l.b16 %v4427
        %v4558 = vunpack.c.l.b16 %v4428
        %v4559 = vunpack.c.l.b16 %v4429
        %v4560 = vunpack.c.l.b16 %v4430
        %v4561 = vunpack.c.l.b16 %v4431
        %v4562 = vunpack.c.l.b16 %v4432
        %v4563 = vunpack.c.l.b16 %v4433
        %v4564 = vunpack.c.l.b16 %v4434
        %v4565 = vunpack.c.l.b16 %v4435
        %v4566 = vunpack.c.l.b16 %v4436
        %v4567 = vunpack.c.l.b16 %v4437
        %v4568 = vunpack.c.l.b16 %v4438
        %v4569 = vunpack.c.l.b16 %v4439
        %v4570 = vunpack.c.l.b16 %v4440
        %v4571 = vunpack.c.l.b16 %v4441
        %v4572 = vunpack.c.l.b16 %v4442
        %v4573 = vunpack.c.l.b16 %v4443
        %v4574 = vunpack.c.l.b16 %v4444
        %v4575 = vunpack.c.l.b16 %v4445
        %v4576 = vunpack.c.l.b16 %v4446
        %v4577 = vunpack.c.l.b16 %v4447
        %v4578 = vunpack.c.l.b16 %v4448
        %v4579 = vunpack.c.l.b16 %v4449
        %v4580 = vunpack.c.l.b16 %v4450
        %v4581 = vunpack.c.l.b16 %v4451
        %v4582 = vunpack.c.l.b16 %v4452
        %v4583 = vunpack.c.l.b16 %v4453
        %v4584 = vunpack.c.l.b16 %v4454
        %v4585 = vunpack.c.l.b16 %v4455
        %v4586 = vunpack.c.l.b16 %v4456
        %v4587 = vunpack.c.l.b16 %v4457
        %v4588 = vunpack.c.l.b16 %v4458
        %v4589 = vunpack.c.l.b16 %v4459
        %v4590 = vunpack.c.l.b16 %v4460
        %v4591 = vunpack.c.l.b16 %v4461
        %v4592 = vunpack.c.l.b16 %v4462
        %v4593 = vunpack.c.l.b16 %v4463
        %v4594 = vunpack.c.l.b16 %v4464
        %v4595 = vunpack.c.l.b16 %v4465
        %v4596 = vunpack.c.l.b16 %v4466
        %v4597 = vunpack.c.l.b16 %v4467
        %v4598 = vunpack.c.l.b16 %v4468
        %v4599 = vunpack.c.l.b16 %v4469
        %v4600 = vunpack.c.l.b16 %v4470
        %v4601 = vunpack.c.l.b16 %v4471
        %v4602 = vunpack.c.l.b16 %v4472
        %v4603 = vunpack.c.l.b16 %v4473
        %v4604 = vunpack.c.l.b16 %v4474
        %v4605 = vunpack.c.l.b16 %v4475
        %v4606 = vunpack.c.l.b16 %v4476
        %v4607 = vunpack.c.l.b16 %v4477
        %v4608 = vunpack.c.l.b16 %v4478
        %v4609 = vunpack.c.l.b16 %v4479
        %v4610 = vunpack.c.l.b16 %v4480
        %v4611 = vunpack.c.l.b16 %v4481
        %v4612 = vunpack.c.l.b16 %v4482
        %v4613 = vunpack.c.l.b16 %v4483
        %v4614 = vunpack.c.l.b16 %v4484
        %v4615 = vunpack.c.l.b16 %v4485
        %v4616 = vunpack.c.l.b16 %v4486
        %v4617 = vunpack.c.l.b16 %v4487
        %v4618 = vpack.c.b16 %v4555, %v4554
        %v4619 = vpack.c.b16 %v4557, %v4556
        %v4620 = vpack.c.b16 %v4559, %v4558
        %v4621 = vpack.c.b16 %v4561, %v4560
        %v4622 = vpack.c.b16 %v4563, %v4562
        %v4623 = vpack.c.b16 %v4565, %v4564
        %v4624 = vpack.c.b16 %v4567, %v4566
        %v4625 = vpack.c.b16 %v4569, %v4568
        %v4626 = vpack.c.b16 %v4571, %v4570
        %v4627 = vpack.c.b16 %v4573, %v4572
        %v4628 = vpack.c.b16 %v4575, %v4574
        %v4629 = vpack.c.b16 %v4577, %v4576
        %v4630 = vpack.c.b16 %v4579, %v4578
        %v4631 = vpack.c.b16 %v4581, %v4580
        %v4632 = vpack.c.b16 %v4583, %v4582
        %v4633 = vpack.c.b16 %v4585, %v4584
        %v4634 = vpack.c.b16 %v4587, %v4586
        %v4635 = vpack.c.b16 %v4589, %v4588
        %v4636 = vpack.c.b16 %v4591, %v4590
        %v4637 = vpack.c.b16 %v4593, %v4592
        %v4638 = vpack.c.b16 %v4595, %v4594
        %v4639 = vpack.c.b16 %v4597, %v4596
        %v4640 = vpack.c.b16 %v4599, %v4598
        %v4641 = vpack.c.b16 %v4601, %v4600
        %v4642 = vpack.c.b16 %v4603, %v4602
        %v4643 = vpack.c.b16 %v4605, %v4604
        %v4644 = vpack.c.b16 %v4607, %v4606
        %v4645 = vpack.c.b16 %v4609, %v4608
        %v4646 = vpack.c.b16 %v4611, %v4610
        %v4647 = vpack.c.b16 %v4613, %v4612
        %v4648 = vpack.c.b16 %v4615, %v4614
        %v4649 = vpack.c.b16 %v4617, %v4616
        %v4651 = vsel %vm340, %v4618, 0
        %v4654 = vsel %vm340, %v4619, 0
        %v4657 = vsel %vm340, %v4620, 0
        %v4660 = vsel %vm340, %v4621, 0
        %v4663 = vsel %vm340, %v4622, 0
        %v4666 = vsel %vm340, %v4623, 0
        %v4669 = vsel %vm340, %v4624, 0
        %v4672 = vsel %vm340, %v4625, 0
        %v4675 = vsel %vm340, %v4626, 0
        %v4678 = vsel %vm340, %v4627, 0
        %v4681 = vsel %vm340, %v4628, 0
        %v4684 = vsel %vm340, %v4629, 0
        %v4687 = vsel %vm340, %v4630, 0
        %v4690 = vsel %vm340, %v4631, 0
        %v4693 = vsel %vm340, %v4632, 0
        %v4696 = vsel %vm340, %v4633, 0
        %v4699 = vsel %vm340, %v4634, 0
        %v4702 = vsel %vm340, %v4635, 0
        %v4705 = vsel %vm340, %v4636, 0
        %v4708 = vsel %vm340, %v4637, 0
        %v4711 = vsel %vm340, %v4638, 0
        %v4714 = vsel %vm340, %v4639, 0
        %v4717 = vsel %vm340, %v4640, 0
        %v4720 = vsel %vm340, %v4641, 0
        %v4723 = vsel %vm340, %v4642, 0
        %v4726 = vsel %vm340, %v4643, 0
        %v4729 = vsel %vm340, %v4644, 0
        %v4732 = vsel %vm340, %v4645, 0
        %v4735 = vsel %vm340, %v4646, 0
        %v4738 = vsel %vm340, %v4647, 0
        %v4741 = vsel %vm340, %v4648, 0
        %v4744 = vsel %vm340, %v4649, 0
        %v4747 = vsel %vm2453, %v4489, 0
        %4749 = vmatprep.subr.bf16.mxu0 0
        %4750 = vmatpush1.bf16.msra.mxu0 0
        %4751 = vmatprep.subr.bf16.mxu0 0
        %4752 = vmatpush1.bf16.msra.mxu0 0
        %4753 = vmatprep.subr.bf16.mxu0 0
        %4754 = vmatpush1.bf16.msra.mxu0 0
        %4755 = vmatprep.subr.bf16.mxu0 0
        %4756 = vmatpush1.bf16.msra.mxu0 0
        %4757 = vmatprep.subr.bf16.mxu0 0
        %4758 = vmatpush1.bf16.msra.mxu0 0
        %4759 = vmatprep.subr.bf16.mxu0 0
        %4760 = vmatpush1.bf16.msra.mxu0 0
        %4761 = vmatprep.subr.bf16.mxu0 0
        %4762 = vmatpush1.bf16.msra.mxu0 0
        %4763 = vmatprep.subr.bf16.mxu0 0
        %4764 = vmatpush1.bf16.msra.mxu0 %v4747
        %4765 = vmatprep.subr.bf16.mxu0 0
        %4766 = vmatpush2.bf16.msra.mxu0 0
        %4767 = vmatprep.subr.bf16.mxu0 0
        %4768 = vmatpush2.bf16.msra.mxu0 0
        %4769 = vmatprep.subr.bf16.mxu0 0
        %4770 = vmatpush2.bf16.msra.mxu0 0
        %4771 = vmatprep.subr.bf16.mxu0 0
        %4772 = vmatpush2.bf16.msra.mxu0 0
        %4773 = vmatprep.subr.bf16.mxu0 0
        %4774 = vmatpush2.bf16.msra.mxu0 0
        %4775 = vmatprep.subr.bf16.mxu0 0
        %4776 = vmatpush2.bf16.msra.mxu0 0
        %4777 = vmatprep.subr.bf16.mxu0 0
        %4778 = vmatpush2.bf16.msra.mxu0 0
        %4779 = vmatprep.subr.bf16.mxu0 0
        %4780 = vmatpush2.bf16.msra.mxu0 0
        %4781 = vmatprep.mubr.bf16.mxu0 0
        %4782 = vmatmul.mubr.bf16.gmra.mxu0 %v4651
        %v4783 = vpop.f32.mrf.mxu0
        %v4784 = vadd.f32 0.0, %v4783
        %v4785 = vpop.f32.mrf.mxu0
        %v4786 = vpop.f32.mrf.mxu0
        %v4787 = vadd.f32 0.0, %v4786
        %v4788 = vpop.f32.mrf.mxu0
        %4789 = vmatprep.mubr.bf16.mxu0 0
        %4790 = vmatmul.mubr.bf16.gmra.mxu0 %v4654
        %v4791 = vpop.f32.mrf.mxu0
        %v4792 = vadd.f32 0.0, %v4791
        %v4793 = vpop.f32.mrf.mxu0
        %v4794 = vpop.f32.mrf.mxu0
        %v4795 = vadd.f32 0.0, %v4794
        %v4796 = vpop.f32.mrf.mxu0
        %4797 = vmatprep.mubr.bf16.mxu0 0
        %4798 = vmatmul.mubr.bf16.gmra.mxu0 %v4657
        %v4799 = vpop.f32.mrf.mxu0
        %v4800 = vadd.f32 0.0, %v4799
        %v4801 = vpop.f32.mrf.mxu0
        %v4802 = vpop.f32.mrf.mxu0
        %v4803 = vadd.f32 0.0, %v4802
        %v4804 = vpop.f32.mrf.mxu0
        %4805 = vmatprep.mubr.bf16.mxu0 0
        %4806 = vmatmul.mubr.bf16.gmra.mxu0 %v4660
        %v4807 = vpop.f32.mrf.mxu0
        %v4808 = vadd.f32 0.0, %v4807
        %v4809 = vpop.f32.mrf.mxu0
        %v4810 = vpop.f32.mrf.mxu0
        %v4811 = vadd.f32 0.0, %v4810
        %v4812 = vpop.f32.mrf.mxu0
        %4813 = vmatprep.mubr.bf16.mxu0 0
        %4814 = vmatmul.mubr.bf16.gmra.mxu0 %v4663
        %v4815 = vpop.f32.mrf.mxu0
        %v4816 = vadd.f32 0.0, %v4815
        %v4817 = vpop.f32.mrf.mxu0
        %v4818 = vpop.f32.mrf.mxu0
        %v4819 = vadd.f32 0.0, %v4818
        %v4820 = vpop.f32.mrf.mxu0
        %4821 = vmatprep.mubr.bf16.mxu0 0
        %4822 = vmatmul.mubr.bf16.gmra.mxu0 %v4666
        %v4823 = vpop.f32.mrf.mxu0
        %v4824 = vadd.f32 0.0, %v4823
        %v4825 = vpop.f32.mrf.mxu0
        %v4826 = vpop.f32.mrf.mxu0
        %v4827 = vadd.f32 0.0, %v4826
        %v4828 = vpop.f32.mrf.mxu0
        %4829 = vmatprep.mubr.bf16.mxu0 0
        %4830 = vmatmul.mubr.bf16.gmra.mxu0 %v4669
        %v4831 = vpop.f32.mrf.mxu0
        %v4832 = vadd.f32 0.0, %v4831
        %v4833 = vpop.f32.mrf.mxu0
        %v4834 = vpop.f32.mrf.mxu0
        %v4835 = vadd.f32 0.0, %v4834
        %v4836 = vpop.f32.mrf.mxu0
        %4837 = vmatprep.mubr.bf16.mxu0 0
        %4838 = vmatmul.mubr.bf16.gmra.mxu0 %v4672
        %v4839 = vpop.f32.mrf.mxu0
        %v4840 = vadd.f32 0.0, %v4839
        %v4841 = vpop.f32.mrf.mxu0
        %v4842 = vpop.f32.mrf.mxu0
        %v4843 = vadd.f32 0.0, %v4842
        %v4844 = vpop.f32.mrf.mxu0
        %4845 = vmatprep.mubr.bf16.mxu0 0
        %4846 = vmatmul.mubr.bf16.gmra.mxu0 %v4675
        %v4847 = vpop.f32.mrf.mxu0
        %v4848 = vadd.f32 0.0, %v4847
        %v4849 = vpop.f32.mrf.mxu0
        %v4850 = vpop.f32.mrf.mxu0
        %v4851 = vadd.f32 0.0, %v4850
        %v4852 = vpop.f32.mrf.mxu0
        %4853 = vmatprep.mubr.bf16.mxu0 0
        %4854 = vmatmul.mubr.bf16.gmra.mxu0 %v4678
        %v4855 = vpop.f32.mrf.mxu0
        %v4856 = vadd.f32 0.0, %v4855
        %v4857 = vpop.f32.mrf.mxu0
        %v4858 = vpop.f32.mrf.mxu0
        %v4859 = vadd.f32 0.0, %v4858
        %v4860 = vpop.f32.mrf.mxu0
        %4861 = vmatprep.mubr.bf16.mxu0 0
        %4862 = vmatmul.mubr.bf16.gmra.mxu0 %v4681
        %v4863 = vpop.f32.mrf.mxu0
        %v4864 = vadd.f32 0.0, %v4863
        %v4865 = vpop.f32.mrf.mxu0
        %v4866 = vpop.f32.mrf.mxu0
        %v4867 = vadd.f32 0.0, %v4866
        %v4868 = vpop.f32.mrf.mxu0
        %4869 = vmatprep.mubr.bf16.mxu0 0
        %4870 = vmatmul.mubr.bf16.gmra.mxu0 %v4684
        %v4871 = vpop.f32.mrf.mxu0
        %v4872 = vadd.f32 0.0, %v4871
        %v4873 = vpop.f32.mrf.mxu0
        %v4874 = vpop.f32.mrf.mxu0
        %v4875 = vadd.f32 0.0, %v4874
        %v4876 = vpop.f32.mrf.mxu0
        %4877 = vmatprep.mubr.bf16.mxu0 0
        %4878 = vmatmul.mubr.bf16.gmra.mxu0 %v4687
        %v4879 = vpop.f32.mrf.mxu0
        %v4880 = vadd.f32 0.0, %v4879
        %v4881 = vpop.f32.mrf.mxu0
        %v4882 = vpop.f32.mrf.mxu0
        %v4883 = vadd.f32 0.0, %v4882
        %v4884 = vpop.f32.mrf.mxu0
        %4885 = vmatprep.mubr.bf16.mxu0 0
        %4886 = vmatmul.mubr.bf16.gmra.mxu0 %v4690
        %v4887 = vpop.f32.mrf.mxu0
        %v4888 = vadd.f32 0.0, %v4887
        %v4889 = vpop.f32.mrf.mxu0
        %v4890 = vpop.f32.mrf.mxu0
        %v4891 = vadd.f32 0.0, %v4890
        %v4892 = vpop.f32.mrf.mxu0
        %4893 = vmatprep.mubr.bf16.mxu0 0
        %4894 = vmatmul.mubr.bf16.gmra.mxu0 %v4693
        %v4895 = vpop.f32.mrf.mxu0
        %v4896 = vadd.f32 0.0, %v4895
        %v4897 = vpop.f32.mrf.mxu0
        %v4898 = vpop.f32.mrf.mxu0
        %v4899 = vadd.f32 0.0, %v4898
        %v4900 = vpop.f32.mrf.mxu0
        %4901 = vmatprep.mubr.bf16.mxu0 0
        %4902 = vmatmul.mubr.bf16.gmra.mxu0 %v4696
        %v4903 = vpop.f32.mrf.mxu0
        %v4904 = vadd.f32 0.0, %v4903
        %v4905 = vpop.f32.mrf.mxu0
        %v4906 = vpop.f32.mrf.mxu0
        %v4907 = vadd.f32 0.0, %v4906
        %v4908 = vpop.f32.mrf.mxu0
        %4909 = vmatprep.mubr.bf16.mxu0 0
        %4910 = vmatmul.mubr.bf16.gmra.mxu0 %v4699
        %v4911 = vpop.f32.mrf.mxu0
        %v4912 = vadd.f32 0.0, %v4911
        %v4913 = vpop.f32.mrf.mxu0
        %v4914 = vpop.f32.mrf.mxu0
        %v4915 = vadd.f32 0.0, %v4914
        %v4916 = vpop.f32.mrf.mxu0
        %4917 = vmatprep.mubr.bf16.mxu0 0
        %4918 = vmatmul.mubr.bf16.gmra.mxu0 %v4702
        %v4919 = vpop.f32.mrf.mxu0
        %v4920 = vadd.f32 0.0, %v4919
        %v4921 = vpop.f32.mrf.mxu0
        %v4922 = vpop.f32.mrf.mxu0
        %v4923 = vadd.f32 0.0, %v4922
        %v4924 = vpop.f32.mrf.mxu0
        %4925 = vmatprep.mubr.bf16.mxu0 0
        %4926 = vmatmul.mubr.bf16.gmra.mxu0 %v4705
        %v4927 = vpop.f32.mrf.mxu0
        %v4928 = vadd.f32 0.0, %v4927
        %v4929 = vpop.f32.mrf.mxu0
        %v4930 = vpop.f32.mrf.mxu0
        %v4931 = vadd.f32 0.0, %v4930
        %v4932 = vpop.f32.mrf.mxu0
        %4933 = vmatprep.mubr.bf16.mxu0 0
        %4934 = vmatmul.mubr.bf16.gmra.mxu0 %v4708
        %v4935 = vpop.f32.mrf.mxu0
        %v4936 = vadd.f32 0.0, %v4935
        %v4937 = vpop.f32.mrf.mxu0
        %v4938 = vpop.f32.mrf.mxu0
        %v4939 = vadd.f32 0.0, %v4938
        %v4940 = vpop.f32.mrf.mxu0
        %4941 = vmatprep.mubr.bf16.mxu0 0
        %4942 = vmatmul.mubr.bf16.gmra.mxu0 %v4711
        %v4943 = vpop.f32.mrf.mxu0
        %v4944 = vadd.f32 0.0, %v4943
        %v4945 = vpop.f32.mrf.mxu0
        %v4946 = vpop.f32.mrf.mxu0
        %v4947 = vadd.f32 0.0, %v4946
        %v4948 = vpop.f32.mrf.mxu0
        %4949 = vmatprep.mubr.bf16.mxu0 0
        %4950 = vmatmul.mubr.bf16.gmra.mxu0 %v4714
        %v4951 = vpop.f32.mrf.mxu0
        %v4952 = vadd.f32 0.0, %v4951
        %v4953 = vpop.f32.mrf.mxu0
        %v4954 = vpop.f32.mrf.mxu0
        %v4955 = vadd.f32 0.0, %v4954
        %v4956 = vpop.f32.mrf.mxu0
        %4957 = vmatprep.mubr.bf16.mxu0 0
        %4958 = vmatmul.mubr.bf16.gmra.mxu0 %v4717
        %v4959 = vpop.f32.mrf.mxu0
        %v4960 = vadd.f32 0.0, %v4959
        %v4961 = vpop.f32.mrf.mxu0
        %v4962 = vpop.f32.mrf.mxu0
        %v4963 = vadd.f32 0.0, %v4962
        %v4964 = vpop.f32.mrf.mxu0
        %4965 = vmatprep.mubr.bf16.mxu0 0
        %4966 = vmatmul.mubr.bf16.gmra.mxu0 %v4720
        %v4967 = vpop.f32.mrf.mxu0
        %v4968 = vadd.f32 0.0, %v4967
        %v4969 = vpop.f32.mrf.mxu0
        %v4970 = vpop.f32.mrf.mxu0
        %v4971 = vadd.f32 0.0, %v4970
        %v4972 = vpop.f32.mrf.mxu0
        %4973 = vmatprep.mubr.bf16.mxu0 0
        %4974 = vmatmul.mubr.bf16.gmra.mxu0 %v4723
        %v4975 = vpop.f32.mrf.mxu0
        %v4976 = vadd.f32 0.0, %v4975
        %v4977 = vpop.f32.mrf.mxu0
        %v4978 = vpop.f32.mrf.mxu0
        %v4979 = vadd.f32 0.0, %v4978
        %v4980 = vpop.f32.mrf.mxu0
        %4981 = vmatprep.mubr.bf16.mxu0 0
        %4982 = vmatmul.mubr.bf16.gmra.mxu0 %v4726
        %v4983 = vpop.f32.mrf.mxu0
        %v4984 = vadd.f32 0.0, %v4983
        %v4985 = vpop.f32.mrf.mxu0
        %v4986 = vpop.f32.mrf.mxu0
        %v4987 = vadd.f32 0.0, %v4986
        %v4988 = vpop.f32.mrf.mxu0
        %4989 = vmatprep.mubr.bf16.mxu0 0
        %4990 = vmatmul.mubr.bf16.gmra.mxu0 %v4729
        %v4991 = vpop.f32.mrf.mxu0
        %v4992 = vadd.f32 0.0, %v4991
        %v4993 = vpop.f32.mrf.mxu0
        %v4994 = vpop.f32.mrf.mxu0
        %v4995 = vadd.f32 0.0, %v4994
        %v4996 = vpop.f32.mrf.mxu0
        %4997 = vmatprep.mubr.bf16.mxu0 0
        %4998 = vmatmul.mubr.bf16.gmra.mxu0 %v4732
        %v4999 = vpop.f32.mrf.mxu0
        %v5000 = vadd.f32 0.0, %v4999
        %v5001 = vpop.f32.mrf.mxu0
        %v5002 = vpop.f32.mrf.mxu0
        %v5003 = vadd.f32 0.0, %v5002
        %v5004 = vpop.f32.mrf.mxu0
        %5005 = vmatprep.mubr.bf16.mxu0 0
        %5006 = vmatmul.mubr.bf16.gmra.mxu0 %v4735
        %v5007 = vpop.f32.mrf.mxu0
        %v5008 = vadd.f32 0.0, %v5007
        %v5009 = vpop.f32.mrf.mxu0
        %v5010 = vpop.f32.mrf.mxu0
        %v5011 = vadd.f32 0.0, %v5010
        %v5012 = vpop.f32.mrf.mxu0
        %5013 = vmatprep.mubr.bf16.mxu0 0
        %5014 = vmatmul.mubr.bf16.gmra.mxu0 %v4738
        %v5015 = vpop.f32.mrf.mxu0
        %v5016 = vadd.f32 0.0, %v5015
        %v5017 = vpop.f32.mrf.mxu0
        %v5018 = vpop.f32.mrf.mxu0
        %v5019 = vadd.f32 0.0, %v5018
        %v5020 = vpop.f32.mrf.mxu0
        %5021 = vmatprep.mubr.bf16.mxu0 0
        %5022 = vmatmul.mubr.bf16.gmra.mxu0 %v4741
        %v5023 = vpop.f32.mrf.mxu0
        %v5024 = vadd.f32 0.0, %v5023
        %v5025 = vpop.f32.mrf.mxu0
        %v5026 = vpop.f32.mrf.mxu0
        %v5027 = vadd.f32 0.0, %v5026
        %v5028 = vpop.f32.mrf.mxu0
        %5029 = vmatprep.mubr.bf16.mxu0 0
        %5030 = vmatmul.mubr.bf16.gmra.mxu0 %v4744
        %v5031 = vpop.f32.mrf.mxu0
        %v5032 = vadd.f32 0.0, %v5031
        %v5033 = vpop.f32.mrf.mxu0
        %v5034 = vpop.f32.mrf.mxu0
        %v5035 = vadd.f32 0.0, %v5034
        %v5036 = vpop.f32.mrf.mxu0
        %5037 = vdwg.mxu0
        %v5038 = vld [vmem:[#allocation4] sm:$0xff]
        %v5039 = vld [vmem:[#allocation4 + $0x8] sm:$0xff]
        %v5040 = vld [vmem:[#allocation4 + $0x10] sm:$0xff]
        %v5041 = vld [vmem:[#allocation4 + $0x18] sm:$0xff]
        %v5042 = vld [vmem:[#allocation4 + $0x20] sm:$0xff]
        %v5043 = vld [vmem:[#allocation4 + $0x28] sm:$0xff]
        %v5044 = vld [vmem:[#allocation4 + $0x30] sm:$0xff]
        %v5045 = vld [vmem:[#allocation4 + $0x38] sm:$0xff]
        %v5046 = vld [vmem:[#allocation4 + $0x40] sm:$0xff]
        %v5047 = vld [vmem:[#allocation4 + $0x48] sm:$0xff]
        %v5048 = vld [vmem:[#allocation4 + $0x50] sm:$0xff]
        %v5049 = vld [vmem:[#allocation4 + $0x58] sm:$0xff]
        %v5050 = vld [vmem:[#allocation4 + $0x60] sm:$0xff]
        %v5051 = vld [vmem:[#allocation4 + $0x68] sm:$0xff]
        %v5052 = vld [vmem:[#allocation4 + $0x70] sm:$0xff]
        %v5053 = vld [vmem:[#allocation4 + $0x78] sm:$0xff]
        %v5054 = vld [vmem:[#allocation4 + $0x80] sm:$0xff]
        %v5055 = vld [vmem:[#allocation4 + $0x88] sm:$0xff]
        %v5056 = vld [vmem:[#allocation4 + $0x90] sm:$0xff]
        %v5057 = vld [vmem:[#allocation4 + $0x98] sm:$0xff]
        %v5058 = vld [vmem:[#allocation4 + $0xa0] sm:$0xff]
        %v5059 = vld [vmem:[#allocation4 + $0xa8] sm:$0xff]
        %v5060 = vld [vmem:[#allocation4 + $0xb0] sm:$0xff]
        %v5061 = vld [vmem:[#allocation4 + $0xb8] sm:$0xff]
        %v5062 = vld [vmem:[#allocation4 + $0xc0] sm:$0xff]
        %v5063 = vld [vmem:[#allocation4 + $0xc8] sm:$0xff]
        %v5064 = vld [vmem:[#allocation4 + $0xd0] sm:$0xff]
        %v5065 = vld [vmem:[#allocation4 + $0xd8] sm:$0xff]
        %v5066 = vld [vmem:[#allocation4 + $0xe0] sm:$0xff]
        %v5067 = vld [vmem:[#allocation4 + $0xe8] sm:$0xff]
        %v5068 = vld [vmem:[#allocation4 + $0xf0] sm:$0xff]
        %v5069 = vld [vmem:[#allocation4 + $0xf8] sm:$0xff]
        %v5070 = vld [vmem:[#allocation4 + $0x100] sm:$0xff]
        %v5071 = vld [vmem:[#allocation4 + $0x108] sm:$0xff]
        %v5072 = vld [vmem:[#allocation4 + $0x110] sm:$0xff]
        %v5073 = vld [vmem:[#allocation4 + $0x118] sm:$0xff]
        %v5074 = vld [vmem:[#allocation4 + $0x120] sm:$0xff]
        %v5075 = vld [vmem:[#allocation4 + $0x128] sm:$0xff]
        %v5076 = vld [vmem:[#allocation4 + $0x130] sm:$0xff]
        %v5077 = vld [vmem:[#allocation4 + $0x138] sm:$0xff]
        %v5078 = vld [vmem:[#allocation4 + $0x140] sm:$0xff]
        %v5079 = vld [vmem:[#allocation4 + $0x148] sm:$0xff]
        %v5080 = vld [vmem:[#allocation4 + $0x150] sm:$0xff]
        %v5081 = vld [vmem:[#allocation4 + $0x158] sm:$0xff]
        %v5082 = vld [vmem:[#allocation4 + $0x160] sm:$0xff]
        %v5083 = vld [vmem:[#allocation4 + $0x168] sm:$0xff]
        %v5084 = vld [vmem:[#allocation4 + $0x170] sm:$0xff]
        %v5085 = vld [vmem:[#allocation4 + $0x178] sm:$0xff]
        %v5086 = vld [vmem:[#allocation4 + $0x180] sm:$0xff]
        %v5087 = vld [vmem:[#allocation4 + $0x188] sm:$0xff]
        %v5088 = vld [vmem:[#allocation4 + $0x190] sm:$0xff]
        %v5089 = vld [vmem:[#allocation4 + $0x198] sm:$0xff]
        %v5090 = vld [vmem:[#allocation4 + $0x1a0] sm:$0xff]
        %v5091 = vld [vmem:[#allocation4 + $0x1a8] sm:$0xff]
        %v5092 = vld [vmem:[#allocation4 + $0x1b0] sm:$0xff]
        %v5093 = vld [vmem:[#allocation4 + $0x1b8] sm:$0xff]
        %v5094 = vld [vmem:[#allocation4 + $0x1c0] sm:$0xff]
        %v5095 = vld [vmem:[#allocation4 + $0x1c8] sm:$0xff]
        %v5096 = vld [vmem:[#allocation4 + $0x1d0] sm:$0xff]
        %v5097 = vld [vmem:[#allocation4 + $0x1d8] sm:$0xff]
        %v5098 = vld [vmem:[#allocation4 + $0x1e0] sm:$0xff]
        %v5099 = vld [vmem:[#allocation4 + $0x1e8] sm:$0xff]
        %v5100 = vld [vmem:[#allocation4 + $0x1f0] sm:$0xff]
        %v5101 = vld [vmem:[#allocation4 + $0x1f8] sm:$0xff]
        %v5102 = vadd.f32 %v5038, %v4784
        %v5103 = vadd.f32 %v5039, %v4787
        %v5104 = vadd.f32 %v5040, %v4792
        %v5105 = vadd.f32 %v5041, %v4795
        %v5106 = vadd.f32 %v5042, %v4800
        %v5107 = vadd.f32 %v5043, %v4803
        %v5108 = vadd.f32 %v5044, %v4808
        %v5109 = vadd.f32 %v5045, %v4811
        %v5110 = vadd.f32 %v5046, %v4816
        %v5111 = vadd.f32 %v5047, %v4819
        %v5112 = vadd.f32 %v5048, %v4824
        %v5113 = vadd.f32 %v5049, %v4827
        %v5114 = vadd.f32 %v5050, %v4832
        %v5115 = vadd.f32 %v5051, %v4835
        %v5116 = vadd.f32 %v5052, %v4840
        %v5117 = vadd.f32 %v5053, %v4843
        %v5118 = vadd.f32 %v5054, %v4848
        %v5119 = vadd.f32 %v5055, %v4851
        %v5120 = vadd.f32 %v5056, %v4856
        %v5121 = vadd.f32 %v5057, %v4859
        %v5122 = vadd.f32 %v5058, %v4864
        %v5123 = vadd.f32 %v5059, %v4867
        %v5124 = vadd.f32 %v5060, %v4872
        %v5125 = vadd.f32 %v5061, %v4875
        %v5126 = vadd.f32 %v5062, %v4880
        %v5127 = vadd.f32 %v5063, %v4883
        %v5128 = vadd.f32 %v5064, %v4888
        %v5129 = vadd.f32 %v5065, %v4891
        %v5130 = vadd.f32 %v5066, %v4896
        %v5131 = vadd.f32 %v5067, %v4899
        %v5132 = vadd.f32 %v5068, %v4904
        %v5133 = vadd.f32 %v5069, %v4907
        %v5134 = vadd.f32 %v5070, %v4912
        %v5135 = vadd.f32 %v5071, %v4915
        %v5136 = vadd.f32 %v5072, %v4920
        %v5137 = vadd.f32 %v5073, %v4923
        %v5138 = vadd.f32 %v5074, %v4928
        %v5139 = vadd.f32 %v5075, %v4931
        %v5140 = vadd.f32 %v5076, %v4936
        %v5141 = vadd.f32 %v5077, %v4939
        %v5142 = vadd.f32 %v5078, %v4944
        %v5143 = vadd.f32 %v5079, %v4947
        %v5144 = vadd.f32 %v5080, %v4952
        %v5145 = vadd.f32 %v5081, %v4955
        %v5146 = vadd.f32 %v5082, %v4960
        %v5147 = vadd.f32 %v5083, %v4963
        %v5148 = vadd.f32 %v5084, %v4968
        %v5149 = vadd.f32 %v5085, %v4971
        %v5150 = vadd.f32 %v5086, %v4976
        %v5151 = vadd.f32 %v5087, %v4979
        %v5152 = vadd.f32 %v5088, %v4984
        %v5153 = vadd.f32 %v5089, %v4987
        %v5154 = vadd.f32 %v5090, %v4992
        %v5155 = vadd.f32 %v5091, %v4995
        %v5156 = vadd.f32 %v5092, %v5000
        %v5157 = vadd.f32 %v5093, %v5003
        %v5158 = vadd.f32 %v5094, %v5008
        %v5159 = vadd.f32 %v5095, %v5011
        %v5160 = vadd.f32 %v5096, %v5016
        %v5161 = vadd.f32 %v5097, %v5019
        %v5162 = vadd.f32 %v5098, %v5024
        %v5163 = vadd.f32 %v5099, %v5027
        %v5164 = vadd.f32 %v5100, %v5032
        %v5165 = vadd.f32 %v5101, %v5035
        %5166 = vst.msk [vmem:[#allocation4] sm:$0xff] %vm2746, %v5102
        %5167 = vst.msk [vmem:[#allocation4 + $0x8] sm:$0xff] %vm2746, %v5103
        %5168 = vst.msk [vmem:[#allocation4 + $0x10] sm:$0xff] %vm2746, %v5104
        %5169 = vst.msk [vmem:[#allocation4 + $0x18] sm:$0xff] %vm2746, %v5105
        %5170 = vst.msk [vmem:[#allocation4 + $0x20] sm:$0xff] %vm2746, %v5106
        %5171 = vst.msk [vmem:[#allocation4 + $0x28] sm:$0xff] %vm2746, %v5107
        %5172 = vst.msk [vmem:[#allocation4 + $0x30] sm:$0xff] %vm2746, %v5108
        %5173 = vst.msk [vmem:[#allocation4 + $0x38] sm:$0xff] %vm2746, %v5109
        %5174 = vst.msk [vmem:[#allocation4 + $0x40] sm:$0xff] %vm2746, %v5110
        %5175 = vst.msk [vmem:[#allocation4 + $0x48] sm:$0xff] %vm2746, %v5111
        %5176 = vst.msk [vmem:[#allocation4 + $0x50] sm:$0xff] %vm2746, %v5112
        %5177 = vst.msk [vmem:[#allocation4 + $0x58] sm:$0xff] %vm2746, %v5113
        %5178 = vst.msk [vmem:[#allocation4 + $0x60] sm:$0xff] %vm2746, %v5114
        %5179 = vst.msk [vmem:[#allocation4 + $0x68] sm:$0xff] %vm2746, %v5115
        %5180 = vst.msk [vmem:[#allocation4 + $0x70] sm:$0xff] %vm2746, %v5116
        %5181 = vst.msk [vmem:[#allocation4 + $0x78] sm:$0xff] %vm2746, %v5117
        %5182 = vst.msk [vmem:[#allocation4 + $0x80] sm:$0xff] %vm2746, %v5118
        %5183 = vst.msk [vmem:[#allocation4 + $0x88] sm:$0xff] %vm2746, %v5119
        %5184 = vst.msk [vmem:[#allocation4 + $0x90] sm:$0xff] %vm2746, %v5120
        %5185 = vst.msk [vmem:[#allocation4 + $0x98] sm:$0xff] %vm2746, %v5121
        %5186 = vst.msk [vmem:[#allocation4 + $0xa0] sm:$0xff] %vm2746, %v5122
        %5187 = vst.msk [vmem:[#allocation4 + $0xa8] sm:$0xff] %vm2746, %v5123
        %5188 = vst.msk [vmem:[#allocation4 + $0xb0] sm:$0xff] %vm2746, %v5124
        %5189 = vst.msk [vmem:[#allocation4 + $0xb8] sm:$0xff] %vm2746, %v5125
        %5190 = vst.msk [vmem:[#allocation4 + $0xc0] sm:$0xff] %vm2746, %v5126
        %5191 = vst.msk [vmem:[#allocation4 + $0xc8] sm:$0xff] %vm2746, %v5127
        %5192 = vst.msk [vmem:[#allocation4 + $0xd0] sm:$0xff] %vm2746, %v5128
        %5193 = vst.msk [vmem:[#allocation4 + $0xd8] sm:$0xff] %vm2746, %v5129
        %5194 = vst.msk [vmem:[#allocation4 + $0xe0] sm:$0xff] %vm2746, %v5130
        %5195 = vst.msk [vmem:[#allocation4 + $0xe8] sm:$0xff] %vm2746, %v5131
        %5196 = vst.msk [vmem:[#allocation4 + $0xf0] sm:$0xff] %vm2746, %v5132
        %5197 = vst.msk [vmem:[#allocation4 + $0xf8] sm:$0xff] %vm2746, %v5133
        %5198 = vst.msk [vmem:[#allocation4 + $0x100] sm:$0xff] %vm2746, %v5134
        %5199 = vst.msk [vmem:[#allocation4 + $0x108] sm:$0xff] %vm2746, %v5135
        %5200 = vst.msk [vmem:[#allocation4 + $0x110] sm:$0xff] %vm2746, %v5136
        %5201 = vst.msk [vmem:[#allocation4 + $0x118] sm:$0xff] %vm2746, %v5137
        %5202 = vst.msk [vmem:[#allocation4 + $0x120] sm:$0xff] %vm2746, %v5138
        %5203 = vst.msk [vmem:[#allocation4 + $0x128] sm:$0xff] %vm2746, %v5139
        %5204 = vst.msk [vmem:[#allocation4 + $0x130] sm:$0xff] %vm2746, %v5140
        %5205 = vst.msk [vmem:[#allocation4 + $0x138] sm:$0xff] %vm2746, %v5141
        %5206 = vst.msk [vmem:[#allocation4 + $0x140] sm:$0xff] %vm2746, %v5142
        %5207 = vst.msk [vmem:[#allocation4 + $0x148] sm:$0xff] %vm2746, %v5143
        %5208 = vst.msk [vmem:[#allocation4 + $0x150] sm:$0xff] %vm2746, %v5144
        %5209 = vst.msk [vmem:[#allocation4 + $0x158] sm:$0xff] %vm2746, %v5145
        %5210 = vst.msk [vmem:[#allocation4 + $0x160] sm:$0xff] %vm2746, %v5146
        %5211 = vst.msk [vmem:[#allocation4 + $0x168] sm:$0xff] %vm2746, %v5147
        %5212 = vst.msk [vmem:[#allocation4 + $0x170] sm:$0xff] %vm2746, %v5148
        %5213 = vst.msk [vmem:[#allocation4 + $0x178] sm:$0xff] %vm2746, %v5149
        %5214 = vst.msk [vmem:[#allocation4 + $0x180] sm:$0xff] %vm2746, %v5150
        %5215 = vst.msk [vmem:[#allocation4 + $0x188] sm:$0xff] %vm2746, %v5151
        %5216 = vst.msk [vmem:[#allocation4 + $0x190] sm:$0xff] %vm2746, %v5152
        %5217 = vst.msk [vmem:[#allocation4 + $0x198] sm:$0xff] %vm2746, %v5153
        %5218 = vst.msk [vmem:[#allocation4 + $0x1a0] sm:$0xff] %vm2746, %v5154
        %5219 = vst.msk [vmem:[#allocation4 + $0x1a8] sm:$0xff] %vm2746, %v5155
        %5220 = vst.msk [vmem:[#allocation4 + $0x1b0] sm:$0xff] %vm2746, %v5156
        %5221 = vst.msk [vmem:[#allocation4 + $0x1b8] sm:$0xff] %vm2746, %v5157
        %5222 = vst.msk [vmem:[#allocation4 + $0x1c0] sm:$0xff] %vm2746, %v5158
        %5223 = vst.msk [vmem:[#allocation4 + $0x1c8] sm:$0xff] %vm2746, %v5159
        %5224 = vst.msk [vmem:[#allocation4 + $0x1d0] sm:$0xff] %vm2746, %v5160
        %5225 = vst.msk [vmem:[#allocation4 + $0x1d8] sm:$0xff] %vm2746, %v5161
        %5226 = vst.msk [vmem:[#allocation4 + $0x1e0] sm:$0xff] %vm2746, %v5162
        %5227 = vst.msk [vmem:[#allocation4 + $0x1e8] sm:$0xff] %vm2746, %v5163
        %5228 = vst.msk [vmem:[#allocation4 + $0x1f0] sm:$0xff] %vm2746, %v5164
        %5229 = vst.msk [vmem:[#allocation4 + $0x1f8] sm:$0xff] %vm2746, %v5165
        %s5230 = scalar_lea.vmem [#allocation3], 152
        %v5231 = vld [vmem:[%s5230] sm:$0xf]
        %v5232 = vld [vmem:[%s5230 + $0x4] sm:$0xf]
        %v5233 = vld [vmem:[%s5230 + $0x8] sm:$0xf]
        %v5234 = vld [vmem:[%s5230 + $0xc] sm:$0xf]
        %v5235 = vld [vmem:[%s5230 + $0x10] sm:$0xf]
        %v5236 = vld [vmem:[%s5230 + $0x14] sm:$0xf]
        %v5237 = vld [vmem:[%s5230 + $0x18] sm:$0xf]
        %v5238 = vld [vmem:[%s5230 + $0x1c] sm:$0xf]
        %v5239 = vld [vmem:[%s5230 + $0x20] sm:$0xf]
        %v5240 = vld [vmem:[%s5230 + $0x24] sm:$0xf]
        %v5241 = vld [vmem:[%s5230 + $0x28] sm:$0xf]
        %v5242 = vld [vmem:[%s5230 + $0x2c] sm:$0xf]
        %v5243 = vld [vmem:[%s5230 + $0x30] sm:$0xf]
        %v5244 = vld [vmem:[%s5230 + $0x34] sm:$0xf]
        %v5245 = vld [vmem:[%s5230 + $0x38] sm:$0xf]
        %v5246 = vld [vmem:[%s5230 + $0x3c] sm:$0xf]
        %v5247 = vld [vmem:[%s5230 + $0x40] sm:$0xf]
        %v5248 = vld [vmem:[%s5230 + $0x44] sm:$0xf]
        %v5249 = vld [vmem:[%s5230 + $0x48] sm:$0xf]
        %v5250 = vld [vmem:[%s5230 + $0x4c] sm:$0xf]
        %v5251 = vld [vmem:[%s5230 + $0x50] sm:$0xf]
        %v5252 = vld [vmem:[%s5230 + $0x54] sm:$0xf]
        %v5253 = vld [vmem:[%s5230 + $0x58] sm:$0xf]
        %v5254 = vld [vmem:[%s5230 + $0x5c] sm:$0xf]
        %v5255 = vld [vmem:[%s5230 + $0x60] sm:$0xf]
        %v5256 = vld [vmem:[%s5230 + $0x64] sm:$0xf]
        %v5257 = vld [vmem:[%s5230 + $0x68] sm:$0xf]
        %v5258 = vld [vmem:[%s5230 + $0x6c] sm:$0xf]
        %v5259 = vld [vmem:[%s5230 + $0x70] sm:$0xf]
        %v5260 = vld [vmem:[%s5230 + $0x74] sm:$0xf]
        %v5261 = vld [vmem:[%s5230 + $0x78] sm:$0xf]
        %v5262 = vld [vmem:[%s5230 + $0x7c] sm:$0xf]
        %v5263 = vld [vmem:[%s5230 + $0x90] sm:$0xf]
        %v5264 = vld [vmem:[%s5230 + $0x94] sm:$0xf]
        %v5265 = vld [vmem:[%s5230 + $0x98] sm:$0xf]
        %v5266 = vld [vmem:[%s5230 + $0x9c] sm:$0xf]
        %v5267 = vld [vmem:[%s5230 + $0xa0] sm:$0xf]
        %v5268 = vld [vmem:[%s5230 + $0xa4] sm:$0xf]
        %v5269 = vld [vmem:[%s5230 + $0xa8] sm:$0xf]
        %v5270 = vld [vmem:[%s5230 + $0xac] sm:$0xf]
        %v5271 = vld [vmem:[%s5230 + $0xb0] sm:$0xf]
        %v5272 = vld [vmem:[%s5230 + $0xb4] sm:$0xf]
        %v5273 = vld [vmem:[%s5230 + $0xb8] sm:$0xf]
        %v5274 = vld [vmem:[%s5230 + $0xbc] sm:$0xf]
        %v5275 = vld [vmem:[%s5230 + $0xc0] sm:$0xf]
        %v5276 = vld [vmem:[%s5230 + $0xc4] sm:$0xf]
        %v5277 = vld [vmem:[%s5230 + $0xc8] sm:$0xf]
        %v5278 = vld [vmem:[%s5230 + $0xcc] sm:$0xf]
        %v5279 = vld [vmem:[%s5230 + $0xd0] sm:$0xf]
        %v5280 = vld [vmem:[%s5230 + $0xd4] sm:$0xf]
        %v5281 = vld [vmem:[%s5230 + $0xd8] sm:$0xf]
        %v5282 = vld [vmem:[%s5230 + $0xdc] sm:$0xf]
        %v5283 = vld [vmem:[%s5230 + $0xe0] sm:$0xf]
        %v5284 = vld [vmem:[%s5230 + $0xe4] sm:$0xf]
        %v5285 = vld [vmem:[%s5230 + $0xe8] sm:$0xf]
        %v5286 = vld [vmem:[%s5230 + $0xec] sm:$0xf]
        %v5287 = vld [vmem:[%s5230 + $0xf0] sm:$0xf]
        %v5288 = vld [vmem:[%s5230 + $0xf4] sm:$0xf]
        %v5289 = vld [vmem:[%s5230 + $0xf8] sm:$0xf]
        %v5290 = vld [vmem:[%s5230 + $0xfc] sm:$0xf]
        %v5291 = vld [vmem:[%s5230 + $0x100] sm:$0xf]
        %v5292 = vld [vmem:[%s5230 + $0x104] sm:$0xf]
        %v5293 = vld [vmem:[%s5230 + $0x108] sm:$0xf]
        %v5294 = vld [vmem:[%s5230 + $0x10c] sm:$0xf]
        %s5295 = scalar_lea.vmem %s1, 8
        %v5296 = vld [vmem:[%s5295] sm:$0x3]
        %v5361 = vunpack.c.l.b16 %v5231
        %v5362 = vunpack.c.l.b16 %v5232
        %v5363 = vunpack.c.l.b16 %v5233
        %v5364 = vunpack.c.l.b16 %v5234
        %v5365 = vunpack.c.l.b16 %v5235
        %v5366 = vunpack.c.l.b16 %v5236
        %v5367 = vunpack.c.l.b16 %v5237
        %v5368 = vunpack.c.l.b16 %v5238
        %v5369 = vunpack.c.l.b16 %v5239
        %v5370 = vunpack.c.l.b16 %v5240
        %v5371 = vunpack.c.l.b16 %v5241
        %v5372 = vunpack.c.l.b16 %v5242
        %v5373 = vunpack.c.l.b16 %v5243
        %v5374 = vunpack.c.l.b16 %v5244
        %v5375 = vunpack.c.l.b16 %v5245
        %v5376 = vunpack.c.l.b16 %v5246
        %v5377 = vunpack.c.l.b16 %v5247
        %v5378 = vunpack.c.l.b16 %v5248
        %v5379 = vunpack.c.l.b16 %v5249
        %v5380 = vunpack.c.l.b16 %v5250
        %v5381 = vunpack.c.l.b16 %v5251
        %v5382 = vunpack.c.l.b16 %v5252
        %v5383 = vunpack.c.l.b16 %v5253
        %v5384 = vunpack.c.l.b16 %v5254
        %v5385 = vunpack.c.l.b16 %v5255
        %v5386 = vunpack.c.l.b16 %v5256
        %v5387 = vunpack.c.l.b16 %v5257
        %v5388 = vunpack.c.l.b16 %v5258
        %v5389 = vunpack.c.l.b16 %v5259
        %v5390 = vunpack.c.l.b16 %v5260
        %v5391 = vunpack.c.l.b16 %v5261
        %v5392 = vunpack.c.l.b16 %v5262
        %v5393 = vunpack.c.l.b16 %v5263
        %v5394 = vunpack.c.l.b16 %v5264
        %v5395 = vunpack.c.l.b16 %v5265
        %v5396 = vunpack.c.l.b16 %v5266
        %v5397 = vunpack.c.l.b16 %v5267
        %v5398 = vunpack.c.l.b16 %v5268
        %v5399 = vunpack.c.l.b16 %v5269
        %v5400 = vunpack.c.l.b16 %v5270
        %v5401 = vunpack.c.l.b16 %v5271
        %v5402 = vunpack.c.l.b16 %v5272
        %v5403 = vunpack.c.l.b16 %v5273
        %v5404 = vunpack.c.l.b16 %v5274
        %v5405 = vunpack.c.l.b16 %v5275
        %v5406 = vunpack.c.l.b16 %v5276
        %v5407 = vunpack.c.l.b16 %v5277
        %v5408 = vunpack.c.l.b16 %v5278
        %v5409 = vunpack.c.l.b16 %v5279
        %v5410 = vunpack.c.l.b16 %v5280
        %v5411 = vunpack.c.l.b16 %v5281
        %v5412 = vunpack.c.l.b16 %v5282
        %v5413 = vunpack.c.l.b16 %v5283
        %v5414 = vunpack.c.l.b16 %v5284
        %v5415 = vunpack.c.l.b16 %v5285
        %v5416 = vunpack.c.l.b16 %v5286
        %v5417 = vunpack.c.l.b16 %v5287
        %v5418 = vunpack.c.l.b16 %v5288
        %v5419 = vunpack.c.l.b16 %v5289
        %v5420 = vunpack.c.l.b16 %v5290
        %v5421 = vunpack.c.l.b16 %v5291
        %v5422 = vunpack.c.l.b16 %v5292
        %v5423 = vunpack.c.l.b16 %v5293
        %v5424 = vunpack.c.l.b16 %v5294
        %v5425 = vpack.c.b16 %v5362, %v5361
        %v5426 = vpack.c.b16 %v5364, %v5363
        %v5427 = vpack.c.b16 %v5366, %v5365
        %v5428 = vpack.c.b16 %v5368, %v5367
        %v5429 = vpack.c.b16 %v5370, %v5369
        %v5430 = vpack.c.b16 %v5372, %v5371
        %v5431 = vpack.c.b16 %v5374, %v5373
        %v5432 = vpack.c.b16 %v5376, %v5375
        %v5433 = vpack.c.b16 %v5378, %v5377
        %v5434 = vpack.c.b16 %v5380, %v5379
        %v5435 = vpack.c.b16 %v5382, %v5381
        %v5436 = vpack.c.b16 %v5384, %v5383
        %v5437 = vpack.c.b16 %v5386, %v5385
        %v5438 = vpack.c.b16 %v5388, %v5387
        %v5439 = vpack.c.b16 %v5390, %v5389
        %v5440 = vpack.c.b16 %v5392, %v5391
        %v5441 = vpack.c.b16 %v5394, %v5393
        %v5442 = vpack.c.b16 %v5396, %v5395
        %v5443 = vpack.c.b16 %v5398, %v5397
        %v5444 = vpack.c.b16 %v5400, %v5399
        %v5445 = vpack.c.b16 %v5402, %v5401
        %v5446 = vpack.c.b16 %v5404, %v5403
        %v5447 = vpack.c.b16 %v5406, %v5405
        %v5448 = vpack.c.b16 %v5408, %v5407
        %v5449 = vpack.c.b16 %v5410, %v5409
        %v5450 = vpack.c.b16 %v5412, %v5411
        %v5451 = vpack.c.b16 %v5414, %v5413
        %v5452 = vpack.c.b16 %v5416, %v5415
        %v5453 = vpack.c.b16 %v5418, %v5417
        %v5454 = vpack.c.b16 %v5420, %v5419
        %v5455 = vpack.c.b16 %v5422, %v5421
        %v5456 = vpack.c.b16 %v5424, %v5423
        %v5458 = vsel %vm340, %v5425, 0
        %v5461 = vsel %vm340, %v5426, 0
        %v5464 = vsel %vm340, %v5427, 0
        %v5467 = vsel %vm340, %v5428, 0
        %v5470 = vsel %vm340, %v5429, 0
        %v5473 = vsel %vm340, %v5430, 0
        %v5476 = vsel %vm340, %v5431, 0
        %v5479 = vsel %vm340, %v5432, 0
        %v5482 = vsel %vm340, %v5433, 0
        %v5485 = vsel %vm340, %v5434, 0
        %v5488 = vsel %vm340, %v5435, 0
        %v5491 = vsel %vm340, %v5436, 0
        %v5494 = vsel %vm340, %v5437, 0
        %v5497 = vsel %vm340, %v5438, 0
        %v5500 = vsel %vm340, %v5439, 0
        %v5503 = vsel %vm340, %v5440, 0
        %v5506 = vsel %vm340, %v5441, 0
        %v5509 = vsel %vm340, %v5442, 0
        %v5512 = vsel %vm340, %v5443, 0
        %v5515 = vsel %vm340, %v5444, 0
        %v5518 = vsel %vm340, %v5445, 0
        %v5521 = vsel %vm340, %v5446, 0
        %v5524 = vsel %vm340, %v5447, 0
        %v5527 = vsel %vm340, %v5448, 0
        %v5530 = vsel %vm340, %v5449, 0
        %v5533 = vsel %vm340, %v5450, 0
        %v5536 = vsel %vm340, %v5451, 0
        %v5539 = vsel %vm340, %v5452, 0
        %v5542 = vsel %vm340, %v5453, 0
        %v5545 = vsel %vm340, %v5454, 0
        %v5548 = vsel %vm340, %v5455, 0
        %v5551 = vsel %vm340, %v5456, 0
        %v5554 = vsel %vm2453, %v5296, 0
        %5556 = vmatprep.subr.bf16.mxu0 0
        %5557 = vmatpush1.bf16.msra.mxu0 0
        %5558 = vmatprep.subr.bf16.mxu0 0
        %5559 = vmatpush1.bf16.msra.mxu0 0
        %5560 = vmatprep.subr.bf16.mxu0 0
        %5561 = vmatpush1.bf16.msra.mxu0 0
        %5562 = vmatprep.subr.bf16.mxu0 0
        %5563 = vmatpush1.bf16.msra.mxu0 0
        %5564 = vmatprep.subr.bf16.mxu0 0
        %5565 = vmatpush1.bf16.msra.mxu0 0
        %5566 = vmatprep.subr.bf16.mxu0 0
        %5567 = vmatpush1.bf16.msra.mxu0 0
        %5568 = vmatprep.subr.bf16.mxu0 0
        %5569 = vmatpush1.bf16.msra.mxu0 0
        %5570 = vmatprep.subr.bf16.mxu0 0
        %5571 = vmatpush1.bf16.msra.mxu0 %v5554
        %5572 = vmatprep.subr.bf16.mxu0 0
        %5573 = vmatpush2.bf16.msra.mxu0 0
        %5574 = vmatprep.subr.bf16.mxu0 0
        %5575 = vmatpush2.bf16.msra.mxu0 0
        %5576 = vmatprep.subr.bf16.mxu0 0
        %5577 = vmatpush2.bf16.msra.mxu0 0
        %5578 = vmatprep.subr.bf16.mxu0 0
        %5579 = vmatpush2.bf16.msra.mxu0 0
        %5580 = vmatprep.subr.bf16.mxu0 0
        %5581 = vmatpush2.bf16.msra.mxu0 0
        %5582 = vmatprep.subr.bf16.mxu0 0
        %5583 = vmatpush2.bf16.msra.mxu0 0
        %5584 = vmatprep.subr.bf16.mxu0 0
        %5585 = vmatpush2.bf16.msra.mxu0 0
        %5586 = vmatprep.subr.bf16.mxu0 0
        %5587 = vmatpush2.bf16.msra.mxu0 0
        %5588 = vmatprep.mubr.bf16.mxu0 0
        %5589 = vmatmul.mubr.bf16.gmra.mxu0 %v5458
        %v5590 = vpop.f32.mrf.mxu0
        %v5591 = vadd.f32 0.0, %v5590
        %v5592 = vpop.f32.mrf.mxu0
        %v5593 = vpop.f32.mrf.mxu0
        %v5594 = vadd.f32 0.0, %v5593
        %v5595 = vpop.f32.mrf.mxu0
        %5596 = vmatprep.mubr.bf16.mxu0 0
        %5597 = vmatmul.mubr.bf16.gmra.mxu0 %v5461
        %v5598 = vpop.f32.mrf.mxu0
        %v5599 = vadd.f32 0.0, %v5598
        %v5600 = vpop.f32.mrf.mxu0
        %v5601 = vpop.f32.mrf.mxu0
        %v5602 = vadd.f32 0.0, %v5601
        %v5603 = vpop.f32.mrf.mxu0
        %5604 = vmatprep.mubr.bf16.mxu0 0
        %5605 = vmatmul.mubr.bf16.gmra.mxu0 %v5464
        %v5606 = vpop.f32.mrf.mxu0
        %v5607 = vadd.f32 0.0, %v5606
        %v5608 = vpop.f32.mrf.mxu0
        %v5609 = vpop.f32.mrf.mxu0
        %v5610 = vadd.f32 0.0, %v5609
        %v5611 = vpop.f32.mrf.mxu0
        %5612 = vmatprep.mubr.bf16.mxu0 0
        %5613 = vmatmul.mubr.bf16.gmra.mxu0 %v5467
        %v5614 = vpop.f32.mrf.mxu0
        %v5615 = vadd.f32 0.0, %v5614
        %v5616 = vpop.f32.mrf.mxu0
        %v5617 = vpop.f32.mrf.mxu0
        %v5618 = vadd.f32 0.0, %v5617
        %v5619 = vpop.f32.mrf.mxu0
        %5620 = vmatprep.mubr.bf16.mxu0 0
        %5621 = vmatmul.mubr.bf16.gmra.mxu0 %v5470
        %v5622 = vpop.f32.mrf.mxu0
        %v5623 = vadd.f32 0.0, %v5622
        %v5624 = vpop.f32.mrf.mxu0
        %v5625 = vpop.f32.mrf.mxu0
        %v5626 = vadd.f32 0.0, %v5625
        %v5627 = vpop.f32.mrf.mxu0
        %5628 = vmatprep.mubr.bf16.mxu0 0
        %5629 = vmatmul.mubr.bf16.gmra.mxu0 %v5473
        %v5630 = vpop.f32.mrf.mxu0
        %v5631 = vadd.f32 0.0, %v5630
        %v5632 = vpop.f32.mrf.mxu0
        %v5633 = vpop.f32.mrf.mxu0
        %v5634 = vadd.f32 0.0, %v5633
        %v5635 = vpop.f32.mrf.mxu0
        %5636 = vmatprep.mubr.bf16.mxu0 0
        %5637 = vmatmul.mubr.bf16.gmra.mxu0 %v5476
        %v5638 = vpop.f32.mrf.mxu0
        %v5639 = vadd.f32 0.0, %v5638
        %v5640 = vpop.f32.mrf.mxu0
        %v5641 = vpop.f32.mrf.mxu0
        %v5642 = vadd.f32 0.0, %v5641
        %v5643 = vpop.f32.mrf.mxu0
        %5644 = vmatprep.mubr.bf16.mxu0 0
        %5645 = vmatmul.mubr.bf16.gmra.mxu0 %v5479
        %v5646 = vpop.f32.mrf.mxu0
        %v5647 = vadd.f32 0.0, %v5646
        %v5648 = vpop.f32.mrf.mxu0
        %v5649 = vpop.f32.mrf.mxu0
        %v5650 = vadd.f32 0.0, %v5649
        %v5651 = vpop.f32.mrf.mxu0
        %5652 = vmatprep.mubr.bf16.mxu0 0
        %5653 = vmatmul.mubr.bf16.gmra.mxu0 %v5482
        %v5654 = vpop.f32.mrf.mxu0
        %v5655 = vadd.f32 0.0, %v5654
        %v5656 = vpop.f32.mrf.mxu0
        %v5657 = vpop.f32.mrf.mxu0
        %v5658 = vadd.f32 0.0, %v5657
        %v5659 = vpop.f32.mrf.mxu0
        %5660 = vmatprep.mubr.bf16.mxu0 0
        %5661 = vmatmul.mubr.bf16.gmra.mxu0 %v5485
        %v5662 = vpop.f32.mrf.mxu0
        %v5663 = vadd.f32 0.0, %v5662
        %v5664 = vpop.f32.mrf.mxu0
        %v5665 = vpop.f32.mrf.mxu0
        %v5666 = vadd.f32 0.0, %v5665
        %v5667 = vpop.f32.mrf.mxu0
        %5668 = vmatprep.mubr.bf16.mxu0 0
        %5669 = vmatmul.mubr.bf16.gmra.mxu0 %v5488
        %v5670 = vpop.f32.mrf.mxu0
        %v5671 = vadd.f32 0.0, %v5670
        %v5672 = vpop.f32.mrf.mxu0
        %v5673 = vpop.f32.mrf.mxu0
        %v5674 = vadd.f32 0.0, %v5673
        %v5675 = vpop.f32.mrf.mxu0
        %5676 = vmatprep.mubr.bf16.mxu0 0
        %5677 = vmatmul.mubr.bf16.gmra.mxu0 %v5491
        %v5678 = vpop.f32.mrf.mxu0
        %v5679 = vadd.f32 0.0, %v5678
        %v5680 = vpop.f32.mrf.mxu0
        %v5681 = vpop.f32.mrf.mxu0
        %v5682 = vadd.f32 0.0, %v5681
        %v5683 = vpop.f32.mrf.mxu0
        %5684 = vmatprep.mubr.bf16.mxu0 0
        %5685 = vmatmul.mubr.bf16.gmra.mxu0 %v5494
        %v5686 = vpop.f32.mrf.mxu0
        %v5687 = vadd.f32 0.0, %v5686
        %v5688 = vpop.f32.mrf.mxu0
        %v5689 = vpop.f32.mrf.mxu0
        %v5690 = vadd.f32 0.0, %v5689
        %v5691 = vpop.f32.mrf.mxu0
        %5692 = vmatprep.mubr.bf16.mxu0 0
        %5693 = vmatmul.mubr.bf16.gmra.mxu0 %v5497
        %v5694 = vpop.f32.mrf.mxu0
        %v5695 = vadd.f32 0.0, %v5694
        %v5696 = vpop.f32.mrf.mxu0
        %v5697 = vpop.f32.mrf.mxu0
        %v5698 = vadd.f32 0.0, %v5697
        %v5699 = vpop.f32.mrf.mxu0
        %5700 = vmatprep.mubr.bf16.mxu0 0
        %5701 = vmatmul.mubr.bf16.gmra.mxu0 %v5500
        %v5702 = vpop.f32.mrf.mxu0
        %v5703 = vadd.f32 0.0, %v5702
        %v5704 = vpop.f32.mrf.mxu0
        %v5705 = vpop.f32.mrf.mxu0
        %v5706 = vadd.f32 0.0, %v5705
        %v5707 = vpop.f32.mrf.mxu0
        %5708 = vmatprep.mubr.bf16.mxu0 0
        %5709 = vmatmul.mubr.bf16.gmra.mxu0 %v5503
        %v5710 = vpop.f32.mrf.mxu0
        %v5711 = vadd.f32 0.0, %v5710
        %v5712 = vpop.f32.mrf.mxu0
        %v5713 = vpop.f32.mrf.mxu0
        %v5714 = vadd.f32 0.0, %v5713
        %v5715 = vpop.f32.mrf.mxu0
        %5716 = vmatprep.mubr.bf16.mxu0 0
        %5717 = vmatmul.mubr.bf16.gmra.mxu0 %v5506
        %v5718 = vpop.f32.mrf.mxu0
        %v5719 = vadd.f32 0.0, %v5718
        %v5720 = vpop.f32.mrf.mxu0
        %v5721 = vpop.f32.mrf.mxu0
        %v5722 = vadd.f32 0.0, %v5721
        %v5723 = vpop.f32.mrf.mxu0
        %5724 = vmatprep.mubr.bf16.mxu0 0
        %5725 = vmatmul.mubr.bf16.gmra.mxu0 %v5509
        %v5726 = vpop.f32.mrf.mxu0
        %v5727 = vadd.f32 0.0, %v5726
        %v5728 = vpop.f32.mrf.mxu0
        %v5729 = vpop.f32.mrf.mxu0
        %v5730 = vadd.f32 0.0, %v5729
        %v5731 = vpop.f32.mrf.mxu0
        %5732 = vmatprep.mubr.bf16.mxu0 0
        %5733 = vmatmul.mubr.bf16.gmra.mxu0 %v5512
        %v5734 = vpop.f32.mrf.mxu0
        %v5735 = vadd.f32 0.0, %v5734
        %v5736 = vpop.f32.mrf.mxu0
        %v5737 = vpop.f32.mrf.mxu0
        %v5738 = vadd.f32 0.0, %v5737
        %v5739 = vpop.f32.mrf.mxu0
        %5740 = vmatprep.mubr.bf16.mxu0 0
        %5741 = vmatmul.mubr.bf16.gmra.mxu0 %v5515
        %v5742 = vpop.f32.mrf.mxu0
        %v5743 = vadd.f32 0.0, %v5742
        %v5744 = vpop.f32.mrf.mxu0
        %v5745 = vpop.f32.mrf.mxu0
        %v5746 = vadd.f32 0.0, %v5745
        %v5747 = vpop.f32.mrf.mxu0
        %5748 = vmatprep.mubr.bf16.mxu0 0
        %5749 = vmatmul.mubr.bf16.gmra.mxu0 %v5518
        %v5750 = vpop.f32.mrf.mxu0
        %v5751 = vadd.f32 0.0, %v5750
        %v5752 = vpop.f32.mrf.mxu0
        %v5753 = vpop.f32.mrf.mxu0
        %v5754 = vadd.f32 0.0, %v5753
        %v5755 = vpop.f32.mrf.mxu0
        %5756 = vmatprep.mubr.bf16.mxu0 0
        %5757 = vmatmul.mubr.bf16.gmra.mxu0 %v5521
        %v5758 = vpop.f32.mrf.mxu0
        %v5759 = vadd.f32 0.0, %v5758
        %v5760 = vpop.f32.mrf.mxu0
        %v5761 = vpop.f32.mrf.mxu0
        %v5762 = vadd.f32 0.0, %v5761
        %v5763 = vpop.f32.mrf.mxu0
        %5764 = vmatprep.mubr.bf16.mxu0 0
        %5765 = vmatmul.mubr.bf16.gmra.mxu0 %v5524
        %v5766 = vpop.f32.mrf.mxu0
        %v5767 = vadd.f32 0.0, %v5766
        %v5768 = vpop.f32.mrf.mxu0
        %v5769 = vpop.f32.mrf.mxu0
        %v5770 = vadd.f32 0.0, %v5769
        %v5771 = vpop.f32.mrf.mxu0
        %5772 = vmatprep.mubr.bf16.mxu0 0
        %5773 = vmatmul.mubr.bf16.gmra.mxu0 %v5527
        %v5774 = vpop.f32.mrf.mxu0
        %v5775 = vadd.f32 0.0, %v5774
        %v5776 = vpop.f32.mrf.mxu0
        %v5777 = vpop.f32.mrf.mxu0
        %v5778 = vadd.f32 0.0, %v5777
        %v5779 = vpop.f32.mrf.mxu0
        %5780 = vmatprep.mubr.bf16.mxu0 0
        %5781 = vmatmul.mubr.bf16.gmra.mxu0 %v5530
        %v5782 = vpop.f32.mrf.mxu0
        %v5783 = vadd.f32 0.0, %v5782
        %v5784 = vpop.f32.mrf.mxu0
        %v5785 = vpop.f32.mrf.mxu0
        %v5786 = vadd.f32 0.0, %v5785
        %v5787 = vpop.f32.mrf.mxu0
        %5788 = vmatprep.mubr.bf16.mxu0 0
        %5789 = vmatmul.mubr.bf16.gmra.mxu0 %v5533
        %v5790 = vpop.f32.mrf.mxu0
        %v5791 = vadd.f32 0.0, %v5790
        %v5792 = vpop.f32.mrf.mxu0
        %v5793 = vpop.f32.mrf.mxu0
        %v5794 = vadd.f32 0.0, %v5793
        %v5795 = vpop.f32.mrf.mxu0
        %5796 = vmatprep.mubr.bf16.mxu0 0
        %5797 = vmatmul.mubr.bf16.gmra.mxu0 %v5536
        %v5798 = vpop.f32.mrf.mxu0
        %v5799 = vadd.f32 0.0, %v5798
        %v5800 = vpop.f32.mrf.mxu0
        %v5801 = vpop.f32.mrf.mxu0
        %v5802 = vadd.f32 0.0, %v5801
        %v5803 = vpop.f32.mrf.mxu0
        %5804 = vmatprep.mubr.bf16.mxu0 0
        %5805 = vmatmul.mubr.bf16.gmra.mxu0 %v5539
        %v5806 = vpop.f32.mrf.mxu0
        %v5807 = vadd.f32 0.0, %v5806
        %v5808 = vpop.f32.mrf.mxu0
        %v5809 = vpop.f32.mrf.mxu0
        %v5810 = vadd.f32 0.0, %v5809
        %v5811 = vpop.f32.mrf.mxu0
        %5812 = vmatprep.mubr.bf16.mxu0 0
        %5813 = vmatmul.mubr.bf16.gmra.mxu0 %v5542
        %v5814 = vpop.f32.mrf.mxu0
        %v5815 = vadd.f32 0.0, %v5814
        %v5816 = vpop.f32.mrf.mxu0
        %v5817 = vpop.f32.mrf.mxu0
        %v5818 = vadd.f32 0.0, %v5817
        %v5819 = vpop.f32.mrf.mxu0
        %5820 = vmatprep.mubr.bf16.mxu0 0
        %5821 = vmatmul.mubr.bf16.gmra.mxu0 %v5545
        %v5822 = vpop.f32.mrf.mxu0
        %v5823 = vadd.f32 0.0, %v5822
        %v5824 = vpop.f32.mrf.mxu0
        %v5825 = vpop.f32.mrf.mxu0
        %v5826 = vadd.f32 0.0, %v5825
        %v5827 = vpop.f32.mrf.mxu0
        %5828 = vmatprep.mubr.bf16.mxu0 0
        %5829 = vmatmul.mubr.bf16.gmra.mxu0 %v5548
        %v5830 = vpop.f32.mrf.mxu0
        %v5831 = vadd.f32 0.0, %v5830
        %v5832 = vpop.f32.mrf.mxu0
        %v5833 = vpop.f32.mrf.mxu0
        %v5834 = vadd.f32 0.0, %v5833
        %v5835 = vpop.f32.mrf.mxu0
        %5836 = vmatprep.mubr.bf16.mxu0 0
        %5837 = vmatmul.mubr.bf16.gmra.mxu0 %v5551
        %v5838 = vpop.f32.mrf.mxu0
        %v5839 = vadd.f32 0.0, %v5838
        %v5840 = vpop.f32.mrf.mxu0
        %v5841 = vpop.f32.mrf.mxu0
        %v5842 = vadd.f32 0.0, %v5841
        %v5843 = vpop.f32.mrf.mxu0
        %5844 = vdwg.mxu0
        %v5845 = vld [vmem:[#allocation4] sm:$0xff]
        %v5846 = vld [vmem:[#allocation4 + $0x8] sm:$0xff]
        %v5847 = vld [vmem:[#allocation4 + $0x10] sm:$0xff]
        %v5848 = vld [vmem:[#allocation4 + $0x18] sm:$0xff]
        %v5849 = vld [vmem:[#allocation4 + $0x20] sm:$0xff]
        %v5850 = vld [vmem:[#allocation4 + $0x28] sm:$0xff]
        %v5851 = vld [vmem:[#allocation4 + $0x30] sm:$0xff]
        %v5852 = vld [vmem:[#allocation4 + $0x38] sm:$0xff]
        %v5853 = vld [vmem:[#allocation4 + $0x40] sm:$0xff]
        %v5854 = vld [vmem:[#allocation4 + $0x48] sm:$0xff]
        %v5855 = vld [vmem:[#allocation4 + $0x50] sm:$0xff]
        %v5856 = vld [vmem:[#allocation4 + $0x58] sm:$0xff]
        %v5857 = vld [vmem:[#allocation4 + $0x60] sm:$0xff]
        %v5858 = vld [vmem:[#allocation4 + $0x68] sm:$0xff]
        %v5859 = vld [vmem:[#allocation4 + $0x70] sm:$0xff]
        %v5860 = vld [vmem:[#allocation4 + $0x78] sm:$0xff]
        %v5861 = vld [vmem:[#allocation4 + $0x80] sm:$0xff]
        %v5862 = vld [vmem:[#allocation4 + $0x88] sm:$0xff]
        %v5863 = vld [vmem:[#allocation4 + $0x90] sm:$0xff]
        %v5864 = vld [vmem:[#allocation4 + $0x98] sm:$0xff]
        %v5865 = vld [vmem:[#allocation4 + $0xa0] sm:$0xff]
        %v5866 = vld [vmem:[#allocation4 + $0xa8] sm:$0xff]
        %v5867 = vld [vmem:[#allocation4 + $0xb0] sm:$0xff]
        %v5868 = vld [vmem:[#allocation4 + $0xb8] sm:$0xff]
        %v5869 = vld [vmem:[#allocation4 + $0xc0] sm:$0xff]
        %v5870 = vld [vmem:[#allocation4 + $0xc8] sm:$0xff]
        %v5871 = vld [vmem:[#allocation4 + $0xd0] sm:$0xff]
        %v5872 = vld [vmem:[#allocation4 + $0xd8] sm:$0xff]
        %v5873 = vld [vmem:[#allocation4 + $0xe0] sm:$0xff]
        %v5874 = vld [vmem:[#allocation4 + $0xe8] sm:$0xff]
        %v5875 = vld [vmem:[#allocation4 + $0xf0] sm:$0xff]
        %v5876 = vld [vmem:[#allocation4 + $0xf8] sm:$0xff]
        %v5877 = vld [vmem:[#allocation4 + $0x100] sm:$0xff]
        %v5878 = vld [vmem:[#allocation4 + $0x108] sm:$0xff]
        %v5879 = vld [vmem:[#allocation4 + $0x110] sm:$0xff]
        %v5880 = vld [vmem:[#allocation4 + $0x118] sm:$0xff]
        %v5881 = vld [vmem:[#allocation4 + $0x120] sm:$0xff]
        %v5882 = vld [vmem:[#allocation4 + $0x128] sm:$0xff]
        %v5883 = vld [vmem:[#allocation4 + $0x130] sm:$0xff]
        %v5884 = vld [vmem:[#allocation4 + $0x138] sm:$0xff]
        %v5885 = vld [vmem:[#allocation4 + $0x140] sm:$0xff]
        %v5886 = vld [vmem:[#allocation4 + $0x148] sm:$0xff]
        %v5887 = vld [vmem:[#allocation4 + $0x150] sm:$0xff]
        %v5888 = vld [vmem:[#allocation4 + $0x158] sm:$0xff]
        %v5889 = vld [vmem:[#allocation4 + $0x160] sm:$0xff]
        %v5890 = vld [vmem:[#allocation4 + $0x168] sm:$0xff]
        %v5891 = vld [vmem:[#allocation4 + $0x170] sm:$0xff]
        %v5892 = vld [vmem:[#allocation4 + $0x178] sm:$0xff]
        %v5893 = vld [vmem:[#allocation4 + $0x180] sm:$0xff]
        %v5894 = vld [vmem:[#allocation4 + $0x188] sm:$0xff]
        %v5895 = vld [vmem:[#allocation4 + $0x190] sm:$0xff]
        %v5896 = vld [vmem:[#allocation4 + $0x198] sm:$0xff]
        %v5897 = vld [vmem:[#allocation4 + $0x1a0] sm:$0xff]
        %v5898 = vld [vmem:[#allocation4 + $0x1a8] sm:$0xff]
        %v5899 = vld [vmem:[#allocation4 + $0x1b0] sm:$0xff]
        %v5900 = vld [vmem:[#allocation4 + $0x1b8] sm:$0xff]
        %v5901 = vld [vmem:[#allocation4 + $0x1c0] sm:$0xff]
        %v5902 = vld [vmem:[#allocation4 + $0x1c8] sm:$0xff]
        %v5903 = vld [vmem:[#allocation4 + $0x1d0] sm:$0xff]
        %v5904 = vld [vmem:[#allocation4 + $0x1d8] sm:$0xff]
        %v5905 = vld [vmem:[#allocation4 + $0x1e0] sm:$0xff]
        %v5906 = vld [vmem:[#allocation4 + $0x1e8] sm:$0xff]
        %v5907 = vld [vmem:[#allocation4 + $0x1f0] sm:$0xff]
        %v5908 = vld [vmem:[#allocation4 + $0x1f8] sm:$0xff]
        %v5909 = vadd.f32 %v5845, %v5591
        %v5910 = vadd.f32 %v5846, %v5594
        %v5911 = vadd.f32 %v5847, %v5599
        %v5912 = vadd.f32 %v5848, %v5602
        %v5913 = vadd.f32 %v5849, %v5607
        %v5914 = vadd.f32 %v5850, %v5610
        %v5915 = vadd.f32 %v5851, %v5615
        %v5916 = vadd.f32 %v5852, %v5618
        %v5917 = vadd.f32 %v5853, %v5623
        %v5918 = vadd.f32 %v5854, %v5626
        %v5919 = vadd.f32 %v5855, %v5631
        %v5920 = vadd.f32 %v5856, %v5634
        %v5921 = vadd.f32 %v5857, %v5639
        %v5922 = vadd.f32 %v5858, %v5642
        %v5923 = vadd.f32 %v5859, %v5647
        %v5924 = vadd.f32 %v5860, %v5650
        %v5925 = vadd.f32 %v5861, %v5655
        %v5926 = vadd.f32 %v5862, %v5658
        %v5927 = vadd.f32 %v5863, %v5663
        %v5928 = vadd.f32 %v5864, %v5666
        %v5929 = vadd.f32 %v5865, %v5671
        %v5930 = vadd.f32 %v5866, %v5674
        %v5931 = vadd.f32 %v5867, %v5679
        %v5932 = vadd.f32 %v5868, %v5682
        %v5933 = vadd.f32 %v5869, %v5687
        %v5934 = vadd.f32 %v5870, %v5690
        %v5935 = vadd.f32 %v5871, %v5695
        %v5936 = vadd.f32 %v5872, %v5698
        %v5937 = vadd.f32 %v5873, %v5703
        %v5938 = vadd.f32 %v5874, %v5706
        %v5939 = vadd.f32 %v5875, %v5711
        %v5940 = vadd.f32 %v5876, %v5714
        %v5941 = vadd.f32 %v5877, %v5719
        %v5942 = vadd.f32 %v5878, %v5722
        %v5943 = vadd.f32 %v5879, %v5727
        %v5944 = vadd.f32 %v5880, %v5730
        %v5945 = vadd.f32 %v5881, %v5735
        %v5946 = vadd.f32 %v5882, %v5738
        %v5947 = vadd.f32 %v5883, %v5743
        %v5948 = vadd.f32 %v5884, %v5746
        %v5949 = vadd.f32 %v5885, %v5751
        %v5950 = vadd.f32 %v5886, %v5754
        %v5951 = vadd.f32 %v5887, %v5759
        %v5952 = vadd.f32 %v5888, %v5762
        %v5953 = vadd.f32 %v5889, %v5767
        %v5954 = vadd.f32 %v5890, %v5770
        %v5955 = vadd.f32 %v5891, %v5775
        %v5956 = vadd.f32 %v5892, %v5778
        %v5957 = vadd.f32 %v5893, %v5783
        %v5958 = vadd.f32 %v5894, %v5786
        %v5959 = vadd.f32 %v5895, %v5791
        %v5960 = vadd.f32 %v5896, %v5794
        %v5961 = vadd.f32 %v5897, %v5799
        %v5962 = vadd.f32 %v5898, %v5802
        %v5963 = vadd.f32 %v5899, %v5807
        %v5964 = vadd.f32 %v5900, %v5810
        %v5965 = vadd.f32 %v5901, %v5815
        %v5966 = vadd.f32 %v5902, %v5818
        %v5967 = vadd.f32 %v5903, %v5823
        %v5968 = vadd.f32 %v5904, %v5826
        %v5969 = vadd.f32 %v5905, %v5831
        %v5970 = vadd.f32 %v5906, %v5834
        %v5971 = vadd.f32 %v5907, %v5839
        %v5972 = vadd.f32 %v5908, %v5842
        %5973 = vst.msk [vmem:[#allocation4] sm:$0xff] %vm2746, %v5909
        %5974 = vst.msk [vmem:[#allocation4 + $0x8] sm:$0xff] %vm2746, %v5910
        %5975 = vst.msk [vmem:[#allocation4 + $0x10] sm:$0xff] %vm2746, %v5911
        %5976 = vst.msk [vmem:[#allocation4 + $0x18] sm:$0xff] %vm2746, %v5912
        %5977 = vst.msk [vmem:[#allocation4 + $0x20] sm:$0xff] %vm2746, %v5913
        %5978 = vst.msk [vmem:[#allocation4 + $0x28] sm:$0xff] %vm2746, %v5914
        %5979 = vst.msk [vmem:[#allocation4 + $0x30] sm:$0xff] %vm2746, %v5915
        %5980 = vst.msk [vmem:[#allocation4 + $0x38] sm:$0xff] %vm2746, %v5916
        %5981 = vst.msk [vmem:[#allocation4 + $0x40] sm:$0xff] %vm2746, %v5917
        %5982 = vst.msk [vmem:[#allocation4 + $0x48] sm:$0xff] %vm2746, %v5918
        %5983 = vst.msk [vmem:[#allocation4 + $0x50] sm:$0xff] %vm2746, %v5919
        %5984 = vst.msk [vmem:[#allocation4 + $0x58] sm:$0xff] %vm2746, %v5920
        %5985 = vst.msk [vmem:[#allocation4 + $0x60] sm:$0xff] %vm2746, %v5921
        %5986 = vst.msk [vmem:[#allocation4 + $0x68] sm:$0xff] %vm2746, %v5922
        %5987 = vst.msk [vmem:[#allocation4 + $0x70] sm:$0xff] %vm2746, %v5923
        %5988 = vst.msk [vmem:[#allocation4 + $0x78] sm:$0xff] %vm2746, %v5924
        %5989 = vst.msk [vmem:[#allocation4 + $0x80] sm:$0xff] %vm2746, %v5925
        %5990 = vst.msk [vmem:[#allocation4 + $0x88] sm:$0xff] %vm2746, %v5926
        %5991 = vst.msk [vmem:[#allocation4 + $0x90] sm:$0xff] %vm2746, %v5927
        %5992 = vst.msk [vmem:[#allocation4 + $0x98] sm:$0xff] %vm2746, %v5928
        %5993 = vst.msk [vmem:[#allocation4 + $0xa0] sm:$0xff] %vm2746, %v5929
        %5994 = vst.msk [vmem:[#allocation4 + $0xa8] sm:$0xff] %vm2746, %v5930
        %5995 = vst.msk [vmem:[#allocation4 + $0xb0] sm:$0xff] %vm2746, %v5931
        %5996 = vst.msk [vmem:[#allocation4 + $0xb8] sm:$0xff] %vm2746, %v5932
        %5997 = vst.msk [vmem:[#allocation4 + $0xc0] sm:$0xff] %vm2746, %v5933
        %5998 = vst.msk [vmem:[#allocation4 + $0xc8] sm:$0xff] %vm2746, %v5934
        %5999 = vst.msk [vmem:[#allocation4 + $0xd0] sm:$0xff] %vm2746, %v5935
        %6000 = vst.msk [vmem:[#allocation4 + $0xd8] sm:$0xff] %vm2746, %v5936
        %6001 = vst.msk [vmem:[#allocation4 + $0xe0] sm:$0xff] %vm2746, %v5937
        %6002 = vst.msk [vmem:[#allocation4 + $0xe8] sm:$0xff] %vm2746, %v5938
        %6003 = vst.msk [vmem:[#allocation4 + $0xf0] sm:$0xff] %vm2746, %v5939
        %6004 = vst.msk [vmem:[#allocation4 + $0xf8] sm:$0xff] %vm2746, %v5940
        %6005 = vst.msk [vmem:[#allocation4 + $0x100] sm:$0xff] %vm2746, %v5941
        %6006 = vst.msk [vmem:[#allocation4 + $0x108] sm:$0xff] %vm2746, %v5942
        %6007 = vst.msk [vmem:[#allocation4 + $0x110] sm:$0xff] %vm2746, %v5943
        %6008 = vst.msk [vmem:[#allocation4 + $0x118] sm:$0xff] %vm2746, %v5944
        %6009 = vst.msk [vmem:[#allocation4 + $0x120] sm:$0xff] %vm2746, %v5945
        %6010 = vst.msk [vmem:[#allocation4 + $0x128] sm:$0xff] %vm2746, %v5946
        %6011 = vst.msk [vmem:[#allocation4 + $0x130] sm:$0xff] %vm2746, %v5947
        %6012 = vst.msk [vmem:[#allocation4 + $0x138] sm:$0xff] %vm2746, %v5948
        %6013 = vst.msk [vmem:[#allocation4 + $0x140] sm:$0xff] %vm2746, %v5949
        %6014 = vst.msk [vmem:[#allocation4 + $0x148] sm:$0xff] %vm2746, %v5950
        %6015 = vst.msk [vmem:[#allocation4 + $0x150] sm:$0xff] %vm2746, %v5951
        %6016 = vst.msk [vmem:[#allocation4 + $0x158] sm:$0xff] %vm2746, %v5952
        %6017 = vst.msk [vmem:[#allocation4 + $0x160] sm:$0xff] %vm2746, %v5953
        %6018 = vst.msk [vmem:[#allocation4 + $0x168] sm:$0xff] %vm2746, %v5954
        %6019 = vst.msk [vmem:[#allocation4 + $0x170] sm:$0xff] %vm2746, %v5955
        %6020 = vst.msk [vmem:[#allocation4 + $0x178] sm:$0xff] %vm2746, %v5956
        %6021 = vst.msk [vmem:[#allocation4 + $0x180] sm:$0xff] %vm2746, %v5957
        %6022 = vst.msk [vmem:[#allocation4 + $0x188] sm:$0xff] %vm2746, %v5958
        %6023 = vst.msk [vmem:[#allocation4 + $0x190] sm:$0xff] %vm2746, %v5959
        %6024 = vst.msk [vmem:[#allocation4 + $0x198] sm:$0xff] %vm2746, %v5960
        %6025 = vst.msk [vmem:[#allocation4 + $0x1a0] sm:$0xff] %vm2746, %v5961
        %6026 = vst.msk [vmem:[#allocation4 + $0x1a8] sm:$0xff] %vm2746, %v5962
        %6027 = vst.msk [vmem:[#allocation4 + $0x1b0] sm:$0xff] %vm2746, %v5963
        %6028 = vst.msk [vmem:[#allocation4 + $0x1b8] sm:$0xff] %vm2746, %v5964
        %6029 = vst.msk [vmem:[#allocation4 + $0x1c0] sm:$0xff] %vm2746, %v5965
        %6030 = vst.msk [vmem:[#allocation4 + $0x1c8] sm:$0xff] %vm2746, %v5966
        %6031 = vst.msk [vmem:[#allocation4 + $0x1d0] sm:$0xff] %vm2746, %v5967
        %6032 = vst.msk [vmem:[#allocation4 + $0x1d8] sm:$0xff] %vm2746, %v5968
        %6033 = vst.msk [vmem:[#allocation4 + $0x1e0] sm:$0xff] %vm2746, %v5969
        %6034 = vst.msk [vmem:[#allocation4 + $0x1e8] sm:$0xff] %vm2746, %v5970
        %6035 = vst.msk [vmem:[#allocation4 + $0x1f0] sm:$0xff] %vm2746, %v5971
        %6036 = vst.msk [vmem:[#allocation4 + $0x1f8] sm:$0xff] %vm2746, %v5972
        %s6037 = scalar_lea.vmem [#allocation3], 296
        %v6038 = vld [vmem:[%s6037] sm:$0xf]
        %v6039 = vld [vmem:[%s6037 + $0x4] sm:$0xf]
        %v6040 = vld [vmem:[%s6037 + $0x8] sm:$0xf]
        %v6041 = vld [vmem:[%s6037 + $0xc] sm:$0xf]
        %v6042 = vld [vmem:[%s6037 + $0x10] sm:$0xf]
        %v6043 = vld [vmem:[%s6037 + $0x14] sm:$0xf]
        %v6044 = vld [vmem:[%s6037 + $0x18] sm:$0xf]
        %v6045 = vld [vmem:[%s6037 + $0x1c] sm:$0xf]
        %v6046 = vld [vmem:[%s6037 + $0x20] sm:$0xf]
        %v6047 = vld [vmem:[%s6037 + $0x24] sm:$0xf]
        %v6048 = vld [vmem:[%s6037 + $0x28] sm:$0xf]
        %v6049 = vld [vmem:[%s6037 + $0x2c] sm:$0xf]
        %v6050 = vld [vmem:[%s6037 + $0x30] sm:$0xf]
        %v6051 = vld [vmem:[%s6037 + $0x34] sm:$0xf]
        %v6052 = vld [vmem:[%s6037 + $0x38] sm:$0xf]
        %v6053 = vld [vmem:[%s6037 + $0x3c] sm:$0xf]
        %v6054 = vld [vmem:[%s6037 + $0x40] sm:$0xf]
        %v6055 = vld [vmem:[%s6037 + $0x44] sm:$0xf]
        %v6056 = vld [vmem:[%s6037 + $0x48] sm:$0xf]
        %v6057 = vld [vmem:[%s6037 + $0x4c] sm:$0xf]
        %v6058 = vld [vmem:[%s6037 + $0x50] sm:$0xf]
        %v6059 = vld [vmem:[%s6037 + $0x54] sm:$0xf]
        %v6060 = vld [vmem:[%s6037 + $0x58] sm:$0xf]
        %v6061 = vld [vmem:[%s6037 + $0x5c] sm:$0xf]
        %v6062 = vld [vmem:[%s6037 + $0x60] sm:$0xf]
        %v6063 = vld [vmem:[%s6037 + $0x64] sm:$0xf]
        %v6064 = vld [vmem:[%s6037 + $0x68] sm:$0xf]
        %v6065 = vld [vmem:[%s6037 + $0x6c] sm:$0xf]
        %v6066 = vld [vmem:[%s6037 + $0x70] sm:$0xf]
        %v6067 = vld [vmem:[%s6037 + $0x74] sm:$0xf]
        %v6068 = vld [vmem:[%s6037 + $0x78] sm:$0xf]
        %v6069 = vld [vmem:[%s6037 + $0x7c] sm:$0xf]
        %v6070 = vld [vmem:[%s6037 + $0x90] sm:$0xf]
        %v6071 = vld [vmem:[%s6037 + $0x94] sm:$0xf]
        %v6072 = vld [vmem:[%s6037 + $0x98] sm:$0xf]
        %v6073 = vld [vmem:[%s6037 + $0x9c] sm:$0xf]
        %v6074 = vld [vmem:[%s6037 + $0xa0] sm:$0xf]
        %v6075 = vld [vmem:[%s6037 + $0xa4] sm:$0xf]
        %v6076 = vld [vmem:[%s6037 + $0xa8] sm:$0xf]
        %v6077 = vld [vmem:[%s6037 + $0xac] sm:$0xf]
        %v6078 = vld [vmem:[%s6037 + $0xb0] sm:$0xf]
        %v6079 = vld [vmem:[%s6037 + $0xb4] sm:$0xf]
        %v6080 = vld [vmem:[%s6037 + $0xb8] sm:$0xf]
        %v6081 = vld [vmem:[%s6037 + $0xbc] sm:$0xf]
        %v6082 = vld [vmem:[%s6037 + $0xc0] sm:$0xf]
        %v6083 = vld [vmem:[%s6037 + $0xc4] sm:$0xf]
        %v6084 = vld [vmem:[%s6037 + $0xc8] sm:$0xf]
        %v6085 = vld [vmem:[%s6037 + $0xcc] sm:$0xf]
        %v6086 = vld [vmem:[%s6037 + $0xd0] sm:$0xf]
        %v6087 = vld [vmem:[%s6037 + $0xd4] sm:$0xf]
        %v6088 = vld [vmem:[%s6037 + $0xd8] sm:$0xf]
        %v6089 = vld [vmem:[%s6037 + $0xdc] sm:$0xf]
        %v6090 = vld [vmem:[%s6037 + $0xe0] sm:$0xf]
        %v6091 = vld [vmem:[%s6037 + $0xe4] sm:$0xf]
        %v6092 = vld [vmem:[%s6037 + $0xe8] sm:$0xf]
        %v6093 = vld [vmem:[%s6037 + $0xec] sm:$0xf]
        %v6094 = vld [vmem:[%s6037 + $0xf0] sm:$0xf]
        %v6095 = vld [vmem:[%s6037 + $0xf4] sm:$0xf]
        %v6096 = vld [vmem:[%s6037 + $0xf8] sm:$0xf]
        %v6097 = vld [vmem:[%s6037 + $0xfc] sm:$0xf]
        %v6098 = vld [vmem:[%s6037 + $0x100] sm:$0xf]
        %v6099 = vld [vmem:[%s6037 + $0x104] sm:$0xf]
        %v6100 = vld [vmem:[%s6037 + $0x108] sm:$0xf]
        %v6101 = vld [vmem:[%s6037 + $0x10c] sm:$0xf]
        %s6102 = scalar_lea.vmem %s1, 10
        %v6103 = vld [vmem:[%s6102] sm:$0x3]
        %v6168 = vunpack.c.l.b16 %v6038
        %v6169 = vunpack.c.l.b16 %v6039
        %v6170 = vunpack.c.l.b16 %v6040
        %v6171 = vunpack.c.l.b16 %v6041
        %v6172 = vunpack.c.l.b16 %v6042
        %v6173 = vunpack.c.l.b16 %v6043
        %v6174 = vunpack.c.l.b16 %v6044
        %v6175 = vunpack.c.l.b16 %v6045
        %v6176 = vunpack.c.l.b16 %v6046
        %v6177 = vunpack.c.l.b16 %v6047
        %v6178 = vunpack.c.l.b16 %v6048
        %v6179 = vunpack.c.l.b16 %v6049
        %v6180 = vunpack.c.l.b16 %v6050
        %v6181 = vunpack.c.l.b16 %v6051
        %v6182 = vunpack.c.l.b16 %v6052
        %v6183 = vunpack.c.l.b16 %v6053
        %v6184 = vunpack.c.l.b16 %v6054
        %v6185 = vunpack.c.l.b16 %v6055
        %v6186 = vunpack.c.l.b16 %v6056
        %v6187 = vunpack.c.l.b16 %v6057
        %v6188 = vunpack.c.l.b16 %v6058
        %v6189 = vunpack.c.l.b16 %v6059
        %v6190 = vunpack.c.l.b16 %v6060
        %v6191 = vunpack.c.l.b16 %v6061
        %v6192 = vunpack.c.l.b16 %v6062
        %v6193 = vunpack.c.l.b16 %v6063
        %v6194 = vunpack.c.l.b16 %v6064
        %v6195 = vunpack.c.l.b16 %v6065
        %v6196 = vunpack.c.l.b16 %v6066
        %v6197 = vunpack.c.l.b16 %v6067
        %v6198 = vunpack.c.l.b16 %v6068
        %v6199 = vunpack.c.l.b16 %v6069
        %v6200 = vunpack.c.l.b16 %v6070
        %v6201 = vunpack.c.l.b16 %v6071
        %v6202 = vunpack.c.l.b16 %v6072
        %v6203 = vunpack.c.l.b16 %v6073
        %v6204 = vunpack.c.l.b16 %v6074
        %v6205 = vunpack.c.l.b16 %v6075
        %v6206 = vunpack.c.l.b16 %v6076
        %v6207 = vunpack.c.l.b16 %v6077
        %v6208 = vunpack.c.l.b16 %v6078
        %v6209 = vunpack.c.l.b16 %v6079
        %v6210 = vunpack.c.l.b16 %v6080
        %v6211 = vunpack.c.l.b16 %v6081
        %v6212 = vunpack.c.l.b16 %v6082
        %v6213 = vunpack.c.l.b16 %v6083
        %v6214 = vunpack.c.l.b16 %v6084
        %v6215 = vunpack.c.l.b16 %v6085
        %v6216 = vunpack.c.l.b16 %v6086
        %v6217 = vunpack.c.l.b16 %v6087
        %v6218 = vunpack.c.l.b16 %v6088
        %v6219 = vunpack.c.l.b16 %v6089
        %v6220 = vunpack.c.l.b16 %v6090
        %v6221 = vunpack.c.l.b16 %v6091
        %v6222 = vunpack.c.l.b16 %v6092
        %v6223 = vunpack.c.l.b16 %v6093
        %v6224 = vunpack.c.l.b16 %v6094
        %v6225 = vunpack.c.l.b16 %v6095
        %v6226 = vunpack.c.l.b16 %v6096
        %v6227 = vunpack.c.l.b16 %v6097
        %v6228 = vunpack.c.l.b16 %v6098
        %v6229 = vunpack.c.l.b16 %v6099
        %v6230 = vunpack.c.l.b16 %v6100
        %v6231 = vunpack.c.l.b16 %v6101
        %v6232 = vpack.c.b16 %v6169, %v6168
        %v6233 = vpack.c.b16 %v6171, %v6170
        %v6234 = vpack.c.b16 %v6173, %v6172
        %v6235 = vpack.c.b16 %v6175, %v6174
        %v6236 = vpack.c.b16 %v6177, %v6176
        %v6237 = vpack.c.b16 %v6179, %v6178
        %v6238 = vpack.c.b16 %v6181, %v6180
        %v6239 = vpack.c.b16 %v6183, %v6182
        %v6240 = vpack.c.b16 %v6185, %v6184
        %v6241 = vpack.c.b16 %v6187, %v6186
        %v6242 = vpack.c.b16 %v6189, %v6188
        %v6243 = vpack.c.b16 %v6191, %v6190
        %v6244 = vpack.c.b16 %v6193, %v6192
        %v6245 = vpack.c.b16 %v6195, %v6194
        %v6246 = vpack.c.b16 %v6197, %v6196
        %v6247 = vpack.c.b16 %v6199, %v6198
        %v6248 = vpack.c.b16 %v6201, %v6200
        %v6249 = vpack.c.b16 %v6203, %v6202
        %v6250 = vpack.c.b16 %v6205, %v6204
        %v6251 = vpack.c.b16 %v6207, %v6206
        %v6252 = vpack.c.b16 %v6209, %v6208
        %v6253 = vpack.c.b16 %v6211, %v6210
        %v6254 = vpack.c.b16 %v6213, %v6212
        %v6255 = vpack.c.b16 %v6215, %v6214
        %v6256 = vpack.c.b16 %v6217, %v6216
        %v6257 = vpack.c.b16 %v6219, %v6218
        %v6258 = vpack.c.b16 %v6221, %v6220
        %v6259 = vpack.c.b16 %v6223, %v6222
        %v6260 = vpack.c.b16 %v6225, %v6224
        %v6261 = vpack.c.b16 %v6227, %v6226
        %v6262 = vpack.c.b16 %v6229, %v6228
        %v6263 = vpack.c.b16 %v6231, %v6230
        %v6265 = vsel %vm340, %v6232, 0
        %v6268 = vsel %vm340, %v6233, 0
        %v6271 = vsel %vm340, %v6234, 0
        %v6274 = vsel %vm340, %v6235, 0
        %v6277 = vsel %vm340, %v6236, 0
        %v6280 = vsel %vm340, %v6237, 0
        %v6283 = vsel %vm340, %v6238, 0
        %v6286 = vsel %vm340, %v6239, 0
        %v6289 = vsel %vm340, %v6240, 0
        %v6292 = vsel %vm340, %v6241, 0
        %v6295 = vsel %vm340, %v6242, 0
        %v6298 = vsel %vm340, %v6243, 0
        %v6301 = vsel %vm340, %v6244, 0
        %v6304 = vsel %vm340, %v6245, 0
        %v6307 = vsel %vm340, %v6246, 0
        %v6310 = vsel %vm340, %v6247, 0
        %v6313 = vsel %vm340, %v6248, 0
        %v6316 = vsel %vm340, %v6249, 0
        %v6319 = vsel %vm340, %v6250, 0
        %v6322 = vsel %vm340, %v6251, 0
        %v6325 = vsel %vm340, %v6252, 0
        %v6328 = vsel %vm340, %v6253, 0
        %v6331 = vsel %vm340, %v6254, 0
        %v6334 = vsel %vm340, %v6255, 0
        %v6337 = vsel %vm340, %v6256, 0
        %v6340 = vsel %vm340, %v6257, 0
        %v6343 = vsel %vm340, %v6258, 0
        %v6346 = vsel %vm340, %v6259, 0
        %v6349 = vsel %vm340, %v6260, 0
        %v6352 = vsel %vm340, %v6261, 0
        %v6355 = vsel %vm340, %v6262, 0
        %v6358 = vsel %vm340, %v6263, 0
        %v6361 = vsel %vm2453, %v6103, 0
        %6363 = vmatprep.subr.bf16.mxu0 0
        %6364 = vmatpush1.bf16.msra.mxu0 0
        %6365 = vmatprep.subr.bf16.mxu0 0
        %6366 = vmatpush1.bf16.msra.mxu0 0
        %6367 = vmatprep.subr.bf16.mxu0 0
        %6368 = vmatpush1.bf16.msra.mxu0 0
        %6369 = vmatprep.subr.bf16.mxu0 0
        %6370 = vmatpush1.bf16.msra.mxu0 0
        %6371 = vmatprep.subr.bf16.mxu0 0
        %6372 = vmatpush1.bf16.msra.mxu0 0
        %6373 = vmatprep.subr.bf16.mxu0 0
        %6374 = vmatpush1.bf16.msra.mxu0 0
        %6375 = vmatprep.subr.bf16.mxu0 0
        %6376 = vmatpush1.bf16.msra.mxu0 0
        %6377 = vmatprep.subr.bf16.mxu0 0
        %6378 = vmatpush1.bf16.msra.mxu0 %v6361
        %6379 = vmatprep.subr.bf16.mxu0 0
        %6380 = vmatpush2.bf16.msra.mxu0 0
        %6381 = vmatprep.subr.bf16.mxu0 0
        %6382 = vmatpush2.bf16.msra.mxu0 0
        %6383 = vmatprep.subr.bf16.mxu0 0
        %6384 = vmatpush2.bf16.msra.mxu0 0
        %6385 = vmatprep.subr.bf16.mxu0 0
        %6386 = vmatpush2.bf16.msra.mxu0 0
        %6387 = vmatprep.subr.bf16.mxu0 0
        %6388 = vmatpush2.bf16.msra.mxu0 0
        %6389 = vmatprep.subr.bf16.mxu0 0
        %6390 = vmatpush2.bf16.msra.mxu0 0
        %6391 = vmatprep.subr.bf16.mxu0 0
        %6392 = vmatpush2.bf16.msra.mxu0 0
        %6393 = vmatprep.subr.bf16.mxu0 0
        %6394 = vmatpush2.bf16.msra.mxu0 0
        %6395 = vmatprep.mubr.bf16.mxu0 0
        %6396 = vmatmul.mubr.bf16.gmra.mxu0 %v6265
        %v6397 = vpop.f32.mrf.mxu0
        %v6398 = vadd.f32 0.0, %v6397
        %v6399 = vpop.f32.mrf.mxu0
        %v6400 = vpop.f32.mrf.mxu0
        %v6401 = vadd.f32 0.0, %v6400
        %v6402 = vpop.f32.mrf.mxu0
        %6403 = vmatprep.mubr.bf16.mxu0 0
        %6404 = vmatmul.mubr.bf16.gmra.mxu0 %v6268
        %v6405 = vpop.f32.mrf.mxu0
        %v6406 = vadd.f32 0.0, %v6405
        %v6407 = vpop.f32.mrf.mxu0
        %v6408 = vpop.f32.mrf.mxu0
        %v6409 = vadd.f32 0.0, %v6408
        %v6410 = vpop.f32.mrf.mxu0
        %6411 = vmatprep.mubr.bf16.mxu0 0
        %6412 = vmatmul.mubr.bf16.gmra.mxu0 %v6271
        %v6413 = vpop.f32.mrf.mxu0
        %v6414 = vadd.f32 0.0, %v6413
        %v6415 = vpop.f32.mrf.mxu0
        %v6416 = vpop.f32.mrf.mxu0
        %v6417 = vadd.f32 0.0, %v6416
        %v6418 = vpop.f32.mrf.mxu0
        %6419 = vmatprep.mubr.bf16.mxu0 0
        %6420 = vmatmul.mubr.bf16.gmra.mxu0 %v6274
        %v6421 = vpop.f32.mrf.mxu0
        %v6422 = vadd.f32 0.0, %v6421
        %v6423 = vpop.f32.mrf.mxu0
        %v6424 = vpop.f32.mrf.mxu0
        %v6425 = vadd.f32 0.0, %v6424
        %v6426 = vpop.f32.mrf.mxu0
        %6427 = vmatprep.mubr.bf16.mxu0 0
        %6428 = vmatmul.mubr.bf16.gmra.mxu0 %v6277
        %v6429 = vpop.f32.mrf.mxu0
        %v6430 = vadd.f32 0.0, %v6429
        %v6431 = vpop.f32.mrf.mxu0
        %v6432 = vpop.f32.mrf.mxu0
        %v6433 = vadd.f32 0.0, %v6432
        %v6434 = vpop.f32.mrf.mxu0
        %6435 = vmatprep.mubr.bf16.mxu0 0
        %6436 = vmatmul.mubr.bf16.gmra.mxu0 %v6280
        %v6437 = vpop.f32.mrf.mxu0
        %v6438 = vadd.f32 0.0, %v6437
        %v6439 = vpop.f32.mrf.mxu0
        %v6440 = vpop.f32.mrf.mxu0
        %v6441 = vadd.f32 0.0, %v6440
        %v6442 = vpop.f32.mrf.mxu0
        %6443 = vmatprep.mubr.bf16.mxu0 0
        %6444 = vmatmul.mubr.bf16.gmra.mxu0 %v6283
        %v6445 = vpop.f32.mrf.mxu0
        %v6446 = vadd.f32 0.0, %v6445
        %v6447 = vpop.f32.mrf.mxu0
        %v6448 = vpop.f32.mrf.mxu0
        %v6449 = vadd.f32 0.0, %v6448
        %v6450 = vpop.f32.mrf.mxu0
        %6451 = vmatprep.mubr.bf16.mxu0 0
        %6452 = vmatmul.mubr.bf16.gmra.mxu0 %v6286
        %v6453 = vpop.f32.mrf.mxu0
        %v6454 = vadd.f32 0.0, %v6453
        %v6455 = vpop.f32.mrf.mxu0
        %v6456 = vpop.f32.mrf.mxu0
        %v6457 = vadd.f32 0.0, %v6456
        %v6458 = vpop.f32.mrf.mxu0
        %6459 = vmatprep.mubr.bf16.mxu0 0
        %6460 = vmatmul.mubr.bf16.gmra.mxu0 %v6289
        %v6461 = vpop.f32.mrf.mxu0
        %v6462 = vadd.f32 0.0, %v6461
        %v6463 = vpop.f32.mrf.mxu0
        %v6464 = vpop.f32.mrf.mxu0
        %v6465 = vadd.f32 0.0, %v6464
        %v6466 = vpop.f32.mrf.mxu0
        %6467 = vmatprep.mubr.bf16.mxu0 0
        %6468 = vmatmul.mubr.bf16.gmra.mxu0 %v6292
        %v6469 = vpop.f32.mrf.mxu0
        %v6470 = vadd.f32 0.0, %v6469
        %v6471 = vpop.f32.mrf.mxu0
        %v6472 = vpop.f32.mrf.mxu0
        %v6473 = vadd.f32 0.0, %v6472
        %v6474 = vpop.f32.mrf.mxu0
        %6475 = vmatprep.mubr.bf16.mxu0 0
        %6476 = vmatmul.mubr.bf16.gmra.mxu0 %v6295
        %v6477 = vpop.f32.mrf.mxu0
        %v6478 = vadd.f32 0.0, %v6477
        %v6479 = vpop.f32.mrf.mxu0
        %v6480 = vpop.f32.mrf.mxu0
        %v6481 = vadd.f32 0.0, %v6480
        %v6482 = vpop.f32.mrf.mxu0
        %6483 = vmatprep.mubr.bf16.mxu0 0
        %6484 = vmatmul.mubr.bf16.gmra.mxu0 %v6298
        %v6485 = vpop.f32.mrf.mxu0
        %v6486 = vadd.f32 0.0, %v6485
        %v6487 = vpop.f32.mrf.mxu0
        %v6488 = vpop.f32.mrf.mxu0
        %v6489 = vadd.f32 0.0, %v6488
        %v6490 = vpop.f32.mrf.mxu0
        %6491 = vmatprep.mubr.bf16.mxu0 0
        %6492 = vmatmul.mubr.bf16.gmra.mxu0 %v6301
        %v6493 = vpop.f32.mrf.mxu0
        %v6494 = vadd.f32 0.0, %v6493
        %v6495 = vpop.f32.mrf.mxu0
        %v6496 = vpop.f32.mrf.mxu0
        %v6497 = vadd.f32 0.0, %v6496
        %v6498 = vpop.f32.mrf.mxu0
        %6499 = vmatprep.mubr.bf16.mxu0 0
        %6500 = vmatmul.mubr.bf16.gmra.mxu0 %v6304
        %v6501 = vpop.f32.mrf.mxu0
        %v6502 = vadd.f32 0.0, %v6501
        %v6503 = vpop.f32.mrf.mxu0
        %v6504 = vpop.f32.mrf.mxu0
        %v6505 = vadd.f32 0.0, %v6504
        %v6506 = vpop.f32.mrf.mxu0
        %6507 = vmatprep.mubr.bf16.mxu0 0
        %6508 = vmatmul.mubr.bf16.gmra.mxu0 %v6307
        %v6509 = vpop.f32.mrf.mxu0
        %v6510 = vadd.f32 0.0, %v6509
        %v6511 = vpop.f32.mrf.mxu0
        %v6512 = vpop.f32.mrf.mxu0
        %v6513 = vadd.f32 0.0, %v6512
        %v6514 = vpop.f32.mrf.mxu0
        %6515 = vmatprep.mubr.bf16.mxu0 0
        %6516 = vmatmul.mubr.bf16.gmra.mxu0 %v6310
        %v6517 = vpop.f32.mrf.mxu0
        %v6518 = vadd.f32 0.0, %v6517
        %v6519 = vpop.f32.mrf.mxu0
        %v6520 = vpop.f32.mrf.mxu0
        %v6521 = vadd.f32 0.0, %v6520
        %v6522 = vpop.f32.mrf.mxu0
        %6523 = vmatprep.mubr.bf16.mxu0 0
        %6524 = vmatmul.mubr.bf16.gmra.mxu0 %v6313
        %v6525 = vpop.f32.mrf.mxu0
        %v6526 = vadd.f32 0.0, %v6525
        %v6527 = vpop.f32.mrf.mxu0
        %v6528 = vpop.f32.mrf.mxu0
        %v6529 = vadd.f32 0.0, %v6528
        %v6530 = vpop.f32.mrf.mxu0
        %6531 = vmatprep.mubr.bf16.mxu0 0
        %6532 = vmatmul.mubr.bf16.gmra.mxu0 %v6316
        %v6533 = vpop.f32.mrf.mxu0
        %v6534 = vadd.f32 0.0, %v6533
        %v6535 = vpop.f32.mrf.mxu0
        %v6536 = vpop.f32.mrf.mxu0
        %v6537 = vadd.f32 0.0, %v6536
        %v6538 = vpop.f32.mrf.mxu0
        %6539 = vmatprep.mubr.bf16.mxu0 0
        %6540 = vmatmul.mubr.bf16.gmra.mxu0 %v6319
        %v6541 = vpop.f32.mrf.mxu0
        %v6542 = vadd.f32 0.0, %v6541
        %v6543 = vpop.f32.mrf.mxu0
        %v6544 = vpop.f32.mrf.mxu0
        %v6545 = vadd.f32 0.0, %v6544
        %v6546 = vpop.f32.mrf.mxu0
        %6547 = vmatprep.mubr.bf16.mxu0 0
        %6548 = vmatmul.mubr.bf16.gmra.mxu0 %v6322
        %v6549 = vpop.f32.mrf.mxu0
        %v6550 = vadd.f32 0.0, %v6549
        %v6551 = vpop.f32.mrf.mxu0
        %v6552 = vpop.f32.mrf.mxu0
        %v6553 = vadd.f32 0.0, %v6552
        %v6554 = vpop.f32.mrf.mxu0
        %6555 = vmatprep.mubr.bf16.mxu0 0
        %6556 = vmatmul.mubr.bf16.gmra.mxu0 %v6325
        %v6557 = vpop.f32.mrf.mxu0
        %v6558 = vadd.f32 0.0, %v6557
        %v6559 = vpop.f32.mrf.mxu0
        %v6560 = vpop.f32.mrf.mxu0
        %v6561 = vadd.f32 0.0, %v6560
        %v6562 = vpop.f32.mrf.mxu0
        %6563 = vmatprep.mubr.bf16.mxu0 0
        %6564 = vmatmul.mubr.bf16.gmra.mxu0 %v6328
        %v6565 = vpop.f32.mrf.mxu0
        %v6566 = vadd.f32 0.0, %v6565
        %v6567 = vpop.f32.mrf.mxu0
        %v6568 = vpop.f32.mrf.mxu0
        %v6569 = vadd.f32 0.0, %v6568
        %v6570 = vpop.f32.mrf.mxu0
        %6571 = vmatprep.mubr.bf16.mxu0 0
        %6572 = vmatmul.mubr.bf16.gmra.mxu0 %v6331
        %v6573 = vpop.f32.mrf.mxu0
        %v6574 = vadd.f32 0.0, %v6573
        %v6575 = vpop.f32.mrf.mxu0
        %v6576 = vpop.f32.mrf.mxu0
        %v6577 = vadd.f32 0.0, %v6576
        %v6578 = vpop.f32.mrf.mxu0
        %6579 = vmatprep.mubr.bf16.mxu0 0
        %6580 = vmatmul.mubr.bf16.gmra.mxu0 %v6334
        %v6581 = vpop.f32.mrf.mxu0
        %v6582 = vadd.f32 0.0, %v6581
        %v6583 = vpop.f32.mrf.mxu0
        %v6584 = vpop.f32.mrf.mxu0
        %v6585 = vadd.f32 0.0, %v6584
        %v6586 = vpop.f32.mrf.mxu0
        %6587 = vmatprep.mubr.bf16.mxu0 0
        %6588 = vmatmul.mubr.bf16.gmra.mxu0 %v6337
        %v6589 = vpop.f32.mrf.mxu0
        %v6590 = vadd.f32 0.0, %v6589
        %v6591 = vpop.f32.mrf.mxu0
        %v6592 = vpop.f32.mrf.mxu0
        %v6593 = vadd.f32 0.0, %v6592
        %v6594 = vpop.f32.mrf.mxu0
        %6595 = vmatprep.mubr.bf16.mxu0 0
        %6596 = vmatmul.mubr.bf16.gmra.mxu0 %v6340
        %v6597 = vpop.f32.mrf.mxu0
        %v6598 = vadd.f32 0.0, %v6597
        %v6599 = vpop.f32.mrf.mxu0
        %v6600 = vpop.f32.mrf.mxu0
        %v6601 = vadd.f32 0.0, %v6600
        %v6602 = vpop.f32.mrf.mxu0
        %6603 = vmatprep.mubr.bf16.mxu0 0
        %6604 = vmatmul.mubr.bf16.gmra.mxu0 %v6343
        %v6605 = vpop.f32.mrf.mxu0
        %v6606 = vadd.f32 0.0, %v6605
        %v6607 = vpop.f32.mrf.mxu0
        %v6608 = vpop.f32.mrf.mxu0
        %v6609 = vadd.f32 0.0, %v6608
        %v6610 = vpop.f32.mrf.mxu0
        %6611 = vmatprep.mubr.bf16.mxu0 0
        %6612 = vmatmul.mubr.bf16.gmra.mxu0 %v6346
        %v6613 = vpop.f32.mrf.mxu0
        %v6614 = vadd.f32 0.0, %v6613
        %v6615 = vpop.f32.mrf.mxu0
        %v6616 = vpop.f32.mrf.mxu0
        %v6617 = vadd.f32 0.0, %v6616
        %v6618 = vpop.f32.mrf.mxu0
        %6619 = vmatprep.mubr.bf16.mxu0 0
        %6620 = vmatmul.mubr.bf16.gmra.mxu0 %v6349
        %v6621 = vpop.f32.mrf.mxu0
        %v6622 = vadd.f32 0.0, %v6621
        %v6623 = vpop.f32.mrf.mxu0
        %v6624 = vpop.f32.mrf.mxu0
        %v6625 = vadd.f32 0.0, %v6624
        %v6626 = vpop.f32.mrf.mxu0
        %6627 = vmatprep.mubr.bf16.mxu0 0
        %6628 = vmatmul.mubr.bf16.gmra.mxu0 %v6352
        %v6629 = vpop.f32.mrf.mxu0
        %v6630 = vadd.f32 0.0, %v6629
        %v6631 = vpop.f32.mrf.mxu0
        %v6632 = vpop.f32.mrf.mxu0
        %v6633 = vadd.f32 0.0, %v6632
        %v6634 = vpop.f32.mrf.mxu0
        %6635 = vmatprep.mubr.bf16.mxu0 0
        %6636 = vmatmul.mubr.bf16.gmra.mxu0 %v6355
        %v6637 = vpop.f32.mrf.mxu0
        %v6638 = vadd.f32 0.0, %v6637
        %v6639 = vpop.f32.mrf.mxu0
        %v6640 = vpop.f32.mrf.mxu0
        %v6641 = vadd.f32 0.0, %v6640
        %v6642 = vpop.f32.mrf.mxu0
        %6643 = vmatprep.mubr.bf16.mxu0 0
        %6644 = vmatmul.mubr.bf16.gmra.mxu0 %v6358
        %v6645 = vpop.f32.mrf.mxu0
        %v6646 = vadd.f32 0.0, %v6645
        %v6647 = vpop.f32.mrf.mxu0
        %v6648 = vpop.f32.mrf.mxu0
        %v6649 = vadd.f32 0.0, %v6648
        %v6650 = vpop.f32.mrf.mxu0
        %6651 = vdwg.mxu0
        %v6652 = vld [vmem:[#allocation4] sm:$0xff]
        %v6653 = vld [vmem:[#allocation4 + $0x8] sm:$0xff]
        %v6654 = vld [vmem:[#allocation4 + $0x10] sm:$0xff]
        %v6655 = vld [vmem:[#allocation4 + $0x18] sm:$0xff]
        %v6656 = vld [vmem:[#allocation4 + $0x20] sm:$0xff]
        %v6657 = vld [vmem:[#allocation4 + $0x28] sm:$0xff]
        %v6658 = vld [vmem:[#allocation4 + $0x30] sm:$0xff]
        %v6659 = vld [vmem:[#allocation4 + $0x38] sm:$0xff]
        %v6660 = vld [vmem:[#allocation4 + $0x40] sm:$0xff]
        %v6661 = vld [vmem:[#allocation4 + $0x48] sm:$0xff]
        %v6662 = vld [vmem:[#allocation4 + $0x50] sm:$0xff]
        %v6663 = vld [vmem:[#allocation4 + $0x58] sm:$0xff]
        %v6664 = vld [vmem:[#allocation4 + $0x60] sm:$0xff]
        %v6665 = vld [vmem:[#allocation4 + $0x68] sm:$0xff]
        %v6666 = vld [vmem:[#allocation4 + $0x70] sm:$0xff]
        %v6667 = vld [vmem:[#allocation4 + $0x78] sm:$0xff]
        %v6668 = vld [vmem:[#allocation4 + $0x80] sm:$0xff]
        %v6669 = vld [vmem:[#allocation4 + $0x88] sm:$0xff]
        %v6670 = vld [vmem:[#allocation4 + $0x90] sm:$0xff]
        %v6671 = vld [vmem:[#allocation4 + $0x98] sm:$0xff]
        %v6672 = vld [vmem:[#allocation4 + $0xa0] sm:$0xff]
        %v6673 = vld [vmem:[#allocation4 + $0xa8] sm:$0xff]
        %v6674 = vld [vmem:[#allocation4 + $0xb0] sm:$0xff]
        %v6675 = vld [vmem:[#allocation4 + $0xb8] sm:$0xff]
        %v6676 = vld [vmem:[#allocation4 + $0xc0] sm:$0xff]
        %v6677 = vld [vmem:[#allocation4 + $0xc8] sm:$0xff]
        %v6678 = vld [vmem:[#allocation4 + $0xd0] sm:$0xff]
        %v6679 = vld [vmem:[#allocation4 + $0xd8] sm:$0xff]
        %v6680 = vld [vmem:[#allocation4 + $0xe0] sm:$0xff]
        %v6681 = vld [vmem:[#allocation4 + $0xe8] sm:$0xff]
        %v6682 = vld [vmem:[#allocation4 + $0xf0] sm:$0xff]
        %v6683 = vld [vmem:[#allocation4 + $0xf8] sm:$0xff]
        %v6684 = vld [vmem:[#allocation4 + $0x100] sm:$0xff]
        %v6685 = vld [vmem:[#allocation4 + $0x108] sm:$0xff]
        %v6686 = vld [vmem:[#allocation4 + $0x110] sm:$0xff]
        %v6687 = vld [vmem:[#allocation4 + $0x118] sm:$0xff]
        %v6688 = vld [vmem:[#allocation4 + $0x120] sm:$0xff]
        %v6689 = vld [vmem:[#allocation4 + $0x128] sm:$0xff]
        %v6690 = vld [vmem:[#allocation4 + $0x130] sm:$0xff]
        %v6691 = vld [vmem:[#allocation4 + $0x138] sm:$0xff]
        %v6692 = vld [vmem:[#allocation4 + $0x140] sm:$0xff]
        %v6693 = vld [vmem:[#allocation4 + $0x148] sm:$0xff]
        %v6694 = vld [vmem:[#allocation4 + $0x150] sm:$0xff]
        %v6695 = vld [vmem:[#allocation4 + $0x158] sm:$0xff]
        %v6696 = vld [vmem:[#allocation4 + $0x160] sm:$0xff]
        %v6697 = vld [vmem:[#allocation4 + $0x168] sm:$0xff]
        %v6698 = vld [vmem:[#allocation4 + $0x170] sm:$0xff]
        %v6699 = vld [vmem:[#allocation4 + $0x178] sm:$0xff]
        %v6700 = vld [vmem:[#allocation4 + $0x180] sm:$0xff]
        %v6701 = vld [vmem:[#allocation4 + $0x188] sm:$0xff]
        %v6702 = vld [vmem:[#allocation4 + $0x190] sm:$0xff]
        %v6703 = vld [vmem:[#allocation4 + $0x198] sm:$0xff]
        %v6704 = vld [vmem:[#allocation4 + $0x1a0] sm:$0xff]
        %v6705 = vld [vmem:[#allocation4 + $0x1a8] sm:$0xff]
        %v6706 = vld [vmem:[#allocation4 + $0x1b0] sm:$0xff]
        %v6707 = vld [vmem:[#allocation4 + $0x1b8] sm:$0xff]
        %v6708 = vld [vmem:[#allocation4 + $0x1c0] sm:$0xff]
        %v6709 = vld [vmem:[#allocation4 + $0x1c8] sm:$0xff]
        %v6710 = vld [vmem:[#allocation4 + $0x1d0] sm:$0xff]
        %v6711 = vld [vmem:[#allocation4 + $0x1d8] sm:$0xff]
        %v6712 = vld [vmem:[#allocation4 + $0x1e0] sm:$0xff]
        %v6713 = vld [vmem:[#allocation4 + $0x1e8] sm:$0xff]
        %v6714 = vld [vmem:[#allocation4 + $0x1f0] sm:$0xff]
        %v6715 = vld [vmem:[#allocation4 + $0x1f8] sm:$0xff]
        %v6716 = vadd.f32 %v6652, %v6398
        %v6717 = vadd.f32 %v6653, %v6401
        %v6718 = vadd.f32 %v6654, %v6406
        %v6719 = vadd.f32 %v6655, %v6409
        %v6720 = vadd.f32 %v6656, %v6414
        %v6721 = vadd.f32 %v6657, %v6417
        %v6722 = vadd.f32 %v6658, %v6422
        %v6723 = vadd.f32 %v6659, %v6425
        %v6724 = vadd.f32 %v6660, %v6430
        %v6725 = vadd.f32 %v6661, %v6433
        %v6726 = vadd.f32 %v6662, %v6438
        %v6727 = vadd.f32 %v6663, %v6441
        %v6728 = vadd.f32 %v6664, %v6446
        %v6729 = vadd.f32 %v6665, %v6449
        %v6730 = vadd.f32 %v6666, %v6454
        %v6731 = vadd.f32 %v6667, %v6457
        %v6732 = vadd.f32 %v6668, %v6462
        %v6733 = vadd.f32 %v6669, %v6465
        %v6734 = vadd.f32 %v6670, %v6470
        %v6735 = vadd.f32 %v6671, %v6473
        %v6736 = vadd.f32 %v6672, %v6478
        %v6737 = vadd.f32 %v6673, %v6481
        %v6738 = vadd.f32 %v6674, %v6486
        %v6739 = vadd.f32 %v6675, %v6489
        %v6740 = vadd.f32 %v6676, %v6494
        %v6741 = vadd.f32 %v6677, %v6497
        %v6742 = vadd.f32 %v6678, %v6502
        %v6743 = vadd.f32 %v6679, %v6505
        %v6744 = vadd.f32 %v6680, %v6510
        %v6745 = vadd.f32 %v6681, %v6513
        %v6746 = vadd.f32 %v6682, %v6518
        %v6747 = vadd.f32 %v6683, %v6521
        %v6748 = vadd.f32 %v6684, %v6526
        %v6749 = vadd.f32 %v6685, %v6529
        %v6750 = vadd.f32 %v6686, %v6534
        %v6751 = vadd.f32 %v6687, %v6537
        %v6752 = vadd.f32 %v6688, %v6542
        %v6753 = vadd.f32 %v6689, %v6545
        %v6754 = vadd.f32 %v6690, %v6550
        %v6755 = vadd.f32 %v6691, %v6553
        %v6756 = vadd.f32 %v6692, %v6558
        %v6757 = vadd.f32 %v6693, %v6561
        %v6758 = vadd.f32 %v6694, %v6566
        %v6759 = vadd.f32 %v6695, %v6569
        %v6760 = vadd.f32 %v6696, %v6574
        %v6761 = vadd.f32 %v6697, %v6577
        %v6762 = vadd.f32 %v6698, %v6582
        %v6763 = vadd.f32 %v6699, %v6585
        %v6764 = vadd.f32 %v6700, %v6590
        %v6765 = vadd.f32 %v6701, %v6593
        %v6766 = vadd.f32 %v6702, %v6598
        %v6767 = vadd.f32 %v6703, %v6601
        %v6768 = vadd.f32 %v6704, %v6606
        %v6769 = vadd.f32 %v6705, %v6609
        %v6770 = vadd.f32 %v6706, %v6614
        %v6771 = vadd.f32 %v6707, %v6617
        %v6772 = vadd.f32 %v6708, %v6622
        %v6773 = vadd.f32 %v6709, %v6625
        %v6774 = vadd.f32 %v6710, %v6630
        %v6775 = vadd.f32 %v6711, %v6633
        %v6776 = vadd.f32 %v6712, %v6638
        %v6777 = vadd.f32 %v6713, %v6641
        %v6778 = vadd.f32 %v6714, %v6646
        %v6779 = vadd.f32 %v6715, %v6649
        %6780 = vst.msk [vmem:[#allocation4] sm:$0xff] %vm2746, %v6716
        %6781 = vst.msk [vmem:[#allocation4 + $0x8] sm:$0xff] %vm2746, %v6717
        %6782 = vst.msk [vmem:[#allocation4 + $0x10] sm:$0xff] %vm2746, %v6718
        %6783 = vst.msk [vmem:[#allocation4 + $0x18] sm:$0xff] %vm2746, %v6719
        %6784 = vst.msk [vmem:[#allocation4 + $0x20] sm:$0xff] %vm2746, %v6720
        %6785 = vst.msk [vmem:[#allocation4 + $0x28] sm:$0xff] %vm2746, %v6721
        %6786 = vst.msk [vmem:[#allocation4 + $0x30] sm:$0xff] %vm2746, %v6722
        %6787 = vst.msk [vmem:[#allocation4 + $0x38] sm:$0xff] %vm2746, %v6723
        %6788 = vst.msk [vmem:[#allocation4 + $0x40] sm:$0xff] %vm2746, %v6724
        %6789 = vst.msk [vmem:[#allocation4 + $0x48] sm:$0xff] %vm2746, %v6725
        %6790 = vst.msk [vmem:[#allocation4 + $0x50] sm:$0xff] %vm2746, %v6726
        %6791 = vst.msk [vmem:[#allocation4 + $0x58] sm:$0xff] %vm2746, %v6727
        %6792 = vst.msk [vmem:[#allocation4 + $0x60] sm:$0xff] %vm2746, %v6728
        %6793 = vst.msk [vmem:[#allocation4 + $0x68] sm:$0xff] %vm2746, %v6729
        %6794 = vst.msk [vmem:[#allocation4 + $0x70] sm:$0xff] %vm2746, %v6730
        %6795 = vst.msk [vmem:[#allocation4 + $0x78] sm:$0xff] %vm2746, %v6731
        %6796 = vst.msk [vmem:[#allocation4 + $0x80] sm:$0xff] %vm2746, %v6732
        %6797 = vst.msk [vmem:[#allocation4 + $0x88] sm:$0xff] %vm2746, %v6733
        %6798 = vst.msk [vmem:[#allocation4 + $0x90] sm:$0xff] %vm2746, %v6734
        %6799 = vst.msk [vmem:[#allocation4 + $0x98] sm:$0xff] %vm2746, %v6735
        %6800 = vst.msk [vmem:[#allocation4 + $0xa0] sm:$0xff] %vm2746, %v6736
        %6801 = vst.msk [vmem:[#allocation4 + $0xa8] sm:$0xff] %vm2746, %v6737
        %6802 = vst.msk [vmem:[#allocation4 + $0xb0] sm:$0xff] %vm2746, %v6738
        %6803 = vst.msk [vmem:[#allocation4 + $0xb8] sm:$0xff] %vm2746, %v6739
        %6804 = vst.msk [vmem:[#allocation4 + $0xc0] sm:$0xff] %vm2746, %v6740
        %6805 = vst.msk [vmem:[#allocation4 + $0xc8] sm:$0xff] %vm2746, %v6741
        %6806 = vst.msk [vmem:[#allocation4 + $0xd0] sm:$0xff] %vm2746, %v6742
        %6807 = vst.msk [vmem:[#allocation4 + $0xd8] sm:$0xff] %vm2746, %v6743
        %6808 = vst.msk [vmem:[#allocation4 + $0xe0] sm:$0xff] %vm2746, %v6744
        %6809 = vst.msk [vmem:[#allocation4 + $0xe8] sm:$0xff] %vm2746, %v6745
        %6810 = vst.msk [vmem:[#allocation4 + $0xf0] sm:$0xff] %vm2746, %v6746
        %6811 = vst.msk [vmem:[#allocation4 + $0xf8] sm:$0xff] %vm2746, %v6747
        %6812 = vst.msk [vmem:[#allocation4 + $0x100] sm:$0xff] %vm2746, %v6748
        %6813 = vst.msk [vmem:[#allocation4 + $0x108] sm:$0xff] %vm2746, %v6749
        %6814 = vst.msk [vmem:[#allocation4 + $0x110] sm:$0xff] %vm2746, %v6750
        %6815 = vst.msk [vmem:[#allocation4 + $0x118] sm:$0xff] %vm2746, %v6751
        %6816 = vst.msk [vmem:[#allocation4 + $0x120] sm:$0xff] %vm2746, %v6752
        %6817 = vst.msk [vmem:[#allocation4 + $0x128] sm:$0xff] %vm2746, %v6753
        %6818 = vst.msk [vmem:[#allocation4 + $0x130] sm:$0xff] %vm2746, %v6754
        %6819 = vst.msk [vmem:[#allocation4 + $0x138] sm:$0xff] %vm2746, %v6755
        %6820 = vst.msk [vmem:[#allocation4 + $0x140] sm:$0xff] %vm2746, %v6756
        %6821 = vst.msk [vmem:[#allocation4 + $0x148] sm:$0xff] %vm2746, %v6757
        %6822 = vst.msk [vmem:[#allocation4 + $0x150] sm:$0xff] %vm2746, %v6758
        %6823 = vst.msk [vmem:[#allocation4 + $0x158] sm:$0xff] %vm2746, %v6759
        %6824 = vst.msk [vmem:[#allocation4 + $0x160] sm:$0xff] %vm2746, %v6760
        %6825 = vst.msk [vmem:[#allocation4 + $0x168] sm:$0xff] %vm2746, %v6761
        %6826 = vst.msk [vmem:[#allocation4 + $0x170] sm:$0xff] %vm2746, %v6762
        %6827 = vst.msk [vmem:[#allocation4 + $0x178] sm:$0xff] %vm2746, %v6763
        %6828 = vst.msk [vmem:[#allocation4 + $0x180] sm:$0xff] %vm2746, %v6764
        %6829 = vst.msk [vmem:[#allocation4 + $0x188] sm:$0xff] %vm2746, %v6765
        %6830 = vst.msk [vmem:[#allocation4 + $0x190] sm:$0xff] %vm2746, %v6766
        %6831 = vst.msk [vmem:[#allocation4 + $0x198] sm:$0xff] %vm2746, %v6767
        %6832 = vst.msk [vmem:[#allocation4 + $0x1a0] sm:$0xff] %vm2746, %v6768
        %6833 = vst.msk [vmem:[#allocation4 + $0x1a8] sm:$0xff] %vm2746, %v6769
        %6834 = vst.msk [vmem:[#allocation4 + $0x1b0] sm:$0xff] %vm2746, %v6770
        %6835 = vst.msk [vmem:[#allocation4 + $0x1b8] sm:$0xff] %vm2746, %v6771
        %6836 = vst.msk [vmem:[#allocation4 + $0x1c0] sm:$0xff] %vm2746, %v6772
        %6837 = vst.msk [vmem:[#allocation4 + $0x1c8] sm:$0xff] %vm2746, %v6773
        %6838 = vst.msk [vmem:[#allocation4 + $0x1d0] sm:$0xff] %vm2746, %v6774
        %6839 = vst.msk [vmem:[#allocation4 + $0x1d8] sm:$0xff] %vm2746, %v6775
        %6840 = vst.msk [vmem:[#allocation4 + $0x1e0] sm:$0xff] %vm2746, %v6776
        %6841 = vst.msk [vmem:[#allocation4 + $0x1e8] sm:$0xff] %vm2746, %v6777
        %6842 = vst.msk [vmem:[#allocation4 + $0x1f0] sm:$0xff] %vm2746, %v6778
        %6843 = vst.msk [vmem:[#allocation4 + $0x1f8] sm:$0xff] %vm2746, %v6779
        %s6844 = scalar_lea.vmem [#allocation3], 16
        %v6845 = vld [vmem:[%s6844] sm:$0xf]
        %v6846 = vld [vmem:[%s6844 + $0x4] sm:$0xf]
        %v6847 = vld [vmem:[%s6844 + $0x8] sm:$0xf]
        %v6848 = vld [vmem:[%s6844 + $0xc] sm:$0xf]
        %v6849 = vld [vmem:[%s6844 + $0x10] sm:$0xf]
        %v6850 = vld [vmem:[%s6844 + $0x14] sm:$0xf]
        %v6851 = vld [vmem:[%s6844 + $0x18] sm:$0xf]
        %v6852 = vld [vmem:[%s6844 + $0x1c] sm:$0xf]
        %v6853 = vld [vmem:[%s6844 + $0x20] sm:$0xf]
        %v6854 = vld [vmem:[%s6844 + $0x24] sm:$0xf]
        %v6855 = vld [vmem:[%s6844 + $0x28] sm:$0xf]
        %v6856 = vld [vmem:[%s6844 + $0x2c] sm:$0xf]
        %v6857 = vld [vmem:[%s6844 + $0x30] sm:$0xf]
        %v6858 = vld [vmem:[%s6844 + $0x34] sm:$0xf]
        %v6859 = vld [vmem:[%s6844 + $0x38] sm:$0xf]
        %v6860 = vld [vmem:[%s6844 + $0x3c] sm:$0xf]
        %v6861 = vld [vmem:[%s6844 + $0x40] sm:$0xf]
        %v6862 = vld [vmem:[%s6844 + $0x44] sm:$0xf]
        %v6863 = vld [vmem:[%s6844 + $0x48] sm:$0xf]
        %v6864 = vld [vmem:[%s6844 + $0x4c] sm:$0xf]
        %v6865 = vld [vmem:[%s6844 + $0x50] sm:$0xf]
        %v6866 = vld [vmem:[%s6844 + $0x54] sm:$0xf]
        %v6867 = vld [vmem:[%s6844 + $0x58] sm:$0xf]
        %v6868 = vld [vmem:[%s6844 + $0x5c] sm:$0xf]
        %v6869 = vld [vmem:[%s6844 + $0x60] sm:$0xf]
        %v6870 = vld [vmem:[%s6844 + $0x64] sm:$0xf]
        %v6871 = vld [vmem:[%s6844 + $0x68] sm:$0xf]
        %v6872 = vld [vmem:[%s6844 + $0x6c] sm:$0xf]
        %v6873 = vld [vmem:[%s6844 + $0x70] sm:$0xf]
        %v6874 = vld [vmem:[%s6844 + $0x74] sm:$0xf]
        %v6875 = vld [vmem:[%s6844 + $0x78] sm:$0xf]
        %v6876 = vld [vmem:[%s6844 + $0x7c] sm:$0xf]
        %v6877 = vld [vmem:[%s6844 + $0x90] sm:$0xf]
        %v6878 = vld [vmem:[%s6844 + $0x94] sm:$0xf]
        %v6879 = vld [vmem:[%s6844 + $0x98] sm:$0xf]
        %v6880 = vld [vmem:[%s6844 + $0x9c] sm:$0xf]
        %v6881 = vld [vmem:[%s6844 + $0xa0] sm:$0xf]
        %v6882 = vld [vmem:[%s6844 + $0xa4] sm:$0xf]
        %v6883 = vld [vmem:[%s6844 + $0xa8] sm:$0xf]
        %v6884 = vld [vmem:[%s6844 + $0xac] sm:$0xf]
        %v6885 = vld [vmem:[%s6844 + $0xb0] sm:$0xf]
        %v6886 = vld [vmem:[%s6844 + $0xb4] sm:$0xf]
        %v6887 = vld [vmem:[%s6844 + $0xb8] sm:$0xf]
        %v6888 = vld [vmem:[%s6844 + $0xbc] sm:$0xf]
        %v6889 = vld [vmem:[%s6844 + $0xc0] sm:$0xf]
        %v6890 = vld [vmem:[%s6844 + $0xc4] sm:$0xf]
        %v6891 = vld [vmem:[%s6844 + $0xc8] sm:$0xf]
        %v6892 = vld [vmem:[%s6844 + $0xcc] sm:$0xf]
        %v6893 = vld [vmem:[%s6844 + $0xd0] sm:$0xf]
        %v6894 = vld [vmem:[%s6844 + $0xd4] sm:$0xf]
        %v6895 = vld [vmem:[%s6844 + $0xd8] sm:$0xf]
        %v6896 = vld [vmem:[%s6844 + $0xdc] sm:$0xf]
        %v6897 = vld [vmem:[%s6844 + $0xe0] sm:$0xf]
        %v6898 = vld [vmem:[%s6844 + $0xe4] sm:$0xf]
        %v6899 = vld [vmem:[%s6844 + $0xe8] sm:$0xf]
        %v6900 = vld [vmem:[%s6844 + $0xec] sm:$0xf]
        %v6901 = vld [vmem:[%s6844 + $0xf0] sm:$0xf]
        %v6902 = vld [vmem:[%s6844 + $0xf4] sm:$0xf]
        %v6903 = vld [vmem:[%s6844 + $0xf8] sm:$0xf]
        %v6904 = vld [vmem:[%s6844 + $0xfc] sm:$0xf]
        %v6905 = vld [vmem:[%s6844 + $0x100] sm:$0xf]
        %v6906 = vld [vmem:[%s6844 + $0x104] sm:$0xf]
        %v6907 = vld [vmem:[%s6844 + $0x108] sm:$0xf]
        %v6908 = vld [vmem:[%s6844 + $0x10c] sm:$0xf]
        %s6909 = scalar_lea.vmem %s1, 12
        %v6910 = vld [vmem:[%s6909] sm:$0x3]
        %v6975 = vunpack.c.l.b16 %v6845
        %v6976 = vunpack.c.l.b16 %v6846
        %v6977 = vunpack.c.l.b16 %v6847
        %v6978 = vunpack.c.l.b16 %v6848
        %v6979 = vunpack.c.l.b16 %v6849
        %v6980 = vunpack.c.l.b16 %v6850
        %v6981 = vunpack.c.l.b16 %v6851
        %v6982 = vunpack.c.l.b16 %v6852
        %v6983 = vunpack.c.l.b16 %v6853
        %v6984 = vunpack.c.l.b16 %v6854
        %v6985 = vunpack.c.l.b16 %v6855
        %v6986 = vunpack.c.l.b16 %v6856
        %v6987 = vunpack.c.l.b16 %v6857
        %v6988 = vunpack.c.l.b16 %v6858
        %v6989 = vunpack.c.l.b16 %v6859
        %v6990 = vunpack.c.l.b16 %v6860
        %v6991 = vunpack.c.l.b16 %v6861
        %v6992 = vunpack.c.l.b16 %v6862
        %v6993 = vunpack.c.l.b16 %v6863
        %v6994 = vunpack.c.l.b16 %v6864
        %v6995 = vunpack.c.l.b16 %v6865
        %v6996 = vunpack.c.l.b16 %v6866
        %v6997 = vunpack.c.l.b16 %v6867
        %v6998 = vunpack.c.l.b16 %v6868
        %v6999 = vunpack.c.l.b16 %v6869
        %v7000 = vunpack.c.l.b16 %v6870
        %v7001 = vunpack.c.l.b16 %v6871
        %v7002 = vunpack.c.l.b16 %v6872
        %v7003 = vunpack.c.l.b16 %v6873
        %v7004 = vunpack.c.l.b16 %v6874
        %v7005 = vunpack.c.l.b16 %v6875
        %v7006 = vunpack.c.l.b16 %v6876
        %v7007 = vunpack.c.l.b16 %v6877
        %v7008 = vunpack.c.l.b16 %v6878
        %v7009 = vunpack.c.l.b16 %v6879
        %v7010 = vunpack.c.l.b16 %v6880
        %v7011 = vunpack.c.l.b16 %v6881
        %v7012 = vunpack.c.l.b16 %v6882
        %v7013 = vunpack.c.l.b16 %v6883
        %v7014 = vunpack.c.l.b16 %v6884
        %v7015 = vunpack.c.l.b16 %v6885
        %v7016 = vunpack.c.l.b16 %v6886
        %v7017 = vunpack.c.l.b16 %v6887
        %v7018 = vunpack.c.l.b16 %v6888
        %v7019 = vunpack.c.l.b16 %v6889
        %v7020 = vunpack.c.l.b16 %v6890
        %v7021 = vunpack.c.l.b16 %v6891
        %v7022 = vunpack.c.l.b16 %v6892
        %v7023 = vunpack.c.l.b16 %v6893
        %v7024 = vunpack.c.l.b16 %v6894
        %v7025 = vunpack.c.l.b16 %v6895
        %v7026 = vunpack.c.l.b16 %v6896
        %v7027 = vunpack.c.l.b16 %v6897
        %v7028 = vunpack.c.l.b16 %v6898
        %v7029 = vunpack.c.l.b16 %v6899
        %v7030 = vunpack.c.l.b16 %v6900
        %v7031 = vunpack.c.l.b16 %v6901
        %v7032 = vunpack.c.l.b16 %v6902
        %v7033 = vunpack.c.l.b16 %v6903
        %v7034 = vunpack.c.l.b16 %v6904
        %v7035 = vunpack.c.l.b16 %v6905
        %v7036 = vunpack.c.l.b16 %v6906
        %v7037 = vunpack.c.l.b16 %v6907
        %v7038 = vunpack.c.l.b16 %v6908
        %v7039 = vpack.c.b16 %v6976, %v6975
        %v7040 = vpack.c.b16 %v6978, %v6977
        %v7041 = vpack.c.b16 %v6980, %v6979
        %v7042 = vpack.c.b16 %v6982, %v6981
        %v7043 = vpack.c.b16 %v6984, %v6983
        %v7044 = vpack.c.b16 %v6986, %v6985
        %v7045 = vpack.c.b16 %v6988, %v6987
        %v7046 = vpack.c.b16 %v6990, %v6989
        %v7047 = vpack.c.b16 %v6992, %v6991
        %v7048 = vpack.c.b16 %v6994, %v6993
        %v7049 = vpack.c.b16 %v6996, %v6995
        %v7050 = vpack.c.b16 %v6998, %v6997
        %v7051 = vpack.c.b16 %v7000, %v6999
        %v7052 = vpack.c.b16 %v7002, %v7001
        %v7053 = vpack.c.b16 %v7004, %v7003
        %v7054 = vpack.c.b16 %v7006, %v7005
        %v7055 = vpack.c.b16 %v7008, %v7007
        %v7056 = vpack.c.b16 %v7010, %v7009
        %v7057 = vpack.c.b16 %v7012, %v7011
        %v7058 = vpack.c.b16 %v7014, %v7013
        %v7059 = vpack.c.b16 %v7016, %v7015
        %v7060 = vpack.c.b16 %v7018, %v7017
        %v7061 = vpack.c.b16 %v7020, %v7019
        %v7062 = vpack.c.b16 %v7022, %v7021
        %v7063 = vpack.c.b16 %v7024, %v7023
        %v7064 = vpack.c.b16 %v7026, %v7025
        %v7065 = vpack.c.b16 %v7028, %v7027
        %v7066 = vpack.c.b16 %v7030, %v7029
        %v7067 = vpack.c.b16 %v7032, %v7031
        %v7068 = vpack.c.b16 %v7034, %v7033
        %v7069 = vpack.c.b16 %v7036, %v7035
        %v7070 = vpack.c.b16 %v7038, %v7037
        %v7072 = vsel %vm340, %v7039, 0
        %v7075 = vsel %vm340, %v7040, 0
        %v7078 = vsel %vm340, %v7041, 0
        %v7081 = vsel %vm340, %v7042, 0
        %v7084 = vsel %vm340, %v7043, 0
        %v7087 = vsel %vm340, %v7044, 0
        %v7090 = vsel %vm340, %v7045, 0
        %v7093 = vsel %vm340, %v7046, 0
        %v7096 = vsel %vm340, %v7047, 0
        %v7099 = vsel %vm340, %v7048, 0
        %v7102 = vsel %vm340, %v7049, 0
        %v7105 = vsel %vm340, %v7050, 0
        %v7108 = vsel %vm340, %v7051, 0
        %v7111 = vsel %vm340, %v7052, 0
        %v7114 = vsel %vm340, %v7053, 0
        %v7117 = vsel %vm340, %v7054, 0
        %v7120 = vsel %vm340, %v7055, 0
        %v7123 = vsel %vm340, %v7056, 0
        %v7126 = vsel %vm340, %v7057, 0
        %v7129 = vsel %vm340, %v7058, 0
        %v7132 = vsel %vm340, %v7059, 0
        %v7135 = vsel %vm340, %v7060, 0
        %v7138 = vsel %vm340, %v7061, 0
        %v7141 = vsel %vm340, %v7062, 0
        %v7144 = vsel %vm340, %v7063, 0
        %v7147 = vsel %vm340, %v7064, 0
        %v7150 = vsel %vm340, %v7065, 0
        %v7153 = vsel %vm340, %v7066, 0
        %v7156 = vsel %vm340, %v7067, 0
        %v7159 = vsel %vm340, %v7068, 0
        %v7162 = vsel %vm340, %v7069, 0
        %v7165 = vsel %vm340, %v7070, 0
        %v7168 = vsel %vm2453, %v6910, 0
        %7170 = vmatprep.subr.bf16.mxu0 0
        %7171 = vmatpush1.bf16.msra.mxu0 0
        %7172 = vmatprep.subr.bf16.mxu0 0
        %7173 = vmatpush1.bf16.msra.mxu0 0
        %7174 = vmatprep.subr.bf16.mxu0 0
        %7175 = vmatpush1.bf16.msra.mxu0 0
        %7176 = vmatprep.subr.bf16.mxu0 0
        %7177 = vmatpush1.bf16.msra.mxu0 0
        %7178 = vmatprep.subr.bf16.mxu0 0
        %7179 = vmatpush1.bf16.msra.mxu0 0
        %7180 = vmatprep.subr.bf16.mxu0 0
        %7181 = vmatpush1.bf16.msra.mxu0 0
        %7182 = vmatprep.subr.bf16.mxu0 0
        %7183 = vmatpush1.bf16.msra.mxu0 0
        %7184 = vmatprep.subr.bf16.mxu0 0
        %7185 = vmatpush1.bf16.msra.mxu0 %v7168
        %7186 = vmatprep.subr.bf16.mxu0 0
        %7187 = vmatpush2.bf16.msra.mxu0 0
        %7188 = vmatprep.subr.bf16.mxu0 0
        %7189 = vmatpush2.bf16.msra.mxu0 0
        %7190 = vmatprep.subr.bf16.mxu0 0
        %7191 = vmatpush2.bf16.msra.mxu0 0
        %7192 = vmatprep.subr.bf16.mxu0 0
        %7193 = vmatpush2.bf16.msra.mxu0 0
        %7194 = vmatprep.subr.bf16.mxu0 0
        %7195 = vmatpush2.bf16.msra.mxu0 0
        %7196 = vmatprep.subr.bf16.mxu0 0
        %7197 = vmatpush2.bf16.msra.mxu0 0
        %7198 = vmatprep.subr.bf16.mxu0 0
        %7199 = vmatpush2.bf16.msra.mxu0 0
        %7200 = vmatprep.subr.bf16.mxu0 0
        %7201 = vmatpush2.bf16.msra.mxu0 0
        %7202 = vmatprep.mubr.bf16.mxu0 0
        %7203 = vmatmul.mubr.bf16.gmra.mxu0 %v7072
        %v7204 = vpop.f32.mrf.mxu0
        %v7205 = vadd.f32 0.0, %v7204
        %v7206 = vpop.f32.mrf.mxu0
        %v7207 = vpop.f32.mrf.mxu0
        %v7208 = vadd.f32 0.0, %v7207
        %v7209 = vpop.f32.mrf.mxu0
        %7210 = vmatprep.mubr.bf16.mxu0 0
        %7211 = vmatmul.mubr.bf16.gmra.mxu0 %v7075
        %v7212 = vpop.f32.mrf.mxu0
        %v7213 = vadd.f32 0.0, %v7212
        %v7214 = vpop.f32.mrf.mxu0
        %v7215 = vpop.f32.mrf.mxu0
        %v7216 = vadd.f32 0.0, %v7215
        %v7217 = vpop.f32.mrf.mxu0
        %7218 = vmatprep.mubr.bf16.mxu0 0
        %7219 = vmatmul.mubr.bf16.gmra.mxu0 %v7078
        %v7220 = vpop.f32.mrf.mxu0
        %v7221 = vadd.f32 0.0, %v7220
        %v7222 = vpop.f32.mrf.mxu0
        %v7223 = vpop.f32.mrf.mxu0
        %v7224 = vadd.f32 0.0, %v7223
        %v7225 = vpop.f32.mrf.mxu0
        %7226 = vmatprep.mubr.bf16.mxu0 0
        %7227 = vmatmul.mubr.bf16.gmra.mxu0 %v7081
        %v7228 = vpop.f32.mrf.mxu0
        %v7229 = vadd.f32 0.0, %v7228
        %v7230 = vpop.f32.mrf.mxu0
        %v7231 = vpop.f32.mrf.mxu0
        %v7232 = vadd.f32 0.0, %v7231
        %v7233 = vpop.f32.mrf.mxu0
        %7234 = vmatprep.mubr.bf16.mxu0 0
        %7235 = vmatmul.mubr.bf16.gmra.mxu0 %v7084
        %v7236 = vpop.f32.mrf.mxu0
        %v7237 = vadd.f32 0.0, %v7236
        %v7238 = vpop.f32.mrf.mxu0
        %v7239 = vpop.f32.mrf.mxu0
        %v7240 = vadd.f32 0.0, %v7239
        %v7241 = vpop.f32.mrf.mxu0
        %7242 = vmatprep.mubr.bf16.mxu0 0
        %7243 = vmatmul.mubr.bf16.gmra.mxu0 %v7087
        %v7244 = vpop.f32.mrf.mxu0
        %v7245 = vadd.f32 0.0, %v7244
        %v7246 = vpop.f32.mrf.mxu0
        %v7247 = vpop.f32.mrf.mxu0
        %v7248 = vadd.f32 0.0, %v7247
        %v7249 = vpop.f32.mrf.mxu0
        %7250 = vmatprep.mubr.bf16.mxu0 0
        %7251 = vmatmul.mubr.bf16.gmra.mxu0 %v7090
        %v7252 = vpop.f32.mrf.mxu0
        %v7253 = vadd.f32 0.0, %v7252
        %v7254 = vpop.f32.mrf.mxu0
        %v7255 = vpop.f32.mrf.mxu0
        %v7256 = vadd.f32 0.0, %v7255
        %v7257 = vpop.f32.mrf.mxu0
        %7258 = vmatprep.mubr.bf16.mxu0 0
        %7259 = vmatmul.mubr.bf16.gmra.mxu0 %v7093
        %v7260 = vpop.f32.mrf.mxu0
        %v7261 = vadd.f32 0.0, %v7260
        %v7262 = vpop.f32.mrf.mxu0
        %v7263 = vpop.f32.mrf.mxu0
        %v7264 = vadd.f32 0.0, %v7263
        %v7265 = vpop.f32.mrf.mxu0
        %7266 = vmatprep.mubr.bf16.mxu0 0
        %7267 = vmatmul.mubr.bf16.gmra.mxu0 %v7096
        %v7268 = vpop.f32.mrf.mxu0
        %v7269 = vadd.f32 0.0, %v7268
        %v7270 = vpop.f32.mrf.mxu0
        %v7271 = vpop.f32.mrf.mxu0
        %v7272 = vadd.f32 0.0, %v7271
        %v7273 = vpop.f32.mrf.mxu0
        %7274 = vmatprep.mubr.bf16.mxu0 0
        %7275 = vmatmul.mubr.bf16.gmra.mxu0 %v7099
        %v7276 = vpop.f32.mrf.mxu0
        %v7277 = vadd.f32 0.0, %v7276
        %v7278 = vpop.f32.mrf.mxu0
        %v7279 = vpop.f32.mrf.mxu0
        %v7280 = vadd.f32 0.0, %v7279
        %v7281 = vpop.f32.mrf.mxu0
        %7282 = vmatprep.mubr.bf16.mxu0 0
        %7283 = vmatmul.mubr.bf16.gmra.mxu0 %v7102
        %v7284 = vpop.f32.mrf.mxu0
        %v7285 = vadd.f32 0.0, %v7284
        %v7286 = vpop.f32.mrf.mxu0
        %v7287 = vpop.f32.mrf.mxu0
        %v7288 = vadd.f32 0.0, %v7287
        %v7289 = vpop.f32.mrf.mxu0
        %7290 = vmatprep.mubr.bf16.mxu0 0
        %7291 = vmatmul.mubr.bf16.gmra.mxu0 %v7105
        %v7292 = vpop.f32.mrf.mxu0
        %v7293 = vadd.f32 0.0, %v7292
        %v7294 = vpop.f32.mrf.mxu0
        %v7295 = vpop.f32.mrf.mxu0
        %v7296 = vadd.f32 0.0, %v7295
        %v7297 = vpop.f32.mrf.mxu0
        %7298 = vmatprep.mubr.bf16.mxu0 0
        %7299 = vmatmul.mubr.bf16.gmra.mxu0 %v7108
        %v7300 = vpop.f32.mrf.mxu0
        %v7301 = vadd.f32 0.0, %v7300
        %v7302 = vpop.f32.mrf.mxu0
        %v7303 = vpop.f32.mrf.mxu0
        %v7304 = vadd.f32 0.0, %v7303
        %v7305 = vpop.f32.mrf.mxu0
        %7306 = vmatprep.mubr.bf16.mxu0 0
        %7307 = vmatmul.mubr.bf16.gmra.mxu0 %v7111
        %v7308 = vpop.f32.mrf.mxu0
        %v7309 = vadd.f32 0.0, %v7308
        %v7310 = vpop.f32.mrf.mxu0
        %v7311 = vpop.f32.mrf.mxu0
        %v7312 = vadd.f32 0.0, %v7311
        %v7313 = vpop.f32.mrf.mxu0
        %7314 = vmatprep.mubr.bf16.mxu0 0
        %7315 = vmatmul.mubr.bf16.gmra.mxu0 %v7114
        %v7316 = vpop.f32.mrf.mxu0
        %v7317 = vadd.f32 0.0, %v7316
        %v7318 = vpop.f32.mrf.mxu0
        %v7319 = vpop.f32.mrf.mxu0
        %v7320 = vadd.f32 0.0, %v7319
        %v7321 = vpop.f32.mrf.mxu0
        %7322 = vmatprep.mubr.bf16.mxu0 0
        %7323 = vmatmul.mubr.bf16.gmra.mxu0 %v7117
        %v7324 = vpop.f32.mrf.mxu0
        %v7325 = vadd.f32 0.0, %v7324
        %v7326 = vpop.f32.mrf.mxu0
        %v7327 = vpop.f32.mrf.mxu0
        %v7328 = vadd.f32 0.0, %v7327
        %v7329 = vpop.f32.mrf.mxu0
        %7330 = vmatprep.mubr.bf16.mxu0 0
        %7331 = vmatmul.mubr.bf16.gmra.mxu0 %v7120
        %v7332 = vpop.f32.mrf.mxu0
        %v7333 = vadd.f32 0.0, %v7332
        %v7334 = vpop.f32.mrf.mxu0
        %v7335 = vpop.f32.mrf.mxu0
        %v7336 = vadd.f32 0.0, %v7335
        %v7337 = vpop.f32.mrf.mxu0
        %7338 = vmatprep.mubr.bf16.mxu0 0
        %7339 = vmatmul.mubr.bf16.gmra.mxu0 %v7123
        %v7340 = vpop.f32.mrf.mxu0
        %v7341 = vadd.f32 0.0, %v7340
        %v7342 = vpop.f32.mrf.mxu0
        %v7343 = vpop.f32.mrf.mxu0
        %v7344 = vadd.f32 0.0, %v7343
        %v7345 = vpop.f32.mrf.mxu0
        %7346 = vmatprep.mubr.bf16.mxu0 0
        %7347 = vmatmul.mubr.bf16.gmra.mxu0 %v7126
        %v7348 = vpop.f32.mrf.mxu0
        %v7349 = vadd.f32 0.0, %v7348
        %v7350 = vpop.f32.mrf.mxu0
        %v7351 = vpop.f32.mrf.mxu0
        %v7352 = vadd.f32 0.0, %v7351
        %v7353 = vpop.f32.mrf.mxu0
        %7354 = vmatprep.mubr.bf16.mxu0 0
        %7355 = vmatmul.mubr.bf16.gmra.mxu0 %v7129
        %v7356 = vpop.f32.mrf.mxu0
        %v7357 = vadd.f32 0.0, %v7356
        %v7358 = vpop.f32.mrf.mxu0
        %v7359 = vpop.f32.mrf.mxu0
        %v7360 = vadd.f32 0.0, %v7359
        %v7361 = vpop.f32.mrf.mxu0
        %7362 = vmatprep.mubr.bf16.mxu0 0
        %7363 = vmatmul.mubr.bf16.gmra.mxu0 %v7132
        %v7364 = vpop.f32.mrf.mxu0
        %v7365 = vadd.f32 0.0, %v7364
        %v7366 = vpop.f32.mrf.mxu0
        %v7367 = vpop.f32.mrf.mxu0
        %v7368 = vadd.f32 0.0, %v7367
        %v7369 = vpop.f32.mrf.mxu0
        %7370 = vmatprep.mubr.bf16.mxu0 0
        %7371 = vmatmul.mubr.bf16.gmra.mxu0 %v7135
        %v7372 = vpop.f32.mrf.mxu0
        %v7373 = vadd.f32 0.0, %v7372
        %v7374 = vpop.f32.mrf.mxu0
        %v7375 = vpop.f32.mrf.mxu0
        %v7376 = vadd.f32 0.0, %v7375
        %v7377 = vpop.f32.mrf.mxu0
        %7378 = vmatprep.mubr.bf16.mxu0 0
        %7379 = vmatmul.mubr.bf16.gmra.mxu0 %v7138
        %v7380 = vpop.f32.mrf.mxu0
        %v7381 = vadd.f32 0.0, %v7380
        %v7382 = vpop.f32.mrf.mxu0
        %v7383 = vpop.f32.mrf.mxu0
        %v7384 = vadd.f32 0.0, %v7383
        %v7385 = vpop.f32.mrf.mxu0
        %7386 = vmatprep.mubr.bf16.mxu0 0
        %7387 = vmatmul.mubr.bf16.gmra.mxu0 %v7141
        %v7388 = vpop.f32.mrf.mxu0
        %v7389 = vadd.f32 0.0, %v7388
        %v7390 = vpop.f32.mrf.mxu0
        %v7391 = vpop.f32.mrf.mxu0
        %v7392 = vadd.f32 0.0, %v7391
        %v7393 = vpop.f32.mrf.mxu0
        %7394 = vmatprep.mubr.bf16.mxu0 0
        %7395 = vmatmul.mubr.bf16.gmra.mxu0 %v7144
        %v7396 = vpop.f32.mrf.mxu0
        %v7397 = vadd.f32 0.0, %v7396
        %v7398 = vpop.f32.mrf.mxu0
        %v7399 = vpop.f32.mrf.mxu0
        %v7400 = vadd.f32 0.0, %v7399
        %v7401 = vpop.f32.mrf.mxu0
        %7402 = vmatprep.mubr.bf16.mxu0 0
        %7403 = vmatmul.mubr.bf16.gmra.mxu0 %v7147
        %v7404 = vpop.f32.mrf.mxu0
        %v7405 = vadd.f32 0.0, %v7404
        %v7406 = vpop.f32.mrf.mxu0
        %v7407 = vpop.f32.mrf.mxu0
        %v7408 = vadd.f32 0.0, %v7407
        %v7409 = vpop.f32.mrf.mxu0
        %7410 = vmatprep.mubr.bf16.mxu0 0
        %7411 = vmatmul.mubr.bf16.gmra.mxu0 %v7150
        %v7412 = vpop.f32.mrf.mxu0
        %v7413 = vadd.f32 0.0, %v7412
        %v7414 = vpop.f32.mrf.mxu0
        %v7415 = vpop.f32.mrf.mxu0
        %v7416 = vadd.f32 0.0, %v7415
        %v7417 = vpop.f32.mrf.mxu0
        %7418 = vmatprep.mubr.bf16.mxu0 0
        %7419 = vmatmul.mubr.bf16.gmra.mxu0 %v7153
        %v7420 = vpop.f32.mrf.mxu0
        %v7421 = vadd.f32 0.0, %v7420
        %v7422 = vpop.f32.mrf.mxu0
        %v7423 = vpop.f32.mrf.mxu0
        %v7424 = vadd.f32 0.0, %v7423
        %v7425 = vpop.f32.mrf.mxu0
        %7426 = vmatprep.mubr.bf16.mxu0 0
        %7427 = vmatmul.mubr.bf16.gmra.mxu0 %v7156
        %v7428 = vpop.f32.mrf.mxu0
        %v7429 = vadd.f32 0.0, %v7428
        %v7430 = vpop.f32.mrf.mxu0
        %v7431 = vpop.f32.mrf.mxu0
        %v7432 = vadd.f32 0.0, %v7431
        %v7433 = vpop.f32.mrf.mxu0
        %7434 = vmatprep.mubr.bf16.mxu0 0
        %7435 = vmatmul.mubr.bf16.gmra.mxu0 %v7159
        %v7436 = vpop.f32.mrf.mxu0
        %v7437 = vadd.f32 0.0, %v7436
        %v7438 = vpop.f32.mrf.mxu0
        %v7439 = vpop.f32.mrf.mxu0
        %v7440 = vadd.f32 0.0, %v7439
        %v7441 = vpop.f32.mrf.mxu0
        %7442 = vmatprep.mubr.bf16.mxu0 0
        %7443 = vmatmul.mubr.bf16.gmra.mxu0 %v7162
        %v7444 = vpop.f32.mrf.mxu0
        %v7445 = vadd.f32 0.0, %v7444
        %v7446 = vpop.f32.mrf.mxu0
        %v7447 = vpop.f32.mrf.mxu0
        %v7448 = vadd.f32 0.0, %v7447
        %v7449 = vpop.f32.mrf.mxu0
        %7450 = vmatprep.mubr.bf16.mxu0 0
        %7451 = vmatmul.mubr.bf16.gmra.mxu0 %v7165
        %v7452 = vpop.f32.mrf.mxu0
        %v7453 = vadd.f32 0.0, %v7452
        %v7454 = vpop.f32.mrf.mxu0
        %v7455 = vpop.f32.mrf.mxu0
        %v7456 = vadd.f32 0.0, %v7455
        %v7457 = vpop.f32.mrf.mxu0
        %7458 = vdwg.mxu0
        %v7459 = vld [vmem:[#allocation4] sm:$0xff]
        %v7460 = vld [vmem:[#allocation4 + $0x8] sm:$0xff]
        %v7461 = vld [vmem:[#allocation4 + $0x10] sm:$0xff]
        %v7462 = vld [vmem:[#allocation4 + $0x18] sm:$0xff]
        %v7463 = vld [vmem:[#allocation4 + $0x20] sm:$0xff]
        %v7464 = vld [vmem:[#allocation4 + $0x28] sm:$0xff]
        %v7465 = vld [vmem:[#allocation4 + $0x30] sm:$0xff]
        %v7466 = vld [vmem:[#allocation4 + $0x38] sm:$0xff]
        %v7467 = vld [vmem:[#allocation4 + $0x40] sm:$0xff]
        %v7468 = vld [vmem:[#allocation4 + $0x48] sm:$0xff]
        %v7469 = vld [vmem:[#allocation4 + $0x50] sm:$0xff]
        %v7470 = vld [vmem:[#allocation4 + $0x58] sm:$0xff]
        %v7471 = vld [vmem:[#allocation4 + $0x60] sm:$0xff]
        %v7472 = vld [vmem:[#allocation4 + $0x68] sm:$0xff]
        %v7473 = vld [vmem:[#allocation4 + $0x70] sm:$0xff]
        %v7474 = vld [vmem:[#allocation4 + $0x78] sm:$0xff]
        %v7475 = vld [vmem:[#allocation4 + $0x80] sm:$0xff]
        %v7476 = vld [vmem:[#allocation4 + $0x88] sm:$0xff]
        %v7477 = vld [vmem:[#allocation4 + $0x90] sm:$0xff]
        %v7478 = vld [vmem:[#allocation4 + $0x98] sm:$0xff]
        %v7479 = vld [vmem:[#allocation4 + $0xa0] sm:$0xff]
        %v7480 = vld [vmem:[#allocation4 + $0xa8] sm:$0xff]
        %v7481 = vld [vmem:[#allocation4 + $0xb0] sm:$0xff]
        %v7482 = vld [vmem:[#allocation4 + $0xb8] sm:$0xff]
        %v7483 = vld [vmem:[#allocation4 + $0xc0] sm:$0xff]
        %v7484 = vld [vmem:[#allocation4 + $0xc8] sm:$0xff]
        %v7485 = vld [vmem:[#allocation4 + $0xd0] sm:$0xff]
        %v7486 = vld [vmem:[#allocation4 + $0xd8] sm:$0xff]
        %v7487 = vld [vmem:[#allocation4 + $0xe0] sm:$0xff]
        %v7488 = vld [vmem:[#allocation4 + $0xe8] sm:$0xff]
        %v7489 = vld [vmem:[#allocation4 + $0xf0] sm:$0xff]
        %v7490 = vld [vmem:[#allocation4 + $0xf8] sm:$0xff]
        %v7491 = vld [vmem:[#allocation4 + $0x100] sm:$0xff]
        %v7492 = vld [vmem:[#allocation4 + $0x108] sm:$0xff]
        %v7493 = vld [vmem:[#allocation4 + $0x110] sm:$0xff]
        %v7494 = vld [vmem:[#allocation4 + $0x118] sm:$0xff]
        %v7495 = vld [vmem:[#allocation4 + $0x120] sm:$0xff]
        %v7496 = vld [vmem:[#allocation4 + $0x128] sm:$0xff]
        %v7497 = vld [vmem:[#allocation4 + $0x130] sm:$0xff]
        %v7498 = vld [vmem:[#allocation4 + $0x138] sm:$0xff]
        %v7499 = vld [vmem:[#allocation4 + $0x140] sm:$0xff]
        %v7500 = vld [vmem:[#allocation4 + $0x148] sm:$0xff]
        %v7501 = vld [vmem:[#allocation4 + $0x150] sm:$0xff]
        %v7502 = vld [vmem:[#allocation4 + $0x158] sm:$0xff]
        %v7503 = vld [vmem:[#allocation4 + $0x160] sm:$0xff]
        %v7504 = vld [vmem:[#allocation4 + $0x168] sm:$0xff]
        %v7505 = vld [vmem:[#allocation4 + $0x170] sm:$0xff]
        %v7506 = vld [vmem:[#allocation4 + $0x178] sm:$0xff]
        %v7507 = vld [vmem:[#allocation4 + $0x180] sm:$0xff]
        %v7508 = vld [vmem:[#allocation4 + $0x188] sm:$0xff]
        %v7509 = vld [vmem:[#allocation4 + $0x190] sm:$0xff]
        %v7510 = vld [vmem:[#allocation4 + $0x198] sm:$0xff]
        %v7511 = vld [vmem:[#allocation4 + $0x1a0] sm:$0xff]
        %v7512 = vld [vmem:[#allocation4 + $0x1a8] sm:$0xff]
        %v7513 = vld [vmem:[#allocation4 + $0x1b0] sm:$0xff]
        %v7514 = vld [vmem:[#allocation4 + $0x1b8] sm:$0xff]
        %v7515 = vld [vmem:[#allocation4 + $0x1c0] sm:$0xff]
        %v7516 = vld [vmem:[#allocation4 + $0x1c8] sm:$0xff]
        %v7517 = vld [vmem:[#allocation4 + $0x1d0] sm:$0xff]
        %v7518 = vld [vmem:[#allocation4 + $0x1d8] sm:$0xff]
        %v7519 = vld [vmem:[#allocation4 + $0x1e0] sm:$0xff]
        %v7520 = vld [vmem:[#allocation4 + $0x1e8] sm:$0xff]
        %v7521 = vld [vmem:[#allocation4 + $0x1f0] sm:$0xff]
        %v7522 = vld [vmem:[#allocation4 + $0x1f8] sm:$0xff]
        %v7523 = vadd.f32 %v7459, %v7205
        %v7524 = vadd.f32 %v7460, %v7208
        %v7525 = vadd.f32 %v7461, %v7213
        %v7526 = vadd.f32 %v7462, %v7216
        %v7527 = vadd.f32 %v7463, %v7221
        %v7528 = vadd.f32 %v7464, %v7224
        %v7529 = vadd.f32 %v7465, %v7229
        %v7530 = vadd.f32 %v7466, %v7232
        %v7531 = vadd.f32 %v7467, %v7237
        %v7532 = vadd.f32 %v7468, %v7240
        %v7533 = vadd.f32 %v7469, %v7245
        %v7534 = vadd.f32 %v7470, %v7248
        %v7535 = vadd.f32 %v7471, %v7253
        %v7536 = vadd.f32 %v7472, %v7256
        %v7537 = vadd.f32 %v7473, %v7261
        %v7538 = vadd.f32 %v7474, %v7264
        %v7539 = vadd.f32 %v7475, %v7269
        %v7540 = vadd.f32 %v7476, %v7272
        %v7541 = vadd.f32 %v7477, %v7277
        %v7542 = vadd.f32 %v7478, %v7280
        %v7543 = vadd.f32 %v7479, %v7285
        %v7544 = vadd.f32 %v7480, %v7288
        %v7545 = vadd.f32 %v7481, %v7293
        %v7546 = vadd.f32 %v7482, %v7296
        %v7547 = vadd.f32 %v7483, %v7301
        %v7548 = vadd.f32 %v7484, %v7304
        %v7549 = vadd.f32 %v7485, %v7309
        %v7550 = vadd.f32 %v7486, %v7312
        %v7551 = vadd.f32 %v7487, %v7317
        %v7552 = vadd.f32 %v7488, %v7320
        %v7553 = vadd.f32 %v7489, %v7325
        %v7554 = vadd.f32 %v7490, %v7328
        %v7555 = vadd.f32 %v7491, %v7333
        %v7556 = vadd.f32 %v7492, %v7336
        %v7557 = vadd.f32 %v7493, %v7341
        %v7558 = vadd.f32 %v7494, %v7344
        %v7559 = vadd.f32 %v7495, %v7349
        %v7560 = vadd.f32 %v7496, %v7352
        %v7561 = vadd.f32 %v7497, %v7357
        %v7562 = vadd.f32 %v7498, %v7360
        %v7563 = vadd.f32 %v7499, %v7365
        %v7564 = vadd.f32 %v7500, %v7368
        %v7565 = vadd.f32 %v7501, %v7373
        %v7566 = vadd.f32 %v7502, %v7376
        %v7567 = vadd.f32 %v7503, %v7381
        %v7568 = vadd.f32 %v7504, %v7384
        %v7569 = vadd.f32 %v7505, %v7389
        %v7570 = vadd.f32 %v7506, %v7392
        %v7571 = vadd.f32 %v7507, %v7397
        %v7572 = vadd.f32 %v7508, %v7400
        %v7573 = vadd.f32 %v7509, %v7405
        %v7574 = vadd.f32 %v7510, %v7408
        %v7575 = vadd.f32 %v7511, %v7413
        %v7576 = vadd.f32 %v7512, %v7416
        %v7577 = vadd.f32 %v7513, %v7421
        %v7578 = vadd.f32 %v7514, %v7424
        %v7579 = vadd.f32 %v7515, %v7429
        %v7580 = vadd.f32 %v7516, %v7432
        %v7581 = vadd.f32 %v7517, %v7437
        %v7582 = vadd.f32 %v7518, %v7440
        %v7583 = vadd.f32 %v7519, %v7445
        %v7584 = vadd.f32 %v7520, %v7448
        %v7585 = vadd.f32 %v7521, %v7453
        %v7586 = vadd.f32 %v7522, %v7456
        %7587 = vst.msk [vmem:[#allocation4] sm:$0xff] %vm2746, %v7523
        %7588 = vst.msk [vmem:[#allocation4 + $0x8] sm:$0xff] %vm2746, %v7524
        %7589 = vst.msk [vmem:[#allocation4 + $0x10] sm:$0xff] %vm2746, %v7525
        %7590 = vst.msk [vmem:[#allocation4 + $0x18] sm:$0xff] %vm2746, %v7526
        %7591 = vst.msk [vmem:[#allocation4 + $0x20] sm:$0xff] %vm2746, %v7527
        %7592 = vst.msk [vmem:[#allocation4 + $0x28] sm:$0xff] %vm2746, %v7528
        %7593 = vst.msk [vmem:[#allocation4 + $0x30] sm:$0xff] %vm2746, %v7529
        %7594 = vst.msk [vmem:[#allocation4 + $0x38] sm:$0xff] %vm2746, %v7530
        %7595 = vst.msk [vmem:[#allocation4 + $0x40] sm:$0xff] %vm2746, %v7531
        %7596 = vst.msk [vmem:[#allocation4 + $0x48] sm:$0xff] %vm2746, %v7532
        %7597 = vst.msk [vmem:[#allocation4 + $0x50] sm:$0xff] %vm2746, %v7533
        %7598 = vst.msk [vmem:[#allocation4 + $0x58] sm:$0xff] %vm2746, %v7534
        %7599 = vst.msk [vmem:[#allocation4 + $0x60] sm:$0xff] %vm2746, %v7535
        %7600 = vst.msk [vmem:[#allocation4 + $0x68] sm:$0xff] %vm2746, %v7536
        %7601 = vst.msk [vmem:[#allocation4 + $0x70] sm:$0xff] %vm2746, %v7537
        %7602 = vst.msk [vmem:[#allocation4 + $0x78] sm:$0xff] %vm2746, %v7538
        %7603 = vst.msk [vmem:[#allocation4 + $0x80] sm:$0xff] %vm2746, %v7539
        %7604 = vst.msk [vmem:[#allocation4 + $0x88] sm:$0xff] %vm2746, %v7540
        %7605 = vst.msk [vmem:[#allocation4 + $0x90] sm:$0xff] %vm2746, %v7541
        %7606 = vst.msk [vmem:[#allocation4 + $0x98] sm:$0xff] %vm2746, %v7542
        %7607 = vst.msk [vmem:[#allocation4 + $0xa0] sm:$0xff] %vm2746, %v7543
        %7608 = vst.msk [vmem:[#allocation4 + $0xa8] sm:$0xff] %vm2746, %v7544
        %7609 = vst.msk [vmem:[#allocation4 + $0xb0] sm:$0xff] %vm2746, %v7545
        %7610 = vst.msk [vmem:[#allocation4 + $0xb8] sm:$0xff] %vm2746, %v7546
        %7611 = vst.msk [vmem:[#allocation4 + $0xc0] sm:$0xff] %vm2746, %v7547
        %7612 = vst.msk [vmem:[#allocation4 + $0xc8] sm:$0xff] %vm2746, %v7548
        %7613 = vst.msk [vmem:[#allocation4 + $0xd0] sm:$0xff] %vm2746, %v7549
        %7614 = vst.msk [vmem:[#allocation4 + $0xd8] sm:$0xff] %vm2746, %v7550
        %7615 = vst.msk [vmem:[#allocation4 + $0xe0] sm:$0xff] %vm2746, %v7551
        %7616 = vst.msk [vmem:[#allocation4 + $0xe8] sm:$0xff] %vm2746, %v7552
        %7617 = vst.msk [vmem:[#allocation4 + $0xf0] sm:$0xff] %vm2746, %v7553
        %7618 = vst.msk [vmem:[#allocation4 + $0xf8] sm:$0xff] %vm2746, %v7554
        %7619 = vst.msk [vmem:[#allocation4 + $0x100] sm:$0xff] %vm2746, %v7555
        %7620 = vst.msk [vmem:[#allocation4 + $0x108] sm:$0xff] %vm2746, %v7556
        %7621 = vst.msk [vmem:[#allocation4 + $0x110] sm:$0xff] %vm2746, %v7557
        %7622 = vst.msk [vmem:[#allocation4 + $0x118] sm:$0xff] %vm2746, %v7558
        %7623 = vst.msk [vmem:[#allocation4 + $0x120] sm:$0xff] %vm2746, %v7559
        %7624 = vst.msk [vmem:[#allocation4 + $0x128] sm:$0xff] %vm2746, %v7560
        %7625 = vst.msk [vmem:[#allocation4 + $0x130] sm:$0xff] %vm2746, %v7561
        %7626 = vst.msk [vmem:[#allocation4 + $0x138] sm:$0xff] %vm2746, %v7562
        %7627 = vst.msk [vmem:[#allocation4 + $0x140] sm:$0xff] %vm2746, %v7563
        %7628 = vst.msk [vmem:[#allocation4 + $0x148] sm:$0xff] %vm2746, %v7564
        %7629 = vst.msk [vmem:[#allocation4 + $0x150] sm:$0xff] %vm2746, %v7565
        %7630 = vst.msk [vmem:[#allocation4 + $0x158] sm:$0xff] %vm2746, %v7566
        %7631 = vst.msk [vmem:[#allocation4 + $0x160] sm:$0xff] %vm2746, %v7567
        %7632 = vst.msk [vmem:[#allocation4 + $0x168] sm:$0xff] %vm2746, %v7568
        %7633 = vst.msk [vmem:[#allocation4 + $0x170] sm:$0xff] %vm2746, %v7569
        %7634 = vst.msk [vmem:[#allocation4 + $0x178] sm:$0xff] %vm2746, %v7570
        %7635 = vst.msk [vmem:[#allocation4 + $0x180] sm:$0xff] %vm2746, %v7571
        %7636 = vst.msk [vmem:[#allocation4 + $0x188] sm:$0xff] %vm2746, %v7572
        %7637 = vst.msk [vmem:[#allocation4 + $0x190] sm:$0xff] %vm2746, %v7573
        %7638 = vst.msk [vmem:[#allocation4 + $0x198] sm:$0xff] %vm2746, %v7574
        %7639 = vst.msk [vmem:[#allocation4 + $0x1a0] sm:$0xff] %vm2746, %v7575
        %7640 = vst.msk [vmem:[#allocation4 + $0x1a8] sm:$0xff] %vm2746, %v7576
        %7641 = vst.msk [vmem:[#allocation4 + $0x1b0] sm:$0xff] %vm2746, %v7577
        %7642 = vst.msk [vmem:[#allocation4 + $0x1b8] sm:$0xff] %vm2746, %v7578
        %7643 = vst.msk [vmem:[#allocation4 + $0x1c0] sm:$0xff] %vm2746, %v7579
        %7644 = vst.msk [vmem:[#allocation4 + $0x1c8] sm:$0xff] %vm2746, %v7580
        %7645 = vst.msk [vmem:[#allocation4 + $0x1d0] sm:$0xff] %vm2746, %v7581
        %7646 = vst.msk [vmem:[#allocation4 + $0x1d8] sm:$0xff] %vm2746, %v7582
        %7647 = vst.msk [vmem:[#allocation4 + $0x1e0] sm:$0xff] %vm2746, %v7583
        %7648 = vst.msk [vmem:[#allocation4 + $0x1e8] sm:$0xff] %vm2746, %v7584
        %7649 = vst.msk [vmem:[#allocation4 + $0x1f0] sm:$0xff] %vm2746, %v7585
        %7650 = vst.msk [vmem:[#allocation4 + $0x1f8] sm:$0xff] %vm2746, %v7586
        %s7651 = scalar_lea.vmem [#allocation3], 160
        %v7652 = vld [vmem:[%s7651] sm:$0xf]
        %v7653 = vld [vmem:[%s7651 + $0x4] sm:$0xf]
        %v7654 = vld [vmem:[%s7651 + $0x8] sm:$0xf]
        %v7655 = vld [vmem:[%s7651 + $0xc] sm:$0xf]
        %v7656 = vld [vmem:[%s7651 + $0x10] sm:$0xf]
        %v7657 = vld [vmem:[%s7651 + $0x14] sm:$0xf]
        %v7658 = vld [vmem:[%s7651 + $0x18] sm:$0xf]
        %v7659 = vld [vmem:[%s7651 + $0x1c] sm:$0xf]
        %v7660 = vld [vmem:[%s7651 + $0x20] sm:$0xf]
        %v7661 = vld [vmem:[%s7651 + $0x24] sm:$0xf]
        %v7662 = vld [vmem:[%s7651 + $0x28] sm:$0xf]
        %v7663 = vld [vmem:[%s7651 + $0x2c] sm:$0xf]
        %v7664 = vld [vmem:[%s7651 + $0x30] sm:$0xf]
        %v7665 = vld [vmem:[%s7651 + $0x34] sm:$0xf]
        %v7666 = vld [vmem:[%s7651 + $0x38] sm:$0xf]
        %v7667 = vld [vmem:[%s7651 + $0x3c] sm:$0xf]
        %v7668 = vld [vmem:[%s7651 + $0x40] sm:$0xf]
        %v7669 = vld [vmem:[%s7651 + $0x44] sm:$0xf]
        %v7670 = vld [vmem:[%s7651 + $0x48] sm:$0xf]
        %v7671 = vld [vmem:[%s7651 + $0x4c] sm:$0xf]
        %v7672 = vld [vmem:[%s7651 + $0x50] sm:$0xf]
        %v7673 = vld [vmem:[%s7651 + $0x54] sm:$0xf]
        %v7674 = vld [vmem:[%s7651 + $0x58] sm:$0xf]
        %v7675 = vld [vmem:[%s7651 + $0x5c] sm:$0xf]
        %v7676 = vld [vmem:[%s7651 + $0x60] sm:$0xf]
        %v7677 = vld [vmem:[%s7651 + $0x64] sm:$0xf]
        %v7678 = vld [vmem:[%s7651 + $0x68] sm:$0xf]
        %v7679 = vld [vmem:[%s7651 + $0x6c] sm:$0xf]
        %v7680 = vld [vmem:[%s7651 + $0x70] sm:$0xf]
        %v7681 = vld [vmem:[%s7651 + $0x74] sm:$0xf]
        %v7682 = vld [vmem:[%s7651 + $0x78] sm:$0xf]
        %v7683 = vld [vmem:[%s7651 + $0x7c] sm:$0xf]
        %v7684 = vld [vmem:[%s7651 + $0x90] sm:$0xf]
        %v7685 = vld [vmem:[%s7651 + $0x94] sm:$0xf]
        %v7686 = vld [vmem:[%s7651 + $0x98] sm:$0xf]
        %v7687 = vld [vmem:[%s7651 + $0x9c] sm:$0xf]
        %v7688 = vld [vmem:[%s7651 + $0xa0] sm:$0xf]
        %v7689 = vld [vmem:[%s7651 + $0xa4] sm:$0xf]
        %v7690 = vld [vmem:[%s7651 + $0xa8] sm:$0xf]
        %v7691 = vld [vmem:[%s7651 + $0xac] sm:$0xf]
        %v7692 = vld [vmem:[%s7651 + $0xb0] sm:$0xf]
        %v7693 = vld [vmem:[%s7651 + $0xb4] sm:$0xf]
        %v7694 = vld [vmem:[%s7651 + $0xb8] sm:$0xf]
        %v7695 = vld [vmem:[%s7651 + $0xbc] sm:$0xf]
        %v7696 = vld [vmem:[%s7651 + $0xc0] sm:$0xf]
        %v7697 = vld [vmem:[%s7651 + $0xc4] sm:$0xf]
        %v7698 = vld [vmem:[%s7651 + $0xc8] sm:$0xf]
        %v7699 = vld [vmem:[%s7651 + $0xcc] sm:$0xf]
        %v7700 = vld [vmem:[%s7651 + $0xd0] sm:$0xf]
        %v7701 = vld [vmem:[%s7651 + $0xd4] sm:$0xf]
        %v7702 = vld [vmem:[%s7651 + $0xd8] sm:$0xf]
        %v7703 = vld [vmem:[%s7651 + $0xdc] sm:$0xf]
        %v7704 = vld [vmem:[%s7651 + $0xe0] sm:$0xf]
        %v7705 = vld [vmem:[%s7651 + $0xe4] sm:$0xf]
        %v7706 = vld [vmem:[%s7651 + $0xe8] sm:$0xf]
        %v7707 = vld [vmem:[%s7651 + $0xec] sm:$0xf]
        %v7708 = vld [vmem:[%s7651 + $0xf0] sm:$0xf]
        %v7709 = vld [vmem:[%s7651 + $0xf4] sm:$0xf]
        %v7710 = vld [vmem:[%s7651 + $0xf8] sm:$0xf]
        %v7711 = vld [vmem:[%s7651 + $0xfc] sm:$0xf]
        %v7712 = vld [vmem:[%s7651 + $0x100] sm:$0xf]
        %v7713 = vld [vmem:[%s7651 + $0x104] sm:$0xf]
        %v7714 = vld [vmem:[%s7651 + $0x108] sm:$0xf]
        %v7715 = vld [vmem:[%s7651 + $0x10c] sm:$0xf]
        %s7716 = scalar_lea.vmem %s1, 14
        %v7717 = vld [vmem:[%s7716] sm:$0x3]
        %v7782 = vunpack.c.l.b16 %v7652
        %v7783 = vunpack.c.l.b16 %v7653
        %v7784 = vunpack.c.l.b16 %v7654
        %v7785 = vunpack.c.l.b16 %v7655
        %v7786 = vunpack.c.l.b16 %v7656
        %v7787 = vunpack.c.l.b16 %v7657
        %v7788 = vunpack.c.l.b16 %v7658
        %v7789 = vunpack.c.l.b16 %v7659
        %v7790 = vunpack.c.l.b16 %v7660
        %v7791 = vunpack.c.l.b16 %v7661
        %v7792 = vunpack.c.l.b16 %v7662
        %v7793 = vunpack.c.l.b16 %v7663
        %v7794 = vunpack.c.l.b16 %v7664
        %v7795 = vunpack.c.l.b16 %v7665
        %v7796 = vunpack.c.l.b16 %v7666
        %v7797 = vunpack.c.l.b16 %v7667
        %v7798 = vunpack.c.l.b16 %v7668
        %v7799 = vunpack.c.l.b16 %v7669
        %v7800 = vunpack.c.l.b16 %v7670
        %v7801 = vunpack.c.l.b16 %v7671
        %v7802 = vunpack.c.l.b16 %v7672
        %v7803 = vunpack.c.l.b16 %v7673
        %v7804 = vunpack.c.l.b16 %v7674
        %v7805 = vunpack.c.l.b16 %v7675
        %v7806 = vunpack.c.l.b16 %v7676
        %v7807 = vunpack.c.l.b16 %v7677
        %v7808 = vunpack.c.l.b16 %v7678
        %v7809 = vunpack.c.l.b16 %v7679
        %v7810 = vunpack.c.l.b16 %v7680
        %v7811 = vunpack.c.l.b16 %v7681
        %v7812 = vunpack.c.l.b16 %v7682
        %v7813 = vunpack.c.l.b16 %v7683
        %v7814 = vunpack.c.l.b16 %v7684
        %v7815 = vunpack.c.l.b16 %v7685
        %v7816 = vunpack.c.l.b16 %v7686
        %v7817 = vunpack.c.l.b16 %v7687
        %v7818 = vunpack.c.l.b16 %v7688
        %v7819 = vunpack.c.l.b16 %v7689
        %v7820 = vunpack.c.l.b16 %v7690
        %v7821 = vunpack.c.l.b16 %v7691
        %v7822 = vunpack.c.l.b16 %v7692
        %v7823 = vunpack.c.l.b16 %v7693
        %v7824 = vunpack.c.l.b16 %v7694
        %v7825 = vunpack.c.l.b16 %v7695
        %v7826 = vunpack.c.l.b16 %v7696
        %v7827 = vunpack.c.l.b16 %v7697
        %v7828 = vunpack.c.l.b16 %v7698
        %v7829 = vunpack.c.l.b16 %v7699
        %v7830 = vunpack.c.l.b16 %v7700
        %v7831 = vunpack.c.l.b16 %v7701
        %v7832 = vunpack.c.l.b16 %v7702
        %v7833 = vunpack.c.l.b16 %v7703
        %v7834 = vunpack.c.l.b16 %v7704
        %v7835 = vunpack.c.l.b16 %v7705
        %v7836 = vunpack.c.l.b16 %v7706
        %v7837 = vunpack.c.l.b16 %v7707
        %v7838 = vunpack.c.l.b16 %v7708
        %v7839 = vunpack.c.l.b16 %v7709
        %v7840 = vunpack.c.l.b16 %v7710
        %v7841 = vunpack.c.l.b16 %v7711
        %v7842 = vunpack.c.l.b16 %v7712
        %v7843 = vunpack.c.l.b16 %v7713
        %v7844 = vunpack.c.l.b16 %v7714
        %v7845 = vunpack.c.l.b16 %v7715
        %v7846 = vpack.c.b16 %v7783, %v7782
        %v7847 = vpack.c.b16 %v7785, %v7784
        %v7848 = vpack.c.b16 %v7787, %v7786
        %v7849 = vpack.c.b16 %v7789, %v7788
        %v7850 = vpack.c.b16 %v7791, %v7790
        %v7851 = vpack.c.b16 %v7793, %v7792
        %v7852 = vpack.c.b16 %v7795, %v7794
        %v7853 = vpack.c.b16 %v7797, %v7796
        %v7854 = vpack.c.b16 %v7799, %v7798
        %v7855 = vpack.c.b16 %v7801, %v7800
        %v7856 = vpack.c.b16 %v7803, %v7802
        %v7857 = vpack.c.b16 %v7805, %v7804
        %v7858 = vpack.c.b16 %v7807, %v7806
        %v7859 = vpack.c.b16 %v7809, %v7808
        %v7860 = vpack.c.b16 %v7811, %v7810
        %v7861 = vpack.c.b16 %v7813, %v7812
        %v7862 = vpack.c.b16 %v7815, %v7814
        %v7863 = vpack.c.b16 %v7817, %v7816
        %v7864 = vpack.c.b16 %v7819, %v7818
        %v7865 = vpack.c.b16 %v7821, %v7820
        %v7866 = vpack.c.b16 %v7823, %v7822
        %v7867 = vpack.c.b16 %v7825, %v7824
        %v7868 = vpack.c.b16 %v7827, %v7826
        %v7869 = vpack.c.b16 %v7829, %v7828
        %v7870 = vpack.c.b16 %v7831, %v7830
        %v7871 = vpack.c.b16 %v7833, %v7832
        %v7872 = vpack.c.b16 %v7835, %v7834
        %v7873 = vpack.c.b16 %v7837, %v7836
        %v7874 = vpack.c.b16 %v7839, %v7838
        %v7875 = vpack.c.b16 %v7841, %v7840
        %v7876 = vpack.c.b16 %v7843, %v7842
        %v7877 = vpack.c.b16 %v7845, %v7844
        %v7879 = vsel %vm340, %v7846, 0
        %v7882 = vsel %vm340, %v7847, 0
        %v7885 = vsel %vm340, %v7848, 0
        %v7888 = vsel %vm340, %v7849, 0
        %v7891 = vsel %vm340, %v7850, 0
        %v7894 = vsel %vm340, %v7851, 0
        %v7897 = vsel %vm340, %v7852, 0
        %v7900 = vsel %vm340, %v7853, 0
        %v7903 = vsel %vm340, %v7854, 0
        %v7906 = vsel %vm340, %v7855, 0
        %v7909 = vsel %vm340, %v7856, 0
        %v7912 = vsel %vm340, %v7857, 0
        %v7915 = vsel %vm340, %v7858, 0
        %v7918 = vsel %vm340, %v7859, 0
        %v7921 = vsel %vm340, %v7860, 0
        %v7924 = vsel %vm340, %v7861, 0
        %v7927 = vsel %vm340, %v7862, 0
        %v7930 = vsel %vm340, %v7863, 0
        %v7933 = vsel %vm340, %v7864, 0
        %v7936 = vsel %vm340, %v7865, 0
        %v7939 = vsel %vm340, %v7866, 0
        %v7942 = vsel %vm340, %v7867, 0
        %v7945 = vsel %vm340, %v7868, 0
        %v7948 = vsel %vm340, %v7869, 0
        %v7951 = vsel %vm340, %v7870, 0
        %v7954 = vsel %vm340, %v7871, 0
        %v7957 = vsel %vm340, %v7872, 0
        %v7960 = vsel %vm340, %v7873, 0
        %v7963 = vsel %vm340, %v7874, 0
        %v7966 = vsel %vm340, %v7875, 0
        %v7969 = vsel %vm340, %v7876, 0
        %v7972 = vsel %vm340, %v7877, 0
        %v7975 = vsel %vm2453, %v7717, 0
        %7977 = vmatprep.subr.bf16.mxu0 0
        %7978 = vmatpush1.bf16.msra.mxu0 0
        %7979 = vmatprep.subr.bf16.mxu0 0
        %7980 = vmatpush1.bf16.msra.mxu0 0
        %7981 = vmatprep.subr.bf16.mxu0 0
        %7982 = vmatpush1.bf16.msra.mxu0 0
        %7983 = vmatprep.subr.bf16.mxu0 0
        %7984 = vmatpush1.bf16.msra.mxu0 0
        %7985 = vmatprep.subr.bf16.mxu0 0
        %7986 = vmatpush1.bf16.msra.mxu0 0
        %7987 = vmatprep.subr.bf16.mxu0 0
        %7988 = vmatpush1.bf16.msra.mxu0 0
        %7989 = vmatprep.subr.bf16.mxu0 0
        %7990 = vmatpush1.bf16.msra.mxu0 0
        %7991 = vmatprep.subr.bf16.mxu0 0
        %7992 = vmatpush1.bf16.msra.mxu0 %v7975
        %7993 = vmatprep.subr.bf16.mxu0 0
        %7994 = vmatpush2.bf16.msra.mxu0 0
        %7995 = vmatprep.subr.bf16.mxu0 0
        %7996 = vmatpush2.bf16.msra.mxu0 0
        %7997 = vmatprep.subr.bf16.mxu0 0
        %7998 = vmatpush2.bf16.msra.mxu0 0
        %7999 = vmatprep.subr.bf16.mxu0 0
        %8000 = vmatpush2.bf16.msra.mxu0 0
        %8001 = vmatprep.subr.bf16.mxu0 0
        %8002 = vmatpush2.bf16.msra.mxu0 0
        %8003 = vmatprep.subr.bf16.mxu0 0
        %8004 = vmatpush2.bf16.msra.mxu0 0
        %8005 = vmatprep.subr.bf16.mxu0 0
        %8006 = vmatpush2.bf16.msra.mxu0 0
        %8007 = vmatprep.subr.bf16.mxu0 0
        %8008 = vmatpush2.bf16.msra.mxu0 0
        %8009 = vmatprep.mubr.bf16.mxu0 0
        %8010 = vmatmul.mubr.bf16.gmra.mxu0 %v7879
        %v8011 = vpop.f32.mrf.mxu0
        %v8012 = vadd.f32 0.0, %v8011
        %v8013 = vpop.f32.mrf.mxu0
        %v8014 = vpop.f32.mrf.mxu0
        %v8015 = vadd.f32 0.0, %v8014
        %v8016 = vpop.f32.mrf.mxu0
        %8017 = vmatprep.mubr.bf16.mxu0 0
        %8018 = vmatmul.mubr.bf16.gmra.mxu0 %v7882
        %v8019 = vpop.f32.mrf.mxu0
        %v8020 = vadd.f32 0.0, %v8019
        %v8021 = vpop.f32.mrf.mxu0
        %v8022 = vpop.f32.mrf.mxu0
        %v8023 = vadd.f32 0.0, %v8022
        %v8024 = vpop.f32.mrf.mxu0
        %8025 = vmatprep.mubr.bf16.mxu0 0
        %8026 = vmatmul.mubr.bf16.gmra.mxu0 %v7885
        %v8027 = vpop.f32.mrf.mxu0
        %v8028 = vadd.f32 0.0, %v8027
        %v8029 = vpop.f32.mrf.mxu0
        %v8030 = vpop.f32.mrf.mxu0
        %v8031 = vadd.f32 0.0, %v8030
        %v8032 = vpop.f32.mrf.mxu0
        %8033 = vmatprep.mubr.bf16.mxu0 0
        %8034 = vmatmul.mubr.bf16.gmra.mxu0 %v7888
        %v8035 = vpop.f32.mrf.mxu0
        %v8036 = vadd.f32 0.0, %v8035
        %v8037 = vpop.f32.mrf.mxu0
        %v8038 = vpop.f32.mrf.mxu0
        %v8039 = vadd.f32 0.0, %v8038
        %v8040 = vpop.f32.mrf.mxu0
        %8041 = vmatprep.mubr.bf16.mxu0 0
        %8042 = vmatmul.mubr.bf16.gmra.mxu0 %v7891
        %v8043 = vpop.f32.mrf.mxu0
        %v8044 = vadd.f32 0.0, %v8043
        %v8045 = vpop.f32.mrf.mxu0
        %v8046 = vpop.f32.mrf.mxu0
        %v8047 = vadd.f32 0.0, %v8046
        %v8048 = vpop.f32.mrf.mxu0
        %8049 = vmatprep.mubr.bf16.mxu0 0
        %8050 = vmatmul.mubr.bf16.gmra.mxu0 %v7894
        %v8051 = vpop.f32.mrf.mxu0
        %v8052 = vadd.f32 0.0, %v8051
        %v8053 = vpop.f32.mrf.mxu0
        %v8054 = vpop.f32.mrf.mxu0
        %v8055 = vadd.f32 0.0, %v8054
        %v8056 = vpop.f32.mrf.mxu0
        %8057 = vmatprep.mubr.bf16.mxu0 0
        %8058 = vmatmul.mubr.bf16.gmra.mxu0 %v7897
        %v8059 = vpop.f32.mrf.mxu0
        %v8060 = vadd.f32 0.0, %v8059
        %v8061 = vpop.f32.mrf.mxu0
        %v8062 = vpop.f32.mrf.mxu0
        %v8063 = vadd.f32 0.0, %v8062
        %v8064 = vpop.f32.mrf.mxu0
        %8065 = vmatprep.mubr.bf16.mxu0 0
        %8066 = vmatmul.mubr.bf16.gmra.mxu0 %v7900
        %v8067 = vpop.f32.mrf.mxu0
        %v8068 = vadd.f32 0.0, %v8067
        %v8069 = vpop.f32.mrf.mxu0
        %v8070 = vpop.f32.mrf.mxu0
        %v8071 = vadd.f32 0.0, %v8070
        %v8072 = vpop.f32.mrf.mxu0
        %8073 = vmatprep.mubr.bf16.mxu0 0
        %8074 = vmatmul.mubr.bf16.gmra.mxu0 %v7903
        %v8075 = vpop.f32.mrf.mxu0
        %v8076 = vadd.f32 0.0, %v8075
        %v8077 = vpop.f32.mrf.mxu0
        %v8078 = vpop.f32.mrf.mxu0
        %v8079 = vadd.f32 0.0, %v8078
        %v8080 = vpop.f32.mrf.mxu0
        %8081 = vmatprep.mubr.bf16.mxu0 0
        %8082 = vmatmul.mubr.bf16.gmra.mxu0 %v7906
        %v8083 = vpop.f32.mrf.mxu0
        %v8084 = vadd.f32 0.0, %v8083
        %v8085 = vpop.f32.mrf.mxu0
        %v8086 = vpop.f32.mrf.mxu0
        %v8087 = vadd.f32 0.0, %v8086
        %v8088 = vpop.f32.mrf.mxu0
        %8089 = vmatprep.mubr.bf16.mxu0 0
        %8090 = vmatmul.mubr.bf16.gmra.mxu0 %v7909
        %v8091 = vpop.f32.mrf.mxu0
        %v8092 = vadd.f32 0.0, %v8091
        %v8093 = vpop.f32.mrf.mxu0
        %v8094 = vpop.f32.mrf.mxu0
        %v8095 = vadd.f32 0.0, %v8094
        %v8096 = vpop.f32.mrf.mxu0
        %8097 = vmatprep.mubr.bf16.mxu0 0
        %8098 = vmatmul.mubr.bf16.gmra.mxu0 %v7912
        %v8099 = vpop.f32.mrf.mxu0
        %v8100 = vadd.f32 0.0, %v8099
        %v8101 = vpop.f32.mrf.mxu0
        %v8102 = vpop.f32.mrf.mxu0
        %v8103 = vadd.f32 0.0, %v8102
        %v8104 = vpop.f32.mrf.mxu0
        %8105 = vmatprep.mubr.bf16.mxu0 0
        %8106 = vmatmul.mubr.bf16.gmra.mxu0 %v7915
        %v8107 = vpop.f32.mrf.mxu0
        %v8108 = vadd.f32 0.0, %v8107
        %v8109 = vpop.f32.mrf.mxu0
        %v8110 = vpop.f32.mrf.mxu0
        %v8111 = vadd.f32 0.0, %v8110
        %v8112 = vpop.f32.mrf.mxu0
        %8113 = vmatprep.mubr.bf16.mxu0 0
        %8114 = vmatmul.mubr.bf16.gmra.mxu0 %v7918
        %v8115 = vpop.f32.mrf.mxu0
        %v8116 = vadd.f32 0.0, %v8115
        %v8117 = vpop.f32.mrf.mxu0
        %v8118 = vpop.f32.mrf.mxu0
        %v8119 = vadd.f32 0.0, %v8118
        %v8120 = vpop.f32.mrf.mxu0
        %8121 = vmatprep.mubr.bf16.mxu0 0
        %8122 = vmatmul.mubr.bf16.gmra.mxu0 %v7921
        %v8123 = vpop.f32.mrf.mxu0
        %v8124 = vadd.f32 0.0, %v8123
        %v8125 = vpop.f32.mrf.mxu0
        %v8126 = vpop.f32.mrf.mxu0
        %v8127 = vadd.f32 0.0, %v8126
        %v8128 = vpop.f32.mrf.mxu0
        %8129 = vmatprep.mubr.bf16.mxu0 0
        %8130 = vmatmul.mubr.bf16.gmra.mxu0 %v7924
        %v8131 = vpop.f32.mrf.mxu0
        %v8132 = vadd.f32 0.0, %v8131
        %v8133 = vpop.f32.mrf.mxu0
        %v8134 = vpop.f32.mrf.mxu0
        %v8135 = vadd.f32 0.0, %v8134
        %v8136 = vpop.f32.mrf.mxu0
        %8137 = vmatprep.mubr.bf16.mxu0 0
        %8138 = vmatmul.mubr.bf16.gmra.mxu0 %v7927
        %v8139 = vpop.f32.mrf.mxu0
        %v8140 = vadd.f32 0.0, %v8139
        %v8141 = vpop.f32.mrf.mxu0
        %v8142 = vpop.f32.mrf.mxu0
        %v8143 = vadd.f32 0.0, %v8142
        %v8144 = vpop.f32.mrf.mxu0
        %8145 = vmatprep.mubr.bf16.mxu0 0
        %8146 = vmatmul.mubr.bf16.gmra.mxu0 %v7930
        %v8147 = vpop.f32.mrf.mxu0
        %v8148 = vadd.f32 0.0, %v8147
        %v8149 = vpop.f32.mrf.mxu0
        %v8150 = vpop.f32.mrf.mxu0
        %v8151 = vadd.f32 0.0, %v8150
        %v8152 = vpop.f32.mrf.mxu0
        %8153 = vmatprep.mubr.bf16.mxu0 0
        %8154 = vmatmul.mubr.bf16.gmra.mxu0 %v7933
        %v8155 = vpop.f32.mrf.mxu0
        %v8156 = vadd.f32 0.0, %v8155
        %v8157 = vpop.f32.mrf.mxu0
        %v8158 = vpop.f32.mrf.mxu0
        %v8159 = vadd.f32 0.0, %v8158
        %v8160 = vpop.f32.mrf.mxu0
        %8161 = vmatprep.mubr.bf16.mxu0 0
        %8162 = vmatmul.mubr.bf16.gmra.mxu0 %v7936
        %v8163 = vpop.f32.mrf.mxu0
        %v8164 = vadd.f32 0.0, %v8163
        %v8165 = vpop.f32.mrf.mxu0
        %v8166 = vpop.f32.mrf.mxu0
        %v8167 = vadd.f32 0.0, %v8166
        %v8168 = vpop.f32.mrf.mxu0
        %8169 = vmatprep.mubr.bf16.mxu0 0
        %8170 = vmatmul.mubr.bf16.gmra.mxu0 %v7939
        %v8171 = vpop.f32.mrf.mxu0
        %v8172 = vadd.f32 0.0, %v8171
        %v8173 = vpop.f32.mrf.mxu0
        %v8174 = vpop.f32.mrf.mxu0
        %v8175 = vadd.f32 0.0, %v8174
        %v8176 = vpop.f32.mrf.mxu0
        %8177 = vmatprep.mubr.bf16.mxu0 0
        %8178 = vmatmul.mubr.bf16.gmra.mxu0 %v7942
        %v8179 = vpop.f32.mrf.mxu0
        %v8180 = vadd.f32 0.0, %v8179
        %v8181 = vpop.f32.mrf.mxu0
        %v8182 = vpop.f32.mrf.mxu0
        %v8183 = vadd.f32 0.0, %v8182
        %v8184 = vpop.f32.mrf.mxu0
        %8185 = vmatprep.mubr.bf16.mxu0 0
        %8186 = vmatmul.mubr.bf16.gmra.mxu0 %v7945
        %v8187 = vpop.f32.mrf.mxu0
        %v8188 = vadd.f32 0.0, %v8187
        %v8189 = vpop.f32.mrf.mxu0
        %v8190 = vpop.f32.mrf.mxu0
        %v8191 = vadd.f32 0.0, %v8190
        %v8192 = vpop.f32.mrf.mxu0
        %8193 = vmatprep.mubr.bf16.mxu0 0
        %8194 = vmatmul.mubr.bf16.gmra.mxu0 %v7948
        %v8195 = vpop.f32.mrf.mxu0
        %v8196 = vadd.f32 0.0, %v8195
        %v8197 = vpop.f32.mrf.mxu0
        %v8198 = vpop.f32.mrf.mxu0
        %v8199 = vadd.f32 0.0, %v8198
        %v8200 = vpop.f32.mrf.mxu0
        %8201 = vmatprep.mubr.bf16.mxu0 0
        %8202 = vmatmul.mubr.bf16.gmra.mxu0 %v7951
        %v8203 = vpop.f32.mrf.mxu0
        %v8204 = vadd.f32 0.0, %v8203
        %v8205 = vpop.f32.mrf.mxu0
        %v8206 = vpop.f32.mrf.mxu0
        %v8207 = vadd.f32 0.0, %v8206
        %v8208 = vpop.f32.mrf.mxu0
        %8209 = vmatprep.mubr.bf16.mxu0 0
        %8210 = vmatmul.mubr.bf16.gmra.mxu0 %v7954
        %v8211 = vpop.f32.mrf.mxu0
        %v8212 = vadd.f32 0.0, %v8211
        %v8213 = vpop.f32.mrf.mxu0
        %v8214 = vpop.f32.mrf.mxu0
        %v8215 = vadd.f32 0.0, %v8214
        %v8216 = vpop.f32.mrf.mxu0
        %8217 = vmatprep.mubr.bf16.mxu0 0
        %8218 = vmatmul.mubr.bf16.gmra.mxu0 %v7957
        %v8219 = vpop.f32.mrf.mxu0
        %v8220 = vadd.f32 0.0, %v8219
        %v8221 = vpop.f32.mrf.mxu0
        %v8222 = vpop.f32.mrf.mxu0
        %v8223 = vadd.f32 0.0, %v8222
        %v8224 = vpop.f32.mrf.mxu0
        %8225 = vmatprep.mubr.bf16.mxu0 0
        %8226 = vmatmul.mubr.bf16.gmra.mxu0 %v7960
        %v8227 = vpop.f32.mrf.mxu0
        %v8228 = vadd.f32 0.0, %v8227
        %v8229 = vpop.f32.mrf.mxu0
        %v8230 = vpop.f32.mrf.mxu0
        %v8231 = vadd.f32 0.0, %v8230
        %v8232 = vpop.f32.mrf.mxu0
        %8233 = vmatprep.mubr.bf16.mxu0 0
        %8234 = vmatmul.mubr.bf16.gmra.mxu0 %v7963
        %v8235 = vpop.f32.mrf.mxu0
        %v8236 = vadd.f32 0.0, %v8235
        %v8237 = vpop.f32.mrf.mxu0
        %v8238 = vpop.f32.mrf.mxu0
        %v8239 = vadd.f32 0.0, %v8238
        %v8240 = vpop.f32.mrf.mxu0
        %8241 = vmatprep.mubr.bf16.mxu0 0
        %8242 = vmatmul.mubr.bf16.gmra.mxu0 %v7966
        %v8243 = vpop.f32.mrf.mxu0
        %v8244 = vadd.f32 0.0, %v8243
        %v8245 = vpop.f32.mrf.mxu0
        %v8246 = vpop.f32.mrf.mxu0
        %v8247 = vadd.f32 0.0, %v8246
        %v8248 = vpop.f32.mrf.mxu0
        %8249 = vmatprep.mubr.bf16.mxu0 0
        %8250 = vmatmul.mubr.bf16.gmra.mxu0 %v7969
        %v8251 = vpop.f32.mrf.mxu0
        %v8252 = vadd.f32 0.0, %v8251
        %v8253 = vpop.f32.mrf.mxu0
        %v8254 = vpop.f32.mrf.mxu0
        %v8255 = vadd.f32 0.0, %v8254
        %v8256 = vpop.f32.mrf.mxu0
        %8257 = vmatprep.mubr.bf16.mxu0 0
        %8258 = vmatmul.mubr.bf16.gmra.mxu0 %v7972
        %v8259 = vpop.f32.mrf.mxu0
        %v8260 = vadd.f32 0.0, %v8259
        %v8261 = vpop.f32.mrf.mxu0
        %v8262 = vpop.f32.mrf.mxu0
        %v8263 = vadd.f32 0.0, %v8262
        %v8264 = vpop.f32.mrf.mxu0
        %8265 = vdwg.mxu0
        %v8266 = vld [vmem:[#allocation4] sm:$0xff]
        %v8267 = vld [vmem:[#allocation4 + $0x8] sm:$0xff]
        %v8268 = vld [vmem:[#allocation4 + $0x10] sm:$0xff]
        %v8269 = vld [vmem:[#allocation4 + $0x18] sm:$0xff]
        %v8270 = vld [vmem:[#allocation4 + $0x20] sm:$0xff]
        %v8271 = vld [vmem:[#allocation4 + $0x28] sm:$0xff]
        %v8272 = vld [vmem:[#allocation4 + $0x30] sm:$0xff]
        %v8273 = vld [vmem:[#allocation4 + $0x38] sm:$0xff]
        %v8274 = vld [vmem:[#allocation4 + $0x40] sm:$0xff]
        %v8275 = vld [vmem:[#allocation4 + $0x48] sm:$0xff]
        %v8276 = vld [vmem:[#allocation4 + $0x50] sm:$0xff]
        %v8277 = vld [vmem:[#allocation4 + $0x58] sm:$0xff]
        %v8278 = vld [vmem:[#allocation4 + $0x60] sm:$0xff]
        %v8279 = vld [vmem:[#allocation4 + $0x68] sm:$0xff]
        %v8280 = vld [vmem:[#allocation4 + $0x70] sm:$0xff]
        %v8281 = vld [vmem:[#allocation4 + $0x78] sm:$0xff]
        %v8282 = vld [vmem:[#allocation4 + $0x80] sm:$0xff]
        %v8283 = vld [vmem:[#allocation4 + $0x88] sm:$0xff]
        %v8284 = vld [vmem:[#allocation4 + $0x90] sm:$0xff]
        %v8285 = vld [vmem:[#allocation4 + $0x98] sm:$0xff]
        %v8286 = vld [vmem:[#allocation4 + $0xa0] sm:$0xff]
        %v8287 = vld [vmem:[#allocation4 + $0xa8] sm:$0xff]
        %v8288 = vld [vmem:[#allocation4 + $0xb0] sm:$0xff]
        %v8289 = vld [vmem:[#allocation4 + $0xb8] sm:$0xff]
        %v8290 = vld [vmem:[#allocation4 + $0xc0] sm:$0xff]
        %v8291 = vld [vmem:[#allocation4 + $0xc8] sm:$0xff]
        %v8292 = vld [vmem:[#allocation4 + $0xd0] sm:$0xff]
        %v8293 = vld [vmem:[#allocation4 + $0xd8] sm:$0xff]
        %v8294 = vld [vmem:[#allocation4 + $0xe0] sm:$0xff]
        %v8295 = vld [vmem:[#allocation4 + $0xe8] sm:$0xff]
        %v8296 = vld [vmem:[#allocation4 + $0xf0] sm:$0xff]
        %v8297 = vld [vmem:[#allocation4 + $0xf8] sm:$0xff]
        %v8298 = vld [vmem:[#allocation4 + $0x100] sm:$0xff]
        %v8299 = vld [vmem:[#allocation4 + $0x108] sm:$0xff]
        %v8300 = vld [vmem:[#allocation4 + $0x110] sm:$0xff]
        %v8301 = vld [vmem:[#allocation4 + $0x118] sm:$0xff]
        %v8302 = vld [vmem:[#allocation4 + $0x120] sm:$0xff]
        %v8303 = vld [vmem:[#allocation4 + $0x128] sm:$0xff]
        %v8304 = vld [vmem:[#allocation4 + $0x130] sm:$0xff]
        %v8305 = vld [vmem:[#allocation4 + $0x138] sm:$0xff]
        %v8306 = vld [vmem:[#allocation4 + $0x140] sm:$0xff]
        %v8307 = vld [vmem:[#allocation4 + $0x148] sm:$0xff]
        %v8308 = vld [vmem:[#allocation4 + $0x150] sm:$0xff]
        %v8309 = vld [vmem:[#allocation4 + $0x158] sm:$0xff]
        %v8310 = vld [vmem:[#allocation4 + $0x160] sm:$0xff]
        %v8311 = vld [vmem:[#allocation4 + $0x168] sm:$0xff]
        %v8312 = vld [vmem:[#allocation4 + $0x170] sm:$0xff]
        %v8313 = vld [vmem:[#allocation4 + $0x178] sm:$0xff]
        %v8314 = vld [vmem:[#allocation4 + $0x180] sm:$0xff]
        %v8315 = vld [vmem:[#allocation4 + $0x188] sm:$0xff]
        %v8316 = vld [vmem:[#allocation4 + $0x190] sm:$0xff]
        %v8317 = vld [vmem:[#allocation4 + $0x198] sm:$0xff]
        %v8318 = vld [vmem:[#allocation4 + $0x1a0] sm:$0xff]
        %v8319 = vld [vmem:[#allocation4 + $0x1a8] sm:$0xff]
        %v8320 = vld [vmem:[#allocation4 + $0x1b0] sm:$0xff]
        %v8321 = vld [vmem:[#allocation4 + $0x1b8] sm:$0xff]
        %v8322 = vld [vmem:[#allocation4 + $0x1c0] sm:$0xff]
        %v8323 = vld [vmem:[#allocation4 + $0x1c8] sm:$0xff]
        %v8324 = vld [vmem:[#allocation4 + $0x1d0] sm:$0xff]
        %v8325 = vld [vmem:[#allocation4 + $0x1d8] sm:$0xff]
        %v8326 = vld [vmem:[#allocation4 + $0x1e0] sm:$0xff]
        %v8327 = vld [vmem:[#allocation4 + $0x1e8] sm:$0xff]
        %v8328 = vld [vmem:[#allocation4 + $0x1f0] sm:$0xff]
        %v8329 = vld [vmem:[#allocation4 + $0x1f8] sm:$0xff]
        %v8330 = vadd.f32 %v8266, %v8012
        %v8331 = vadd.f32 %v8267, %v8015
        %v8332 = vadd.f32 %v8268, %v8020
        %v8333 = vadd.f32 %v8269, %v8023
        %v8334 = vadd.f32 %v8270, %v8028
        %v8335 = vadd.f32 %v8271, %v8031
        %v8336 = vadd.f32 %v8272, %v8036
        %v8337 = vadd.f32 %v8273, %v8039
        %v8338 = vadd.f32 %v8274, %v8044
        %v8339 = vadd.f32 %v8275, %v8047
        %v8340 = vadd.f32 %v8276, %v8052
        %v8341 = vadd.f32 %v8277, %v8055
        %v8342 = vadd.f32 %v8278, %v8060
        %v8343 = vadd.f32 %v8279, %v8063
        %v8344 = vadd.f32 %v8280, %v8068
        %v8345 = vadd.f32 %v8281, %v8071
        %v8346 = vadd.f32 %v8282, %v8076
        %v8347 = vadd.f32 %v8283, %v8079
        %v8348 = vadd.f32 %v8284, %v8084
        %v8349 = vadd.f32 %v8285, %v8087
        %v8350 = vadd.f32 %v8286, %v8092
        %v8351 = vadd.f32 %v8287, %v8095
        %v8352 = vadd.f32 %v8288, %v8100
        %v8353 = vadd.f32 %v8289, %v8103
        %v8354 = vadd.f32 %v8290, %v8108
        %v8355 = vadd.f32 %v8291, %v8111
        %v8356 = vadd.f32 %v8292, %v8116
        %v8357 = vadd.f32 %v8293, %v8119
        %v8358 = vadd.f32 %v8294, %v8124
        %v8359 = vadd.f32 %v8295, %v8127
        %v8360 = vadd.f32 %v8296, %v8132
        %v8361 = vadd.f32 %v8297, %v8135
        %v8362 = vadd.f32 %v8298, %v8140
        %v8363 = vadd.f32 %v8299, %v8143
        %v8364 = vadd.f32 %v8300, %v8148
        %v8365 = vadd.f32 %v8301, %v8151
        %v8366 = vadd.f32 %v8302, %v8156
        %v8367 = vadd.f32 %v8303, %v8159
        %v8368 = vadd.f32 %v8304, %v8164
        %v8369 = vadd.f32 %v8305, %v8167
        %v8370 = vadd.f32 %v8306, %v8172
        %v8371 = vadd.f32 %v8307, %v8175
        %v8372 = vadd.f32 %v8308, %v8180
        %v8373 = vadd.f32 %v8309, %v8183
        %v8374 = vadd.f32 %v8310, %v8188
        %v8375 = vadd.f32 %v8311, %v8191
        %v8376 = vadd.f32 %v8312, %v8196
        %v8377 = vadd.f32 %v8313, %v8199
        %v8378 = vadd.f32 %v8314, %v8204
        %v8379 = vadd.f32 %v8315, %v8207
        %v8380 = vadd.f32 %v8316, %v8212
        %v8381 = vadd.f32 %v8317, %v8215
        %v8382 = vadd.f32 %v8318, %v8220
        %v8383 = vadd.f32 %v8319, %v8223
        %v8384 = vadd.f32 %v8320, %v8228
        %v8385 = vadd.f32 %v8321, %v8231
        %v8386 = vadd.f32 %v8322, %v8236
        %v8387 = vadd.f32 %v8323, %v8239
        %v8388 = vadd.f32 %v8324, %v8244
        %v8389 = vadd.f32 %v8325, %v8247
        %v8390 = vadd.f32 %v8326, %v8252
        %v8391 = vadd.f32 %v8327, %v8255
        %v8392 = vadd.f32 %v8328, %v8260
        %v8393 = vadd.f32 %v8329, %v8263
        %8394 = vst.msk [vmem:[#allocation4] sm:$0xff] %vm2746, %v8330
        %8395 = vst.msk [vmem:[#allocation4 + $0x8] sm:$0xff] %vm2746, %v8331
        %8396 = vst.msk [vmem:[#allocation4 + $0x10] sm:$0xff] %vm2746, %v8332
        %8397 = vst.msk [vmem:[#allocation4 + $0x18] sm:$0xff] %vm2746, %v8333
        %8398 = vst.msk [vmem:[#allocation4 + $0x20] sm:$0xff] %vm2746, %v8334
        %8399 = vst.msk [vmem:[#allocation4 + $0x28] sm:$0xff] %vm2746, %v8335
        %8400 = vst.msk [vmem:[#allocation4 + $0x30] sm:$0xff] %vm2746, %v8336
        %8401 = vst.msk [vmem:[#allocation4 + $0x38] sm:$0xff] %vm2746, %v8337
        %8402 = vst.msk [vmem:[#allocation4 + $0x40] sm:$0xff] %vm2746, %v8338
        %8403 = vst.msk [vmem:[#allocation4 + $0x48] sm:$0xff] %vm2746, %v8339
        %8404 = vst.msk [vmem:[#allocation4 + $0x50] sm:$0xff] %vm2746, %v8340
        %8405 = vst.msk [vmem:[#allocation4 + $0x58] sm:$0xff] %vm2746, %v8341
        %8406 = vst.msk [vmem:[#allocation4 + $0x60] sm:$0xff] %vm2746, %v8342
        %8407 = vst.msk [vmem:[#allocation4 + $0x68] sm:$0xff] %vm2746, %v8343
        %8408 = vst.msk [vmem:[#allocation4 + $0x70] sm:$0xff] %vm2746, %v8344
        %8409 = vst.msk [vmem:[#allocation4 + $0x78] sm:$0xff] %vm2746, %v8345
        %8410 = vst.msk [vmem:[#allocation4 + $0x80] sm:$0xff] %vm2746, %v8346
        %8411 = vst.msk [vmem:[#allocation4 + $0x88] sm:$0xff] %vm2746, %v8347
        %8412 = vst.msk [vmem:[#allocation4 + $0x90] sm:$0xff] %vm2746, %v8348
        %8413 = vst.msk [vmem:[#allocation4 + $0x98] sm:$0xff] %vm2746, %v8349
        %8414 = vst.msk [vmem:[#allocation4 + $0xa0] sm:$0xff] %vm2746, %v8350
        %8415 = vst.msk [vmem:[#allocation4 + $0xa8] sm:$0xff] %vm2746, %v8351
        %8416 = vst.msk [vmem:[#allocation4 + $0xb0] sm:$0xff] %vm2746, %v8352
        %8417 = vst.msk [vmem:[#allocation4 + $0xb8] sm:$0xff] %vm2746, %v8353
        %8418 = vst.msk [vmem:[#allocation4 + $0xc0] sm:$0xff] %vm2746, %v8354
        %8419 = vst.msk [vmem:[#allocation4 + $0xc8] sm:$0xff] %vm2746, %v8355
        %8420 = vst.msk [vmem:[#allocation4 + $0xd0] sm:$0xff] %vm2746, %v8356
        %8421 = vst.msk [vmem:[#allocation4 + $0xd8] sm:$0xff] %vm2746, %v8357
        %8422 = vst.msk [vmem:[#allocation4 + $0xe0] sm:$0xff] %vm2746, %v8358
        %8423 = vst.msk [vmem:[#allocation4 + $0xe8] sm:$0xff] %vm2746, %v8359
        %8424 = vst.msk [vmem:[#allocation4 + $0xf0] sm:$0xff] %vm2746, %v8360
        %8425 = vst.msk [vmem:[#allocation4 + $0xf8] sm:$0xff] %vm2746, %v8361
        %8426 = vst.msk [vmem:[#allocation4 + $0x100] sm:$0xff] %vm2746, %v8362
        %8427 = vst.msk [vmem:[#allocation4 + $0x108] sm:$0xff] %vm2746, %v8363
        %8428 = vst.msk [vmem:[#allocation4 + $0x110] sm:$0xff] %vm2746, %v8364
        %8429 = vst.msk [vmem:[#allocation4 + $0x118] sm:$0xff] %vm2746, %v8365
        %8430 = vst.msk [vmem:[#allocation4 + $0x120] sm:$0xff] %vm2746, %v8366
        %8431 = vst.msk [vmem:[#allocation4 + $0x128] sm:$0xff] %vm2746, %v8367
        %8432 = vst.msk [vmem:[#allocation4 + $0x130] sm:$0xff] %vm2746, %v8368
        %8433 = vst.msk [vmem:[#allocation4 + $0x138] sm:$0xff] %vm2746, %v8369
        %8434 = vst.msk [vmem:[#allocation4 + $0x140] sm:$0xff] %vm2746, %v8370
        %8435 = vst.msk [vmem:[#allocation4 + $0x148] sm:$0xff] %vm2746, %v8371
        %8436 = vst.msk [vmem:[#allocation4 + $0x150] sm:$0xff] %vm2746, %v8372
        %8437 = vst.msk [vmem:[#allocation4 + $0x158] sm:$0xff] %vm2746, %v8373
        %8438 = vst.msk [vmem:[#allocation4 + $0x160] sm:$0xff] %vm2746, %v8374
        %8439 = vst.msk [vmem:[#allocation4 + $0x168] sm:$0xff] %vm2746, %v8375
        %8440 = vst.msk [vmem:[#allocation4 + $0x170] sm:$0xff] %vm2746, %v8376
        %8441 = vst.msk [vmem:[#allocation4 + $0x178] sm:$0xff] %vm2746, %v8377
        %8442 = vst.msk [vmem:[#allocation4 + $0x180] sm:$0xff] %vm2746, %v8378
        %8443 = vst.msk [vmem:[#allocation4 + $0x188] sm:$0xff] %vm2746, %v8379
        %8444 = vst.msk [vmem:[#allocation4 + $0x190] sm:$0xff] %vm2746, %v8380
        %8445 = vst.msk [vmem:[#allocation4 + $0x198] sm:$0xff] %vm2746, %v8381
        %8446 = vst.msk [vmem:[#allocation4 + $0x1a0] sm:$0xff] %vm2746, %v8382
        %8447 = vst.msk [vmem:[#allocation4 + $0x1a8] sm:$0xff] %vm2746, %v8383
        %8448 = vst.msk [vmem:[#allocation4 + $0x1b0] sm:$0xff] %vm2746, %v8384
        %8449 = vst.msk [vmem:[#allocation4 + $0x1b8] sm:$0xff] %vm2746, %v8385
        %8450 = vst.msk [vmem:[#allocation4 + $0x1c0] sm:$0xff] %vm2746, %v8386
        %8451 = vst.msk [vmem:[#allocation4 + $0x1c8] sm:$0xff] %vm2746, %v8387
        %8452 = vst.msk [vmem:[#allocation4 + $0x1d0] sm:$0xff] %vm2746, %v8388
        %8453 = vst.msk [vmem:[#allocation4 + $0x1d8] sm:$0xff] %vm2746, %v8389
        %8454 = vst.msk [vmem:[#allocation4 + $0x1e0] sm:$0xff] %vm2746, %v8390
        %8455 = vst.msk [vmem:[#allocation4 + $0x1e8] sm:$0xff] %vm2746, %v8391
        %8456 = vst.msk [vmem:[#allocation4 + $0x1f0] sm:$0xff] %vm2746, %v8392
        %8457 = vst.msk [vmem:[#allocation4 + $0x1f8] sm:$0xff] %vm2746, %v8393
        %s8458 = scalar_lea.vmem [#allocation3], 304
        %v8459 = vld [vmem:[%s8458] sm:$0xf]
        %v8460 = vld [vmem:[%s8458 + $0x4] sm:$0xf]
        %v8461 = vld [vmem:[%s8458 + $0x8] sm:$0xf]
        %v8462 = vld [vmem:[%s8458 + $0xc] sm:$0xf]
        %v8463 = vld [vmem:[%s8458 + $0x10] sm:$0xf]
        %v8464 = vld [vmem:[%s8458 + $0x14] sm:$0xf]
        %v8465 = vld [vmem:[%s8458 + $0x18] sm:$0xf]
        %v8466 = vld [vmem:[%s8458 + $0x1c] sm:$0xf]
        %v8467 = vld [vmem:[%s8458 + $0x20] sm:$0xf]
        %v8468 = vld [vmem:[%s8458 + $0x24] sm:$0xf]
        %v8469 = vld [vmem:[%s8458 + $0x28] sm:$0xf]
        %v8470 = vld [vmem:[%s8458 + $0x2c] sm:$0xf]
        %v8471 = vld [vmem:[%s8458 + $0x30] sm:$0xf]
        %v8472 = vld [vmem:[%s8458 + $0x34] sm:$0xf]
        %v8473 = vld [vmem:[%s8458 + $0x38] sm:$0xf]
        %v8474 = vld [vmem:[%s8458 + $0x3c] sm:$0xf]
        %v8475 = vld [vmem:[%s8458 + $0x40] sm:$0xf]
        %v8476 = vld [vmem:[%s8458 + $0x44] sm:$0xf]
        %v8477 = vld [vmem:[%s8458 + $0x48] sm:$0xf]
        %v8478 = vld [vmem:[%s8458 + $0x4c] sm:$0xf]
        %v8479 = vld [vmem:[%s8458 + $0x50] sm:$0xf]
        %v8480 = vld [vmem:[%s8458 + $0x54] sm:$0xf]
        %v8481 = vld [vmem:[%s8458 + $0x58] sm:$0xf]
        %v8482 = vld [vmem:[%s8458 + $0x5c] sm:$0xf]
        %v8483 = vld [vmem:[%s8458 + $0x60] sm:$0xf]
        %v8484 = vld [vmem:[%s8458 + $0x64] sm:$0xf]
        %v8485 = vld [vmem:[%s8458 + $0x68] sm:$0xf]
        %v8486 = vld [vmem:[%s8458 + $0x6c] sm:$0xf]
        %v8487 = vld [vmem:[%s8458 + $0x70] sm:$0xf]
        %v8488 = vld [vmem:[%s8458 + $0x74] sm:$0xf]
        %v8489 = vld [vmem:[%s8458 + $0x78] sm:$0xf]
        %v8490 = vld [vmem:[%s8458 + $0x7c] sm:$0xf]
        %v8491 = vld [vmem:[%s8458 + $0x90] sm:$0xf]
        %v8492 = vld [vmem:[%s8458 + $0x94] sm:$0xf]
        %v8493 = vld [vmem:[%s8458 + $0x98] sm:$0xf]
        %v8494 = vld [vmem:[%s8458 + $0x9c] sm:$0xf]
        %v8495 = vld [vmem:[%s8458 + $0xa0] sm:$0xf]
        %v8496 = vld [vmem:[%s8458 + $0xa4] sm:$0xf]
        %v8497 = vld [vmem:[%s8458 + $0xa8] sm:$0xf]
        %v8498 = vld [vmem:[%s8458 + $0xac] sm:$0xf]
        %v8499 = vld [vmem:[%s8458 + $0xb0] sm:$0xf]
        %v8500 = vld [vmem:[%s8458 + $0xb4] sm:$0xf]
        %v8501 = vld [vmem:[%s8458 + $0xb8] sm:$0xf]
        %v8502 = vld [vmem:[%s8458 + $0xbc] sm:$0xf]
        %v8503 = vld [vmem:[%s8458 + $0xc0] sm:$0xf]
        %v8504 = vld [vmem:[%s8458 + $0xc4] sm:$0xf]
        %v8505 = vld [vmem:[%s8458 + $0xc8] sm:$0xf]
        %v8506 = vld [vmem:[%s8458 + $0xcc] sm:$0xf]
        %v8507 = vld [vmem:[%s8458 + $0xd0] sm:$0xf]
        %v8508 = vld [vmem:[%s8458 + $0xd4] sm:$0xf]
        %v8509 = vld [vmem:[%s8458 + $0xd8] sm:$0xf]
        %v8510 = vld [vmem:[%s8458 + $0xdc] sm:$0xf]
        %v8511 = vld [vmem:[%s8458 + $0xe0] sm:$0xf]
        %v8512 = vld [vmem:[%s8458 + $0xe4] sm:$0xf]
        %v8513 = vld [vmem:[%s8458 + $0xe8] sm:$0xf]
        %v8514 = vld [vmem:[%s8458 + $0xec] sm:$0xf]
        %v8515 = vld [vmem:[%s8458 + $0xf0] sm:$0xf]
        %v8516 = vld [vmem:[%s8458 + $0xf4] sm:$0xf]
        %v8517 = vld [vmem:[%s8458 + $0xf8] sm:$0xf]
        %v8518 = vld [vmem:[%s8458 + $0xfc] sm:$0xf]
        %v8519 = vld [vmem:[%s8458 + $0x100] sm:$0xf]
        %v8520 = vld [vmem:[%s8458 + $0x104] sm:$0xf]
        %v8521 = vld [vmem:[%s8458 + $0x108] sm:$0xf]
        %v8522 = vld [vmem:[%s8458 + $0x10c] sm:$0xf]
        %s8523 = scalar_lea.vmem %s1, 16
        %v8524 = vld [vmem:[%s8523] sm:$0x3]
        %v8589 = vunpack.c.l.b16 %v8459
        %v8590 = vunpack.c.l.b16 %v8460
        %v8591 = vunpack.c.l.b16 %v8461
        %v8592 = vunpack.c.l.b16 %v8462
        %v8593 = vunpack.c.l.b16 %v8463
        %v8594 = vunpack.c.l.b16 %v8464
        %v8595 = vunpack.c.l.b16 %v8465
        %v8596 = vunpack.c.l.b16 %v8466
        %v8597 = vunpack.c.l.b16 %v8467
        %v8598 = vunpack.c.l.b16 %v8468
        %v8599 = vunpack.c.l.b16 %v8469
        %v8600 = vunpack.c.l.b16 %v8470
        %v8601 = vunpack.c.l.b16 %v8471
        %v8602 = vunpack.c.l.b16 %v8472
        %v8603 = vunpack.c.l.b16 %v8473
        %v8604 = vunpack.c.l.b16 %v8474
        %v8605 = vunpack.c.l.b16 %v8475
        %v8606 = vunpack.c.l.b16 %v8476
        %v8607 = vunpack.c.l.b16 %v8477
        %v8608 = vunpack.c.l.b16 %v8478
        %v8609 = vunpack.c.l.b16 %v8479
        %v8610 = vunpack.c.l.b16 %v8480
        %v8611 = vunpack.c.l.b16 %v8481
        %v8612 = vunpack.c.l.b16 %v8482
        %v8613 = vunpack.c.l.b16 %v8483
        %v8614 = vunpack.c.l.b16 %v8484
        %v8615 = vunpack.c.l.b16 %v8485
        %v8616 = vunpack.c.l.b16 %v8486
        %v8617 = vunpack.c.l.b16 %v8487
        %v8618 = vunpack.c.l.b16 %v8488
        %v8619 = vunpack.c.l.b16 %v8489
        %v8620 = vunpack.c.l.b16 %v8490
        %v8621 = vunpack.c.l.b16 %v8491
        %v8622 = vunpack.c.l.b16 %v8492
        %v8623 = vunpack.c.l.b16 %v8493
        %v8624 = vunpack.c.l.b16 %v8494
        %v8625 = vunpack.c.l.b16 %v8495
        %v8626 = vunpack.c.l.b16 %v8496
        %v8627 = vunpack.c.l.b16 %v8497
        %v8628 = vunpack.c.l.b16 %v8498
        %v8629 = vunpack.c.l.b16 %v8499
        %v8630 = vunpack.c.l.b16 %v8500
        %v8631 = vunpack.c.l.b16 %v8501
        %v8632 = vunpack.c.l.b16 %v8502
        %v8633 = vunpack.c.l.b16 %v8503
        %v8634 = vunpack.c.l.b16 %v8504
        %v8635 = vunpack.c.l.b16 %v8505
        %v8636 = vunpack.c.l.b16 %v8506
        %v8637 = vunpack.c.l.b16 %v8507
        %v8638 = vunpack.c.l.b16 %v8508
        %v8639 = vunpack.c.l.b16 %v8509
        %v8640 = vunpack.c.l.b16 %v8510
        %v8641 = vunpack.c.l.b16 %v8511
        %v8642 = vunpack.c.l.b16 %v8512
        %v8643 = vunpack.c.l.b16 %v8513
        %v8644 = vunpack.c.l.b16 %v8514
        %v8645 = vunpack.c.l.b16 %v8515
        %v8646 = vunpack.c.l.b16 %v8516
        %v8647 = vunpack.c.l.b16 %v8517
        %v8648 = vunpack.c.l.b16 %v8518
        %v8649 = vunpack.c.l.b16 %v8519
        %v8650 = vunpack.c.l.b16 %v8520
        %v8651 = vunpack.c.l.b16 %v8521
        %v8652 = vunpack.c.l.b16 %v8522
        %v8653 = vpack.c.b16 %v8590, %v8589
        %v8654 = vpack.c.b16 %v8592, %v8591
        %v8655 = vpack.c.b16 %v8594, %v8593
        %v8656 = vpack.c.b16 %v8596, %v8595
        %v8657 = vpack.c.b16 %v8598, %v8597
        %v8658 = vpack.c.b16 %v8600, %v8599
        %v8659 = vpack.c.b16 %v8602, %v8601
        %v8660 = vpack.c.b16 %v8604, %v8603
        %v8661 = vpack.c.b16 %v8606, %v8605
        %v8662 = vpack.c.b16 %v8608, %v8607
        %v8663 = vpack.c.b16 %v8610, %v8609
        %v8664 = vpack.c.b16 %v8612, %v8611
        %v8665 = vpack.c.b16 %v8614, %v8613
        %v8666 = vpack.c.b16 %v8616, %v8615
        %v8667 = vpack.c.b16 %v8618, %v8617
        %v8668 = vpack.c.b16 %v8620, %v8619
        %v8669 = vpack.c.b16 %v8622, %v8621
        %v8670 = vpack.c.b16 %v8624, %v8623
        %v8671 = vpack.c.b16 %v8626, %v8625
        %v8672 = vpack.c.b16 %v8628, %v8627
        %v8673 = vpack.c.b16 %v8630, %v8629
        %v8674 = vpack.c.b16 %v8632, %v8631
        %v8675 = vpack.c.b16 %v8634, %v8633
        %v8676 = vpack.c.b16 %v8636, %v8635
        %v8677 = vpack.c.b16 %v8638, %v8637
        %v8678 = vpack.c.b16 %v8640, %v8639
        %v8679 = vpack.c.b16 %v8642, %v8641
        %v8680 = vpack.c.b16 %v8644, %v8643
        %v8681 = vpack.c.b16 %v8646, %v8645
        %v8682 = vpack.c.b16 %v8648, %v8647
        %v8683 = vpack.c.b16 %v8650, %v8649
        %v8684 = vpack.c.b16 %v8652, %v8651
        %v8686 = vsel %vm340, %v8653, 0
        %v8689 = vsel %vm340, %v8654, 0
        %v8692 = vsel %vm340, %v8655, 0
        %v8695 = vsel %vm340, %v8656, 0
        %v8698 = vsel %vm340, %v8657, 0
        %v8701 = vsel %vm340, %v8658, 0
        %v8704 = vsel %vm340, %v8659, 0
        %v8707 = vsel %vm340, %v8660, 0
        %v8710 = vsel %vm340, %v8661, 0
        %v8713 = vsel %vm340, %v8662, 0
        %v8716 = vsel %vm340, %v8663, 0
        %v8719 = vsel %vm340, %v8664, 0
        %v8722 = vsel %vm340, %v8665, 0
        %v8725 = vsel %vm340, %v8666, 0
        %v8728 = vsel %vm340, %v8667, 0
        %v8731 = vsel %vm340, %v8668, 0
        %v8734 = vsel %vm340, %v8669, 0
        %v8737 = vsel %vm340, %v8670, 0
        %v8740 = vsel %vm340, %v8671, 0
        %v8743 = vsel %vm340, %v8672, 0
        %v8746 = vsel %vm340, %v8673, 0
        %v8749 = vsel %vm340, %v8674, 0
        %v8752 = vsel %vm340, %v8675, 0
        %v8755 = vsel %vm340, %v8676, 0
        %v8758 = vsel %vm340, %v8677, 0
        %v8761 = vsel %vm340, %v8678, 0
        %v8764 = vsel %vm340, %v8679, 0
        %v8767 = vsel %vm340, %v8680, 0
        %v8770 = vsel %vm340, %v8681, 0
        %v8773 = vsel %vm340, %v8682, 0
        %v8776 = vsel %vm340, %v8683, 0
        %v8779 = vsel %vm340, %v8684, 0
        %v8782 = vsel %vm2453, %v8524, 0
        %8784 = vmatprep.subr.bf16.mxu0 0
        %8785 = vmatpush1.bf16.msra.mxu0 0
        %8786 = vmatprep.subr.bf16.mxu0 0
        %8787 = vmatpush1.bf16.msra.mxu0 0
        %8788 = vmatprep.subr.bf16.mxu0 0
        %8789 = vmatpush1.bf16.msra.mxu0 0
        %8790 = vmatprep.subr.bf16.mxu0 0
        %8791 = vmatpush1.bf16.msra.mxu0 0
        %8792 = vmatprep.subr.bf16.mxu0 0
        %8793 = vmatpush1.bf16.msra.mxu0 0
        %8794 = vmatprep.subr.bf16.mxu0 0
        %8795 = vmatpush1.bf16.msra.mxu0 0
        %8796 = vmatprep.subr.bf16.mxu0 0
        %8797 = vmatpush1.bf16.msra.mxu0 0
        %8798 = vmatprep.subr.bf16.mxu0 0
        %8799 = vmatpush1.bf16.msra.mxu0 %v8782
        %8800 = vmatprep.subr.bf16.mxu0 0
        %8801 = vmatpush2.bf16.msra.mxu0 0
        %8802 = vmatprep.subr.bf16.mxu0 0
        %8803 = vmatpush2.bf16.msra.mxu0 0
        %8804 = vmatprep.subr.bf16.mxu0 0
        %8805 = vmatpush2.bf16.msra.mxu0 0
        %8806 = vmatprep.subr.bf16.mxu0 0
        %8807 = vmatpush2.bf16.msra.mxu0 0
        %8808 = vmatprep.subr.bf16.mxu0 0
        %8809 = vmatpush2.bf16.msra.mxu0 0
        %8810 = vmatprep.subr.bf16.mxu0 0
        %8811 = vmatpush2.bf16.msra.mxu0 0
        %8812 = vmatprep.subr.bf16.mxu0 0
        %8813 = vmatpush2.bf16.msra.mxu0 0
        %8814 = vmatprep.subr.bf16.mxu0 0
        %8815 = vmatpush2.bf16.msra.mxu0 0
        %8816 = vmatprep.mubr.bf16.mxu0 0
        %8817 = vmatmul.mubr.bf16.gmra.mxu0 %v8686
        %v8818 = vpop.f32.mrf.mxu0
        %v8819 = vadd.f32 0.0, %v8818
        %v8820 = vpop.f32.mrf.mxu0
        %v8821 = vpop.f32.mrf.mxu0
        %v8822 = vadd.f32 0.0, %v8821
        %v8823 = vpop.f32.mrf.mxu0
        %8824 = vmatprep.mubr.bf16.mxu0 0
        %8825 = vmatmul.mubr.bf16.gmra.mxu0 %v8689
        %v8826 = vpop.f32.mrf.mxu0
        %v8827 = vadd.f32 0.0, %v8826
        %v8828 = vpop.f32.mrf.mxu0
        %v8829 = vpop.f32.mrf.mxu0
        %v8830 = vadd.f32 0.0, %v8829
        %v8831 = vpop.f32.mrf.mxu0
        %8832 = vmatprep.mubr.bf16.mxu0 0
        %8833 = vmatmul.mubr.bf16.gmra.mxu0 %v8692
        %v8834 = vpop.f32.mrf.mxu0
        %v8835 = vadd.f32 0.0, %v8834
        %v8836 = vpop.f32.mrf.mxu0
        %v8837 = vpop.f32.mrf.mxu0
        %v8838 = vadd.f32 0.0, %v8837
        %v8839 = vpop.f32.mrf.mxu0
        %8840 = vmatprep.mubr.bf16.mxu0 0
        %8841 = vmatmul.mubr.bf16.gmra.mxu0 %v8695
        %v8842 = vpop.f32.mrf.mxu0
        %v8843 = vadd.f32 0.0, %v8842
        %v8844 = vpop.f32.mrf.mxu0
        %v8845 = vpop.f32.mrf.mxu0
        %v8846 = vadd.f32 0.0, %v8845
        %v8847 = vpop.f32.mrf.mxu0
        %8848 = vmatprep.mubr.bf16.mxu0 0
        %8849 = vmatmul.mubr.bf16.gmra.mxu0 %v8698
        %v8850 = vpop.f32.mrf.mxu0
        %v8851 = vadd.f32 0.0, %v8850
        %v8852 = vpop.f32.mrf.mxu0
        %v8853 = vpop.f32.mrf.mxu0
        %v8854 = vadd.f32 0.0, %v8853
        %v8855 = vpop.f32.mrf.mxu0
        %8856 = vmatprep.mubr.bf16.mxu0 0
        %8857 = vmatmul.mubr.bf16.gmra.mxu0 %v8701
        %v8858 = vpop.f32.mrf.mxu0
        %v8859 = vadd.f32 0.0, %v8858
        %v8860 = vpop.f32.mrf.mxu0
        %v8861 = vpop.f32.mrf.mxu0
        %v8862 = vadd.f32 0.0, %v8861
        %v8863 = vpop.f32.mrf.mxu0
        %8864 = vmatprep.mubr.bf16.mxu0 0
        %8865 = vmatmul.mubr.bf16.gmra.mxu0 %v8704
        %v8866 = vpop.f32.mrf.mxu0
        %v8867 = vadd.f32 0.0, %v8866
        %v8868 = vpop.f32.mrf.mxu0
        %v8869 = vpop.f32.mrf.mxu0
        %v8870 = vadd.f32 0.0, %v8869
        %v8871 = vpop.f32.mrf.mxu0
        %8872 = vmatprep.mubr.bf16.mxu0 0
        %8873 = vmatmul.mubr.bf16.gmra.mxu0 %v8707
        %v8874 = vpop.f32.mrf.mxu0
        %v8875 = vadd.f32 0.0, %v8874
        %v8876 = vpop.f32.mrf.mxu0
        %v8877 = vpop.f32.mrf.mxu0
        %v8878 = vadd.f32 0.0, %v8877
        %v8879 = vpop.f32.mrf.mxu0
        %8880 = vmatprep.mubr.bf16.mxu0 0
        %8881 = vmatmul.mubr.bf16.gmra.mxu0 %v8710
        %v8882 = vpop.f32.mrf.mxu0
        %v8883 = vadd.f32 0.0, %v8882
        %v8884 = vpop.f32.mrf.mxu0
        %v8885 = vpop.f32.mrf.mxu0
        %v8886 = vadd.f32 0.0, %v8885
        %v8887 = vpop.f32.mrf.mxu0
        %8888 = vmatprep.mubr.bf16.mxu0 0
        %8889 = vmatmul.mubr.bf16.gmra.mxu0 %v8713
        %v8890 = vpop.f32.mrf.mxu0
        %v8891 = vadd.f32 0.0, %v8890
        %v8892 = vpop.f32.mrf.mxu0
        %v8893 = vpop.f32.mrf.mxu0
        %v8894 = vadd.f32 0.0, %v8893
        %v8895 = vpop.f32.mrf.mxu0
        %8896 = vmatprep.mubr.bf16.mxu0 0
        %8897 = vmatmul.mubr.bf16.gmra.mxu0 %v8716
        %v8898 = vpop.f32.mrf.mxu0
        %v8899 = vadd.f32 0.0, %v8898
        %v8900 = vpop.f32.mrf.mxu0
        %v8901 = vpop.f32.mrf.mxu0
        %v8902 = vadd.f32 0.0, %v8901
        %v8903 = vpop.f32.mrf.mxu0
        %8904 = vmatprep.mubr.bf16.mxu0 0
        %8905 = vmatmul.mubr.bf16.gmra.mxu0 %v8719
        %v8906 = vpop.f32.mrf.mxu0
        %v8907 = vadd.f32 0.0, %v8906
        %v8908 = vpop.f32.mrf.mxu0
        %v8909 = vpop.f32.mrf.mxu0
        %v8910 = vadd.f32 0.0, %v8909
        %v8911 = vpop.f32.mrf.mxu0
        %8912 = vmatprep.mubr.bf16.mxu0 0
        %8913 = vmatmul.mubr.bf16.gmra.mxu0 %v8722
        %v8914 = vpop.f32.mrf.mxu0
        %v8915 = vadd.f32 0.0, %v8914
        %v8916 = vpop.f32.mrf.mxu0
        %v8917 = vpop.f32.mrf.mxu0
        %v8918 = vadd.f32 0.0, %v8917
        %v8919 = vpop.f32.mrf.mxu0
        %8920 = vmatprep.mubr.bf16.mxu0 0
        %8921 = vmatmul.mubr.bf16.gmra.mxu0 %v8725
        %v8922 = vpop.f32.mrf.mxu0
        %v8923 = vadd.f32 0.0, %v8922
        %v8924 = vpop.f32.mrf.mxu0
        %v8925 = vpop.f32.mrf.mxu0
        %v8926 = vadd.f32 0.0, %v8925
        %v8927 = vpop.f32.mrf.mxu0
        %8928 = vmatprep.mubr.bf16.mxu0 0
        %8929 = vmatmul.mubr.bf16.gmra.mxu0 %v8728
        %v8930 = vpop.f32.mrf.mxu0
        %v8931 = vadd.f32 0.0, %v8930
        %v8932 = vpop.f32.mrf.mxu0
        %v8933 = vpop.f32.mrf.mxu0
        %v8934 = vadd.f32 0.0, %v8933
        %v8935 = vpop.f32.mrf.mxu0
        %8936 = vmatprep.mubr.bf16.mxu0 0
        %8937 = vmatmul.mubr.bf16.gmra.mxu0 %v8731
        %v8938 = vpop.f32.mrf.mxu0
        %v8939 = vadd.f32 0.0, %v8938
        %v8940 = vpop.f32.mrf.mxu0
        %v8941 = vpop.f32.mrf.mxu0
        %v8942 = vadd.f32 0.0, %v8941
        %v8943 = vpop.f32.mrf.mxu0
        %8944 = vmatprep.mubr.bf16.mxu0 0
        %8945 = vmatmul.mubr.bf16.gmra.mxu0 %v8734
        %v8946 = vpop.f32.mrf.mxu0
        %v8947 = vadd.f32 0.0, %v8946
        %v8948 = vpop.f32.mrf.mxu0
        %v8949 = vpop.f32.mrf.mxu0
        %v8950 = vadd.f32 0.0, %v8949
        %v8951 = vpop.f32.mrf.mxu0
        %8952 = vmatprep.mubr.bf16.mxu0 0
        %8953 = vmatmul.mubr.bf16.gmra.mxu0 %v8737
        %v8954 = vpop.f32.mrf.mxu0
        %v8955 = vadd.f32 0.0, %v8954
        %v8956 = vpop.f32.mrf.mxu0
        %v8957 = vpop.f32.mrf.mxu0
        %v8958 = vadd.f32 0.0, %v8957
        %v8959 = vpop.f32.mrf.mxu0
        %8960 = vmatprep.mubr.bf16.mxu0 0
        %8961 = vmatmul.mubr.bf16.gmra.mxu0 %v8740
        %v8962 = vpop.f32.mrf.mxu0
        %v8963 = vadd.f32 0.0, %v8962
        %v8964 = vpop.f32.mrf.mxu0
        %v8965 = vpop.f32.mrf.mxu0
        %v8966 = vadd.f32 0.0, %v8965
        %v8967 = vpop.f32.mrf.mxu0
        %8968 = vmatprep.mubr.bf16.mxu0 0
        %8969 = vmatmul.mubr.bf16.gmra.mxu0 %v8743
        %v8970 = vpop.f32.mrf.mxu0
        %v8971 = vadd.f32 0.0, %v8970
        %v8972 = vpop.f32.mrf.mxu0
        %v8973 = vpop.f32.mrf.mxu0
        %v8974 = vadd.f32 0.0, %v8973
        %v8975 = vpop.f32.mrf.mxu0
        %8976 = vmatprep.mubr.bf16.mxu0 0
        %8977 = vmatmul.mubr.bf16.gmra.mxu0 %v8746
        %v8978 = vpop.f32.mrf.mxu0
        %v8979 = vadd.f32 0.0, %v8978
        %v8980 = vpop.f32.mrf.mxu0
        %v8981 = vpop.f32.mrf.mxu0
        %v8982 = vadd.f32 0.0, %v8981
        %v8983 = vpop.f32.mrf.mxu0
        %8984 = vmatprep.mubr.bf16.mxu0 0
        %8985 = vmatmul.mubr.bf16.gmra.mxu0 %v8749
        %v8986 = vpop.f32.mrf.mxu0
        %v8987 = vadd.f32 0.0, %v8986
        %v8988 = vpop.f32.mrf.mxu0
        %v8989 = vpop.f32.mrf.mxu0
        %v8990 = vadd.f32 0.0, %v8989
        %v8991 = vpop.f32.mrf.mxu0
        %8992 = vmatprep.mubr.bf16.mxu0 0
        %8993 = vmatmul.mubr.bf16.gmra.mxu0 %v8752
        %v8994 = vpop.f32.mrf.mxu0
        %v8995 = vadd.f32 0.0, %v8994
        %v8996 = vpop.f32.mrf.mxu0
        %v8997 = vpop.f32.mrf.mxu0
        %v8998 = vadd.f32 0.0, %v8997
        %v8999 = vpop.f32.mrf.mxu0
        %9000 = vmatprep.mubr.bf16.mxu0 0
        %9001 = vmatmul.mubr.bf16.gmra.mxu0 %v8755
        %v9002 = vpop.f32.mrf.mxu0
        %v9003 = vadd.f32 0.0, %v9002
        %v9004 = vpop.f32.mrf.mxu0
        %v9005 = vpop.f32.mrf.mxu0
        %v9006 = vadd.f32 0.0, %v9005
        %v9007 = vpop.f32.mrf.mxu0
        %9008 = vmatprep.mubr.bf16.mxu0 0
        %9009 = vmatmul.mubr.bf16.gmra.mxu0 %v8758
        %v9010 = vpop.f32.mrf.mxu0
        %v9011 = vadd.f32 0.0, %v9010
        %v9012 = vpop.f32.mrf.mxu0
        %v9013 = vpop.f32.mrf.mxu0
        %v9014 = vadd.f32 0.0, %v9013
        %v9015 = vpop.f32.mrf.mxu0
        %9016 = vmatprep.mubr.bf16.mxu0 0
        %9017 = vmatmul.mubr.bf16.gmra.mxu0 %v8761
        %v9018 = vpop.f32.mrf.mxu0
        %v9019 = vadd.f32 0.0, %v9018
        %v9020 = vpop.f32.mrf.mxu0
        %v9021 = vpop.f32.mrf.mxu0
        %v9022 = vadd.f32 0.0, %v9021
        %v9023 = vpop.f32.mrf.mxu0
        %9024 = vmatprep.mubr.bf16.mxu0 0
        %9025 = vmatmul.mubr.bf16.gmra.mxu0 %v8764
        %v9026 = vpop.f32.mrf.mxu0
        %v9027 = vadd.f32 0.0, %v9026
        %v9028 = vpop.f32.mrf.mxu0
        %v9029 = vpop.f32.mrf.mxu0
        %v9030 = vadd.f32 0.0, %v9029
        %v9031 = vpop.f32.mrf.mxu0
        %9032 = vmatprep.mubr.bf16.mxu0 0
        %9033 = vmatmul.mubr.bf16.gmra.mxu0 %v8767
        %v9034 = vpop.f32.mrf.mxu0
        %v9035 = vadd.f32 0.0, %v9034
        %v9036 = vpop.f32.mrf.mxu0
        %v9037 = vpop.f32.mrf.mxu0
        %v9038 = vadd.f32 0.0, %v9037
        %v9039 = vpop.f32.mrf.mxu0
        %9040 = vmatprep.mubr.bf16.mxu0 0
        %9041 = vmatmul.mubr.bf16.gmra.mxu0 %v8770
        %v9042 = vpop.f32.mrf.mxu0
        %v9043 = vadd.f32 0.0, %v9042
        %v9044 = vpop.f32.mrf.mxu0
        %v9045 = vpop.f32.mrf.mxu0
        %v9046 = vadd.f32 0.0, %v9045
        %v9047 = vpop.f32.mrf.mxu0
        %9048 = vmatprep.mubr.bf16.mxu0 0
        %9049 = vmatmul.mubr.bf16.gmra.mxu0 %v8773
        %v9050 = vpop.f32.mrf.mxu0
        %v9051 = vadd.f32 0.0, %v9050
        %v9052 = vpop.f32.mrf.mxu0
        %v9053 = vpop.f32.mrf.mxu0
        %v9054 = vadd.f32 0.0, %v9053
        %v9055 = vpop.f32.mrf.mxu0
        %9056 = vmatprep.mubr.bf16.mxu0 0
        %9057 = vmatmul.mubr.bf16.gmra.mxu0 %v8776
        %v9058 = vpop.f32.mrf.mxu0
        %v9059 = vadd.f32 0.0, %v9058
        %v9060 = vpop.f32.mrf.mxu0
        %v9061 = vpop.f32.mrf.mxu0
        %v9062 = vadd.f32 0.0, %v9061
        %v9063 = vpop.f32.mrf.mxu0
        %9064 = vmatprep.mubr.bf16.mxu0 0
        %9065 = vmatmul.mubr.bf16.gmra.mxu0 %v8779
        %v9066 = vpop.f32.mrf.mxu0
        %v9067 = vadd.f32 0.0, %v9066
        %v9068 = vpop.f32.mrf.mxu0
        %v9069 = vpop.f32.mrf.mxu0
        %v9070 = vadd.f32 0.0, %v9069
        %v9071 = vpop.f32.mrf.mxu0
        %9072 = vdwg.mxu0
        %v9073 = vld [vmem:[#allocation4] sm:$0xff]
        %v9074 = vld [vmem:[#allocation4 + $0x8] sm:$0xff]
        %v9075 = vld [vmem:[#allocation4 + $0x10] sm:$0xff]
        %v9076 = vld [vmem:[#allocation4 + $0x18] sm:$0xff]
        %v9077 = vld [vmem:[#allocation4 + $0x20] sm:$0xff]
        %v9078 = vld [vmem:[#allocation4 + $0x28] sm:$0xff]
        %v9079 = vld [vmem:[#allocation4 + $0x30] sm:$0xff]
        %v9080 = vld [vmem:[#allocation4 + $0x38] sm:$0xff]
        %v9081 = vld [vmem:[#allocation4 + $0x40] sm:$0xff]
        %v9082 = vld [vmem:[#allocation4 + $0x48] sm:$0xff]
        %v9083 = vld [vmem:[#allocation4 + $0x50] sm:$0xff]
        %v9084 = vld [vmem:[#allocation4 + $0x58] sm:$0xff]
        %v9085 = vld [vmem:[#allocation4 + $0x60] sm:$0xff]
        %v9086 = vld [vmem:[#allocation4 + $0x68] sm:$0xff]
        %v9087 = vld [vmem:[#allocation4 + $0x70] sm:$0xff]
        %v9088 = vld [vmem:[#allocation4 + $0x78] sm:$0xff]
        %v9089 = vld [vmem:[#allocation4 + $0x80] sm:$0xff]
        %v9090 = vld [vmem:[#allocation4 + $0x88] sm:$0xff]
        %v9091 = vld [vmem:[#allocation4 + $0x90] sm:$0xff]
        %v9092 = vld [vmem:[#allocation4 + $0x98] sm:$0xff]
        %v9093 = vld [vmem:[#allocation4 + $0xa0] sm:$0xff]
        %v9094 = vld [vmem:[#allocation4 + $0xa8] sm:$0xff]
        %v9095 = vld [vmem:[#allocation4 + $0xb0] sm:$0xff]
        %v9096 = vld [vmem:[#allocation4 + $0xb8] sm:$0xff]
        %v9097 = vld [vmem:[#allocation4 + $0xc0] sm:$0xff]
        %v9098 = vld [vmem:[#allocation4 + $0xc8] sm:$0xff]
        %v9099 = vld [vmem:[#allocation4 + $0xd0] sm:$0xff]
        %v9100 = vld [vmem:[#allocation4 + $0xd8] sm:$0xff]
        %v9101 = vld [vmem:[#allocation4 + $0xe0] sm:$0xff]
        %v9102 = vld [vmem:[#allocation4 + $0xe8] sm:$0xff]
        %v9103 = vld [vmem:[#allocation4 + $0xf0] sm:$0xff]
        %v9104 = vld [vmem:[#allocation4 + $0xf8] sm:$0xff]
        %v9105 = vld [vmem:[#allocation4 + $0x100] sm:$0xff]
        %v9106 = vld [vmem:[#allocation4 + $0x108] sm:$0xff]
        %v9107 = vld [vmem:[#allocation4 + $0x110] sm:$0xff]
        %v9108 = vld [vmem:[#allocation4 + $0x118] sm:$0xff]
        %v9109 = vld [vmem:[#allocation4 + $0x120] sm:$0xff]
        %v9110 = vld [vmem:[#allocation4 + $0x128] sm:$0xff]
        %v9111 = vld [vmem:[#allocation4 + $0x130] sm:$0xff]
        %v9112 = vld [vmem:[#allocation4 + $0x138] sm:$0xff]
        %v9113 = vld [vmem:[#allocation4 + $0x140] sm:$0xff]
        %v9114 = vld [vmem:[#allocation4 + $0x148] sm:$0xff]
        %v9115 = vld [vmem:[#allocation4 + $0x150] sm:$0xff]
        %v9116 = vld [vmem:[#allocation4 + $0x158] sm:$0xff]
        %v9117 = vld [vmem:[#allocation4 + $0x160] sm:$0xff]
        %v9118 = vld [vmem:[#allocation4 + $0x168] sm:$0xff]
        %v9119 = vld [vmem:[#allocation4 + $0x170] sm:$0xff]
        %v9120 = vld [vmem:[#allocation4 + $0x178] sm:$0xff]
        %v9121 = vld [vmem:[#allocation4 + $0x180] sm:$0xff]
        %v9122 = vld [vmem:[#allocation4 + $0x188] sm:$0xff]
        %v9123 = vld [vmem:[#allocation4 + $0x190] sm:$0xff]
        %v9124 = vld [vmem:[#allocation4 + $0x198] sm:$0xff]
        %v9125 = vld [vmem:[#allocation4 + $0x1a0] sm:$0xff]
        %v9126 = vld [vmem:[#allocation4 + $0x1a8] sm:$0xff]
        %v9127 = vld [vmem:[#allocation4 + $0x1b0] sm:$0xff]
        %v9128 = vld [vmem:[#allocation4 + $0x1b8] sm:$0xff]
        %v9129 = vld [vmem:[#allocation4 + $0x1c0] sm:$0xff]
        %v9130 = vld [vmem:[#allocation4 + $0x1c8] sm:$0xff]
        %v9131 = vld [vmem:[#allocation4 + $0x1d0] sm:$0xff]
        %v9132 = vld [vmem:[#allocation4 + $0x1d8] sm:$0xff]
        %v9133 = vld [vmem:[#allocation4 + $0x1e0] sm:$0xff]
        %v9134 = vld [vmem:[#allocation4 + $0x1e8] sm:$0xff]
        %v9135 = vld [vmem:[#allocation4 + $0x1f0] sm:$0xff]
        %v9136 = vld [vmem:[#allocation4 + $0x1f8] sm:$0xff]
        %v9137 = vadd.f32 %v9073, %v8819
        %v9138 = vadd.f32 %v9074, %v8822
        %v9139 = vadd.f32 %v9075, %v8827
        %v9140 = vadd.f32 %v9076, %v8830
        %v9141 = vadd.f32 %v9077, %v8835
        %v9142 = vadd.f32 %v9078, %v8838
        %v9143 = vadd.f32 %v9079, %v8843
        %v9144 = vadd.f32 %v9080, %v8846
        %v9145 = vadd.f32 %v9081, %v8851
        %v9146 = vadd.f32 %v9082, %v8854
        %v9147 = vadd.f32 %v9083, %v8859
        %v9148 = vadd.f32 %v9084, %v8862
        %v9149 = vadd.f32 %v9085, %v8867
        %v9150 = vadd.f32 %v9086, %v8870
        %v9151 = vadd.f32 %v9087, %v8875
        %v9152 = vadd.f32 %v9088, %v8878
        %v9153 = vadd.f32 %v9089, %v8883
        %v9154 = vadd.f32 %v9090, %v8886
        %v9155 = vadd.f32 %v9091, %v8891
        %v9156 = vadd.f32 %v9092, %v8894
        %v9157 = vadd.f32 %v9093, %v8899
        %v9158 = vadd.f32 %v9094, %v8902
        %v9159 = vadd.f32 %v9095, %v8907
        %v9160 = vadd.f32 %v9096, %v8910
        %v9161 = vadd.f32 %v9097, %v8915
        %v9162 = vadd.f32 %v9098, %v8918
        %v9163 = vadd.f32 %v9099, %v8923
        %v9164 = vadd.f32 %v9100, %v8926
        %v9165 = vadd.f32 %v9101, %v8931
        %v9166 = vadd.f32 %v9102, %v8934
        %v9167 = vadd.f32 %v9103, %v8939
        %v9168 = vadd.f32 %v9104, %v8942
        %v9169 = vadd.f32 %v9105, %v8947
        %v9170 = vadd.f32 %v9106, %v8950
        %v9171 = vadd.f32 %v9107, %v8955
        %v9172 = vadd.f32 %v9108, %v8958
        %v9173 = vadd.f32 %v9109, %v8963
        %v9174 = vadd.f32 %v9110, %v8966
        %v9175 = vadd.f32 %v9111, %v8971
        %v9176 = vadd.f32 %v9112, %v8974
        %v9177 = vadd.f32 %v9113, %v8979
        %v9178 = vadd.f32 %v9114, %v8982
        %v9179 = vadd.f32 %v9115, %v8987
        %v9180 = vadd.f32 %v9116, %v8990
        %v9181 = vadd.f32 %v9117, %v8995
        %v9182 = vadd.f32 %v9118, %v8998
        %v9183 = vadd.f32 %v9119, %v9003
        %v9184 = vadd.f32 %v9120, %v9006
        %v9185 = vadd.f32 %v9121, %v9011
        %v9186 = vadd.f32 %v9122, %v9014
        %v9187 = vadd.f32 %v9123, %v9019
        %v9188 = vadd.f32 %v9124, %v9022
        %v9189 = vadd.f32 %v9125, %v9027
        %v9190 = vadd.f32 %v9126, %v9030
        %v9191 = vadd.f32 %v9127, %v9035
        %v9192 = vadd.f32 %v9128, %v9038
        %v9193 = vadd.f32 %v9129, %v9043
        %v9194 = vadd.f32 %v9130, %v9046
        %v9195 = vadd.f32 %v9131, %v9051
        %v9196 = vadd.f32 %v9132, %v9054
        %v9197 = vadd.f32 %v9133, %v9059
        %v9198 = vadd.f32 %v9134, %v9062
        %v9199 = vadd.f32 %v9135, %v9067
        %v9200 = vadd.f32 %v9136, %v9070
        %9201 = vst.msk [vmem:[#allocation4] sm:$0xff] %vm2746, %v9137
        %9202 = vst.msk [vmem:[#allocation4 + $0x8] sm:$0xff] %vm2746, %v9138
        %9203 = vst.msk [vmem:[#allocation4 + $0x10] sm:$0xff] %vm2746, %v9139
        %9204 = vst.msk [vmem:[#allocation4 + $0x18] sm:$0xff] %vm2746, %v9140
        %9205 = vst.msk [vmem:[#allocation4 + $0x20] sm:$0xff] %vm2746, %v9141
        %9206 = vst.msk [vmem:[#allocation4 + $0x28] sm:$0xff] %vm2746, %v9142
        %9207 = vst.msk [vmem:[#allocation4 + $0x30] sm:$0xff] %vm2746, %v9143
        %9208 = vst.msk [vmem:[#allocation4 + $0x38] sm:$0xff] %vm2746, %v9144
        %9209 = vst.msk [vmem:[#allocation4 + $0x40] sm:$0xff] %vm2746, %v9145
        %9210 = vst.msk [vmem:[#allocation4 + $0x48] sm:$0xff] %vm2746, %v9146
        %9211 = vst.msk [vmem:[#allocation4 + $0x50] sm:$0xff] %vm2746, %v9147
        %9212 = vst.msk [vmem:[#allocation4 + $0x58] sm:$0xff] %vm2746, %v9148
        %9213 = vst.msk [vmem:[#allocation4 + $0x60] sm:$0xff] %vm2746, %v9149
        %9214 = vst.msk [vmem:[#allocation4 + $0x68] sm:$0xff] %vm2746, %v9150
        %9215 = vst.msk [vmem:[#allocation4 + $0x70] sm:$0xff] %vm2746, %v9151
        %9216 = vst.msk [vmem:[#allocation4 + $0x78] sm:$0xff] %vm2746, %v9152
        %9217 = vst.msk [vmem:[#allocation4 + $0x80] sm:$0xff] %vm2746, %v9153
        %9218 = vst.msk [vmem:[#allocation4 + $0x88] sm:$0xff] %vm2746, %v9154
        %9219 = vst.msk [vmem:[#allocation4 + $0x90] sm:$0xff] %vm2746, %v9155
        %9220 = vst.msk [vmem:[#allocation4 + $0x98] sm:$0xff] %vm2746, %v9156
        %9221 = vst.msk [vmem:[#allocation4 + $0xa0] sm:$0xff] %vm2746, %v9157
        %9222 = vst.msk [vmem:[#allocation4 + $0xa8] sm:$0xff] %vm2746, %v9158
        %9223 = vst.msk [vmem:[#allocation4 + $0xb0] sm:$0xff] %vm2746, %v9159
        %9224 = vst.msk [vmem:[#allocation4 + $0xb8] sm:$0xff] %vm2746, %v9160
        %9225 = vst.msk [vmem:[#allocation4 + $0xc0] sm:$0xff] %vm2746, %v9161
        %9226 = vst.msk [vmem:[#allocation4 + $0xc8] sm:$0xff] %vm2746, %v9162
        %9227 = vst.msk [vmem:[#allocation4 + $0xd0] sm:$0xff] %vm2746, %v9163
        %9228 = vst.msk [vmem:[#allocation4 + $0xd8] sm:$0xff] %vm2746, %v9164
        %9229 = vst.msk [vmem:[#allocation4 + $0xe0] sm:$0xff] %vm2746, %v9165
        %9230 = vst.msk [vmem:[#allocation4 + $0xe8] sm:$0xff] %vm2746, %v9166
        %9231 = vst.msk [vmem:[#allocation4 + $0xf0] sm:$0xff] %vm2746, %v9167
        %9232 = vst.msk [vmem:[#allocation4 + $0xf8] sm:$0xff] %vm2746, %v9168
        %9233 = vst.msk [vmem:[#allocation4 + $0x100] sm:$0xff] %vm2746, %v9169
        %9234 = vst.msk [vmem:[#allocation4 + $0x108] sm:$0xff] %vm2746, %v9170
        %9235 = vst.msk [vmem:[#allocation4 + $0x110] sm:$0xff] %vm2746, %v9171
        %9236 = vst.msk [vmem:[#allocation4 + $0x118] sm:$0xff] %vm2746, %v9172
        %9237 = vst.msk [vmem:[#allocation4 + $0x120] sm:$0xff] %vm2746, %v9173
        %9238 = vst.msk [vmem:[#allocation4 + $0x128] sm:$0xff] %vm2746, %v9174
        %9239 = vst.msk [vmem:[#allocation4 + $0x130] sm:$0xff] %vm2746, %v9175
        %9240 = vst.msk [vmem:[#allocation4 + $0x138] sm:$0xff] %vm2746, %v9176
        %9241 = vst.msk [vmem:[#allocation4 + $0x140] sm:$0xff] %vm2746, %v9177
        %9242 = vst.msk [vmem:[#allocation4 + $0x148] sm:$0xff] %vm2746, %v9178
        %9243 = vst.msk [vmem:[#allocation4 + $0x150] sm:$0xff] %vm2746, %v9179
        %9244 = vst.msk [vmem:[#allocation4 + $0x158] sm:$0xff] %vm2746, %v9180
        %9245 = vst.msk [vmem:[#allocation4 + $0x160] sm:$0xff] %vm2746, %v9181
        %9246 = vst.msk [vmem:[#allocation4 + $0x168] sm:$0xff] %vm2746, %v9182
        %9247 = vst.msk [vmem:[#allocation4 + $0x170] sm:$0xff] %vm2746, %v9183
        %9248 = vst.msk [vmem:[#allocation4 + $0x178] sm:$0xff] %vm2746, %v9184
        %9249 = vst.msk [vmem:[#allocation4 + $0x180] sm:$0xff] %vm2746, %v9185
        %9250 = vst.msk [vmem:[#allocation4 + $0x188] sm:$0xff] %vm2746, %v9186
        %9251 = vst.msk [vmem:[#allocation4 + $0x190] sm:$0xff] %vm2746, %v9187
        %9252 = vst.msk [vmem:[#allocation4 + $0x198] sm:$0xff] %vm2746, %v9188
        %9253 = vst.msk [vmem:[#allocation4 + $0x1a0] sm:$0xff] %vm2746, %v9189
        %9254 = vst.msk [vmem:[#allocation4 + $0x1a8] sm:$0xff] %vm2746, %v9190
        %9255 = vst.msk [vmem:[#allocation4 + $0x1b0] sm:$0xff] %vm2746, %v9191
        %9256 = vst.msk [vmem:[#allocation4 + $0x1b8] sm:$0xff] %vm2746, %v9192
        %9257 = vst.msk [vmem:[#allocation4 + $0x1c0] sm:$0xff] %vm2746, %v9193
        %9258 = vst.msk [vmem:[#allocation4 + $0x1c8] sm:$0xff] %vm2746, %v9194
        %9259 = vst.msk [vmem:[#allocation4 + $0x1d0] sm:$0xff] %vm2746, %v9195
        %9260 = vst.msk [vmem:[#allocation4 + $0x1d8] sm:$0xff] %vm2746, %v9196
        %9261 = vst.msk [vmem:[#allocation4 + $0x1e0] sm:$0xff] %vm2746, %v9197
        %9262 = vst.msk [vmem:[#allocation4 + $0x1e8] sm:$0xff] %vm2746, %v9198
        %9263 = vst.msk [vmem:[#allocation4 + $0x1f0] sm:$0xff] %vm2746, %v9199
        %9264 = vst.msk [vmem:[#allocation4 + $0x1f8] sm:$0xff] %vm2746, %v9200
        %v9265 = vld [vmem:[#allocation4] sm:$0xff]
        %v9266 = vld [vmem:[#allocation4 + $0x8] sm:$0xff]
        %v9267 = vld [vmem:[#allocation4 + $0x10] sm:$0xff]
        %v9268 = vld [vmem:[#allocation4 + $0x18] sm:$0xff]
        %v9269 = vld [vmem:[#allocation4 + $0x20] sm:$0xff]
        %v9270 = vld [vmem:[#allocation4 + $0x28] sm:$0xff]
        %v9271 = vld [vmem:[#allocation4 + $0x30] sm:$0xff]
        %v9272 = vld [vmem:[#allocation4 + $0x38] sm:$0xff]
        %v9273 = vld [vmem:[#allocation4 + $0x40] sm:$0xff]
        %v9274 = vld [vmem:[#allocation4 + $0x48] sm:$0xff]
        %v9275 = vld [vmem:[#allocation4 + $0x50] sm:$0xff]
        %v9276 = vld [vmem:[#allocation4 + $0x58] sm:$0xff]
        %v9277 = vld [vmem:[#allocation4 + $0x60] sm:$0xff]
        %v9278 = vld [vmem:[#allocation4 + $0x68] sm:$0xff]
        %v9279 = vld [vmem:[#allocation4 + $0x70] sm:$0xff]
        %v9280 = vld [vmem:[#allocation4 + $0x78] sm:$0xff]
        %v9281 = vld [vmem:[#allocation4 + $0x80] sm:$0xff]
        %v9282 = vld [vmem:[#allocation4 + $0x88] sm:$0xff]
        %v9283 = vld [vmem:[#allocation4 + $0x90] sm:$0xff]
        %v9284 = vld [vmem:[#allocation4 + $0x98] sm:$0xff]
        %v9285 = vld [vmem:[#allocation4 + $0xa0] sm:$0xff]
        %v9286 = vld [vmem:[#allocation4 + $0xa8] sm:$0xff]
        %v9287 = vld [vmem:[#allocation4 + $0xb0] sm:$0xff]
        %v9288 = vld [vmem:[#allocation4 + $0xb8] sm:$0xff]
        %v9289 = vld [vmem:[#allocation4 + $0xc0] sm:$0xff]
        %v9290 = vld [vmem:[#allocation4 + $0xc8] sm:$0xff]
        %v9291 = vld [vmem:[#allocation4 + $0xd0] sm:$0xff]
        %v9292 = vld [vmem:[#allocation4 + $0xd8] sm:$0xff]
        %v9293 = vld [vmem:[#allocation4 + $0xe0] sm:$0xff]
        %v9294 = vld [vmem:[#allocation4 + $0xe8] sm:$0xff]
        %v9295 = vld [vmem:[#allocation4 + $0xf0] sm:$0xff]
        %v9296 = vld [vmem:[#allocation4 + $0xf8] sm:$0xff]
        %v9297 = vld [vmem:[#allocation4 + $0x100] sm:$0xff]
        %v9298 = vld [vmem:[#allocation4 + $0x108] sm:$0xff]
        %v9299 = vld [vmem:[#allocation4 + $0x110] sm:$0xff]
        %v9300 = vld [vmem:[#allocation4 + $0x118] sm:$0xff]
        %v9301 = vld [vmem:[#allocation4 + $0x120] sm:$0xff]
        %v9302 = vld [vmem:[#allocation4 + $0x128] sm:$0xff]
        %v9303 = vld [vmem:[#allocation4 + $0x130] sm:$0xff]
        %v9304 = vld [vmem:[#allocation4 + $0x138] sm:$0xff]
        %v9305 = vld [vmem:[#allocation4 + $0x140] sm:$0xff]
        %v9306 = vld [vmem:[#allocation4 + $0x148] sm:$0xff]
        %v9307 = vld [vmem:[#allocation4 + $0x150] sm:$0xff]
        %v9308 = vld [vmem:[#allocation4 + $0x158] sm:$0xff]
        %v9309 = vld [vmem:[#allocation4 + $0x160] sm:$0xff]
        %v9310 = vld [vmem:[#allocation4 + $0x168] sm:$0xff]
        %v9311 = vld [vmem:[#allocation4 + $0x170] sm:$0xff]
        %v9312 = vld [vmem:[#allocation4 + $0x178] sm:$0xff]
        %v9313 = vld [vmem:[#allocation4 + $0x180] sm:$0xff]
        %v9314 = vld [vmem:[#allocation4 + $0x188] sm:$0xff]
        %v9315 = vld [vmem:[#allocation4 + $0x190] sm:$0xff]
        %v9316 = vld [vmem:[#allocation4 + $0x198] sm:$0xff]
        %v9317 = vld [vmem:[#allocation4 + $0x1a0] sm:$0xff]
        %v9318 = vld [vmem:[#allocation4 + $0x1a8] sm:$0xff]
        %v9319 = vld [vmem:[#allocation4 + $0x1b0] sm:$0xff]
        %v9320 = vld [vmem:[#allocation4 + $0x1b8] sm:$0xff]
        %v9321 = vld [vmem:[#allocation4 + $0x1c0] sm:$0xff]
        %v9322 = vld [vmem:[#allocation4 + $0x1c8] sm:$0xff]
        %v9323 = vld [vmem:[#allocation4 + $0x1d0] sm:$0xff]
        %v9324 = vld [vmem:[#allocation4 + $0x1d8] sm:$0xff]
        %v9325 = vld [vmem:[#allocation4 + $0x1e0] sm:$0xff]
        %v9326 = vld [vmem:[#allocation4 + $0x1e8] sm:$0xff]
        %v9327 = vld [vmem:[#allocation4 + $0x1f0] sm:$0xff]
        %v9328 = vld [vmem:[#allocation4 + $0x1f8] sm:$0xff]
        %v9329 = vld [vmem:[%s2] sm:$0x1]
        %v9331 = vlaneseq
        %v9332 = vshrl.u32 %v9331, 7
        %v9333 = vsub.s32 0, %v9332
        %v9334 = vrot.slane %v9329, %v9333
        %v9336 = vmul.f32 %v9265, %v9334
        %v9337 = vmul.f32 %v9266, %v9334
        %v9338 = vmul.f32 %v9267, %v9334
        %v9339 = vmul.f32 %v9268, %v9334
        %v9340 = vmul.f32 %v9269, %v9334
        %v9341 = vmul.f32 %v9270, %v9334
        %v9342 = vmul.f32 %v9271, %v9334
        %v9343 = vmul.f32 %v9272, %v9334
        %v9344 = vmul.f32 %v9273, %v9334
        %v9345 = vmul.f32 %v9274, %v9334
        %v9346 = vmul.f32 %v9275, %v9334
        %v9347 = vmul.f32 %v9276, %v9334
        %v9348 = vmul.f32 %v9277, %v9334
        %v9349 = vmul.f32 %v9278, %v9334
        %v9350 = vmul.f32 %v9279, %v9334
        %v9351 = vmul.f32 %v9280, %v9334
        %v9352 = vmul.f32 %v9281, %v9334
        %v9353 = vmul.f32 %v9282, %v9334
        %v9354 = vmul.f32 %v9283, %v9334
        %v9355 = vmul.f32 %v9284, %v9334
        %v9356 = vmul.f32 %v9285, %v9334
        %v9357 = vmul.f32 %v9286, %v9334
        %v9358 = vmul.f32 %v9287, %v9334
        %v9359 = vmul.f32 %v9288, %v9334
        %v9360 = vmul.f32 %v9289, %v9334
        %v9361 = vmul.f32 %v9290, %v9334
        %v9362 = vmul.f32 %v9291, %v9334
        %v9363 = vmul.f32 %v9292, %v9334
        %v9364 = vmul.f32 %v9293, %v9334
        %v9365 = vmul.f32 %v9294, %v9334
        %v9366 = vmul.f32 %v9295, %v9334
        %v9367 = vmul.f32 %v9296, %v9334
        %v9368 = vmul.f32 %v9297, %v9334
        %v9369 = vmul.f32 %v9298, %v9334
        %v9370 = vmul.f32 %v9299, %v9334
        %v9371 = vmul.f32 %v9300, %v9334
        %v9372 = vmul.f32 %v9301, %v9334
        %v9373 = vmul.f32 %v9302, %v9334
        %v9374 = vmul.f32 %v9303, %v9334
        %v9375 = vmul.f32 %v9304, %v9334
        %v9376 = vmul.f32 %v9305, %v9334
        %v9377 = vmul.f32 %v9306, %v9334
        %v9378 = vmul.f32 %v9307, %v9334
        %v9379 = vmul.f32 %v9308, %v9334
        %v9380 = vmul.f32 %v9309, %v9334
        %v9381 = vmul.f32 %v9310, %v9334
        %v9382 = vmul.f32 %v9311, %v9334
        %v9383 = vmul.f32 %v9312, %v9334
        %v9384 = vmul.f32 %v9313, %v9334
        %v9385 = vmul.f32 %v9314, %v9334
        %v9386 = vmul.f32 %v9315, %v9334
        %v9387 = vmul.f32 %v9316, %v9334
        %v9388 = vmul.f32 %v9317, %v9334
        %v9389 = vmul.f32 %v9318, %v9334
        %v9390 = vmul.f32 %v9319, %v9334
        %v9391 = vmul.f32 %v9320, %v9334
        %v9392 = vmul.f32 %v9321, %v9334
        %v9393 = vmul.f32 %v9322, %v9334
        %v9394 = vmul.f32 %v9323, %v9334
        %v9395 = vmul.f32 %v9324, %v9334
        %v9396 = vmul.f32 %v9325, %v9334
        %v9397 = vmul.f32 %v9326, %v9334
        %v9398 = vmul.f32 %v9327, %v9334
        %v9399 = vmul.f32 %v9328, %v9334
        %v9400 = vld [vmem:[%s3] sm:$0x1]
        %v9402 = vlaneseq
        %v9403 = vshrl.u32 %v9402, 7
        %v9404 = vsub.s32 0, %v9403
        %v9405 = vrot.slane %v9400, %v9404
        %v9407 = vadd.f32 %v9336, %v9405
        %v9408 = vadd.f32 %v9337, %v9405
        %v9409 = vadd.f32 %v9338, %v9405
        %v9410 = vadd.f32 %v9339, %v9405
        %v9411 = vadd.f32 %v9340, %v9405
        %v9412 = vadd.f32 %v9341, %v9405
        %v9413 = vadd.f32 %v9342, %v9405
        %v9414 = vadd.f32 %v9343, %v9405
        %v9415 = vadd.f32 %v9344, %v9405
        %v9416 = vadd.f32 %v9345, %v9405
        %v9417 = vadd.f32 %v9346, %v9405
        %v9418 = vadd.f32 %v9347, %v9405
        %v9419 = vadd.f32 %v9348, %v9405
        %v9420 = vadd.f32 %v9349, %v9405
        %v9421 = vadd.f32 %v9350, %v9405
        %v9422 = vadd.f32 %v9351, %v9405
        %v9423 = vadd.f32 %v9352, %v9405
        %v9424 = vadd.f32 %v9353, %v9405
        %v9425 = vadd.f32 %v9354, %v9405
        %v9426 = vadd.f32 %v9355, %v9405
        %v9427 = vadd.f32 %v9356, %v9405
        %v9428 = vadd.f32 %v9357, %v9405
        %v9429 = vadd.f32 %v9358, %v9405
        %v9430 = vadd.f32 %v9359, %v9405
        %v9431 = vadd.f32 %v9360, %v9405
        %v9432 = vadd.f32 %v9361, %v9405
        %v9433 = vadd.f32 %v9362, %v9405
        %v9434 = vadd.f32 %v9363, %v9405
        %v9435 = vadd.f32 %v9364, %v9405
        %v9436 = vadd.f32 %v9365, %v9405
        %v9437 = vadd.f32 %v9366, %v9405
        %v9438 = vadd.f32 %v9367, %v9405
        %v9439 = vadd.f32 %v9368, %v9405
        %v9440 = vadd.f32 %v9369, %v9405
        %v9441 = vadd.f32 %v9370, %v9405
        %v9442 = vadd.f32 %v9371, %v9405
        %v9443 = vadd.f32 %v9372, %v9405
        %v9444 = vadd.f32 %v9373, %v9405
        %v9445 = vadd.f32 %v9374, %v9405
        %v9446 = vadd.f32 %v9375, %v9405
        %v9447 = vadd.f32 %v9376, %v9405
        %v9448 = vadd.f32 %v9377, %v9405
        %v9449 = vadd.f32 %v9378, %v9405
        %v9450 = vadd.f32 %v9379, %v9405
        %v9451 = vadd.f32 %v9380, %v9405
        %v9452 = vadd.f32 %v9381, %v9405
        %v9453 = vadd.f32 %v9382, %v9405
        %v9454 = vadd.f32 %v9383, %v9405
        %v9455 = vadd.f32 %v9384, %v9405
        %v9456 = vadd.f32 %v9385, %v9405
        %v9457 = vadd.f32 %v9386, %v9405
        %v9458 = vadd.f32 %v9387, %v9405
        %v9459 = vadd.f32 %v9388, %v9405
        %v9460 = vadd.f32 %v9389, %v9405
        %v9461 = vadd.f32 %v9390, %v9405
        %v9462 = vadd.f32 %v9391, %v9405
        %v9463 = vadd.f32 %v9392, %v9405
        %v9464 = vadd.f32 %v9393, %v9405
        %v9465 = vadd.f32 %v9394, %v9405
        %v9466 = vadd.f32 %v9395, %v9405
        %v9467 = vadd.f32 %v9396, %v9405
        %v9468 = vadd.f32 %v9397, %v9405
        %v9469 = vadd.f32 %v9398, %v9405
        %v9470 = vadd.f32 %v9399, %v9405
        %v9471 = vmax.f32 %v9407, 0.0
        %v9472 = vmax.f32 %v9408, 0.0
        %v9473 = vmax.f32 %v9409, 0.0
        %v9474 = vmax.f32 %v9410, 0.0
        %v9475 = vmax.f32 %v9411, 0.0
        %v9476 = vmax.f32 %v9412, 0.0
        %v9477 = vmax.f32 %v9413, 0.0
        %v9478 = vmax.f32 %v9414, 0.0
        %v9479 = vmax.f32 %v9415, 0.0
        %v9480 = vmax.f32 %v9416, 0.0
        %v9481 = vmax.f32 %v9417, 0.0
        %v9482 = vmax.f32 %v9418, 0.0
        %v9483 = vmax.f32 %v9419, 0.0
        %v9484 = vmax.f32 %v9420, 0.0
        %v9485 = vmax.f32 %v9421, 0.0
        %v9486 = vmax.f32 %v9422, 0.0
        %v9487 = vmax.f32 %v9423, 0.0
        %v9488 = vmax.f32 %v9424, 0.0
        %v9489 = vmax.f32 %v9425, 0.0
        %v9490 = vmax.f32 %v9426, 0.0
        %v9491 = vmax.f32 %v9427, 0.0
        %v9492 = vmax.f32 %v9428, 0.0
        %v9493 = vmax.f32 %v9429, 0.0
        %v9494 = vmax.f32 %v9430, 0.0
        %v9495 = vmax.f32 %v9431, 0.0
        %v9496 = vmax.f32 %v9432, 0.0
        %v9497 = vmax.f32 %v9433, 0.0
        %v9498 = vmax.f32 %v9434, 0.0
        %v9499 = vmax.f32 %v9435, 0.0
        %v9500 = vmax.f32 %v9436, 0.0
        %v9501 = vmax.f32 %v9437, 0.0
        %v9502 = vmax.f32 %v9438, 0.0
        %v9503 = vmax.f32 %v9439, 0.0
        %v9504 = vmax.f32 %v9440, 0.0
        %v9505 = vmax.f32 %v9441, 0.0
        %v9506 = vmax.f32 %v9442, 0.0
        %v9507 = vmax.f32 %v9443, 0.0
        %v9508 = vmax.f32 %v9444, 0.0
        %v9509 = vmax.f32 %v9445, 0.0
        %v9510 = vmax.f32 %v9446, 0.0
        %v9511 = vmax.f32 %v9447, 0.0
        %v9512 = vmax.f32 %v9448, 0.0
        %v9513 = vmax.f32 %v9449, 0.0
        %v9514 = vmax.f32 %v9450, 0.0
        %v9515 = vmax.f32 %v9451, 0.0
        %v9516 = vmax.f32 %v9452, 0.0
        %v9517 = vmax.f32 %v9453, 0.0
        %v9518 = vmax.f32 %v9454, 0.0
        %v9519 = vmax.f32 %v9455, 0.0
        %v9520 = vmax.f32 %v9456, 0.0
        %v9521 = vmax.f32 %v9457, 0.0
        %v9522 = vmax.f32 %v9458, 0.0
        %v9523 = vmax.f32 %v9459, 0.0
        %v9524 = vmax.f32 %v9460, 0.0
        %v9525 = vmax.f32 %v9461, 0.0
        %v9526 = vmax.f32 %v9462, 0.0
        %v9527 = vmax.f32 %v9463, 0.0
        %v9528 = vmax.f32 %v9464, 0.0
        %v9529 = vmax.f32 %v9465, 0.0
        %v9530 = vmax.f32 %v9466, 0.0
        %v9531 = vmax.f32 %v9467, 0.0
        %v9532 = vmax.f32 %v9468, 0.0
        %v9533 = vmax.f32 %v9469, 0.0
        %v9534 = vmax.f32 %v9470, 0.0
        %9535 = vst.msk [vmem:[%s200] sm:$0xff] %vm2746, %v9471
        %9536 = vst.msk [vmem:[%s200 + $0x8] sm:$0xff] %vm2746, %v9472
        %9537 = vst.msk [vmem:[%s200 + $0x10] sm:$0xff] %vm2746, %v9473
        %9538 = vst.msk [vmem:[%s200 + $0x18] sm:$0xff] %vm2746, %v9474
        %9539 = vst.msk [vmem:[%s200 + $0x20] sm:$0xff] %vm2746, %v9475
        %9540 = vst.msk [vmem:[%s200 + $0x28] sm:$0xff] %vm2746, %v9476
        %9541 = vst.msk [vmem:[%s200 + $0x30] sm:$0xff] %vm2746, %v9477
        %9542 = vst.msk [vmem:[%s200 + $0x38] sm:$0xff] %vm2746, %v9478
        %9543 = vst.msk [vmem:[%s200 + $0x40] sm:$0xff] %vm2746, %v9479
        %9544 = vst.msk [vmem:[%s200 + $0x48] sm:$0xff] %vm2746, %v9480
        %9545 = vst.msk [vmem:[%s200 + $0x50] sm:$0xff] %vm2746, %v9481
        %9546 = vst.msk [vmem:[%s200 + $0x58] sm:$0xff] %vm2746, %v9482
        %9547 = vst.msk [vmem:[%s200 + $0x60] sm:$0xff] %vm2746, %v9483
        %9548 = vst.msk [vmem:[%s200 + $0x68] sm:$0xff] %vm2746, %v9484
        %9549 = vst.msk [vmem:[%s200 + $0x70] sm:$0xff] %vm2746, %v9485
        %9550 = vst.msk [vmem:[%s200 + $0x78] sm:$0xff] %vm2746, %v9486
        %9551 = vst.msk [vmem:[%s200 + $0x80] sm:$0xff] %vm2746, %v9487
        %9552 = vst.msk [vmem:[%s200 + $0x88] sm:$0xff] %vm2746, %v9488
        %9553 = vst.msk [vmem:[%s200 + $0x90] sm:$0xff] %vm2746, %v9489
        %9554 = vst.msk [vmem:[%s200 + $0x98] sm:$0xff] %vm2746, %v9490
        %9555 = vst.msk [vmem:[%s200 + $0xa0] sm:$0xff] %vm2746, %v9491
        %9556 = vst.msk [vmem:[%s200 + $0xa8] sm:$0xff] %vm2746, %v9492
        %9557 = vst.msk [vmem:[%s200 + $0xb0] sm:$0xff] %vm2746, %v9493
        %9558 = vst.msk [vmem:[%s200 + $0xb8] sm:$0xff] %vm2746, %v9494
        %9559 = vst.msk [vmem:[%s200 + $0xc0] sm:$0xff] %vm2746, %v9495
        %9560 = vst.msk [vmem:[%s200 + $0xc8] sm:$0xff] %vm2746, %v9496
        %9561 = vst.msk [vmem:[%s200 + $0xd0] sm:$0xff] %vm2746, %v9497
        %9562 = vst.msk [vmem:[%s200 + $0xd8] sm:$0xff] %vm2746, %v9498
        %9563 = vst.msk [vmem:[%s200 + $0xe0] sm:$0xff] %vm2746, %v9499
        %9564 = vst.msk [vmem:[%s200 + $0xe8] sm:$0xff] %vm2746, %v9500
        %9565 = vst.msk [vmem:[%s200 + $0xf0] sm:$0xff] %vm2746, %v9501
        %9566 = vst.msk [vmem:[%s200 + $0xf8] sm:$0xff] %vm2746, %v9502
        %9567 = vst.msk [vmem:[%s200 + $0x100] sm:$0xff] %vm2746, %v9503
        %9568 = vst.msk [vmem:[%s200 + $0x108] sm:$0xff] %vm2746, %v9504
        %9569 = vst.msk [vmem:[%s200 + $0x110] sm:$0xff] %vm2746, %v9505
        %9570 = vst.msk [vmem:[%s200 + $0x118] sm:$0xff] %vm2746, %v9506
        %9571 = vst.msk [vmem:[%s200 + $0x120] sm:$0xff] %vm2746, %v9507
        %9572 = vst.msk [vmem:[%s200 + $0x128] sm:$0xff] %vm2746, %v9508
        %9573 = vst.msk [vmem:[%s200 + $0x130] sm:$0xff] %vm2746, %v9509
        %9574 = vst.msk [vmem:[%s200 + $0x138] sm:$0xff] %vm2746, %v9510
        %9575 = vst.msk [vmem:[%s200 + $0x140] sm:$0xff] %vm2746, %v9511
        %9576 = vst.msk [vmem:[%s200 + $0x148] sm:$0xff] %vm2746, %v9512
        %9577 = vst.msk [vmem:[%s200 + $0x150] sm:$0xff] %vm2746, %v9513
        %9578 = vst.msk [vmem:[%s200 + $0x158] sm:$0xff] %vm2746, %v9514
        %9579 = vst.msk [vmem:[%s200 + $0x160] sm:$0xff] %vm2746, %v9515
        %9580 = vst.msk [vmem:[%s200 + $0x168] sm:$0xff] %vm2746, %v9516
        %9581 = vst.msk [vmem:[%s200 + $0x170] sm:$0xff] %vm2746, %v9517
        %9582 = vst.msk [vmem:[%s200 + $0x178] sm:$0xff] %vm2746, %v9518
        %9583 = vst.msk [vmem:[%s200 + $0x180] sm:$0xff] %vm2746, %v9519
        %9584 = vst.msk [vmem:[%s200 + $0x188] sm:$0xff] %vm2746, %v9520
        %9585 = vst.msk [vmem:[%s200 + $0x190] sm:$0xff] %vm2746, %v9521
        %9586 = vst.msk [vmem:[%s200 + $0x198] sm:$0xff] %vm2746, %v9522
        %9587 = vst.msk [vmem:[%s200 + $0x1a0] sm:$0xff] %vm2746, %v9523
        %9588 = vst.msk [vmem:[%s200 + $0x1a8] sm:$0xff] %vm2746, %v9524
        %9589 = vst.msk [vmem:[%s200 + $0x1b0] sm:$0xff] %vm2746, %v9525
        %9590 = vst.msk [vmem:[%s200 + $0x1b8] sm:$0xff] %vm2746, %v9526
        %9591 = vst.msk [vmem:[%s200 + $0x1c0] sm:$0xff] %vm2746, %v9527
        %9592 = vst.msk [vmem:[%s200 + $0x1c8] sm:$0xff] %vm2746, %v9528
        %9593 = vst.msk [vmem:[%s200 + $0x1d0] sm:$0xff] %vm2746, %v9529
        %9594 = vst.msk [vmem:[%s200 + $0x1d8] sm:$0xff] %vm2746, %v9530
        %9595 = vst.msk [vmem:[%s200 + $0x1e0] sm:$0xff] %vm2746, %v9531
        %9596 = vst.msk [vmem:[%s200 + $0x1e8] sm:$0xff] %vm2746, %v9532
        %9597 = vst.msk [vmem:[%s200 + $0x1f0] sm:$0xff] %vm2746, %v9533
        %9598 = vst.msk [vmem:[%s200 + $0x1f8] sm:$0xff] %vm2746, %v9534
        %s9599 = sand.u32 %s126, 1
        %s9600 = sand.u32 %s126, 1
        %s9601 = smul.addr %s9600, 512
        %s9602 = scalar_lea.vmem [#allocation5], %s9601
        // Predicated region
        $region45: #{tpu_custom_call.1} parent=35 // pred_check
          %p9603 = pneg %p136
        $region46: #{tpu_custom_call.1} parent=35 // pred_check_branch
          %9605 = sbr.rel (%p9603) target = $region48
        $region47: #{tpu_custom_call.1} parent=35 // pred_region
          %s9606 = smul.u32 16, %s20
          %s9607 = smul.addr %s9606, 2
          %s9608 = smul.addr %s19, 128
          %s9609 = sadd.s32 %s9607, %s9608
          %s9610 = smul.addr %s9609, 8
          %s9611 = scalar_lea.vmem %s4, %s9610
          // Predicated region
          $region49: #{tpu_custom_call.1} parent=47 // pred_check
            _
          $region50: #{tpu_custom_call.1} parent=47 // pred_check_branch
            %9613 = sbr.rel (0) target = $region52
          $region51: #{tpu_custom_call.1} parent=47 // pred_region
            // Predicated region
            $region53: #{tpu_custom_call.1} parent=51 // pred_check
              _
            $region54: #{tpu_custom_call.1} parent=51 // pred_check_branch
              %9615 = sbr.rel (0) target = $region56
            $region55: #{tpu_custom_call.1} parent=51 // pred_region
              // Predicated region
              $region68: #{tpu_custom_call.1} parent=55 // pred_check
                _
              $region69: #{tpu_custom_call.1} parent=55 // pred_check_branch
                %9757 = sbr.rel (0) target = $region71
              $region70: #{tpu_custom_call.1} parent=55 // pred_region
                loop: start=0, step=1, limit=1
                $region72: #{tpu_custom_call.1} parent=70 // loop_pre_header
                  _
                $region73: #{tpu_custom_call.1} parent=70 // loop_header
                  %s9759 = sphi 0, %s9763
                  %p9760 = scmp.ge.s32.totalorder %s9759, 1
                  %s9764 = sphi %s9602, %s9602
                  %s9765 = sphi %s9611, %s9611
                $region74: #{tpu_custom_call.1} parent=70 // loop_header_branch
                  %9762 = sbr.rel (%p9760) target = $region78
                $region75: #{tpu_custom_call.1} parent=70 // loop_body
                  %v9766 = vld [vmem:[%s9764] sm:$0xff]
                  %9767 = vst [vmem:[%s9765] sm:$0xff] %v9766
                  %v9768 = vld [vmem:[%s9764 + $0x8] sm:$0xff]
                  %9769 = vst [vmem:[%s9765 + $0x8] sm:$0xff] %v9768
                  %v9770 = vld [vmem:[%s9764 + $0x10] sm:$0xff]
                  %9771 = vst [vmem:[%s9765 + $0x10] sm:$0xff] %v9770
                  %v9772 = vld [vmem:[%s9764 + $0x18] sm:$0xff]
                  %9773 = vst [vmem:[%s9765 + $0x18] sm:$0xff] %v9772
                  %v9774 = vld [vmem:[%s9764 + $0x20] sm:$0xff]
                  %9775 = vst [vmem:[%s9765 + $0x20] sm:$0xff] %v9774
                  %v9776 = vld [vmem:[%s9764 + $0x28] sm:$0xff]
                  %9777 = vst [vmem:[%s9765 + $0x28] sm:$0xff] %v9776
                  %v9778 = vld [vmem:[%s9764 + $0x30] sm:$0xff]
                  %9779 = vst [vmem:[%s9765 + $0x30] sm:$0xff] %v9778
                  %v9780 = vld [vmem:[%s9764 + $0x38] sm:$0xff]
                  %9781 = vst [vmem:[%s9765 + $0x38] sm:$0xff] %v9780
                  %v9782 = vld [vmem:[%s9764 + $0x40] sm:$0xff]
                  %9783 = vst [vmem:[%s9765 + $0x40] sm:$0xff] %v9782
                  %v9784 = vld [vmem:[%s9764 + $0x48] sm:$0xff]
                  %9785 = vst [vmem:[%s9765 + $0x48] sm:$0xff] %v9784
                  %v9786 = vld [vmem:[%s9764 + $0x50] sm:$0xff]
                  %9787 = vst [vmem:[%s9765 + $0x50] sm:$0xff] %v9786
                  %v9788 = vld [vmem:[%s9764 + $0x58] sm:$0xff]
                  %9789 = vst [vmem:[%s9765 + $0x58] sm:$0xff] %v9788
                  %v9790 = vld [vmem:[%s9764 + $0x60] sm:$0xff]
                  %9791 = vst [vmem:[%s9765 + $0x60] sm:$0xff] %v9790
                  %v9792 = vld [vmem:[%s9764 + $0x68] sm:$0xff]
                  %9793 = vst [vmem:[%s9765 + $0x68] sm:$0xff] %v9792
                  %v9794 = vld [vmem:[%s9764 + $0x70] sm:$0xff]
                  %9795 = vst [vmem:[%s9765 + $0x70] sm:$0xff] %v9794
                  %v9796 = vld [vmem:[%s9764 + $0x78] sm:$0xff]
                  %9797 = vst [vmem:[%s9765 + $0x78] sm:$0xff] %v9796
                  %v9798 = vld [vmem:[%s9764 + $0x80] sm:$0xff]
                  %9799 = vst [vmem:[%s9765 + $0x80] sm:$0xff] %v9798
                  %v9800 = vld [vmem:[%s9764 + $0x88] sm:$0xff]
                  %9801 = vst [vmem:[%s9765 + $0x88] sm:$0xff] %v9800
                  %v9802 = vld [vmem:[%s9764 + $0x90] sm:$0xff]
                  %9803 = vst [vmem:[%s9765 + $0x90] sm:$0xff] %v9802
                  %v9804 = vld [vmem:[%s9764 + $0x98] sm:$0xff]
                  %9805 = vst [vmem:[%s9765 + $0x98] sm:$0xff] %v9804
                  %v9806 = vld [vmem:[%s9764 + $0xa0] sm:$0xff]
                  %9807 = vst [vmem:[%s9765 + $0xa0] sm:$0xff] %v9806
                  %v9808 = vld [vmem:[%s9764 + $0xa8] sm:$0xff]
                  %9809 = vst [vmem:[%s9765 + $0xa8] sm:$0xff] %v9808
                  %v9810 = vld [vmem:[%s9764 + $0xb0] sm:$0xff]
                  %9811 = vst [vmem:[%s9765 + $0xb0] sm:$0xff] %v9810
                  %v9812 = vld [vmem:[%s9764 + $0xb8] sm:$0xff]
                  %9813 = vst [vmem:[%s9765 + $0xb8] sm:$0xff] %v9812
                  %v9814 = vld [vmem:[%s9764 + $0xc0] sm:$0xff]
                  %9815 = vst [vmem:[%s9765 + $0xc0] sm:$0xff] %v9814
                  %v9816 = vld [vmem:[%s9764 + $0xc8] sm:$0xff]
                  %9817 = vst [vmem:[%s9765 + $0xc8] sm:$0xff] %v9816
                  %v9818 = vld [vmem:[%s9764 + $0xd0] sm:$0xff]
                  %9819 = vst [vmem:[%s9765 + $0xd0] sm:$0xff] %v9818
                  %v9820 = vld [vmem:[%s9764 + $0xd8] sm:$0xff]
                  %9821 = vst [vmem:[%s9765 + $0xd8] sm:$0xff] %v9820
                  %v9822 = vld [vmem:[%s9764 + $0xe0] sm:$0xff]
                  %9823 = vst [vmem:[%s9765 + $0xe0] sm:$0xff] %v9822
                  %v9824 = vld [vmem:[%s9764 + $0xe8] sm:$0xff]
                  %9825 = vst [vmem:[%s9765 + $0xe8] sm:$0xff] %v9824
                  %v9826 = vld [vmem:[%s9764 + $0xf0] sm:$0xff]
                  %9827 = vst [vmem:[%s9765 + $0xf0] sm:$0xff] %v9826
                  %v9828 = vld [vmem:[%s9764 + $0xf8] sm:$0xff]
                  %9829 = vst [vmem:[%s9765 + $0xf8] sm:$0xff] %v9828
                  %v9830 = vld [vmem:[%s9764 + $0x100] sm:$0xff]
                  %9831 = vst [vmem:[%s9765 + $0x200] sm:$0xff] %v9830
                  %v9832 = vld [vmem:[%s9764 + $0x108] sm:$0xff]
                  %9833 = vst [vmem:[%s9765 + $0x208] sm:$0xff] %v9832
                  %v9834 = vld [vmem:[%s9764 + $0x110] sm:$0xff]
                  %9835 = vst [vmem:[%s9765 + $0x210] sm:$0xff] %v9834
                  %v9836 = vld [vmem:[%s9764 + $0x118] sm:$0xff]
                  %9837 = vst [vmem:[%s9765 + $0x218] sm:$0xff] %v9836
                  %v9838 = vld [vmem:[%s9764 + $0x120] sm:$0xff]
                  %9839 = vst [vmem:[%s9765 + $0x220] sm:$0xff] %v9838
                  %v9840 = vld [vmem:[%s9764 + $0x128] sm:$0xff]
                  %9841 = vst [vmem:[%s9765 + $0x228] sm:$0xff] %v9840
                  %v9842 = vld [vmem:[%s9764 + $0x130] sm:$0xff]
                  %9843 = vst [vmem:[%s9765 + $0x230] sm:$0xff] %v9842
                  %v9844 = vld [vmem:[%s9764 + $0x138] sm:$0xff]
                  %9845 = vst [vmem:[%s9765 + $0x238] sm:$0xff] %v9844
                  %v9846 = vld [vmem:[%s9764 + $0x140] sm:$0xff]
                  %9847 = vst [vmem:[%s9765 + $0x240] sm:$0xff] %v9846
                  %v9848 = vld [vmem:[%s9764 + $0x148] sm:$0xff]
                  %9849 = vst [vmem:[%s9765 + $0x248] sm:$0xff] %v9848
                  %v9850 = vld [vmem:[%s9764 + $0x150] sm:$0xff]
                  %9851 = vst [vmem:[%s9765 + $0x250] sm:$0xff] %v9850
                  %v9852 = vld [vmem:[%s9764 + $0x158] sm:$0xff]
                  %9853 = vst [vmem:[%s9765 + $0x258] sm:$0xff] %v9852
                  %v9854 = vld [vmem:[%s9764 + $0x160] sm:$0xff]
                  %9855 = vst [vmem:[%s9765 + $0x260] sm:$0xff] %v9854
                  %v9856 = vld [vmem:[%s9764 + $0x168] sm:$0xff]
                  %9857 = vst [vmem:[%s9765 + $0x268] sm:$0xff] %v9856
                  %v9858 = vld [vmem:[%s9764 + $0x170] sm:$0xff]
                  %9859 = vst [vmem:[%s9765 + $0x270] sm:$0xff] %v9858
                  %v9860 = vld [vmem:[%s9764 + $0x178] sm:$0xff]
                  %9861 = vst [vmem:[%s9765 + $0x278] sm:$0xff] %v9860
                  %v9862 = vld [vmem:[%s9764 + $0x180] sm:$0xff]
                  %9863 = vst [vmem:[%s9765 + $0x280] sm:$0xff] %v9862
                  %v9864 = vld [vmem:[%s9764 + $0x188] sm:$0xff]
                  %9865 = vst [vmem:[%s9765 + $0x288] sm:$0xff] %v9864
                  %v9866 = vld [vmem:[%s9764 + $0x190] sm:$0xff]
                  %9867 = vst [vmem:[%s9765 + $0x290] sm:$0xff] %v9866
                  %v9868 = vld [vmem:[%s9764 + $0x198] sm:$0xff]
                  %9869 = vst [vmem:[%s9765 + $0x298] sm:$0xff] %v9868
                  %v9870 = vld [vmem:[%s9764 + $0x1a0] sm:$0xff]
                  %9871 = vst [vmem:[%s9765 + $0x2a0] sm:$0xff] %v9870
                  %v9872 = vld [vmem:[%s9764 + $0x1a8] sm:$0xff]
                  %9873 = vst [vmem:[%s9765 + $0x2a8] sm:$0xff] %v9872
                  %v9874 = vld [vmem:[%s9764 + $0x1b0] sm:$0xff]
                  %9875 = vst [vmem:[%s9765 + $0x2b0] sm:$0xff] %v9874
                  %v9876 = vld [vmem:[%s9764 + $0x1b8] sm:$0xff]
                  %9877 = vst [vmem:[%s9765 + $0x2b8] sm:$0xff] %v9876
                  %v9878 = vld [vmem:[%s9764 + $0x1c0] sm:$0xff]
                  %9879 = vst [vmem:[%s9765 + $0x2c0] sm:$0xff] %v9878
                  %v9880 = vld [vmem:[%s9764 + $0x1c8] sm:$0xff]
                  %9881 = vst [vmem:[%s9765 + $0x2c8] sm:$0xff] %v9880
                  %v9882 = vld [vmem:[%s9764 + $0x1d0] sm:$0xff]
                  %9883 = vst [vmem:[%s9765 + $0x2d0] sm:$0xff] %v9882
                  %v9884 = vld [vmem:[%s9764 + $0x1d8] sm:$0xff]
                  %9885 = vst [vmem:[%s9765 + $0x2d8] sm:$0xff] %v9884
                  %v9886 = vld [vmem:[%s9764 + $0x1e0] sm:$0xff]
                  %9887 = vst [vmem:[%s9765 + $0x2e0] sm:$0xff] %v9886
                  %v9888 = vld [vmem:[%s9764 + $0x1e8] sm:$0xff]
                  %9889 = vst [vmem:[%s9765 + $0x2e8] sm:$0xff] %v9888
                  %v9890 = vld [vmem:[%s9764 + $0x1f0] sm:$0xff]
                  %9891 = vst [vmem:[%s9765 + $0x2f0] sm:$0xff] %v9890
                  %v9892 = vld [vmem:[%s9764 + $0x1f8] sm:$0xff]
                  %9893 = vst [vmem:[%s9765 + $0x2f8] sm:$0xff] %v9892
                $region76: #{tpu_custom_call.1} parent=70 // loop_footer
                  %s9763 = sadd.s32 1, %s9759
                $region77: #{tpu_custom_call.1} parent=70 // loop_footer_branch
                  %9758 = sbr.rel target = $region73
                $region78: #{tpu_custom_call.1} parent=70 // loop_exit
                  _
              $region71: #{tpu_custom_call.1} parent=55 // pred_fallthru
                _
              // Predicated region
              $region79: #{tpu_custom_call.1} parent=55 // pred_check
                _
              $region80: #{tpu_custom_call.1} parent=55 // pred_check_branch
                %9895 = sbr.rel target = $region82
              $region81: #{tpu_custom_call.1} parent=55 // pred_region
                _
              $region82: #{tpu_custom_call.1} parent=55 // pred_fallthru
                _
            $region56: #{tpu_custom_call.1} parent=51 // pred_fallthru
              _
            // Predicated region
            $region57: #{tpu_custom_call.1} parent=51 // pred_check
              _
            $region58: #{tpu_custom_call.1} parent=51 // pred_check_branch
              %9617 = sbr.rel target = $region60
            $region59: #{tpu_custom_call.1} parent=51 // pred_region
              %s9619 = ssub.s32 256, 1
              loop: start=0, step=1, limit=1
              $region61: #{tpu_custom_call.1} parent=59 // loop_pre_header
                _
              $region62: #{tpu_custom_call.1} parent=59 // loop_header
                %s9621 = sphi 0, %s9625
                %p9622 = scmp.ge.s32.totalorder %s9621, 1
                %s9626 = sphi %s9602, %s9602
                %s9627 = sphi %s9611, %s9611
              $region63: #{tpu_custom_call.1} parent=59 // loop_header_branch
                %9624 = sbr.rel (%p9622) target = $region67
              $region64: #{tpu_custom_call.1} parent=59 // loop_body
                %v9628 = vld [vmem:[%s9626] sm:%s9619]
                %9629 = vst [vmem:[%s9627] sm:%s9619] %v9628
                %v9630 = vld [vmem:[%s9626 + $0x8] sm:%s9619]
                %9631 = vst [vmem:[%s9627 + $0x8] sm:%s9619] %v9630
                %v9632 = vld [vmem:[%s9626 + $0x10] sm:%s9619]
                %9633 = vst [vmem:[%s9627 + $0x10] sm:%s9619] %v9632
                %v9634 = vld [vmem:[%s9626 + $0x18] sm:%s9619]
                %9635 = vst [vmem:[%s9627 + $0x18] sm:%s9619] %v9634
                %v9636 = vld [vmem:[%s9626 + $0x20] sm:%s9619]
                %9637 = vst [vmem:[%s9627 + $0x20] sm:%s9619] %v9636
                %v9638 = vld [vmem:[%s9626 + $0x28] sm:%s9619]
                %9639 = vst [vmem:[%s9627 + $0x28] sm:%s9619] %v9638
                %v9640 = vld [vmem:[%s9626 + $0x30] sm:%s9619]
                %9641 = vst [vmem:[%s9627 + $0x30] sm:%s9619] %v9640
                %v9642 = vld [vmem:[%s9626 + $0x38] sm:%s9619]
                %9643 = vst [vmem:[%s9627 + $0x38] sm:%s9619] %v9642
                %v9644 = vld [vmem:[%s9626 + $0x40] sm:%s9619]
                %9645 = vst [vmem:[%s9627 + $0x40] sm:%s9619] %v9644
                %v9646 = vld [vmem:[%s9626 + $0x48] sm:%s9619]
                %9647 = vst [vmem:[%s9627 + $0x48] sm:%s9619] %v9646
                %v9648 = vld [vmem:[%s9626 + $0x50] sm:%s9619]
                %9649 = vst [vmem:[%s9627 + $0x50] sm:%s9619] %v9648
                %v9650 = vld [vmem:[%s9626 + $0x58] sm:%s9619]
                %9651 = vst [vmem:[%s9627 + $0x58] sm:%s9619] %v9650
                %v9652 = vld [vmem:[%s9626 + $0x60] sm:%s9619]
                %9653 = vst [vmem:[%s9627 + $0x60] sm:%s9619] %v9652
                %v9654 = vld [vmem:[%s9626 + $0x68] sm:%s9619]
                %9655 = vst [vmem:[%s9627 + $0x68] sm:%s9619] %v9654
                %v9656 = vld [vmem:[%s9626 + $0x70] sm:%s9619]
                %9657 = vst [vmem:[%s9627 + $0x70] sm:%s9619] %v9656
                %v9658 = vld [vmem:[%s9626 + $0x78] sm:%s9619]
                %9659 = vst [vmem:[%s9627 + $0x78] sm:%s9619] %v9658
                %v9660 = vld [vmem:[%s9626 + $0x80] sm:%s9619]
                %9661 = vst [vmem:[%s9627 + $0x80] sm:%s9619] %v9660
                %v9662 = vld [vmem:[%s9626 + $0x88] sm:%s9619]
                %9663 = vst [vmem:[%s9627 + $0x88] sm:%s9619] %v9662
                %v9664 = vld [vmem:[%s9626 + $0x90] sm:%s9619]
                %9665 = vst [vmem:[%s9627 + $0x90] sm:%s9619] %v9664
                %v9666 = vld [vmem:[%s9626 + $0x98] sm:%s9619]
                %9667 = vst [vmem:[%s9627 + $0x98] sm:%s9619] %v9666
                %v9668 = vld [vmem:[%s9626 + $0xa0] sm:%s9619]
                %9669 = vst [vmem:[%s9627 + $0xa0] sm:%s9619] %v9668
                %v9670 = vld [vmem:[%s9626 + $0xa8] sm:%s9619]
                %9671 = vst [vmem:[%s9627 + $0xa8] sm:%s9619] %v9670
                %v9672 = vld [vmem:[%s9626 + $0xb0] sm:%s9619]
                %9673 = vst [vmem:[%s9627 + $0xb0] sm:%s9619] %v9672
                %v9674 = vld [vmem:[%s9626 + $0xb8] sm:%s9619]
                %9675 = vst [vmem:[%s9627 + $0xb8] sm:%s9619] %v9674
                %v9676 = vld [vmem:[%s9626 + $0xc0] sm:%s9619]
                %9677 = vst [vmem:[%s9627 + $0xc0] sm:%s9619] %v9676
                %v9678 = vld [vmem:[%s9626 + $0xc8] sm:%s9619]
                %9679 = vst [vmem:[%s9627 + $0xc8] sm:%s9619] %v9678
                %v9680 = vld [vmem:[%s9626 + $0xd0] sm:%s9619]
                %9681 = vst [vmem:[%s9627 + $0xd0] sm:%s9619] %v9680
                %v9682 = vld [vmem:[%s9626 + $0xd8] sm:%s9619]
                %9683 = vst [vmem:[%s9627 + $0xd8] sm:%s9619] %v9682
                %v9684 = vld [vmem:[%s9626 + $0xe0] sm:%s9619]
                %9685 = vst [vmem:[%s9627 + $0xe0] sm:%s9619] %v9684
                %v9686 = vld [vmem:[%s9626 + $0xe8] sm:%s9619]
                %9687 = vst [vmem:[%s9627 + $0xe8] sm:%s9619] %v9686
                %v9688 = vld [vmem:[%s9626 + $0xf0] sm:%s9619]
                %9689 = vst [vmem:[%s9627 + $0xf0] sm:%s9619] %v9688
                %v9690 = vld [vmem:[%s9626 + $0xf8] sm:%s9619]
                %9691 = vst [vmem:[%s9627 + $0xf8] sm:%s9619] %v9690
                %v9692 = vld [vmem:[%s9626 + $0x100] sm:%s9619]
                %9693 = vst [vmem:[%s9627 + $0x200] sm:%s9619] %v9692
                %v9694 = vld [vmem:[%s9626 + $0x108] sm:%s9619]
                %9695 = vst [vmem:[%s9627 + $0x208] sm:%s9619] %v9694
                %v9696 = vld [vmem:[%s9626 + $0x110] sm:%s9619]
                %9697 = vst [vmem:[%s9627 + $0x210] sm:%s9619] %v9696
                %v9698 = vld [vmem:[%s9626 + $0x118] sm:%s9619]
                %9699 = vst [vmem:[%s9627 + $0x218] sm:%s9619] %v9698
                %v9700 = vld [vmem:[%s9626 + $0x120] sm:%s9619]
                %9701 = vst [vmem:[%s9627 + $0x220] sm:%s9619] %v9700
                %v9702 = vld [vmem:[%s9626 + $0x128] sm:%s9619]
                %9703 = vst [vmem:[%s9627 + $0x228] sm:%s9619] %v9702
                %v9704 = vld [vmem:[%s9626 + $0x130] sm:%s9619]
                %9705 = vst [vmem:[%s9627 + $0x230] sm:%s9619] %v9704
                %v9706 = vld [vmem:[%s9626 + $0x138] sm:%s9619]
                %9707 = vst [vmem:[%s9627 + $0x238] sm:%s9619] %v9706
                %v9708 = vld [vmem:[%s9626 + $0x140] sm:%s9619]
                %9709 = vst [vmem:[%s9627 + $0x240] sm:%s9619] %v9708
                %v9710 = vld [vmem:[%s9626 + $0x148] sm:%s9619]
                %9711 = vst [vmem:[%s9627 + $0x248] sm:%s9619] %v9710
                %v9712 = vld [vmem:[%s9626 + $0x150] sm:%s9619]
                %9713 = vst [vmem:[%s9627 + $0x250] sm:%s9619] %v9712
                %v9714 = vld [vmem:[%s9626 + $0x158] sm:%s9619]
                %9715 = vst [vmem:[%s9627 + $0x258] sm:%s9619] %v9714
                %v9716 = vld [vmem:[%s9626 + $0x160] sm:%s9619]
                %9717 = vst [vmem:[%s9627 + $0x260] sm:%s9619] %v9716
                %v9718 = vld [vmem:[%s9626 + $0x168] sm:%s9619]
                %9719 = vst [vmem:[%s9627 + $0x268] sm:%s9619] %v9718
                %v9720 = vld [vmem:[%s9626 + $0x170] sm:%s9619]
                %9721 = vst [vmem:[%s9627 + $0x270] sm:%s9619] %v9720
                %v9722 = vld [vmem:[%s9626 + $0x178] sm:%s9619]
                %9723 = vst [vmem:[%s9627 + $0x278] sm:%s9619] %v9722
                %v9724 = vld [vmem:[%s9626 + $0x180] sm:%s9619]
                %9725 = vst [vmem:[%s9627 + $0x280] sm:%s9619] %v9724
                %v9726 = vld [vmem:[%s9626 + $0x188] sm:%s9619]
                %9727 = vst [vmem:[%s9627 + $0x288] sm:%s9619] %v9726
                %v9728 = vld [vmem:[%s9626 + $0x190] sm:%s9619]
                %9729 = vst [vmem:[%s9627 + $0x290] sm:%s9619] %v9728
                %v9730 = vld [vmem:[%s9626 + $0x198] sm:%s9619]
                %9731 = vst [vmem:[%s9627 + $0x298] sm:%s9619] %v9730
                %v9732 = vld [vmem:[%s9626 + $0x1a0] sm:%s9619]
                %9733 = vst [vmem:[%s9627 + $0x2a0] sm:%s9619] %v9732
                %v9734 = vld [vmem:[%s9626 + $0x1a8] sm:%s9619]
                %9735 = vst [vmem:[%s9627 + $0x2a8] sm:%s9619] %v9734
                %v9736 = vld [vmem:[%s9626 + $0x1b0] sm:%s9619]
                %9737 = vst [vmem:[%s9627 + $0x2b0] sm:%s9619] %v9736
                %v9738 = vld [vmem:[%s9626 + $0x1b8] sm:%s9619]
                %9739 = vst [vmem:[%s9627 + $0x2b8] sm:%s9619] %v9738
                %v9740 = vld [vmem:[%s9626 + $0x1c0] sm:%s9619]
                %9741 = vst [vmem:[%s9627 + $0x2c0] sm:%s9619] %v9740
                %v9742 = vld [vmem:[%s9626 + $0x1c8] sm:%s9619]
                %9743 = vst [vmem:[%s9627 + $0x2c8] sm:%s9619] %v9742
                %v9744 = vld [vmem:[%s9626 + $0x1d0] sm:%s9619]
                %9745 = vst [vmem:[%s9627 + $0x2d0] sm:%s9619] %v9744
                %v9746 = vld [vmem:[%s9626 + $0x1d8] sm:%s9619]
                %9747 = vst [vmem:[%s9627 + $0x2d8] sm:%s9619] %v9746
                %v9748 = vld [vmem:[%s9626 + $0x1e0] sm:%s9619]
                %9749 = vst [vmem:[%s9627 + $0x2e0] sm:%s9619] %v9748
                %v9750 = vld [vmem:[%s9626 + $0x1e8] sm:%s9619]
                %9751 = vst [vmem:[%s9627 + $0x2e8] sm:%s9619] %v9750
                %v9752 = vld [vmem:[%s9626 + $0x1f0] sm:%s9619]
                %9753 = vst [vmem:[%s9627 + $0x2f0] sm:%s9619] %v9752
                %v9754 = vld [vmem:[%s9626 + $0x1f8] sm:%s9619]
                %9755 = vst [vmem:[%s9627 + $0x2f8] sm:%s9619] %v9754
              $region65: #{tpu_custom_call.1} parent=59 // loop_footer
                %s9625 = sadd.s32 1, %s9621
              $region66: #{tpu_custom_call.1} parent=59 // loop_footer_branch
                %9620 = sbr.rel target = $region62
              $region67: #{tpu_custom_call.1} parent=59 // loop_exit
                _
            $region60: #{tpu_custom_call.1} parent=51 // pred_fallthru
              _
          $region52: #{tpu_custom_call.1} parent=47 // pred_fallthru
            _
          %9896 = vnop
        $region48: #{tpu_custom_call.1} parent=35 // pred_fallthru
          _
      $region36: #{tpu_custom_call.1} parent=5 // pred_fallthru
        _
      %p9897 = scmp.le.s32.totalorder 2, %s10
      // Predicated region
      $region83: #{tpu_custom_call.1} parent=5 // pred_check
        %p9898 = pneg %p9897
      $region84: #{tpu_custom_call.1} parent=5 // pred_check_branch
        %9900 = sbr.rel (%p9898) target = $region86
      $region85: #{tpu_custom_call.1} parent=5 // pred_region
        %s9901 = ssub.s32 %s10, 2
        // Predicated region
        $region87: #{tpu_custom_call.1} parent=85 // pred_check
          %p9902 = pneg %p142
        $region88: #{tpu_custom_call.1} parent=85 // pred_check_branch
          %9904 = sbr.rel (%p9902) target = $region90
        $region89: #{tpu_custom_call.1} parent=85 // pred_region
          %s9905 = sand.u32 %s127, 1
          %s9906 = sand.u32 %s127, 1
          %s9907 = smul.addr %s9906, 512
          %s9908 = scalar_lea.vmem [#allocation5], %s9907
        $region90: #{tpu_custom_call.1} parent=85 // pred_fallthru
          _
      $region86: #{tpu_custom_call.1} parent=5 // pred_fallthru
        _
    $region6: #{tpu_custom_call.1} parent=1 // loop_footer
      %s14 = sadd.s32 1, %s10
    $region7: #{tpu_custom_call.1} parent=1 // loop_footer_branch
      %9 = sbr.rel target = $region3
    $region8: #{tpu_custom_call.1} parent=1 // loop_exit
      _

</llo_original>
